<compile_context>
chip_gen: v6e
topology: v6e:2x2x1
jax: 0.10.0
libtpu: 0.0.40
codegen_flags: <defaults>
</compile_context>

<pallas_src>
import functools
import math

import jax
import jax.numpy as jnp
from jax.experimental import pallas as pl
from jax.experimental.pallas import tpu as pltpu


def _ffn_kernel(x_ref, w1_ref, w2k_ref, cmask_ref, o_ref,
                h0_scr, hl_scr, hr_scr, *, H, W, n_img, halo):
    """One grid step = `n_img` whole images.

    Scratch row layout: [halo][img0][halo][img1]...[img_{n-1}][halo], where
    each halo is >= W+1 zero rows, so any 3x3 tap crossing an image's
    top/bottom edge (or the block boundary) reads zeros.  Column edges are
    handled by input-side masking:
        h0: unmasked GELU output          -> taps with dx ==  0
        hl: zero where input col == W-1   -> taps with dx == -1
        hr: zero where input col == 0     -> taps with dx == +1
    Each tap is then a static-offset slice of a scratch fed straight into an
    MXU matmul against (wc[k] * w2), i.e. the depthwise conv is folded into
    fc2 and the whole conv+fc2 is 9 small matmuls per image.
    """
    L = H * W
    hd = w1_ref.shape[1]
    stride = L + halo                     # distance between image base rows

    # ---- fc1 + exact (erf) GELU; Dropout(p=0) is identity ----
    h = jnp.dot(x_ref[...], w1_ref[...], preferred_element_type=jnp.float32)
    h = 0.5 * h * (1.0 + jax.scipy.special.erf(h * (1.0 / math.sqrt(2.0))))

    # ---- stage GELU output into the zero-haloed scratches ----
    cm = cmask_ref[...]                   # (L, 2) precomputed column masks
    not_last = cm[:, 0:1]                 # 0.0 where col == W-1
    not_first = cm[:, 1:2]                # 0.0 where col == 0
    zero_halo = jnp.zeros((halo, hd), jnp.float32)
    for i in range(n_img + 1):            # zero every halo gap (tiny, aligned)
        g = i * stride
        h0_scr[pl.ds(g, halo), :] = zero_halo
        hl_scr[pl.ds(g, halo), :] = zero_halo
        hr_scr[pl.ds(g, halo), :] = zero_halo
    for i in range(n_img):
        hi = h if n_img == 1 else h[i * L:(i + 1) * L, :]
        base = halo + i * stride
        h0_scr[pl.ds(base, L), :] = hi
        hl_scr[pl.ds(base, L), :] = hi * not_last
        hr_scr[pl.ds(base, L), :] = hi * not_first

    # ---- depthwise 3x3 conv folded into fc2: 9 shifted-slice matmuls ----
    taps = []
    for dy in (-1, 0, 1):
        for dx in (-1, 0, 1):
            src = {-1: hl_scr, 0: h0_scr, 1: hr_scr}[dx]
            taps.append((dy * W + dx, (dy + 1) * 3 + (dx + 1), src))
    for i in range(n_img):
        base = halo + i * stride
        y = None
        for off, k, src in taps:
            contrib = jnp.dot(src[pl.ds(base + off, L), :],
                              w2k_ref[pl.ds(k * hd, hd), :],
                              preferred_element_type=jnp.float32)
            y = contrib if y is None else y + contrib
        o_ref[pl.ds(i * L, L), :] = y.astype(o_ref.dtype)


def _default_images_per_block(batch, tokens_per_image):
    """Whole images per grid step.

    2-TC chips (v7x / megacore class) keep >= 2 'parallel' grid steps so both
    TensorCores get work; single-TC chips (v5e/v6e) grow the block toward
    >= 512 token rows to amortize the ~0.35 us per-grid-step overhead.
    Blocks are capped at ~4096 token rows so VMEM stays small for any batch
    (matters most on v7x with 64 MiB VMEM)."""
    try:
        kind = jax.devices()[0].device_kind.lower()
    except Exception:  # defensive: fall back to one image per step
        kind = ""
    two_core = any(tag in kind for tag in ("v7", "v3", "v4", "v5p"))
    min_steps = 2 if (two_core and batch >= 2) else 1
    best = 1
    for n in range(1, batch + 1):
        if batch % n:
            continue
        if batch // n < min_steps:
            break
        if n > 1 and n * tokens_per_image > 4096:
            break
        best = n
        if n * tokens_per_image >= 512:
            break
    return best


def simplified_ffn(x, w1, wc, w2, H, W, *, images_per_block=None):
    """x: (B, L, C) f32; w1: (C, hd); wc: (9, hd); w2: (hd, C)."""
    B, L, C = x.shape
    assert L == H * W
    hd = w1.shape[1]
    if images_per_block is None:
        images_per_block = _default_images_per_block(B, L)
    n_img = images_per_block
    assert B % n_img == 0, "each grid step must hold whole images"
    T = n_img * L                                  # token rows per grid step
    halo = ((W + 1 + 7) // 8) * 8                  # zero rows around each image
    scr_rows = n_img * (L + halo) + halo

    # Fold the depthwise tap weights into fc2 (one resident (9*hd, C) input):
    #   w2k[k*hd:(k+1)*hd, :] = diag(wc[k]) @ w2
    w2k = (wc[:, :, None] * w2[None, :, :]).reshape(9 * hd, C)
    # Precompute the column-boundary masks once on the host/wrapper side.
    widx = jnp.arange(L, dtype=jnp.int32) % W
    cmask = jnp.stack([(widx <= W - 2).astype(jnp.float32),
                       (widx >= 1).astype(jnp.float32)], axis=1)   # (L, 2)

    xf = x.reshape(B * L, C)                       # free row-major reshape
    kernel = functools.partial(_ffn_kernel, H=H, W=W, n_img=n_img, halo=halo)
    out = pl.pallas_call(
        kernel,
        out_shape=jax.ShapeDtypeStruct((B * L, C), x.dtype),
        grid_spec=pltpu.PrefetchScalarGridSpec(
            num_scalar_prefetch=0,
            grid=(B // n_img,),
            in_specs=[
                pl.BlockSpec((T, C), lambda i: (i, 0)),
                pl.BlockSpec((C, hd), lambda i: (0, 0)),
                pl.BlockSpec((9 * hd, C), lambda i: (0, 0)),
                pl.BlockSpec((L, 2), lambda i: (0, 0)),
            ],
            out_specs=pl.BlockSpec((T, C), lambda i: (i, 0)),
            scratch_shapes=[
                pltpu.VMEM((scr_rows, hd), jnp.float32),   # h0 (dx == 0 taps)
                pltpu.VMEM((scr_rows, hd), jnp.float32),   # hl (dx == -1 taps)
                pltpu.VMEM((scr_rows, hd), jnp.float32),   # hr (dx == +1 taps)
            ]),
        compiler_params=pltpu.CompilerParams(
            dimension_semantics=("parallel",)),
    )(xf, w1, w2k, cmask)
    return out.reshape(B, L, C)


def ref_ffn(x, w1, wconv_oihw, w2, H, W):
    """Pure-JAX reference matching the PyTorch module (drop=0)."""
    B, L, C = x.shape
    hd = w1.shape[1]
    h = jnp.einsum("blc,ch->blh", x, w1)
    h = 0.5 * h * (1.0 + jax.scipy.special.erf(h / math.sqrt(2.0)))
    himg = jnp.transpose(h, (0, 2, 1)).reshape(B, hd, H, W)       # NCHW
    conv = jax.lax.conv_general_dilated(
        himg, wconv_oihw, window_strides=(1, 1), padding=((1, 1), (1, 1)),
        feature_group_count=hd, dimension_numbers=("NCHW", "OIHW", "NCHW"))
    hs = jnp.transpose(conv.reshape(B, hd, L), (0, 2, 1))
    return jnp.einsum("blh,hc->blc", hs, w2)


if __name__ == "__main__":
    B, H, W, dim = 2, 16, 16, 32
    expansion_ratio = 2.0
    hd = int(dim * expansion_ratio)
    L = H * W

    key = jax.random.PRNGKey(0)
    k1, k2, k3, k4 = jax.random.split(key, 4)
    x = jax.random.normal(k1, (B, L, dim), jnp.float32)

    # Deterministic synthetic parameters (shapes mirror the nn.Module's):
    #   fc1.weight (hd, dim) -> stored transposed (dim, hd)
    #   smix.weight (hd, 1, 3, 3) depthwise
    #   fc2.weight (dim, hd) -> stored transposed (hd, dim)
    w1 = jax.random.normal(k2, (dim, hd), jnp.float32) * 0.02
    wconv = jax.random.normal(k3, (hd, 1, 3, 3), jnp.float32) * 0.1
    w2 = jax.random.normal(k4, (hd, dim), jnp.float32) * 0.02
    # Repack depthwise conv weights as (9, hd): wc[ky*3+kx, c] = wconv[c,0,ky,kx]
    wc = jnp.transpose(wconv.reshape(hd, 9), (1, 0))

    out = simplified_ffn(x, w1, wc, w2, H, W)
    out = jax.block_until_ready(out)

    ref = ref_ffn(x, w1, wconv, w2, H, W)
    assert out.shape == (B, L, dim)
    assert jnp.allclose(out, ref, rtol=1e-4, atol=1e-4), (
        float(jnp.max(jnp.abs(out - ref))))
    print("KERNEL_OK")
</pallas_src>

<mosaic_0001>
module attributes {stable_mosaic.version = 11 : i64} {
  func.func @_ffn_kernel(%arg0: i32, %arg1: memref<512x32xf32, #tpu.memory_space<vmem>>, %arg2: memref<32x64xf32, #tpu.memory_space<vmem>>, %arg3: memref<576x32xf32, #tpu.memory_space<vmem>>, %arg4: memref<256x2xf32, #tpu.memory_space<vmem>>, %arg5: memref<512x32xf32, #tpu.memory_space<vmem>>, %arg6: memref<584x64xf32, #tpu.memory_space<vmem>>, %arg7: memref<584x64xf32, #tpu.memory_space<vmem>>, %arg8: memref<584x64xf32, #tpu.memory_space<vmem>>) attributes {dimension_semantics = [#tpu.dimension_semantics<parallel>], iteration_bounds = array<i64: 1>, scalar_prefetch = 0 : i64, scratch_operands = 3 : i64, tpu.core_type = #tpu.core_type<tc>, window_params = [{transform_indices = @transform_0, window_bounds = array<i64: 512, 32>}, {pipeline_mode = #tpu.pipeline_mode<synchronous>, transform_indices = @transform_1, window_bounds = array<i64: 32, 64>}, {pipeline_mode = #tpu.pipeline_mode<synchronous>, transform_indices = @transform_2, window_bounds = array<i64: 576, 32>}, {pipeline_mode = #tpu.pipeline_mode<synchronous>, transform_indices = @transform_3, window_bounds = array<i64: 256, 2>}, {transform_indices = @transform_4, window_bounds = array<i64: 512, 32>}]} {
    %c0 = arith.constant 0 : index
    %c0_0 = arith.constant 0 : index
    %0 = vector.load %arg1[%c0, %c0_0] : memref<512x32xf32, #tpu.memory_space<vmem>>, vector<512x32xf32>
    %c0_1 = arith.constant 0 : index
    %c0_2 = arith.constant 0 : index
    %1 = vector.load %arg2[%c0_1, %c0_2] : memref<32x64xf32, #tpu.memory_space<vmem>>, vector<32x64xf32>
    %cst = arith.constant dense<0.000000e+00> : vector<512x64xf32>
    %2 = tpu.matmul %0, %1, %cst {dimension_numbers = #tpu.dot_dimension_numbers<[1], [0], [0], [1], [0, 0, 1, 1], [], []>} : vector<512x32xf32>, vector<32x64xf32>, vector<512x64xf32> -> vector<512x64xf32>
    %cst_3 = arith.constant 5.000000e-01 : f32
    %3 = vector.broadcast %cst_3 : f32 to vector<512x64xf32>
    %4 = arith.mulf %3, %2 : vector<512x64xf32>
    %cst_4 = arith.constant 0.707106769 : f32
    %5 = vector.broadcast %cst_4 : f32 to vector<512x64xf32>
    %6 = arith.mulf %2, %5 : vector<512x64xf32>
    %7 = math.erf %6 : vector<512x64xf32>
    %cst_5 = arith.constant 1.000000e+00 : f32
    %8 = vector.broadcast %cst_5 : f32 to vector<512x64xf32>
    %9 = arith.addf %8, %7 : vector<512x64xf32>
    %10 = arith.mulf %4, %9 : vector<512x64xf32>
    %c0_6 = arith.constant 0 : index
    %c0_7 = arith.constant 0 : index
    %11 = vector.load %arg4[%c0_6, %c0_7] : memref<256x2xf32, #tpu.memory_space<vmem>>, vector<256x2xf32>
    %12 = vector.extract_strided_slice %11 {offsets = [0, 0], sizes = [256, 1], strides = [1, 1]} : vector<256x2xf32> to vector<256x1xf32>
    %13 = vector.extract_strided_slice %11 {offsets = [0, 1], sizes = [256, 1], strides = [1, 1]} : vector<256x2xf32> to vector<256x1xf32>
    %cst_8 = arith.constant 0.000000e+00 : f32
    %14 = vector.broadcast %cst_8 : f32 to vector<24x64xf32>
    %c0_9 = arith.constant 0 : index
    %c0_10 = arith.constant 0 : index
    %15 = vector.load %arg6[%c0_9, %c0_10] : memref<584x64xf32, #tpu.memory_space<vmem>>, vector<24x64xf32>
    tpu.vector_store %arg6[%c0_9, %c0_10], %14 {strides = array<i32>} : memref<584x64xf32, #tpu.memory_space<vmem>>, vector<24x64xf32>,
    %c0_11 = arith.constant 0 : index
    %c0_12 = arith.constant 0 : index
    %16 = vector.load %arg7[%c0_11, %c0_12] : memref<584x64xf32, #tpu.memory_space<vmem>>, vector<24x64xf32>
    tpu.vector_store %arg7[%c0_11, %c0_12], %14 {strides = array<i32>} : memref<584x64xf32, #tpu.memory_space<vmem>>, vector<24x64xf32>,
    %c0_13 = arith.constant 0 : index
    %c0_14 = arith.constant 0 : index
    %17 = vector.load %arg8[%c0_13, %c0_14] : memref<584x64xf32, #tpu.memory_space<vmem>>, vector<24x64xf32>
    tpu.vector_store %arg8[%c0_13, %c0_14], %14 {strides = array<i32>} : memref<584x64xf32, #tpu.memory_space<vmem>>, vector<24x64xf32>,
    %c280 = arith.constant 280 : index
    %c0_15 = arith.constant 0 : index
    %18 = vector.load %arg6[%c280, %c0_15] : memref<584x64xf32, #tpu.memory_space<vmem>>, vector<24x64xf32>
    tpu.vector_store %arg6[%c280, %c0_15], %14 {strides = array<i32>} : memref<584x64xf32, #tpu.memory_space<vmem>>, vector<24x64xf32>,
    %c280_16 = arith.constant 280 : index
    %c0_17 = arith.constant 0 : index
    %19 = vector.load %arg7[%c280_16, %c0_17] : memref<584x64xf32, #tpu.memory_space<vmem>>, vector<24x64xf32>
    tpu.vector_store %arg7[%c280_16, %c0_17], %14 {strides = array<i32>} : memref<584x64xf32, #tpu.memory_space<vmem>>, vector<24x64xf32>,
    %c280_18 = arith.constant 280 : index
    %c0_19 = arith.constant 0 : index
    %20 = vector.load %arg8[%c280_18, %c0_19] : memref<584x64xf32, #tpu.memory_space<vmem>>, vector<24x64xf32>
    tpu.vector_store %arg8[%c280_18, %c0_19], %14 {strides = array<i32>} : memref<584x64xf32, #tpu.memory_space<vmem>>, vector<24x64xf32>,
    %c560 = arith.constant 560 : index
    %c0_20 = arith.constant 0 : index
    %21 = vector.load %arg6[%c560, %c0_20] : memref<584x64xf32, #tpu.memory_space<vmem>>, vector<24x64xf32>
    tpu.vector_store %arg6[%c560, %c0_20], %14 {strides = array<i32>} : memref<584x64xf32, #tpu.memory_space<vmem>>, vector<24x64xf32>,
    %c560_21 = arith.constant 560 : index
    %c0_22 = arith.constant 0 : index
    %22 = vector.load %arg7[%c560_21, %c0_22] : memref<584x64xf32, #tpu.memory_space<vmem>>, vector<24x64xf32>
    tpu.vector_store %arg7[%c560_21, %c0_22], %14 {strides = array<i32>} : memref<584x64xf32, #tpu.memory_space<vmem>>, vector<24x64xf32>,
    %c560_23 = arith.constant 560 : index
    %c0_24 = arith.constant 0 : index
    %23 = vector.load %arg8[%c560_23, %c0_24] : memref<584x64xf32, #tpu.memory_space<vmem>>, vector<24x64xf32>
    tpu.vector_store %arg8[%c560_23, %c0_24], %14 {strides = array<i32>} : memref<584x64xf32, #tpu.memory_space<vmem>>, vector<24x64xf32>,
    %24 = vector.extract_strided_slice %10 {offsets = [0, 0], sizes = [256, 64], strides = [1, 1]} : vector<512x64xf32> to vector<256x64xf32>
    %c24 = arith.constant 24 : index
    %c0_25 = arith.constant 0 : index
    %25 = vector.load %arg6[%c24, %c0_25] : memref<584x64xf32, #tpu.memory_space<vmem>>, vector<256x64xf32>
    tpu.vector_store %arg6[%c24, %c0_25], %24 {strides = array<i32>} : memref<584x64xf32, #tpu.memory_space<vmem>>, vector<256x64xf32>,
    %26 = vector.broadcast %12 : vector<256x1xf32> to vector<256x64xf32>
    %27 = arith.mulf %24, %26 : vector<256x64xf32>
    %c24_26 = arith.constant 24 : index
    %c0_27 = arith.constant 0 : index
    %28 = vector.load %arg7[%c24_26, %c0_27] : memref<584x64xf32, #tpu.memory_space<vmem>>, vector<256x64xf32>
    tpu.vector_store %arg7[%c24_26, %c0_27], %27 {strides = array<i32>} : memref<584x64xf32, #tpu.memory_space<vmem>>, vector<256x64xf32>,
    %29 = vector.broadcast %13 : vector<256x1xf32> to vector<256x64xf32>
    %30 = arith.mulf %24, %29 : vector<256x64xf32>
    %c24_28 = arith.constant 24 : index
    %c0_29 = arith.constant 0 : index
    %31 = vector.load %arg8[%c24_28, %c0_29] : memref<584x64xf32, #tpu.memory_space<vmem>>, vector<256x64xf32>
    tpu.vector_store %arg8[%c24_28, %c0_29], %30 {strides = array<i32>} : memref<584x64xf32, #tpu.memory_space<vmem>>, vector<256x64xf32>,
    %32 = vector.extract_strided_slice %10 {offsets = [256, 0], sizes = [256, 64], strides = [1, 1]} : vector<512x64xf32> to vector<256x64xf32>
    %c304 = arith.constant 304 : index
    %c0_30 = arith.constant 0 : index
    %33 = vector.load %arg6[%c304, %c0_30] : memref<584x64xf32, #tpu.memory_space<vmem>>, vector<256x64xf32>
    tpu.vector_store %arg6[%c304, %c0_30], %32 {strides = array<i32>} : memref<584x64xf32, #tpu.memory_space<vmem>>, vector<256x64xf32>,
    %34 = vector.broadcast %12 : vector<256x1xf32> to vector<256x64xf32>
    %35 = arith.mulf %32, %34 : vector<256x64xf32>
    %c304_31 = arith.constant 304 : index
    %c0_32 = arith.constant 0 : index
    %36 = vector.load %arg7[%c304_31, %c0_32] : memref<584x64xf32, #tpu.memory_space<vmem>>, vector<256x64xf32>
    tpu.vector_store %arg7[%c304_31, %c0_32], %35 {strides = array<i32>} : memref<584x64xf32, #tpu.memory_space<vmem>>, vector<256x64xf32>,
    %37 = vector.broadcast %13 : vector<256x1xf32> to vector<256x64xf32>
    %38 = arith.mulf %32, %37 : vector<256x64xf32>
    %c304_33 = arith.constant 304 : index
    %c0_34 = arith.constant 0 : index
    %39 = vector.load %arg8[%c304_33, %c0_34] : memref<584x64xf32, #tpu.memory_space<vmem>>, vector<256x64xf32>
    tpu.vector_store %arg8[%c304_33, %c0_34], %38 {strides = array<i32>} : memref<584x64xf32, #tpu.memory_space<vmem>>, vector<256x64xf32>,
    %c7 = arith.constant 7 : index
    %c0_35 = arith.constant 0 : index
    %40 = vector.load %arg7[%c7, %c0_35] : memref<584x64xf32, #tpu.memory_space<vmem>>, vector<256x64xf32>
    %c0_36 = arith.constant 0 : index
    %c0_37 = arith.constant 0 : index
    %41 = vector.load %arg3[%c0_36, %c0_37] : memref<576x32xf32, #tpu.memory_space<vmem>>, vector<64x32xf32>
    %cst_38 = arith.constant dense<0.000000e+00> : vector<256x32xf32>
    %42 = tpu.matmul %40, %41, %cst_38 {dimension_numbers = #tpu.dot_dimension_numbers<[1], [0], [0], [1], [0, 0, 1, 1], [], []>} : vector<256x64xf32>, vector<64x32xf32>, vector<256x32xf32> -> vector<256x32xf32>
    %c8 = arith.constant 8 : index
    %c0_39 = arith.constant 0 : index
    %43 = vector.load %arg6[%c8, %c0_39] : memref<584x64xf32, #tpu.memory_space<vmem>>, vector<256x64xf32>
    %c64 = arith.constant 64 : index
    %c0_40 = arith.constant 0 : index
    %44 = vector.load %arg3[%c64, %c0_40] : memref<576x32xf32, #tpu.memory_space<vmem>>, vector<64x32xf32>
    %cst_41 = arith.constant dense<0.000000e+00> : vector<256x32xf32>
    %45 = tpu.matmul %43, %44, %cst_41 {dimension_numbers = #tpu.dot_dimension_numbers<[1], [0], [0], [1], [0, 0, 1, 1], [], []>} : vector<256x64xf32>, vector<64x32xf32>, vector<256x32xf32> -> vector<256x32xf32>
    %46 = arith.addf %42, %45 : vector<256x32xf32>
    %c9 = arith.constant 9 : index
    %c0_42 = arith.constant 0 : index
    %47 = vector.load %arg8[%c9, %c0_42] : memref<584x64xf32, #tpu.memory_space<vmem>>, vector<256x64xf32>
    %c128 = arith.constant 128 : index
    %c0_43 = arith.constant 0 : index
    %48 = vector.load %arg3[%c128, %c0_43] : memref<576x32xf32, #tpu.memory_space<vmem>>, vector<64x32xf32>
    %cst_44 = arith.constant dense<0.000000e+00> : vector<256x32xf32>
    %49 = tpu.matmul %47, %48, %cst_44 {dimension_numbers = #tpu.dot_dimension_numbers<[1], [0], [0], [1], [0, 0, 1, 1], [], []>} : vector<256x64xf32>, vector<64x32xf32>, vector<256x32xf32> -> vector<256x32xf32>
    %50 = arith.addf %46, %49 : vector<256x32xf32>
    %c23 = arith.constant 23 : index
    %c0_45 = arith.constant 0 : index
    %51 = vector.load %arg7[%c23, %c0_45] : memref<584x64xf32, #tpu.memory_space<vmem>>, vector<256x64xf32>
    %c192 = arith.constant 192 : index
    %c0_46 = arith.constant 0 : index
    %52 = vector.load %arg3[%c192, %c0_46] : memref<576x32xf32, #tpu.memory_space<vmem>>, vector<64x32xf32>
    %cst_47 = arith.constant dense<0.000000e+00> : vector<256x32xf32>
    %53 = tpu.matmul %51, %52, %cst_47 {dimension_numbers = #tpu.dot_dimension_numbers<[1], [0], [0], [1], [0, 0, 1, 1], [], []>} : vector<256x64xf32>, vector<64x32xf32>, vector<256x32xf32> -> vector<256x32xf32>
    %54 = arith.addf %50, %53 : vector<256x32xf32>
    %c24_48 = arith.constant 24 : index
    %c0_49 = arith.constant 0 : index
    %55 = vector.load %arg6[%c24_48, %c0_49] : memref<584x64xf32, #tpu.memory_space<vmem>>, vector<256x64xf32>
    %c256 = arith.constant 256 : index
    %c0_50 = arith.constant 0 : index
    %56 = vector.load %arg3[%c256, %c0_50] : memref<576x32xf32, #tpu.memory_space<vmem>>, vector<64x32xf32>
    %cst_51 = arith.constant dense<0.000000e+00> : vector<256x32xf32>
    %57 = tpu.matmul %55, %56, %cst_51 {dimension_numbers = #tpu.dot_dimension_numbers<[1], [0], [0], [1], [0, 0, 1, 1], [], []>} : vector<256x64xf32>, vector<64x32xf32>, vector<256x32xf32> -> vector<256x32xf32>
    %58 = arith.addf %54, %57 : vector<256x32xf32>
    %c25 = arith.constant 25 : index
    %c0_52 = arith.constant 0 : index
    %59 = vector.load %arg8[%c25, %c0_52] : memref<584x64xf32, #tpu.memory_space<vmem>>, vector<256x64xf32>
    %c320 = arith.constant 320 : index
    %c0_53 = arith.constant 0 : index
    %60 = vector.load %arg3[%c320, %c0_53] : memref<576x32xf32, #tpu.memory_space<vmem>>, vector<64x32xf32>
    %cst_54 = arith.constant dense<0.000000e+00> : vector<256x32xf32>
    %61 = tpu.matmul %59, %60, %cst_54 {dimension_numbers = #tpu.dot_dimension_numbers<[1], [0], [0], [1], [0, 0, 1, 1], [], []>} : vector<256x64xf32>, vector<64x32xf32>, vector<256x32xf32> -> vector<256x32xf32>
    %62 = arith.addf %58, %61 : vector<256x32xf32>
    %c39 = arith.constant 39 : index
    %c0_55 = arith.constant 0 : index
    %63 = vector.load %arg7[%c39, %c0_55] : memref<584x64xf32, #tpu.memory_space<vmem>>, vector<256x64xf32>
    %c384 = arith.constant 384 : index
    %c0_56 = arith.constant 0 : index
    %64 = vector.load %arg3[%c384, %c0_56] : memref<576x32xf32, #tpu.memory_space<vmem>>, vector<64x32xf32>
    %cst_57 = arith.constant dense<0.000000e+00> : vector<256x32xf32>
    %65 = tpu.matmul %63, %64, %cst_57 {dimension_numbers = #tpu.dot_dimension_numbers<[1], [0], [0], [1], [0, 0, 1, 1], [], []>} : vector<256x64xf32>, vector<64x32xf32>, vector<256x32xf32> -> vector<256x32xf32>
    %66 = arith.addf %62, %65 : vector<256x32xf32>
    %c40 = arith.constant 40 : index
    %c0_58 = arith.constant 0 : index
    %67 = vector.load %arg6[%c40, %c0_58] : memref<584x64xf32, #tpu.memory_space<vmem>>, vector<256x64xf32>
    %c448 = arith.constant 448 : index
    %c0_59 = arith.constant 0 : index
    %68 = vector.load %arg3[%c448, %c0_59] : memref<576x32xf32, #tpu.memory_space<vmem>>, vector<64x32xf32>
    %cst_60 = arith.constant dense<0.000000e+00> : vector<256x32xf32>
    %69 = tpu.matmul %67, %68, %cst_60 {dimension_numbers = #tpu.dot_dimension_numbers<[1], [0], [0], [1], [0, 0, 1, 1], [], []>} : vector<256x64xf32>, vector<64x32xf32>, vector<256x32xf32> -> vector<256x32xf32>
    %70 = arith.addf %66, %69 : vector<256x32xf32>
    %c41 = arith.constant 41 : index
    %c0_61 = arith.constant 0 : index
    %71 = vector.load %arg8[%c41, %c0_61] : memref<584x64xf32, #tpu.memory_space<vmem>>, vector<256x64xf32>
    %c512 = arith.constant 512 : index
    %c0_62 = arith.constant 0 : index
    %72 = vector.load %arg3[%c512, %c0_62] : memref<576x32xf32, #tpu.memory_space<vmem>>, vector<64x32xf32>
    %cst_63 = arith.constant dense<0.000000e+00> : vector<256x32xf32>
    %73 = tpu.matmul %71, %72, %cst_63 {dimension_numbers = #tpu.dot_dimension_numbers<[1], [0], [0], [1], [0, 0, 1, 1], [], []>} : vector<256x64xf32>, vector<64x32xf32>, vector<256x32xf32> -> vector<256x32xf32>
    %74 = arith.addf %70, %73 : vector<256x32xf32>
    %c0_64 = arith.constant 0 : index
    %c0_65 = arith.constant 0 : index
    %75 = vector.load %arg5[%c0_64, %c0_65] : memref<512x32xf32, #tpu.memory_space<vmem>>, vector<256x32xf32>
    tpu.vector_store %arg5[%c0_64, %c0_65], %74 {strides = array<i32>} : memref<512x32xf32, #tpu.memory_space<vmem>>, vector<256x32xf32>,
    %c287 = arith.constant 287 : index
    %c0_66 = arith.constant 0 : index
    %76 = vector.load %arg7[%c287, %c0_66] : memref<584x64xf32, #tpu.memory_space<vmem>>, vector<256x64xf32>
    %c0_67 = arith.constant 0 : index
    %c0_68 = arith.constant 0 : index
    %77 = vector.load %arg3[%c0_67, %c0_68] : memref<576x32xf32, #tpu.memory_space<vmem>>, vector<64x32xf32>
    %cst_69 = arith.constant dense<0.000000e+00> : vector<256x32xf32>
    %78 = tpu.matmul %76, %77, %cst_69 {dimension_numbers = #tpu.dot_dimension_numbers<[1], [0], [0], [1], [0, 0, 1, 1], [], []>} : vector<256x64xf32>, vector<64x32xf32>, vector<256x32xf32> -> vector<256x32xf32>
    %c288 = arith.constant 288 : index
    %c0_70 = arith.constant 0 : index
    %79 = vector.load %arg6[%c288, %c0_70] : memref<584x64xf32, #tpu.memory_space<vmem>>, vector<256x64xf32>
    %c64_71 = arith.constant 64 : index
    %c0_72 = arith.constant 0 : index
    %80 = vector.load %arg3[%c64_71, %c0_72] : memref<576x32xf32, #tpu.memory_space<vmem>>, vector<64x32xf32>
    %cst_73 = arith.constant dense<0.000000e+00> : vector<256x32xf32>
    %81 = tpu.matmul %79, %80, %cst_73 {dimension_numbers = #tpu.dot_dimension_numbers<[1], [0], [0], [1], [0, 0, 1, 1], [], []>} : vector<256x64xf32>, vector<64x32xf32>, vector<256x32xf32> -> vector<256x32xf32>
    %82 = arith.addf %78, %81 : vector<256x32xf32>
    %c289 = arith.constant 289 : index
    %c0_74 = arith.constant 0 : index
    %83 = vector.load %arg8[%c289, %c0_74] : memref<584x64xf32, #tpu.memory_space<vmem>>, vector<256x64xf32>
    %c128_75 = arith.constant 128 : index
    %c0_76 = arith.constant 0 : index
    %84 = vector.load %arg3[%c128_75, %c0_76] : memref<576x32xf32, #tpu.memory_space<vmem>>, vector<64x32xf32>
    %cst_77 = arith.constant dense<0.000000e+00> : vector<256x32xf32>
    %85 = tpu.matmul %83, %84, %cst_77 {dimension_numbers = #tpu.dot_dimension_numbers<[1], [0], [0], [1], [0, 0, 1, 1], [], []>} : vector<256x64xf32>, vector<64x32xf32>, vector<256x32xf32> -> vector<256x32xf32>
    %86 = arith.addf %82, %85 : vector<256x32xf32>
    %c303 = arith.constant 303 : index
    %c0_78 = arith.constant 0 : index
    %87 = vector.load %arg7[%c303, %c0_78] : memref<584x64xf32, #tpu.memory_space<vmem>>, vector<256x64xf32>
    %c192_79 = arith.constant 192 : index
    %c0_80 = arith.constant 0 : index
    %88 = vector.load %arg3[%c192_79, %c0_80] : memref<576x32xf32, #tpu.memory_space<vmem>>, vector<64x32xf32>
    %cst_81 = arith.constant dense<0.000000e+00> : vector<256x32xf32>
    %89 = tpu.matmul %87, %88, %cst_81 {dimension_numbers = #tpu.dot_dimension_numbers<[1], [0], [0], [1], [0, 0, 1, 1], [], []>} : vector<256x64xf32>, vector<64x32xf32>, vector<256x32xf32> -> vector<256x32xf32>
    %90 = arith.addf %86, %89 : vector<256x32xf32>
    %c304_82 = arith.constant 304 : index
    %c0_83 = arith.constant 0 : index
    %91 = vector.load %arg6[%c304_82, %c0_83] : memref<584x64xf32, #tpu.memory_space<vmem>>, vector<256x64xf32>
    %c256_84 = arith.constant 256 : index
    %c0_85 = arith.constant 0 : index
    %92 = vector.load %arg3[%c256_84, %c0_85] : memref<576x32xf32, #tpu.memory_space<vmem>>, vector<64x32xf32>
    %cst_86 = arith.constant dense<0.000000e+00> : vector<256x32xf32>
    %93 = tpu.matmul %91, %92, %cst_86 {dimension_numbers = #tpu.dot_dimension_numbers<[1], [0], [0], [1], [0, 0, 1, 1], [], []>} : vector<256x64xf32>, vector<64x32xf32>, vector<256x32xf32> -> vector<256x32xf32>
    %94 = arith.addf %90, %93 : vector<256x32xf32>
    %c305 = arith.constant 305 : index
    %c0_87 = arith.constant 0 : index
    %95 = vector.load %arg8[%c305, %c0_87] : memref<584x64xf32, #tpu.memory_space<vmem>>, vector<256x64xf32>
    %c320_88 = arith.constant 320 : index
    %c0_89 = arith.constant 0 : index
    %96 = vector.load %arg3[%c320_88, %c0_89] : memref<576x32xf32, #tpu.memory_space<vmem>>, vector<64x32xf32>
    %cst_90 = arith.constant dense<0.000000e+00> : vector<256x32xf32>
    %97 = tpu.matmul %95, %96, %cst_90 {dimension_numbers = #tpu.dot_dimension_numbers<[1], [0], [0], [1], [0, 0, 1, 1], [], []>} : vector<256x64xf32>, vector<64x32xf32>, vector<256x32xf32> -> vector<256x32xf32>
    %98 = arith.addf %94, %97 : vector<256x32xf32>
    %c319 = arith.constant 319 : index
    %c0_91 = arith.constant 0 : index
    %99 = vector.load %arg7[%c319, %c0_91] : memref<584x64xf32, #tpu.memory_space<vmem>>, vector<256x64xf32>
    %c384_92 = arith.constant 384 : index
    %c0_93 = arith.constant 0 : index
    %100 = vector.load %arg3[%c384_92, %c0_93] : memref<576x32xf32, #tpu.memory_space<vmem>>, vector<64x32xf32>
    %cst_94 = arith.constant dense<0.000000e+00> : vector<256x32xf32>
    %101 = tpu.matmul %99, %100, %cst_94 {dimension_numbers = #tpu.dot_dimension_numbers<[1], [0], [0], [1], [0, 0, 1, 1], [], []>} : vector<256x64xf32>, vector<64x32xf32>, vector<256x32xf32> -> vector<256x32xf32>
    %102 = arith.addf %98, %101 : vector<256x32xf32>
    %c320_95 = arith.constant 320 : index
    %c0_96 = arith.constant 0 : index
    %103 = vector.load %arg6[%c320_95, %c0_96] : memref<584x64xf32, #tpu.memory_space<vmem>>, vector<256x64xf32>
    %c448_97 = arith.constant 448 : index
    %c0_98 = arith.constant 0 : index
    %104 = vector.load %arg3[%c448_97, %c0_98] : memref<576x32xf32, #tpu.memory_space<vmem>>, vector<64x32xf32>
    %cst_99 = arith.constant dense<0.000000e+00> : vector<256x32xf32>
    %105 = tpu.matmul %103, %104, %cst_99 {dimension_numbers = #tpu.dot_dimension_numbers<[1], [0], [0], [1], [0, 0, 1, 1], [], []>} : vector<256x64xf32>, vector<64x32xf32>, vector<256x32xf32> -> vector<256x32xf32>
    %106 = arith.addf %102, %105 : vector<256x32xf32>
    %c321 = arith.constant 321 : index
    %c0_100 = arith.constant 0 : index
    %107 = vector.load %arg8[%c321, %c0_100] : memref<584x64xf32, #tpu.memory_space<vmem>>, vector<256x64xf32>
    %c512_101 = arith.constant 512 : index
    %c0_102 = arith.constant 0 : index
    %108 = vector.load %arg3[%c512_101, %c0_102] : memref<576x32xf32, #tpu.memory_space<vmem>>, vector<64x32xf32>
    %cst_103 = arith.constant dense<0.000000e+00> : vector<256x32xf32>
    %109 = tpu.matmul %107, %108, %cst_103 {dimension_numbers = #tpu.dot_dimension_numbers<[1], [0], [0], [1], [0, 0, 1, 1], [], []>} : vector<256x64xf32>, vector<64x32xf32>, vector<256x32xf32> -> vector<256x32xf32>
    %110 = arith.addf %106, %109 : vector<256x32xf32>
    %c256_104 = arith.constant 256 : index
    %c0_105 = arith.constant 0 : index
    %111 = vector.load %arg5[%c256_104, %c0_105] : memref<512x32xf32, #tpu.memory_space<vmem>>, vector<256x32xf32>
    tpu.vector_store %arg5[%c256_104, %c0_105], %110 {strides = array<i32>} : memref<512x32xf32, #tpu.memory_space<vmem>>, vector<256x32xf32>,
    return
  }
  func.func @transform_0(%arg0: i32) -> (i32, i32) {
    %c0_i32 = arith.constant 0 : i32
    %c0_i32_0 = arith.constant 0 : i32
    return %arg0, %c0_i32 : i32, i32
  }
  func.func @transform_1(%arg0: i32) -> (i32, i32) {
    %c0_i32 = arith.constant 0 : i32
    %c0_i32_0 = arith.constant 0 : i32
    %c0_i32_1 = arith.constant 0 : i32
    return %c0_i32, %c0_i32_0 : i32, i32
  }
  func.func @transform_2(%arg0: i32) -> (i32, i32) {
    %c0_i32 = arith.constant 0 : i32
    %c0_i32_0 = arith.constant 0 : i32
    %c0_i32_1 = arith.constant 0 : i32
    return %c0_i32, %c0_i32_0 : i32, i32
  }
  func.func @transform_3(%arg0: i32) -> (i32, i32) {
    %c0_i32 = arith.constant 0 : i32
    %c0_i32_0 = arith.constant 0 : i32
    %c0_i32_1 = arith.constant 0 : i32
    return %c0_i32, %c0_i32_0 : i32, i32
  }
  func.func @transform_4(%arg0: i32) -> (i32, i32) {
    %c0_i32 = arith.constant 0 : i32
    %c0_i32_0 = arith.constant 0 : i32
    return %arg0, %c0_i32 : i32, i32
  }
}

</mosaic_0001>

<llo_original>
// kernel: tpu_custom_call.1
$region0: #{tpu_custom_call.1}
  #allocation0 [shape = 'u32[]', space=smem, size = 0x4, offset = 0x4, fixed_abs, tag = 'smem constant byte address 0x4 - core index']
  #allocation1 [shape = 'u32[144,128]{1,0:T(1,128)}', space=vmem, size = 0x12000, scoped, tag = 'internal scratch']
  #allocation2 [shape = 'f32[584,64]{1,0:T(8,128)}', space=vmem, size = 0x49000, scoped, tag = 'scratch operand']
  #allocation3 [shape = 'f32[584,64]{1,0:T(8,128)}', space=vmem, size = 0x49000, scoped, tag = 'scratch operand']
  #allocation4 [shape = 'f32[584,64]{1,0:T(8,128)}', space=vmem, size = 0x49000, scoped, tag = 'scratch operand']
  %s0 = inlined_call_operand.vmem [shape: f32[512,32], index: 0, kind: input, shape index: {}]
  %s1 = inlined_call_operand.vmem [shape: f32[32,64], index: 1, kind: input, shape index: {}]
  %s2 = inlined_call_operand.vmem [shape: f32[576,32], index: 2, kind: input, shape index: {}]
  %s3 = inlined_call_operand.vmem [shape: f32[256,2], index: 3, kind: input, shape index: {}]
  %s4 = inlined_call_operand.vmem [shape: f32[512,32], index: 4, kind: output, shape index: {}]
  %s5 = sld [smem:[#allocation0]]
  $region26: #{tpu_custom_call.1} parent=0
    _
  %s7 = ssub.s32 1, %s5
  %s8 = scalar_select 0, %s7, %s5
  // Predicated region
  $region2: #{tpu_custom_call.1} parent=0 // pred_check
    _
  $region3: #{tpu_custom_call.1} parent=0 // pred_check_branch
    %10 = sbr.rel (0) target = $region5
  $region4: #{tpu_custom_call.1} parent=0 // pred_region
    _
  $region5: #{tpu_custom_call.1} parent=0 // pred_fallthru
    _
  // Predicated region
  $region6: #{tpu_custom_call.1} parent=0 // pred_check
    _
  $region7: #{tpu_custom_call.1} parent=0 // pred_check_branch
    %12 = sbr.rel (0) target = $region9
  $region8: #{tpu_custom_call.1} parent=0 // pred_region
    _
  $region9: #{tpu_custom_call.1} parent=0 // pred_fallthru
    _
  // Predicated region
  $region10: #{tpu_custom_call.1} parent=0 // pred_check
    _
  $region11: #{tpu_custom_call.1} parent=0 // pred_check_branch
    %14 = sbr.rel (0) target = $region13
  $region12: #{tpu_custom_call.1} parent=0 // pred_region
    _
  $region13: #{tpu_custom_call.1} parent=0 // pred_fallthru
    _
  // Predicated region
  $region14: #{tpu_custom_call.1} parent=0 // pred_check
    _
  $region15: #{tpu_custom_call.1} parent=0 // pred_check_branch
    %16 = sbr.rel (0) target = $region17
  $region16: #{tpu_custom_call.1} parent=0 // pred_region
    _
  $region17: #{tpu_custom_call.1} parent=0 // pred_fallthru
    _
  %v17 = vld [vmem:[%s0] sm:$0xff]
  %v18 = vld [vmem:[%s0 + $0x8] sm:$0xff]
  %v19 = vld [vmem:[%s0 + $0x10] sm:$0xff]
  %v20 = vld [vmem:[%s0 + $0x18] sm:$0xff]
  %v21 = vld [vmem:[%s0 + $0x20] sm:$0xff]
  %v22 = vld [vmem:[%s0 + $0x28] sm:$0xff]
  %v23 = vld [vmem:[%s0 + $0x30] sm:$0xff]
  %v24 = vld [vmem:[%s0 + $0x38] sm:$0xff]
  %v25 = vld [vmem:[%s0 + $0x40] sm:$0xff]
  %v26 = vld [vmem:[%s0 + $0x48] sm:$0xff]
  %v27 = vld [vmem:[%s0 + $0x50] sm:$0xff]
  %v28 = vld [vmem:[%s0 + $0x58] sm:$0xff]
  %v29 = vld [vmem:[%s0 + $0x60] sm:$0xff]
  %v30 = vld [vmem:[%s0 + $0x68] sm:$0xff]
  %v31 = vld [vmem:[%s0 + $0x70] sm:$0xff]
  %v32 = vld [vmem:[%s0 + $0x78] sm:$0xff]
  %v33 = vld [vmem:[%s0 + $0x80] sm:$0xff]
  %v34 = vld [vmem:[%s0 + $0x88] sm:$0xff]
  %v35 = vld [vmem:[%s0 + $0x90] sm:$0xff]
  %v36 = vld [vmem:[%s0 + $0x98] sm:$0xff]
  %v37 = vld [vmem:[%s0 + $0xa0] sm:$0xff]
  %v38 = vld [vmem:[%s0 + $0xa8] sm:$0xff]
  %v39 = vld [vmem:[%s0 + $0xb0] sm:$0xff]
  %v40 = vld [vmem:[%s0 + $0xb8] sm:$0xff]
  %v41 = vld [vmem:[%s0 + $0xc0] sm:$0xff]
  %v42 = vld [vmem:[%s0 + $0xc8] sm:$0xff]
  %v43 = vld [vmem:[%s0 + $0xd0] sm:$0xff]
  %v44 = vld [vmem:[%s0 + $0xd8] sm:$0xff]
  %v45 = vld [vmem:[%s0 + $0xe0] sm:$0xff]
  %v46 = vld [vmem:[%s0 + $0xe8] sm:$0xff]
  %v47 = vld [vmem:[%s0 + $0xf0] sm:$0xff]
  %v48 = vld [vmem:[%s0 + $0xf8] sm:$0xff]
  %v49 = vld [vmem:[%s0 + $0x100] sm:$0xff]
  %v50 = vld [vmem:[%s0 + $0x108] sm:$0xff]
  %v51 = vld [vmem:[%s0 + $0x110] sm:$0xff]
  %v52 = vld [vmem:[%s0 + $0x118] sm:$0xff]
  %v53 = vld [vmem:[%s0 + $0x120] sm:$0xff]
  %v54 = vld [vmem:[%s0 + $0x128] sm:$0xff]
  %v55 = vld [vmem:[%s0 + $0x130] sm:$0xff]
  %v56 = vld [vmem:[%s0 + $0x138] sm:$0xff]
  %v57 = vld [vmem:[%s0 + $0x140] sm:$0xff]
  %v58 = vld [vmem:[%s0 + $0x148] sm:$0xff]
  %v59 = vld [vmem:[%s0 + $0x150] sm:$0xff]
  %v60 = vld [vmem:[%s0 + $0x158] sm:$0xff]
  %v61 = vld [vmem:[%s0 + $0x160] sm:$0xff]
  %v62 = vld [vmem:[%s0 + $0x168] sm:$0xff]
  %v63 = vld [vmem:[%s0 + $0x170] sm:$0xff]
  %v64 = vld [vmem:[%s0 + $0x178] sm:$0xff]
  %v65 = vld [vmem:[%s0 + $0x180] sm:$0xff]
  %v66 = vld [vmem:[%s0 + $0x188] sm:$0xff]
  %v67 = vld [vmem:[%s0 + $0x190] sm:$0xff]
  %v68 = vld [vmem:[%s0 + $0x198] sm:$0xff]
  %v69 = vld [vmem:[%s0 + $0x1a0] sm:$0xff]
  %v70 = vld [vmem:[%s0 + $0x1a8] sm:$0xff]
  %v71 = vld [vmem:[%s0 + $0x1b0] sm:$0xff]
  %v72 = vld [vmem:[%s0 + $0x1b8] sm:$0xff]
  %v73 = vld [vmem:[%s0 + $0x1c0] sm:$0xff]
  %v74 = vld [vmem:[%s0 + $0x1c8] sm:$0xff]
  %v75 = vld [vmem:[%s0 + $0x1d0] sm:$0xff]
  %v76 = vld [vmem:[%s0 + $0x1d8] sm:$0xff]
  %v77 = vld [vmem:[%s0 + $0x1e0] sm:$0xff]
  %v78 = vld [vmem:[%s0 + $0x1e8] sm:$0xff]
  %v79 = vld [vmem:[%s0 + $0x1f0] sm:$0xff]
  %v80 = vld [vmem:[%s0 + $0x1f8] sm:$0xff]
  %v81 = vld [vmem:[%s1] sm:$0xff]
  %v82 = vld [vmem:[%s1 + $0x8] sm:$0xff]
  %v83 = vld [vmem:[%s1 + $0x10] sm:$0xff]
  %v84 = vld [vmem:[%s1 + $0x18] sm:$0xff]
  %vm85 = vcmask 261120
  %v87 = vsel %vm85, %v17, 0
  %v90 = vsel %vm85, %v18, 0
  %v93 = vsel %vm85, %v19, 0
  %v96 = vsel %vm85, %v20, 0
  %v99 = vsel %vm85, %v21, 0
  %v102 = vsel %vm85, %v22, 0
  %v105 = vsel %vm85, %v23, 0
  %v108 = vsel %vm85, %v24, 0
  %v111 = vsel %vm85, %v25, 0
  %v114 = vsel %vm85, %v26, 0
  %v117 = vsel %vm85, %v27, 0
  %v120 = vsel %vm85, %v28, 0
  %v123 = vsel %vm85, %v29, 0
  %v126 = vsel %vm85, %v30, 0
  %v129 = vsel %vm85, %v31, 0
  %v132 = vsel %vm85, %v32, 0
  %v135 = vsel %vm85, %v33, 0
  %v138 = vsel %vm85, %v34, 0
  %v141 = vsel %vm85, %v35, 0
  %v144 = vsel %vm85, %v36, 0
  %v147 = vsel %vm85, %v37, 0
  %v150 = vsel %vm85, %v38, 0
  %v153 = vsel %vm85, %v39, 0
  %v156 = vsel %vm85, %v40, 0
  %v159 = vsel %vm85, %v41, 0
  %v162 = vsel %vm85, %v42, 0
  %v165 = vsel %vm85, %v43, 0
  %v168 = vsel %vm85, %v44, 0
  %v171 = vsel %vm85, %v45, 0
  %v174 = vsel %vm85, %v46, 0
  %v177 = vsel %vm85, %v47, 0
  %v180 = vsel %vm85, %v48, 0
  %v183 = vsel %vm85, %v49, 0
  %v186 = vsel %vm85, %v50, 0
  %v189 = vsel %vm85, %v51, 0
  %v192 = vsel %vm85, %v52, 0
  %v195 = vsel %vm85, %v53, 0
  %v198 = vsel %vm85, %v54, 0
  %v201 = vsel %vm85, %v55, 0
  %v204 = vsel %vm85, %v56, 0
  %v207 = vsel %vm85, %v57, 0
  %v210 = vsel %vm85, %v58, 0
  %v213 = vsel %vm85, %v59, 0
  %v216 = vsel %vm85, %v60, 0
  %v219 = vsel %vm85, %v61, 0
  %v222 = vsel %vm85, %v62, 0
  %v225 = vsel %vm85, %v63, 0
  %v228 = vsel %vm85, %v64, 0
  %v231 = vsel %vm85, %v65, 0
  %v234 = vsel %vm85, %v66, 0
  %v237 = vsel %vm85, %v67, 0
  %v240 = vsel %vm85, %v68, 0
  %v243 = vsel %vm85, %v69, 0
  %v246 = vsel %vm85, %v70, 0
  %v249 = vsel %vm85, %v71, 0
  %v252 = vsel %vm85, %v72, 0
  %v255 = vsel %vm85, %v73, 0
  %v258 = vsel %vm85, %v74, 0
  %v261 = vsel %vm85, %v75, 0
  %v264 = vsel %vm85, %v76, 0
  %v267 = vsel %vm85, %v77, 0
  %v270 = vsel %vm85, %v78, 0
  %v273 = vsel %vm85, %v79, 0
  %v276 = vsel %vm85, %v80, 0
  %278 = vmatprep.subr.mxu0 0.0
  %279 = vmatpush1.msra.mxu0 0.0
  %280 = vmatprep.subr.mxu0 0.0
  %281 = vmatpush1.msra.mxu0 0.0
  %282 = vmatprep.subr.mxu0 0.0
  %283 = vmatpush1.msra.mxu0 0.0
  %284 = vmatprep.subr.mxu0 0.0
  %285 = vmatpush1.msra.mxu0 0.0
  %286 = vmatprep.subr.mxu0 0.0
  %287 = vmatpush1.msra.mxu0 0.0
  %288 = vmatprep.subr.mxu0 0.0
  %289 = vmatpush1.msra.mxu0 0.0
  %290 = vmatprep.subr.mxu0 0.0
  %291 = vmatpush1.msra.mxu0 0.0
  %292 = vmatprep.subr.mxu0 0.0
  %293 = vmatpush1.msra.mxu0 0.0
  %294 = vmatprep.subr.mxu0 0.0
  %295 = vmatpush1.msra.mxu0 0.0
  %296 = vmatprep.subr.mxu0 0.0
  %297 = vmatpush1.msra.mxu0 0.0
  %298 = vmatprep.subr.mxu0 0.0
  %299 = vmatpush1.msra.mxu0 0.0
  %300 = vmatprep.subr.mxu0 0.0
  %301 = vmatpush1.msra.mxu0 0.0
  %302 = vmatprep.subr.mxu0 0.0
  %303 = vmatpush1.msra.mxu0 %v84
  %304 = vmatprep.subr.mxu0 0.0
  %305 = vmatpush1.msra.mxu0 %v83
  %306 = vmatprep.subr.mxu0 0.0
  %307 = vmatpush1.msra.mxu0 %v82
  %308 = vmatprep.subr.mxu0 0.0
  %309 = vmatpush1.msra.mxu0 %v81
  %310 = vmatprep.subr.mxu0 0.0
  %311 = vmatpush2.msra.mxu0 0.0
  %312 = vmatprep.subr.mxu0 0.0
  %313 = vmatpush2.msra.mxu0 0.0
  %314 = vmatprep.subr.mxu0 0.0
  %315 = vmatpush2.msra.mxu0 0.0
  %316 = vmatprep.subr.mxu0 0.0
  %317 = vmatpush2.msra.mxu0 0.0
  %318 = vmatprep.subr.mxu0 0.0
  %319 = vmatpush2.msra.mxu0 0.0
  %320 = vmatprep.subr.mxu0 0.0
  %321 = vmatpush2.msra.mxu0 0.0
  %322 = vmatprep.subr.mxu0 0.0
  %323 = vmatpush2.msra.mxu0 0.0
  %324 = vmatprep.subr.mxu0 0.0
  %325 = vmatpush2.msra.mxu0 0.0
  %326 = vmatprep.subr.mxu0 0.0
  %327 = vmatpush2.msra.mxu0 0.0
  %328 = vmatprep.subr.mxu0 0.0
  %329 = vmatpush2.msra.mxu0 0.0
  %330 = vmatprep.subr.mxu0 0.0
  %331 = vmatpush2.msra.mxu0 0.0
  %332 = vmatprep.subr.mxu0 0.0
  %333 = vmatpush2.msra.mxu0 0.0
  %334 = vmatprep.subr.mxu0 0.0
  %335 = vmatpush2.msra.mxu0 0.0
  %336 = vmatprep.subr.mxu0 0.0
  %337 = vmatpush2.msra.mxu0 0.0
  %338 = vmatprep.subr.mxu0 0.0
  %339 = vmatpush2.msra.mxu0 0.0
  %340 = vmatprep.subr.mxu0 0.0
  %341 = vmatpush2.msra.mxu0 0.0
  %342 = vmatprep.mubr.f32.mxu0 0.0
  %343 = vmatmul.mubr.f32.gmra.mxu0 %v87
  %v344 = vpop.f32.mrf.mxu0
  %v345 = vadd.f32 0.0, %v344
  %v346 = vpop.f32.mrf.mxu0
  %347 = vmatprep.mubr.f32.mxu0 0.0
  %348 = vmatmul.mubr.f32.gmra.mxu0 %v90
  %v349 = vpop.f32.mrf.mxu0
  %v350 = vadd.f32 0.0, %v349
  %v351 = vpop.f32.mrf.mxu0
  %352 = vmatprep.mubr.f32.mxu0 0.0
  %353 = vmatmul.mubr.f32.gmra.mxu0 %v93
  %v354 = vpop.f32.mrf.mxu0
  %v355 = vadd.f32 0.0, %v354
  %v356 = vpop.f32.mrf.mxu0
  %357 = vmatprep.mubr.f32.mxu0 0.0
  %358 = vmatmul.mubr.f32.gmra.mxu0 %v96
  %v359 = vpop.f32.mrf.mxu0
  %v360 = vadd.f32 0.0, %v359
  %v361 = vpop.f32.mrf.mxu0
  %362 = vmatprep.mubr.f32.mxu0 0.0
  %363 = vmatmul.mubr.f32.gmra.mxu0 %v99
  %v364 = vpop.f32.mrf.mxu0
  %v365 = vadd.f32 0.0, %v364
  %v366 = vpop.f32.mrf.mxu0
  %367 = vmatprep.mubr.f32.mxu0 0.0
  %368 = vmatmul.mubr.f32.gmra.mxu0 %v102
  %v369 = vpop.f32.mrf.mxu0
  %v370 = vadd.f32 0.0, %v369
  %v371 = vpop.f32.mrf.mxu0
  %372 = vmatprep.mubr.f32.mxu0 0.0
  %373 = vmatmul.mubr.f32.gmra.mxu0 %v105
  %v374 = vpop.f32.mrf.mxu0
  %v375 = vadd.f32 0.0, %v374
  %v376 = vpop.f32.mrf.mxu0
  %377 = vmatprep.mubr.f32.mxu0 0.0
  %378 = vmatmul.mubr.f32.gmra.mxu0 %v108
  %v379 = vpop.f32.mrf.mxu0
  %v380 = vadd.f32 0.0, %v379
  %v381 = vpop.f32.mrf.mxu0
  %382 = vmatprep.mubr.f32.mxu0 0.0
  %383 = vmatmul.mubr.f32.gmra.mxu0 %v111
  %v384 = vpop.f32.mrf.mxu0
  %v385 = vadd.f32 0.0, %v384
  %v386 = vpop.f32.mrf.mxu0
  %387 = vmatprep.mubr.f32.mxu0 0.0
  %388 = vmatmul.mubr.f32.gmra.mxu0 %v114
  %v389 = vpop.f32.mrf.mxu0
  %v390 = vadd.f32 0.0, %v389
  %v391 = vpop.f32.mrf.mxu0
  %392 = vmatprep.mubr.f32.mxu0 0.0
  %393 = vmatmul.mubr.f32.gmra.mxu0 %v117
  %v394 = vpop.f32.mrf.mxu0
  %v395 = vadd.f32 0.0, %v394
  %v396 = vpop.f32.mrf.mxu0
  %397 = vmatprep.mubr.f32.mxu0 0.0
  %398 = vmatmul.mubr.f32.gmra.mxu0 %v120
  %v399 = vpop.f32.mrf.mxu0
  %v400 = vadd.f32 0.0, %v399
  %v401 = vpop.f32.mrf.mxu0
  %402 = vmatprep.mubr.f32.mxu0 0.0
  %403 = vmatmul.mubr.f32.gmra.mxu0 %v123
  %v404 = vpop.f32.mrf.mxu0
  %v405 = vadd.f32 0.0, %v404
  %v406 = vpop.f32.mrf.mxu0
  %407 = vmatprep.mubr.f32.mxu0 0.0
  %408 = vmatmul.mubr.f32.gmra.mxu0 %v126
  %v409 = vpop.f32.mrf.mxu0
  %v410 = vadd.f32 0.0, %v409
  %v411 = vpop.f32.mrf.mxu0
  %412 = vmatprep.mubr.f32.mxu0 0.0
  %413 = vmatmul.mubr.f32.gmra.mxu0 %v129
  %v414 = vpop.f32.mrf.mxu0
  %v415 = vadd.f32 0.0, %v414
  %v416 = vpop.f32.mrf.mxu0
  %417 = vmatprep.mubr.f32.mxu0 0.0
  %418 = vmatmul.mubr.f32.gmra.mxu0 %v132
  %v419 = vpop.f32.mrf.mxu0
  %v420 = vadd.f32 0.0, %v419
  %v421 = vpop.f32.mrf.mxu0
  %422 = vmatprep.mubr.f32.mxu0 0.0
  %423 = vmatmul.mubr.f32.gmra.mxu0 %v135
  %v424 = vpop.f32.mrf.mxu0
  %v425 = vadd.f32 0.0, %v424
  %v426 = vpop.f32.mrf.mxu0
  %427 = vmatprep.mubr.f32.mxu0 0.0
  %428 = vmatmul.mubr.f32.gmra.mxu0 %v138
  %v429 = vpop.f32.mrf.mxu0
  %v430 = vadd.f32 0.0, %v429
  %v431 = vpop.f32.mrf.mxu0
  %432 = vmatprep.mubr.f32.mxu0 0.0
  %433 = vmatmul.mubr.f32.gmra.mxu0 %v141
  %v434 = vpop.f32.mrf.mxu0
  %v435 = vadd.f32 0.0, %v434
  %v436 = vpop.f32.mrf.mxu0
  %437 = vmatprep.mubr.f32.mxu0 0.0
  %438 = vmatmul.mubr.f32.gmra.mxu0 %v144
  %v439 = vpop.f32.mrf.mxu0
  %v440 = vadd.f32 0.0, %v439
  %v441 = vpop.f32.mrf.mxu0
  %442 = vmatprep.mubr.f32.mxu0 0.0
  %443 = vmatmul.mubr.f32.gmra.mxu0 %v147
  %v444 = vpop.f32.mrf.mxu0
  %v445 = vadd.f32 0.0, %v444
  %v446 = vpop.f32.mrf.mxu0
  %447 = vmatprep.mubr.f32.mxu0 0.0
  %448 = vmatmul.mubr.f32.gmra.mxu0 %v150
  %v449 = vpop.f32.mrf.mxu0
  %v450 = vadd.f32 0.0, %v449
  %v451 = vpop.f32.mrf.mxu0
  %452 = vmatprep.mubr.f32.mxu0 0.0
  %453 = vmatmul.mubr.f32.gmra.mxu0 %v153
  %v454 = vpop.f32.mrf.mxu0
  %v455 = vadd.f32 0.0, %v454
  %v456 = vpop.f32.mrf.mxu0
  %457 = vmatprep.mubr.f32.mxu0 0.0
  %458 = vmatmul.mubr.f32.gmra.mxu0 %v156
  %v459 = vpop.f32.mrf.mxu0
  %v460 = vadd.f32 0.0, %v459
  %v461 = vpop.f32.mrf.mxu0
  %462 = vmatprep.mubr.f32.mxu0 0.0
  %463 = vmatmul.mubr.f32.gmra.mxu0 %v159
  %v464 = vpop.f32.mrf.mxu0
  %v465 = vadd.f32 0.0, %v464
  %v466 = vpop.f32.mrf.mxu0
  %467 = vmatprep.mubr.f32.mxu0 0.0
  %468 = vmatmul.mubr.f32.gmra.mxu0 %v162
  %v469 = vpop.f32.mrf.mxu0
  %v470 = vadd.f32 0.0, %v469
  %v471 = vpop.f32.mrf.mxu0
  %472 = vmatprep.mubr.f32.mxu0 0.0
  %473 = vmatmul.mubr.f32.gmra.mxu0 %v165
  %v474 = vpop.f32.mrf.mxu0
  %v475 = vadd.f32 0.0, %v474
  %v476 = vpop.f32.mrf.mxu0
  %477 = vmatprep.mubr.f32.mxu0 0.0
  %478 = vmatmul.mubr.f32.gmra.mxu0 %v168
  %v479 = vpop.f32.mrf.mxu0
  %v480 = vadd.f32 0.0, %v479
  %v481 = vpop.f32.mrf.mxu0
  %482 = vmatprep.mubr.f32.mxu0 0.0
  %483 = vmatmul.mubr.f32.gmra.mxu0 %v171
  %v484 = vpop.f32.mrf.mxu0
  %v485 = vadd.f32 0.0, %v484
  %v486 = vpop.f32.mrf.mxu0
  %487 = vmatprep.mubr.f32.mxu0 0.0
  %488 = vmatmul.mubr.f32.gmra.mxu0 %v174
  %v489 = vpop.f32.mrf.mxu0
  %v490 = vadd.f32 0.0, %v489
  %v491 = vpop.f32.mrf.mxu0
  %492 = vmatprep.mubr.f32.mxu0 0.0
  %493 = vmatmul.mubr.f32.gmra.mxu0 %v177
  %v494 = vpop.f32.mrf.mxu0
  %v495 = vadd.f32 0.0, %v494
  %v496 = vpop.f32.mrf.mxu0
  %497 = vmatprep.mubr.f32.mxu0 0.0
  %498 = vmatmul.mubr.f32.gmra.mxu0 %v180
  %v499 = vpop.f32.mrf.mxu0
  %v500 = vadd.f32 0.0, %v499
  %v501 = vpop.f32.mrf.mxu0
  %502 = vmatprep.mubr.f32.mxu0 0.0
  %503 = vmatmul.mubr.f32.gmra.mxu0 %v183
  %v504 = vpop.f32.mrf.mxu0
  %v505 = vadd.f32 0.0, %v504
  %v506 = vpop.f32.mrf.mxu0
  %507 = vmatprep.mubr.f32.mxu0 0.0
  %508 = vmatmul.mubr.f32.gmra.mxu0 %v186
  %v509 = vpop.f32.mrf.mxu0
  %v510 = vadd.f32 0.0, %v509
  %v511 = vpop.f32.mrf.mxu0
  %512 = vmatprep.mubr.f32.mxu0 0.0
  %513 = vmatmul.mubr.f32.gmra.mxu0 %v189
  %v514 = vpop.f32.mrf.mxu0
  %v515 = vadd.f32 0.0, %v514
  %v516 = vpop.f32.mrf.mxu0
  %517 = vmatprep.mubr.f32.mxu0 0.0
  %518 = vmatmul.mubr.f32.gmra.mxu0 %v192
  %v519 = vpop.f32.mrf.mxu0
  %v520 = vadd.f32 0.0, %v519
  %v521 = vpop.f32.mrf.mxu0
  %522 = vmatprep.mubr.f32.mxu0 0.0
  %523 = vmatmul.mubr.f32.gmra.mxu0 %v195
  %v524 = vpop.f32.mrf.mxu0
  %v525 = vadd.f32 0.0, %v524
  %v526 = vpop.f32.mrf.mxu0
  %527 = vmatprep.mubr.f32.mxu0 0.0
  %528 = vmatmul.mubr.f32.gmra.mxu0 %v198
  %v529 = vpop.f32.mrf.mxu0
  %v530 = vadd.f32 0.0, %v529
  %v531 = vpop.f32.mrf.mxu0
  %532 = vmatprep.mubr.f32.mxu0 0.0
  %533 = vmatmul.mubr.f32.gmra.mxu0 %v201
  %v534 = vpop.f32.mrf.mxu0
  %v535 = vadd.f32 0.0, %v534
  %v536 = vpop.f32.mrf.mxu0
  %537 = vmatprep.mubr.f32.mxu0 0.0
  %538 = vmatmul.mubr.f32.gmra.mxu0 %v204
  %v539 = vpop.f32.mrf.mxu0
  %v540 = vadd.f32 0.0, %v539
  %v541 = vpop.f32.mrf.mxu0
  %542 = vmatprep.mubr.f32.mxu0 0.0
  %543 = vmatmul.mubr.f32.gmra.mxu0 %v207
  %v544 = vpop.f32.mrf.mxu0
  %v545 = vadd.f32 0.0, %v544
  %v546 = vpop.f32.mrf.mxu0
  %547 = vmatprep.mubr.f32.mxu0 0.0
  %548 = vmatmul.mubr.f32.gmra.mxu0 %v210
  %v549 = vpop.f32.mrf.mxu0
  %v550 = vadd.f32 0.0, %v549
  %v551 = vpop.f32.mrf.mxu0
  %552 = vmatprep.mubr.f32.mxu0 0.0
  %553 = vmatmul.mubr.f32.gmra.mxu0 %v213
  %v554 = vpop.f32.mrf.mxu0
  %v555 = vadd.f32 0.0, %v554
  %v556 = vpop.f32.mrf.mxu0
  %557 = vmatprep.mubr.f32.mxu0 0.0
  %558 = vmatmul.mubr.f32.gmra.mxu0 %v216
  %v559 = vpop.f32.mrf.mxu0
  %v560 = vadd.f32 0.0, %v559
  %v561 = vpop.f32.mrf.mxu0
  %562 = vmatprep.mubr.f32.mxu0 0.0
  %563 = vmatmul.mubr.f32.gmra.mxu0 %v219
  %v564 = vpop.f32.mrf.mxu0
  %v565 = vadd.f32 0.0, %v564
  %v566 = vpop.f32.mrf.mxu0
  %567 = vmatprep.mubr.f32.mxu0 0.0
  %568 = vmatmul.mubr.f32.gmra.mxu0 %v222
  %v569 = vpop.f32.mrf.mxu0
  %v570 = vadd.f32 0.0, %v569
  %v571 = vpop.f32.mrf.mxu0
  %572 = vmatprep.mubr.f32.mxu0 0.0
  %573 = vmatmul.mubr.f32.gmra.mxu0 %v225
  %v574 = vpop.f32.mrf.mxu0
  %v575 = vadd.f32 0.0, %v574
  %v576 = vpop.f32.mrf.mxu0
  %577 = vmatprep.mubr.f32.mxu0 0.0
  %578 = vmatmul.mubr.f32.gmra.mxu0 %v228
  %v579 = vpop.f32.mrf.mxu0
  %v580 = vadd.f32 0.0, %v579
  %v581 = vpop.f32.mrf.mxu0
  %582 = vmatprep.mubr.f32.mxu0 0.0
  %583 = vmatmul.mubr.f32.gmra.mxu0 %v231
  %v584 = vpop.f32.mrf.mxu0
  %v585 = vadd.f32 0.0, %v584
  %v586 = vpop.f32.mrf.mxu0
  %587 = vmatprep.mubr.f32.mxu0 0.0
  %588 = vmatmul.mubr.f32.gmra.mxu0 %v234
  %v589 = vpop.f32.mrf.mxu0
  %v590 = vadd.f32 0.0, %v589
  %v591 = vpop.f32.mrf.mxu0
  %592 = vmatprep.mubr.f32.mxu0 0.0
  %593 = vmatmul.mubr.f32.gmra.mxu0 %v237
  %v594 = vpop.f32.mrf.mxu0
  %v595 = vadd.f32 0.0, %v594
  %v596 = vpop.f32.mrf.mxu0
  %597 = vmatprep.mubr.f32.mxu0 0.0
  %598 = vmatmul.mubr.f32.gmra.mxu0 %v240
  %v599 = vpop.f32.mrf.mxu0
  %v600 = vadd.f32 0.0, %v599
  %v601 = vpop.f32.mrf.mxu0
  %602 = vmatprep.mubr.f32.mxu0 0.0
  %603 = vmatmul.mubr.f32.gmra.mxu0 %v243
  %v604 = vpop.f32.mrf.mxu0
  %v605 = vadd.f32 0.0, %v604
  %v606 = vpop.f32.mrf.mxu0
  %607 = vmatprep.mubr.f32.mxu0 0.0
  %608 = vmatmul.mubr.f32.gmra.mxu0 %v246
  %v609 = vpop.f32.mrf.mxu0
  %v610 = vadd.f32 0.0, %v609
  %v611 = vpop.f32.mrf.mxu0
  %612 = vmatprep.mubr.f32.mxu0 0.0
  %613 = vmatmul.mubr.f32.gmra.mxu0 %v249
  %v614 = vpop.f32.mrf.mxu0
  %v615 = vadd.f32 0.0, %v614
  %v616 = vpop.f32.mrf.mxu0
  %617 = vmatprep.mubr.f32.mxu0 0.0
  %618 = vmatmul.mubr.f32.gmra.mxu0 %v252
  %v619 = vpop.f32.mrf.mxu0
  %v620 = vadd.f32 0.0, %v619
  %v621 = vpop.f32.mrf.mxu0
  %622 = vmatprep.mubr.f32.mxu0 0.0
  %623 = vmatmul.mubr.f32.gmra.mxu0 %v255
  %v624 = vpop.f32.mrf.mxu0
  %v625 = vadd.f32 0.0, %v624
  %v626 = vpop.f32.mrf.mxu0
  %627 = vmatprep.mubr.f32.mxu0 0.0
  %628 = vmatmul.mubr.f32.gmra.mxu0 %v258
  %v629 = vpop.f32.mrf.mxu0
  %v630 = vadd.f32 0.0, %v629
  %v631 = vpop.f32.mrf.mxu0
  %632 = vmatprep.mubr.f32.mxu0 0.0
  %633 = vmatmul.mubr.f32.gmra.mxu0 %v261
  %v634 = vpop.f32.mrf.mxu0
  %v635 = vadd.f32 0.0, %v634
  %v636 = vpop.f32.mrf.mxu0
  %637 = vmatprep.mubr.f32.mxu0 0.0
  %638 = vmatmul.mubr.f32.gmra.mxu0 %v264
  %v639 = vpop.f32.mrf.mxu0
  %v640 = vadd.f32 0.0, %v639
  %v641 = vpop.f32.mrf.mxu0
  %642 = vmatprep.mubr.f32.mxu0 0.0
  %643 = vmatmul.mubr.f32.gmra.mxu0 %v267
  %v644 = vpop.f32.mrf.mxu0
  %v645 = vadd.f32 0.0, %v644
  %v646 = vpop.f32.mrf.mxu0
  %647 = vmatprep.mubr.f32.mxu0 0.0
  %648 = vmatmul.mubr.f32.gmra.mxu0 %v270
  %v649 = vpop.f32.mrf.mxu0
  %v650 = vadd.f32 0.0, %v649
  %v651 = vpop.f32.mrf.mxu0
  %652 = vmatprep.mubr.f32.mxu0 0.0
  %653 = vmatmul.mubr.f32.gmra.mxu0 %v273
  %v654 = vpop.f32.mrf.mxu0
  %v655 = vadd.f32 0.0, %v654
  %v656 = vpop.f32.mrf.mxu0
  %657 = vmatprep.mubr.f32.mxu0 0.0
  %658 = vmatmul.mubr.f32.gmra.mxu0 %v276
  %v659 = vpop.f32.mrf.mxu0
  %v660 = vadd.f32 0.0, %v659
  %v661 = vpop.f32.mrf.mxu0
  %662 = vdwg.mxu0
  %v663 = vmul.f32 %v345, 0.5
  %v664 = vmul.f32 %v350, 0.5
  %v665 = vmul.f32 %v355, 0.5
  %v666 = vmul.f32 %v360, 0.5
  %v667 = vmul.f32 %v365, 0.5
  %v668 = vmul.f32 %v370, 0.5
  %v669 = vmul.f32 %v375, 0.5
  %v670 = vmul.f32 %v380, 0.5
  %v671 = vmul.f32 %v385, 0.5
  %v672 = vmul.f32 %v390, 0.5
  %v673 = vmul.f32 %v395, 0.5
  %v674 = vmul.f32 %v400, 0.5
  %v675 = vmul.f32 %v405, 0.5
  %v676 = vmul.f32 %v410, 0.5
  %v677 = vmul.f32 %v415, 0.5
  %v678 = vmul.f32 %v420, 0.5
  %v679 = vmul.f32 %v425, 0.5
  %v680 = vmul.f32 %v430, 0.5
  %v681 = vmul.f32 %v435, 0.5
  %v682 = vmul.f32 %v440, 0.5
  %v683 = vmul.f32 %v445, 0.5
  %v684 = vmul.f32 %v450, 0.5
  %v685 = vmul.f32 %v455, 0.5
  %v686 = vmul.f32 %v460, 0.5
  %v687 = vmul.f32 %v465, 0.5
  %v688 = vmul.f32 %v470, 0.5
  %v689 = vmul.f32 %v475, 0.5
  %v690 = vmul.f32 %v480, 0.5
  %v691 = vmul.f32 %v485, 0.5
  %v692 = vmul.f32 %v490, 0.5
  %v693 = vmul.f32 %v495, 0.5
  %v694 = vmul.f32 %v500, 0.5
  %v695 = vmul.f32 %v505, 0.5
  %v696 = vmul.f32 %v510, 0.5
  %v697 = vmul.f32 %v515, 0.5
  %v698 = vmul.f32 %v520, 0.5
  %v699 = vmul.f32 %v525, 0.5
  %v700 = vmul.f32 %v530, 0.5
  %v701 = vmul.f32 %v535, 0.5
  %v702 = vmul.f32 %v540, 0.5
  %v703 = vmul.f32 %v545, 0.5
  %v704 = vmul.f32 %v550, 0.5
  %v705 = vmul.f32 %v555, 0.5
  %v706 = vmul.f32 %v560, 0.5
  %v707 = vmul.f32 %v565, 0.5
  %v708 = vmul.f32 %v570, 0.5
  %v709 = vmul.f32 %v575, 0.5
  %v710 = vmul.f32 %v580, 0.5
  %v711 = vmul.f32 %v585, 0.5
  %v712 = vmul.f32 %v590, 0.5
  %v713 = vmul.f32 %v595, 0.5
  %v714 = vmul.f32 %v600, 0.5
  %v715 = vmul.f32 %v605, 0.5
  %v716 = vmul.f32 %v610, 0.5
  %v717 = vmul.f32 %v615, 0.5
  %v718 = vmul.f32 %v620, 0.5
  %v719 = vmul.f32 %v625, 0.5
  %v720 = vmul.f32 %v630, 0.5
  %v721 = vmul.f32 %v635, 0.5
  %v722 = vmul.f32 %v640, 0.5
  %v723 = vmul.f32 %v645, 0.5
  %v724 = vmul.f32 %v650, 0.5
  %v725 = vmul.f32 %v655, 0.5
  %v726 = vmul.f32 %v660, 0.5
  %v727 = vmul.f32 %v345, 0.70710677
  %v728 = vmul.f32 %v350, 0.70710677
  %v729 = vmul.f32 %v355, 0.70710677
  %v730 = vmul.f32 %v360, 0.70710677
  %v731 = vmul.f32 %v365, 0.70710677
  %v732 = vmul.f32 %v370, 0.70710677
  %v733 = vmul.f32 %v375, 0.70710677
  %v734 = vmul.f32 %v380, 0.70710677
  %v735 = vmul.f32 %v385, 0.70710677
  %v736 = vmul.f32 %v390, 0.70710677
  %v737 = vmul.f32 %v395, 0.70710677
  %v738 = vmul.f32 %v400, 0.70710677
  %v739 = vmul.f32 %v405, 0.70710677
  %v740 = vmul.f32 %v410, 0.70710677
  %v741 = vmul.f32 %v415, 0.70710677
  %v742 = vmul.f32 %v420, 0.70710677
  %v743 = vmul.f32 %v425, 0.70710677
  %v744 = vmul.f32 %v430, 0.70710677
  %v745 = vmul.f32 %v435, 0.70710677
  %v746 = vmul.f32 %v440, 0.70710677
  %v747 = vmul.f32 %v445, 0.70710677
  %v748 = vmul.f32 %v450, 0.70710677
  %v749 = vmul.f32 %v455, 0.70710677
  %v750 = vmul.f32 %v460, 0.70710677
  %v751 = vmul.f32 %v465, 0.70710677
  %v752 = vmul.f32 %v470, 0.70710677
  %v753 = vmul.f32 %v475, 0.70710677
  %v754 = vmul.f32 %v480, 0.70710677
  %v755 = vmul.f32 %v485, 0.70710677
  %v756 = vmul.f32 %v490, 0.70710677
  %v757 = vmul.f32 %v495, 0.70710677
  %v758 = vmul.f32 %v500, 0.70710677
  %v759 = vmul.f32 %v505, 0.70710677
  %v760 = vmul.f32 %v510, 0.70710677
  %v761 = vmul.f32 %v515, 0.70710677
  %v762 = vmul.f32 %v520, 0.70710677
  %v763 = vmul.f32 %v525, 0.70710677
  %v764 = vmul.f32 %v530, 0.70710677
  %v765 = vmul.f32 %v535, 0.70710677
  %v766 = vmul.f32 %v540, 0.70710677
  %v767 = vmul.f32 %v545, 0.70710677
  %v768 = vmul.f32 %v550, 0.70710677
  %v769 = vmul.f32 %v555, 0.70710677
  %v770 = vmul.f32 %v560, 0.70710677
  %v771 = vmul.f32 %v565, 0.70710677
  %v772 = vmul.f32 %v570, 0.70710677
  %v773 = vmul.f32 %v575, 0.70710677
  %v774 = vmul.f32 %v580, 0.70710677
  %v775 = vmul.f32 %v585, 0.70710677
  %v776 = vmul.f32 %v590, 0.70710677
  %v777 = vmul.f32 %v595, 0.70710677
  %v778 = vmul.f32 %v600, 0.70710677
  %v779 = vmul.f32 %v605, 0.70710677
  %v780 = vmul.f32 %v610, 0.70710677
  %v781 = vmul.f32 %v615, 0.70710677
  %v782 = vmul.f32 %v620, 0.70710677
  %v783 = vmul.f32 %v625, 0.70710677
  %v784 = vmul.f32 %v630, 0.70710677
  %v785 = vmul.f32 %v635, 0.70710677
  %v786 = vmul.f32 %v640, 0.70710677
  %v787 = vmul.f32 %v645, 0.70710677
  %v788 = vmul.f32 %v650, 0.70710677
  %v789 = vmul.f32 %v655, 0.70710677
  %v790 = vmul.f32 %v660, 0.70710677
  %v791 = verf.f32.pop %v727
  %v792 = verf.f32.pop %v728
  %v793 = verf.f32.pop %v729
  %v794 = verf.f32.pop %v730
  %v795 = verf.f32.pop %v731
  %v796 = verf.f32.pop %v732
  %v797 = verf.f32.pop %v733
  %v798 = verf.f32.pop %v734
  %v799 = verf.f32.pop %v735
  %v800 = verf.f32.pop %v736
  %v801 = verf.f32.pop %v737
  %v802 = verf.f32.pop %v738
  %v803 = verf.f32.pop %v739
  %v804 = verf.f32.pop %v740
  %v805 = verf.f32.pop %v741
  %v806 = verf.f32.pop %v742
  %v807 = verf.f32.pop %v743
  %v808 = verf.f32.pop %v744
  %v809 = verf.f32.pop %v745
  %v810 = verf.f32.pop %v746
  %v811 = verf.f32.pop %v747
  %v812 = verf.f32.pop %v748
  %v813 = verf.f32.pop %v749
  %v814 = verf.f32.pop %v750
  %v815 = verf.f32.pop %v751
  %v816 = verf.f32.pop %v752
  %v817 = verf.f32.pop %v753
  %v818 = verf.f32.pop %v754
  %v819 = verf.f32.pop %v755
  %v820 = verf.f32.pop %v756
  %v821 = verf.f32.pop %v757
  %v822 = verf.f32.pop %v758
  %v823 = verf.f32.pop %v759
  %v824 = verf.f32.pop %v760
  %v825 = verf.f32.pop %v761
  %v826 = verf.f32.pop %v762
  %v827 = verf.f32.pop %v763
  %v828 = verf.f32.pop %v764
  %v829 = verf.f32.pop %v765
  %v830 = verf.f32.pop %v766
  %v831 = verf.f32.pop %v767
  %v832 = verf.f32.pop %v768
  %v833 = verf.f32.pop %v769
  %v834 = verf.f32.pop %v770
  %v835 = verf.f32.pop %v771
  %v836 = verf.f32.pop %v772
  %v837 = verf.f32.pop %v773
  %v838 = verf.f32.pop %v774
  %v839 = verf.f32.pop %v775
  %v840 = verf.f32.pop %v776
  %v841 = verf.f32.pop %v777
  %v842 = verf.f32.pop %v778
  %v843 = verf.f32.pop %v779
  %v844 = verf.f32.pop %v780
  %v845 = verf.f32.pop %v781
  %v846 = verf.f32.pop %v782
  %v847 = verf.f32.pop %v783
  %v848 = verf.f32.pop %v784
  %v849 = verf.f32.pop %v785
  %v850 = verf.f32.pop %v786
  %v851 = verf.f32.pop %v787
  %v852 = verf.f32.pop %v788
  %v853 = verf.f32.pop %v789
  %v854 = verf.f32.pop %v790
  %v855 = vadd.f32 %v791, 1.0
  %v856 = vadd.f32 %v792, 1.0
  %v857 = vadd.f32 %v793, 1.0
  %v858 = vadd.f32 %v794, 1.0
  %v859 = vadd.f32 %v795, 1.0
  %v860 = vadd.f32 %v796, 1.0
  %v861 = vadd.f32 %v797, 1.0
  %v862 = vadd.f32 %v798, 1.0
  %v863 = vadd.f32 %v799, 1.0
  %v864 = vadd.f32 %v800, 1.0
  %v865 = vadd.f32 %v801, 1.0
  %v866 = vadd.f32 %v802, 1.0
  %v867 = vadd.f32 %v803, 1.0
  %v868 = vadd.f32 %v804, 1.0
  %v869 = vadd.f32 %v805, 1.0
  %v870 = vadd.f32 %v806, 1.0
  %v871 = vadd.f32 %v807, 1.0
  %v872 = vadd.f32 %v808, 1.0
  %v873 = vadd.f32 %v809, 1.0
  %v874 = vadd.f32 %v810, 1.0
  %v875 = vadd.f32 %v811, 1.0
  %v876 = vadd.f32 %v812, 1.0
  %v877 = vadd.f32 %v813, 1.0
  %v878 = vadd.f32 %v814, 1.0
  %v879 = vadd.f32 %v815, 1.0
  %v880 = vadd.f32 %v816, 1.0
  %v881 = vadd.f32 %v817, 1.0
  %v882 = vadd.f32 %v818, 1.0
  %v883 = vadd.f32 %v819, 1.0
  %v884 = vadd.f32 %v820, 1.0
  %v885 = vadd.f32 %v821, 1.0
  %v886 = vadd.f32 %v822, 1.0
  %v887 = vadd.f32 %v823, 1.0
  %v888 = vadd.f32 %v824, 1.0
  %v889 = vadd.f32 %v825, 1.0
  %v890 = vadd.f32 %v826, 1.0
  %v891 = vadd.f32 %v827, 1.0
  %v892 = vadd.f32 %v828, 1.0
  %v893 = vadd.f32 %v829, 1.0
  %v894 = vadd.f32 %v830, 1.0
  %v895 = vadd.f32 %v831, 1.0
  %v896 = vadd.f32 %v832, 1.0
  %v897 = vadd.f32 %v833, 1.0
  %v898 = vadd.f32 %v834, 1.0
  %v899 = vadd.f32 %v835, 1.0
  %v900 = vadd.f32 %v836, 1.0
  %v901 = vadd.f32 %v837, 1.0
  %v902 = vadd.f32 %v838, 1.0
  %v903 = vadd.f32 %v839, 1.0
  %v904 = vadd.f32 %v840, 1.0
  %v905 = vadd.f32 %v841, 1.0
  %v906 = vadd.f32 %v842, 1.0
  %v907 = vadd.f32 %v843, 1.0
  %v908 = vadd.f32 %v844, 1.0
  %v909 = vadd.f32 %v845, 1.0
  %v910 = vadd.f32 %v846, 1.0
  %v911 = vadd.f32 %v847, 1.0
  %v912 = vadd.f32 %v848, 1.0
  %v913 = vadd.f32 %v849, 1.0
  %v914 = vadd.f32 %v850, 1.0
  %v915 = vadd.f32 %v851, 1.0
  %v916 = vadd.f32 %v852, 1.0
  %v917 = vadd.f32 %v853, 1.0
  %v918 = vadd.f32 %v854, 1.0
  %v919 = vmul.f32 %v663, %v855
  %v920 = vmul.f32 %v664, %v856
  %v921 = vmul.f32 %v665, %v857
  %v922 = vmul.f32 %v666, %v858
  %v923 = vmul.f32 %v667, %v859
  %v924 = vmul.f32 %v668, %v860
  %v925 = vmul.f32 %v669, %v861
  %v926 = vmul.f32 %v670, %v862
  %v927 = vmul.f32 %v671, %v863
  %v928 = vmul.f32 %v672, %v864
  %v929 = vmul.f32 %v673, %v865
  %v930 = vmul.f32 %v674, %v866
  %v931 = vmul.f32 %v675, %v867
  %v932 = vmul.f32 %v676, %v868
  %v933 = vmul.f32 %v677, %v869
  %v934 = vmul.f32 %v678, %v870
  %v935 = vmul.f32 %v679, %v871
  %v936 = vmul.f32 %v680, %v872
  %v937 = vmul.f32 %v681, %v873
  %v938 = vmul.f32 %v682, %v874
  %v939 = vmul.f32 %v683, %v875
  %v940 = vmul.f32 %v684, %v876
  %v941 = vmul.f32 %v685, %v877
  %v942 = vmul.f32 %v686, %v878
  %v943 = vmul.f32 %v687, %v879
  %v944 = vmul.f32 %v688, %v880
  %v945 = vmul.f32 %v689, %v881
  %v946 = vmul.f32 %v690, %v882
  %v947 = vmul.f32 %v691, %v883
  %v948 = vmul.f32 %v692, %v884
  %v949 = vmul.f32 %v693, %v885
  %v950 = vmul.f32 %v694, %v886
  %v951 = vmul.f32 %v695, %v887
  %v952 = vmul.f32 %v696, %v888
  %v953 = vmul.f32 %v697, %v889
  %v954 = vmul.f32 %v698, %v890
  %v955 = vmul.f32 %v699, %v891
  %v956 = vmul.f32 %v700, %v892
  %v957 = vmul.f32 %v701, %v893
  %v958 = vmul.f32 %v702, %v894
  %v959 = vmul.f32 %v703, %v895
  %v960 = vmul.f32 %v704, %v896
  %v961 = vmul.f32 %v705, %v897
  %v962 = vmul.f32 %v706, %v898
  %v963 = vmul.f32 %v707, %v899
  %v964 = vmul.f32 %v708, %v900
  %v965 = vmul.f32 %v709, %v901
  %v966 = vmul.f32 %v710, %v902
  %v967 = vmul.f32 %v711, %v903
  %v968 = vmul.f32 %v712, %v904
  %v969 = vmul.f32 %v713, %v905
  %v970 = vmul.f32 %v714, %v906
  %v971 = vmul.f32 %v715, %v907
  %v972 = vmul.f32 %v716, %v908
  %v973 = vmul.f32 %v717, %v909
  %v974 = vmul.f32 %v718, %v910
  %v975 = vmul.f32 %v719, %v911
  %v976 = vmul.f32 %v720, %v912
  %v977 = vmul.f32 %v721, %v913
  %v978 = vmul.f32 %v722, %v914
  %v979 = vmul.f32 %v723, %v915
  %v980 = vmul.f32 %v724, %v916
  %v981 = vmul.f32 %v725, %v917
  %v982 = vmul.f32 %v726, %v918
  %v983 = vld [vmem:[%s3] sm:$0xff]
  %v984 = vld [vmem:[%s3 + $0x8] sm:$0xff]
  %v985 = vld [vmem:[%s3 + $0x10] sm:$0xff]
  %v986 = vld [vmem:[%s3 + $0x18] sm:$0xff]
  %v987 = vld [vmem:[%s3 + $0x20] sm:$0xff]
  %v988 = vld [vmem:[%s3 + $0x28] sm:$0xff]
  %v989 = vld [vmem:[%s3 + $0x30] sm:$0xff]
  %v990 = vld [vmem:[%s3 + $0x38] sm:$0xff]
  %v991 = vld [vmem:[%s3 + $0x40] sm:$0xff]
  %v992 = vld [vmem:[%s3 + $0x48] sm:$0xff]
  %v993 = vld [vmem:[%s3 + $0x50] sm:$0xff]
  %v994 = vld [vmem:[%s3 + $0x58] sm:$0xff]
  %v995 = vld [vmem:[%s3 + $0x60] sm:$0xff]
  %v996 = vld [vmem:[%s3 + $0x68] sm:$0xff]
  %v997 = vld [vmem:[%s3 + $0x70] sm:$0xff]
  %v998 = vld [vmem:[%s3 + $0x78] sm:$0xff]
  %v999 = vld [vmem:[%s3 + $0x80] sm:$0xff]
  %v1000 = vld [vmem:[%s3 + $0x88] sm:$0xff]
  %v1001 = vld [vmem:[%s3 + $0x90] sm:$0xff]
  %v1002 = vld [vmem:[%s3 + $0x98] sm:$0xff]
  %v1003 = vld [vmem:[%s3 + $0xa0] sm:$0xff]
  %v1004 = vld [vmem:[%s3 + $0xa8] sm:$0xff]
  %v1005 = vld [vmem:[%s3 + $0xb0] sm:$0xff]
  %v1006 = vld [vmem:[%s3 + $0xb8] sm:$0xff]
  %v1007 = vld [vmem:[%s3 + $0xc0] sm:$0xff]
  %v1008 = vld [vmem:[%s3 + $0xc8] sm:$0xff]
  %v1009 = vld [vmem:[%s3 + $0xd0] sm:$0xff]
  %v1010 = vld [vmem:[%s3 + $0xd8] sm:$0xff]
  %v1011 = vld [vmem:[%s3 + $0xe0] sm:$0xff]
  %v1012 = vld [vmem:[%s3 + $0xe8] sm:$0xff]
  %v1013 = vld [vmem:[%s3 + $0xf0] sm:$0xff]
  %v1014 = vld [vmem:[%s3 + $0xf8] sm:$0xff]
  %vm1015 = vcmask 523264
  %1016 = vst.msk [vmem:[#allocation2] sm:$0xff] %vm1015, 0.0
  %1017 = vst.msk [vmem:[#allocation2 + $0x8] sm:$0xff] %vm1015, 0.0
  %1018 = vst.msk [vmem:[#allocation2 + $0x10] sm:$0xff] %vm1015, 0.0
  %1019 = vst.msk [vmem:[#allocation3] sm:$0xff] %vm1015, 0.0
  %1020 = vst.msk [vmem:[#allocation3 + $0x8] sm:$0xff] %vm1015, 0.0
  %1021 = vst.msk [vmem:[#allocation3 + $0x10] sm:$0xff] %vm1015, 0.0
  %1022 = vst.msk [vmem:[#allocation4] sm:$0xff] %vm1015, 0.0
  %1023 = vst.msk [vmem:[#allocation4 + $0x8] sm:$0xff] %vm1015, 0.0
  %1024 = vst.msk [vmem:[#allocation4 + $0x10] sm:$0xff] %vm1015, 0.0
  %1025 = vst.msk [vmem:[#allocation2 + $0x118] sm:$0xff] %vm1015, 0.0
  %1026 = vst.msk [vmem:[#allocation2 + $0x120] sm:$0xff] %vm1015, 0.0
  %1027 = vst.msk [vmem:[#allocation2 + $0x128] sm:$0xff] %vm1015, 0.0
  %1028 = vst.msk [vmem:[#allocation3 + $0x118] sm:$0xff] %vm1015, 0.0
  %1029 = vst.msk [vmem:[#allocation3 + $0x120] sm:$0xff] %vm1015, 0.0
  %1030 = vst.msk [vmem:[#allocation3 + $0x128] sm:$0xff] %vm1015, 0.0
  %1031 = vst.msk [vmem:[#allocation4 + $0x118] sm:$0xff] %vm1015, 0.0
  %1032 = vst.msk [vmem:[#allocation4 + $0x120] sm:$0xff] %vm1015, 0.0
  %1033 = vst.msk [vmem:[#allocation4 + $0x128] sm:$0xff] %vm1015, 0.0
  %1034 = vst.msk [vmem:[#allocation2 + $0x230] sm:$0xff] %vm1015, 0.0
  %1035 = vst.msk [vmem:[#allocation2 + $0x238] sm:$0xff] %vm1015, 0.0
  %1036 = vst.msk [vmem:[#allocation2 + $0x240] sm:$0xff] %vm1015, 0.0
  %1037 = vst.msk [vmem:[#allocation3 + $0x230] sm:$0xff] %vm1015, 0.0
  %1038 = vst.msk [vmem:[#allocation3 + $0x238] sm:$0xff] %vm1015, 0.0
  %1039 = vst.msk [vmem:[#allocation3 + $0x240] sm:$0xff] %vm1015, 0.0
  %1040 = vst.msk [vmem:[#allocation4 + $0x230] sm:$0xff] %vm1015, 0.0
  %1041 = vst.msk [vmem:[#allocation4 + $0x238] sm:$0xff] %vm1015, 0.0
  %1042 = vst.msk [vmem:[#allocation4 + $0x240] sm:$0xff] %vm1015, 0.0
  %1043 = vst.msk [vmem:[#allocation2 + $0x18] sm:$0xff] %vm1015, %v919
  %1044 = vst.msk [vmem:[#allocation2 + $0x20] sm:$0xff] %vm1015, %v920
  %1045 = vst.msk [vmem:[#allocation2 + $0x28] sm:$0xff] %vm1015, %v921
  %1046 = vst.msk [vmem:[#allocation2 + $0x30] sm:$0xff] %vm1015, %v922
  %1047 = vst.msk [vmem:[#allocation2 + $0x38] sm:$0xff] %vm1015, %v923
  %1048 = vst.msk [vmem:[#allocation2 + $0x40] sm:$0xff] %vm1015, %v924
  %1049 = vst.msk [vmem:[#allocation2 + $0x48] sm:$0xff] %vm1015, %v925
  %1050 = vst.msk [vmem:[#allocation2 + $0x50] sm:$0xff] %vm1015, %v926
  %1051 = vst.msk [vmem:[#allocation2 + $0x58] sm:$0xff] %vm1015, %v927
  %1052 = vst.msk [vmem:[#allocation2 + $0x60] sm:$0xff] %vm1015, %v928
  %1053 = vst.msk [vmem:[#allocation2 + $0x68] sm:$0xff] %vm1015, %v929
  %1054 = vst.msk [vmem:[#allocation2 + $0x70] sm:$0xff] %vm1015, %v930
  %1055 = vst.msk [vmem:[#allocation2 + $0x78] sm:$0xff] %vm1015, %v931
  %1056 = vst.msk [vmem:[#allocation2 + $0x80] sm:$0xff] %vm1015, %v932
  %1057 = vst.msk [vmem:[#allocation2 + $0x88] sm:$0xff] %vm1015, %v933
  %1058 = vst.msk [vmem:[#allocation2 + $0x90] sm:$0xff] %vm1015, %v934
  %1059 = vst.msk [vmem:[#allocation2 + $0x98] sm:$0xff] %vm1015, %v935
  %1060 = vst.msk [vmem:[#allocation2 + $0xa0] sm:$0xff] %vm1015, %v936
  %1061 = vst.msk [vmem:[#allocation2 + $0xa8] sm:$0xff] %vm1015, %v937
  %1062 = vst.msk [vmem:[#allocation2 + $0xb0] sm:$0xff] %vm1015, %v938
  %1063 = vst.msk [vmem:[#allocation2 + $0xb8] sm:$0xff] %vm1015, %v939
  %1064 = vst.msk [vmem:[#allocation2 + $0xc0] sm:$0xff] %vm1015, %v940
  %1065 = vst.msk [vmem:[#allocation2 + $0xc8] sm:$0xff] %vm1015, %v941
  %1066 = vst.msk [vmem:[#allocation2 + $0xd0] sm:$0xff] %vm1015, %v942
  %1067 = vst.msk [vmem:[#allocation2 + $0xd8] sm:$0xff] %vm1015, %v943
  %1068 = vst.msk [vmem:[#allocation2 + $0xe0] sm:$0xff] %vm1015, %v944
  %1069 = vst.msk [vmem:[#allocation2 + $0xe8] sm:$0xff] %vm1015, %v945
  %1070 = vst.msk [vmem:[#allocation2 + $0xf0] sm:$0xff] %vm1015, %v946
  %1071 = vst.msk [vmem:[#allocation2 + $0xf8] sm:$0xff] %vm1015, %v947
  %1072 = vst.msk [vmem:[#allocation2 + $0x100] sm:$0xff] %vm1015, %v948
  %1073 = vst.msk [vmem:[#allocation2 + $0x108] sm:$0xff] %vm1015, %v949
  %1074 = vst.msk [vmem:[#allocation2 + $0x110] sm:$0xff] %vm1015, %v950
  %1076 = vset.pattern.permute.xlu0 0
  %1077 = vperm.xlu0 %1076, %v983
  %v1078 = vpop.permute.xlu0 %1077
  %1081 = vset.pattern.permute.xlu0 0
  %1082 = vperm.xlu0 %1081, %v984
  %v1083 = vpop.permute.xlu0 %1082
  %1086 = vset.pattern.permute.xlu0 0
  %1087 = vperm.xlu0 %1086, %v985
  %v1088 = vpop.permute.xlu0 %1087
  %1091 = vset.pattern.permute.xlu0 0
  %1092 = vperm.xlu0 %1091, %v986
  %v1093 = vpop.permute.xlu0 %1092
  %1096 = vset.pattern.permute.xlu0 0
  %1097 = vperm.xlu0 %1096, %v987
  %v1098 = vpop.permute.xlu0 %1097
  %1101 = vset.pattern.permute.xlu0 0
  %1102 = vperm.xlu0 %1101, %v988
  %v1103 = vpop.permute.xlu0 %1102
  %1106 = vset.pattern.permute.xlu0 0
  %1107 = vperm.xlu0 %1106, %v989
  %v1108 = vpop.permute.xlu0 %1107
  %1111 = vset.pattern.permute.xlu0 0
  %1112 = vperm.xlu0 %1111, %v990
  %v1113 = vpop.permute.xlu0 %1112
  %1116 = vset.pattern.permute.xlu0 0
  %1117 = vperm.xlu0 %1116, %v991
  %v1118 = vpop.permute.xlu0 %1117
  %1121 = vset.pattern.permute.xlu0 0
  %1122 = vperm.xlu0 %1121, %v992
  %v1123 = vpop.permute.xlu0 %1122
  %1126 = vset.pattern.permute.xlu0 0
  %1127 = vperm.xlu0 %1126, %v993
  %v1128 = vpop.permute.xlu0 %1127
  %1131 = vset.pattern.permute.xlu0 0
  %1132 = vperm.xlu0 %1131, %v994
  %v1133 = vpop.permute.xlu0 %1132
  %1136 = vset.pattern.permute.xlu0 0
  %1137 = vperm.xlu0 %1136, %v995
  %v1138 = vpop.permute.xlu0 %1137
  %1141 = vset.pattern.permute.xlu0 0
  %1142 = vperm.xlu0 %1141, %v996
  %v1143 = vpop.permute.xlu0 %1142
  %1146 = vset.pattern.permute.xlu0 0
  %1147 = vperm.xlu0 %1146, %v997
  %v1148 = vpop.permute.xlu0 %1147
  %1151 = vset.pattern.permute.xlu0 0
  %1152 = vperm.xlu0 %1151, %v998
  %v1153 = vpop.permute.xlu0 %1152
  %1156 = vset.pattern.permute.xlu0 0
  %1157 = vperm.xlu0 %1156, %v999
  %v1158 = vpop.permute.xlu0 %1157
  %1161 = vset.pattern.permute.xlu0 0
  %1162 = vperm.xlu0 %1161, %v1000
  %v1163 = vpop.permute.xlu0 %1162
  %1166 = vset.pattern.permute.xlu0 0
  %1167 = vperm.xlu0 %1166, %v1001
  %v1168 = vpop.permute.xlu0 %1167
  %1171 = vset.pattern.permute.xlu0 0
  %1172 = vperm.xlu0 %1171, %v1002
  %v1173 = vpop.permute.xlu0 %1172
  %1176 = vset.pattern.permute.xlu0 0
  %1177 = vperm.xlu0 %1176, %v1003
  %v1178 = vpop.permute.xlu0 %1177
  %1181 = vset.pattern.permute.xlu0 0
  %1182 = vperm.xlu0 %1181, %v1004
  %v1183 = vpop.permute.xlu0 %1182
  %1186 = vset.pattern.permute.xlu0 0
  %1187 = vperm.xlu0 %1186, %v1005
  %v1188 = vpop.permute.xlu0 %1187
  %1191 = vset.pattern.permute.xlu0 0
  %1192 = vperm.xlu0 %1191, %v1006
  %v1193 = vpop.permute.xlu0 %1192
  %1196 = vset.pattern.permute.xlu0 0
  %1197 = vperm.xlu0 %1196, %v1007
  %v1198 = vpop.permute.xlu0 %1197
  %1201 = vset.pattern.permute.xlu0 0
  %1202 = vperm.xlu0 %1201, %v1008
  %v1203 = vpop.permute.xlu0 %1202
  %1206 = vset.pattern.permute.xlu0 0
  %1207 = vperm.xlu0 %1206, %v1009
  %v1208 = vpop.permute.xlu0 %1207
  %1211 = vset.pattern.permute.xlu0 0
  %1212 = vperm.xlu0 %1211, %v1010
  %v1213 = vpop.permute.xlu0 %1212
  %1216 = vset.pattern.permute.xlu0 0
  %1217 = vperm.xlu0 %1216, %v1011
  %v1218 = vpop.permute.xlu0 %1217
  %1221 = vset.pattern.permute.xlu0 0
  %1222 = vperm.xlu0 %1221, %v1012
  %v1223 = vpop.permute.xlu0 %1222
  %1226 = vset.pattern.permute.xlu0 0
  %1227 = vperm.xlu0 %1226, %v1013
  %v1228 = vpop.permute.xlu0 %1227
  %1231 = vset.pattern.permute.xlu0 0
  %1232 = vperm.xlu0 %1231, %v1014
  %v1233 = vpop.permute.xlu0 %1232
  %v1235 = vmul.f32 %v919, %v1078
  %v1236 = vmul.f32 %v920, %v1083
  %v1237 = vmul.f32 %v921, %v1088
  %v1238 = vmul.f32 %v922, %v1093
  %v1239 = vmul.f32 %v923, %v1098
  %v1240 = vmul.f32 %v924, %v1103
  %v1241 = vmul.f32 %v925, %v1108
  %v1242 = vmul.f32 %v926, %v1113
  %v1243 = vmul.f32 %v927, %v1118
  %v1244 = vmul.f32 %v928, %v1123
  %v1245 = vmul.f32 %v929, %v1128
  %v1246 = vmul.f32 %v930, %v1133
  %v1247 = vmul.f32 %v931, %v1138
  %v1248 = vmul.f32 %v932, %v1143
  %v1249 = vmul.f32 %v933, %v1148
  %v1250 = vmul.f32 %v934, %v1153
  %v1251 = vmul.f32 %v935, %v1158
  %v1252 = vmul.f32 %v936, %v1163
  %v1253 = vmul.f32 %v937, %v1168
  %v1254 = vmul.f32 %v938, %v1173
  %v1255 = vmul.f32 %v939, %v1178
  %v1256 = vmul.f32 %v940, %v1183
  %v1257 = vmul.f32 %v941, %v1188
  %v1258 = vmul.f32 %v942, %v1193
  %v1259 = vmul.f32 %v943, %v1198
  %v1260 = vmul.f32 %v944, %v1203
  %v1261 = vmul.f32 %v945, %v1208
  %v1262 = vmul.f32 %v946, %v1213
  %v1263 = vmul.f32 %v947, %v1218
  %v1264 = vmul.f32 %v948, %v1223
  %v1265 = vmul.f32 %v949, %v1228
  %v1266 = vmul.f32 %v950, %v1233
  %1267 = vst.msk [vmem:[#allocation3 + $0x18] sm:$0xff] %vm1015, %v1235
  %1268 = vst.msk [vmem:[#allocation3 + $0x20] sm:$0xff] %vm1015, %v1236
  %1269 = vst.msk [vmem:[#allocation3 + $0x28] sm:$0xff] %vm1015, %v1237
  %1270 = vst.msk [vmem:[#allocation3 + $0x30] sm:$0xff] %vm1015, %v1238
  %1271 = vst.msk [vmem:[#allocation3 + $0x38] sm:$0xff] %vm1015, %v1239
  %1272 = vst.msk [vmem:[#allocation3 + $0x40] sm:$0xff] %vm1015, %v1240
  %1273 = vst.msk [vmem:[#allocation3 + $0x48] sm:$0xff] %vm1015, %v1241
  %1274 = vst.msk [vmem:[#allocation3 + $0x50] sm:$0xff] %vm1015, %v1242
  %1275 = vst.msk [vmem:[#allocation3 + $0x58] sm:$0xff] %vm1015, %v1243
  %1276 = vst.msk [vmem:[#allocation3 + $0x60] sm:$0xff] %vm1015, %v1244
  %1277 = vst.msk [vmem:[#allocation3 + $0x68] sm:$0xff] %vm1015, %v1245
  %1278 = vst.msk [vmem:[#allocation3 + $0x70] sm:$0xff] %vm1015, %v1246
  %1279 = vst.msk [vmem:[#allocation3 + $0x78] sm:$0xff] %vm1015, %v1247
  %1280 = vst.msk [vmem:[#allocation3 + $0x80] sm:$0xff] %vm1015, %v1248
  %1281 = vst.msk [vmem:[#allocation3 + $0x88] sm:$0xff] %vm1015, %v1249
  %1282 = vst.msk [vmem:[#allocation3 + $0x90] sm:$0xff] %vm1015, %v1250
  %1283 = vst.msk [vmem:[#allocation3 + $0x98] sm:$0xff] %vm1015, %v1251
  %1284 = vst.msk [vmem:[#allocation3 + $0xa0] sm:$0xff] %vm1015, %v1252
  %1285 = vst.msk [vmem:[#allocation3 + $0xa8] sm:$0xff] %vm1015, %v1253
  %1286 = vst.msk [vmem:[#allocation3 + $0xb0] sm:$0xff] %vm1015, %v1254
  %1287 = vst.msk [vmem:[#allocation3 + $0xb8] sm:$0xff] %vm1015, %v1255
  %1288 = vst.msk [vmem:[#allocation3 + $0xc0] sm:$0xff] %vm1015, %v1256
  %1289 = vst.msk [vmem:[#allocation3 + $0xc8] sm:$0xff] %vm1015, %v1257
  %1290 = vst.msk [vmem:[#allocation3 + $0xd0] sm:$0xff] %vm1015, %v1258
  %1291 = vst.msk [vmem:[#allocation3 + $0xd8] sm:$0xff] %vm1015, %v1259
  %1292 = vst.msk [vmem:[#allocation3 + $0xe0] sm:$0xff] %vm1015, %v1260
  %1293 = vst.msk [vmem:[#allocation3 + $0xe8] sm:$0xff] %vm1015, %v1261
  %1294 = vst.msk [vmem:[#allocation3 + $0xf0] sm:$0xff] %vm1015, %v1262
  %1295 = vst.msk [vmem:[#allocation3 + $0xf8] sm:$0xff] %vm1015, %v1263
  %1296 = vst.msk [vmem:[#allocation3 + $0x100] sm:$0xff] %vm1015, %v1264
  %1297 = vst.msk [vmem:[#allocation3 + $0x108] sm:$0xff] %vm1015, %v1265
  %1298 = vst.msk [vmem:[#allocation3 + $0x110] sm:$0xff] %vm1015, %v1266
  %1299 = vset.pattern.permute.xlu0 1
  %1300 = vperm.xlu0 %1299, %v983
  %v1301 = vpop.permute.xlu0 %1300
  %1303 = vset.pattern.permute.xlu0 1
  %1304 = vperm.xlu0 %1303, %v984
  %v1305 = vpop.permute.xlu0 %1304
  %1307 = vset.pattern.permute.xlu0 1
  %1308 = vperm.xlu0 %1307, %v985
  %v1309 = vpop.permute.xlu0 %1308
  %1311 = vset.pattern.permute.xlu0 1
  %1312 = vperm.xlu0 %1311, %v986
  %v1313 = vpop.permute.xlu0 %1312
  %1315 = vset.pattern.permute.xlu0 1
  %1316 = vperm.xlu0 %1315, %v987
  %v1317 = vpop.permute.xlu0 %1316
  %1319 = vset.pattern.permute.xlu0 1
  %1320 = vperm.xlu0 %1319, %v988
  %v1321 = vpop.permute.xlu0 %1320
  %1323 = vset.pattern.permute.xlu0 1
  %1324 = vperm.xlu0 %1323, %v989
  %v1325 = vpop.permute.xlu0 %1324
  %1327 = vset.pattern.permute.xlu0 1
  %1328 = vperm.xlu0 %1327, %v990
  %v1329 = vpop.permute.xlu0 %1328
  %1331 = vset.pattern.permute.xlu0 1
  %1332 = vperm.xlu0 %1331, %v991
  %v1333 = vpop.permute.xlu0 %1332
  %1335 = vset.pattern.permute.xlu0 1
  %1336 = vperm.xlu0 %1335, %v992
  %v1337 = vpop.permute.xlu0 %1336
  %1339 = vset.pattern.permute.xlu0 1
  %1340 = vperm.xlu0 %1339, %v993
  %v1341 = vpop.permute.xlu0 %1340
  %1343 = vset.pattern.permute.xlu0 1
  %1344 = vperm.xlu0 %1343, %v994
  %v1345 = vpop.permute.xlu0 %1344
  %1347 = vset.pattern.permute.xlu0 1
  %1348 = vperm.xlu0 %1347, %v995
  %v1349 = vpop.permute.xlu0 %1348
  %1351 = vset.pattern.permute.xlu0 1
  %1352 = vperm.xlu0 %1351, %v996
  %v1353 = vpop.permute.xlu0 %1352
  %1355 = vset.pattern.permute.xlu0 1
  %1356 = vperm.xlu0 %1355, %v997
  %v1357 = vpop.permute.xlu0 %1356
  %1359 = vset.pattern.permute.xlu0 1
  %1360 = vperm.xlu0 %1359, %v998
  %v1361 = vpop.permute.xlu0 %1360
  %1363 = vset.pattern.permute.xlu0 1
  %1364 = vperm.xlu0 %1363, %v999
  %v1365 = vpop.permute.xlu0 %1364
  %1367 = vset.pattern.permute.xlu0 1
  %1368 = vperm.xlu0 %1367, %v1000
  %v1369 = vpop.permute.xlu0 %1368
  %1371 = vset.pattern.permute.xlu0 1
  %1372 = vperm.xlu0 %1371, %v1001
  %v1373 = vpop.permute.xlu0 %1372
  %1375 = vset.pattern.permute.xlu0 1
  %1376 = vperm.xlu0 %1375, %v1002
  %v1377 = vpop.permute.xlu0 %1376
  %1379 = vset.pattern.permute.xlu0 1
  %1380 = vperm.xlu0 %1379, %v1003
  %v1381 = vpop.permute.xlu0 %1380
  %1383 = vset.pattern.permute.xlu0 1
  %1384 = vperm.xlu0 %1383, %v1004
  %v1385 = vpop.permute.xlu0 %1384
  %1387 = vset.pattern.permute.xlu0 1
  %1388 = vperm.xlu0 %1387, %v1005
  %v1389 = vpop.permute.xlu0 %1388
  %1391 = vset.pattern.permute.xlu0 1
  %1392 = vperm.xlu0 %1391, %v1006
  %v1393 = vpop.permute.xlu0 %1392
  %1395 = vset.pattern.permute.xlu0 1
  %1396 = vperm.xlu0 %1395, %v1007
  %v1397 = vpop.permute.xlu0 %1396
  %1399 = vset.pattern.permute.xlu0 1
  %1400 = vperm.xlu0 %1399, %v1008
  %v1401 = vpop.permute.xlu0 %1400
  %1403 = vset.pattern.permute.xlu0 1
  %1404 = vperm.xlu0 %1403, %v1009
  %v1405 = vpop.permute.xlu0 %1404
  %1407 = vset.pattern.permute.xlu0 1
  %1408 = vperm.xlu0 %1407, %v1010
  %v1409 = vpop.permute.xlu0 %1408
  %1411 = vset.pattern.permute.xlu0 1
  %1412 = vperm.xlu0 %1411, %v1011
  %v1413 = vpop.permute.xlu0 %1412
  %1415 = vset.pattern.permute.xlu0 1
  %1416 = vperm.xlu0 %1415, %v1012
  %v1417 = vpop.permute.xlu0 %1416
  %1419 = vset.pattern.permute.xlu0 1
  %1420 = vperm.xlu0 %1419, %v1013
  %v1421 = vpop.permute.xlu0 %1420
  %1423 = vset.pattern.permute.xlu0 1
  %1424 = vperm.xlu0 %1423, %v1014
  %v1425 = vpop.permute.xlu0 %1424
  %v1427 = vmul.f32 %v919, %v1301
  %v1428 = vmul.f32 %v920, %v1305
  %v1429 = vmul.f32 %v921, %v1309
  %v1430 = vmul.f32 %v922, %v1313
  %v1431 = vmul.f32 %v923, %v1317
  %v1432 = vmul.f32 %v924, %v1321
  %v1433 = vmul.f32 %v925, %v1325
  %v1434 = vmul.f32 %v926, %v1329
  %v1435 = vmul.f32 %v927, %v1333
  %v1436 = vmul.f32 %v928, %v1337
  %v1437 = vmul.f32 %v929, %v1341
  %v1438 = vmul.f32 %v930, %v1345
  %v1439 = vmul.f32 %v931, %v1349
  %v1440 = vmul.f32 %v932, %v1353
  %v1441 = vmul.f32 %v933, %v1357
  %v1442 = vmul.f32 %v934, %v1361
  %v1443 = vmul.f32 %v935, %v1365
  %v1444 = vmul.f32 %v936, %v1369
  %v1445 = vmul.f32 %v937, %v1373
  %v1446 = vmul.f32 %v938, %v1377
  %v1447 = vmul.f32 %v939, %v1381
  %v1448 = vmul.f32 %v940, %v1385
  %v1449 = vmul.f32 %v941, %v1389
  %v1450 = vmul.f32 %v942, %v1393
  %v1451 = vmul.f32 %v943, %v1397
  %v1452 = vmul.f32 %v944, %v1401
  %v1453 = vmul.f32 %v945, %v1405
  %v1454 = vmul.f32 %v946, %v1409
  %v1455 = vmul.f32 %v947, %v1413
  %v1456 = vmul.f32 %v948, %v1417
  %v1457 = vmul.f32 %v949, %v1421
  %v1458 = vmul.f32 %v950, %v1425
  %1459 = vst.msk [vmem:[#allocation4 + $0x18] sm:$0xff] %vm1015, %v1427
  %1460 = vst.msk [vmem:[#allocation4 + $0x20] sm:$0xff] %vm1015, %v1428
  %1461 = vst.msk [vmem:[#allocation4 + $0x28] sm:$0xff] %vm1015, %v1429
  %1462 = vst.msk [vmem:[#allocation4 + $0x30] sm:$0xff] %vm1015, %v1430
  %1463 = vst.msk [vmem:[#allocation4 + $0x38] sm:$0xff] %vm1015, %v1431
  %1464 = vst.msk [vmem:[#allocation4 + $0x40] sm:$0xff] %vm1015, %v1432
  %1465 = vst.msk [vmem:[#allocation4 + $0x48] sm:$0xff] %vm1015, %v1433
  %1466 = vst.msk [vmem:[#allocation4 + $0x50] sm:$0xff] %vm1015, %v1434
  %1467 = vst.msk [vmem:[#allocation4 + $0x58] sm:$0xff] %vm1015, %v1435
  %1468 = vst.msk [vmem:[#allocation4 + $0x60] sm:$0xff] %vm1015, %v1436
  %1469 = vst.msk [vmem:[#allocation4 + $0x68] sm:$0xff] %vm1015, %v1437
  %1470 = vst.msk [vmem:[#allocation4 + $0x70] sm:$0xff] %vm1015, %v1438
  %1471 = vst.msk [vmem:[#allocation4 + $0x78] sm:$0xff] %vm1015, %v1439
  %1472 = vst.msk [vmem:[#allocation4 + $0x80] sm:$0xff] %vm1015, %v1440
  %1473 = vst.msk [vmem:[#allocation4 + $0x88] sm:$0xff] %vm1015, %v1441
  %1474 = vst.msk [vmem:[#allocation4 + $0x90] sm:$0xff] %vm1015, %v1442
  %1475 = vst.msk [vmem:[#allocation4 + $0x98] sm:$0xff] %vm1015, %v1443
  %1476 = vst.msk [vmem:[#allocation4 + $0xa0] sm:$0xff] %vm1015, %v1444
  %1477 = vst.msk [vmem:[#allocation4 + $0xa8] sm:$0xff] %vm1015, %v1445
  %1478 = vst.msk [vmem:[#allocation4 + $0xb0] sm:$0xff] %vm1015, %v1446
  %1479 = vst.msk [vmem:[#allocation4 + $0xb8] sm:$0xff] %vm1015, %v1447
  %1480 = vst.msk [vmem:[#allocation4 + $0xc0] sm:$0xff] %vm1015, %v1448
  %1481 = vst.msk [vmem:[#allocation4 + $0xc8] sm:$0xff] %vm1015, %v1449
  %1482 = vst.msk [vmem:[#allocation4 + $0xd0] sm:$0xff] %vm1015, %v1450
  %1483 = vst.msk [vmem:[#allocation4 + $0xd8] sm:$0xff] %vm1015, %v1451
  %1484 = vst.msk [vmem:[#allocation4 + $0xe0] sm:$0xff] %vm1015, %v1452
  %1485 = vst.msk [vmem:[#allocation4 + $0xe8] sm:$0xff] %vm1015, %v1453
  %1486 = vst.msk [vmem:[#allocation4 + $0xf0] sm:$0xff] %vm1015, %v1454
  %1487 = vst.msk [vmem:[#allocation4 + $0xf8] sm:$0xff] %vm1015, %v1455
  %1488 = vst.msk [vmem:[#allocation4 + $0x100] sm:$0xff] %vm1015, %v1456
  %1489 = vst.msk [vmem:[#allocation4 + $0x108] sm:$0xff] %vm1015, %v1457
  %1490 = vst.msk [vmem:[#allocation4 + $0x110] sm:$0xff] %vm1015, %v1458
  %1491 = vst.msk [vmem:[#allocation2 + $0x130] sm:$0xff] %vm1015, %v951
  %1492 = vst.msk [vmem:[#allocation2 + $0x138] sm:$0xff] %vm1015, %v952
  %1493 = vst.msk [vmem:[#allocation2 + $0x140] sm:$0xff] %vm1015, %v953
  %1494 = vst.msk [vmem:[#allocation2 + $0x148] sm:$0xff] %vm1015, %v954
  %1495 = vst.msk [vmem:[#allocation2 + $0x150] sm:$0xff] %vm1015, %v955
  %1496 = vst.msk [vmem:[#allocation2 + $0x158] sm:$0xff] %vm1015, %v956
  %1497 = vst.msk [vmem:[#allocation2 + $0x160] sm:$0xff] %vm1015, %v957
  %1498 = vst.msk [vmem:[#allocation2 + $0x168] sm:$0xff] %vm1015, %v958
  %1499 = vst.msk [vmem:[#allocation2 + $0x170] sm:$0xff] %vm1015, %v959
  %1500 = vst.msk [vmem:[#allocation2 + $0x178] sm:$0xff] %vm1015, %v960
  %1501 = vst.msk [vmem:[#allocation2 + $0x180] sm:$0xff] %vm1015, %v961
  %1502 = vst.msk [vmem:[#allocation2 + $0x188] sm:$0xff] %vm1015, %v962
  %1503 = vst.msk [vmem:[#allocation2 + $0x190] sm:$0xff] %vm1015, %v963
  %1504 = vst.msk [vmem:[#allocation2 + $0x198] sm:$0xff] %vm1015, %v964
  %1505 = vst.msk [vmem:[#allocation2 + $0x1a0] sm:$0xff] %vm1015, %v965
  %1506 = vst.msk [vmem:[#allocation2 + $0x1a8] sm:$0xff] %vm1015, %v966
  %1507 = vst.msk [vmem:[#allocation2 + $0x1b0] sm:$0xff] %vm1015, %v967
  %1508 = vst.msk [vmem:[#allocation2 + $0x1b8] sm:$0xff] %vm1015, %v968
  %1509 = vst.msk [vmem:[#allocation2 + $0x1c0] sm:$0xff] %vm1015, %v969
  %1510 = vst.msk [vmem:[#allocation2 + $0x1c8] sm:$0xff] %vm1015, %v970
  %1511 = vst.msk [vmem:[#allocation2 + $0x1d0] sm:$0xff] %vm1015, %v971
  %1512 = vst.msk [vmem:[#allocation2 + $0x1d8] sm:$0xff] %vm1015, %v972
  %1513 = vst.msk [vmem:[#allocation2 + $0x1e0] sm:$0xff] %vm1015, %v973
  %1514 = vst.msk [vmem:[#allocation2 + $0x1e8] sm:$0xff] %vm1015, %v974
  %1515 = vst.msk [vmem:[#allocation2 + $0x1f0] sm:$0xff] %vm1015, %v975
  %1516 = vst.msk [vmem:[#allocation2 + $0x1f8] sm:$0xff] %vm1015, %v976
  %1517 = vst.msk [vmem:[#allocation2 + $0x200] sm:$0xff] %vm1015, %v977
  %1518 = vst.msk [vmem:[#allocation2 + $0x208] sm:$0xff] %vm1015, %v978
  %1519 = vst.msk [vmem:[#allocation2 + $0x210] sm:$0xff] %vm1015, %v979
  %1520 = vst.msk [vmem:[#allocation2 + $0x218] sm:$0xff] %vm1015, %v980
  %1521 = vst.msk [vmem:[#allocation2 + $0x220] sm:$0xff] %vm1015, %v981
  %1522 = vst.msk [vmem:[#allocation2 + $0x228] sm:$0xff] %vm1015, %v982
  %v1523 = vmul.f32 %v951, %v1078
  %v1524 = vmul.f32 %v952, %v1083
  %v1525 = vmul.f32 %v953, %v1088
  %v1526 = vmul.f32 %v954, %v1093
  %v1527 = vmul.f32 %v955, %v1098
  %v1528 = vmul.f32 %v956, %v1103
  %v1529 = vmul.f32 %v957, %v1108
  %v1530 = vmul.f32 %v958, %v1113
  %v1531 = vmul.f32 %v959, %v1118
  %v1532 = vmul.f32 %v960, %v1123
  %v1533 = vmul.f32 %v961, %v1128
  %v1534 = vmul.f32 %v962, %v1133
  %v1535 = vmul.f32 %v963, %v1138
  %v1536 = vmul.f32 %v964, %v1143
  %v1537 = vmul.f32 %v965, %v1148
  %v1538 = vmul.f32 %v966, %v1153
  %v1539 = vmul.f32 %v967, %v1158
  %v1540 = vmul.f32 %v968, %v1163
  %v1541 = vmul.f32 %v969, %v1168
  %v1542 = vmul.f32 %v970, %v1173
  %v1543 = vmul.f32 %v971, %v1178
  %v1544 = vmul.f32 %v972, %v1183
  %v1545 = vmul.f32 %v973, %v1188
  %v1546 = vmul.f32 %v974, %v1193
  %v1547 = vmul.f32 %v975, %v1198
  %v1548 = vmul.f32 %v976, %v1203
  %v1549 = vmul.f32 %v977, %v1208
  %v1550 = vmul.f32 %v978, %v1213
  %v1551 = vmul.f32 %v979, %v1218
  %v1552 = vmul.f32 %v980, %v1223
  %v1553 = vmul.f32 %v981, %v1228
  %v1554 = vmul.f32 %v982, %v1233
  %1555 = vst.msk [vmem:[#allocation3 + $0x130] sm:$0xff] %vm1015, %v1523
  %1556 = vst.msk [vmem:[#allocation3 + $0x138] sm:$0xff] %vm1015, %v1524
  %1557 = vst.msk [vmem:[#allocation3 + $0x140] sm:$0xff] %vm1015, %v1525
  %1558 = vst.msk [vmem:[#allocation3 + $0x148] sm:$0xff] %vm1015, %v1526
  %1559 = vst.msk [vmem:[#allocation3 + $0x150] sm:$0xff] %vm1015, %v1527
  %1560 = vst.msk [vmem:[#allocation3 + $0x158] sm:$0xff] %vm1015, %v1528
  %1561 = vst.msk [vmem:[#allocation3 + $0x160] sm:$0xff] %vm1015, %v1529
  %1562 = vst.msk [vmem:[#allocation3 + $0x168] sm:$0xff] %vm1015, %v1530
  %1563 = vst.msk [vmem:[#allocation3 + $0x170] sm:$0xff] %vm1015, %v1531
  %1564 = vst.msk [vmem:[#allocation3 + $0x178] sm:$0xff] %vm1015, %v1532
  %1565 = vst.msk [vmem:[#allocation3 + $0x180] sm:$0xff] %vm1015, %v1533
  %1566 = vst.msk [vmem:[#allocation3 + $0x188] sm:$0xff] %vm1015, %v1534
  %1567 = vst.msk [vmem:[#allocation3 + $0x190] sm:$0xff] %vm1015, %v1535
  %1568 = vst.msk [vmem:[#allocation3 + $0x198] sm:$0xff] %vm1015, %v1536
  %1569 = vst.msk [vmem:[#allocation3 + $0x1a0] sm:$0xff] %vm1015, %v1537
  %1570 = vst.msk [vmem:[#allocation3 + $0x1a8] sm:$0xff] %vm1015, %v1538
  %1571 = vst.msk [vmem:[#allocation3 + $0x1b0] sm:$0xff] %vm1015, %v1539
  %1572 = vst.msk [vmem:[#allocation3 + $0x1b8] sm:$0xff] %vm1015, %v1540
  %1573 = vst.msk [vmem:[#allocation3 + $0x1c0] sm:$0xff] %vm1015, %v1541
  %1574 = vst.msk [vmem:[#allocation3 + $0x1c8] sm:$0xff] %vm1015, %v1542
  %1575 = vst.msk [vmem:[#allocation3 + $0x1d0] sm:$0xff] %vm1015, %v1543
  %1576 = vst.msk [vmem:[#allocation3 + $0x1d8] sm:$0xff] %vm1015, %v1544
  %1577 = vst.msk [vmem:[#allocation3 + $0x1e0] sm:$0xff] %vm1015, %v1545
  %1578 = vst.msk [vmem:[#allocation3 + $0x1e8] sm:$0xff] %vm1015, %v1546
  %1579 = vst.msk [vmem:[#allocation3 + $0x1f0] sm:$0xff] %vm1015, %v1547
  %1580 = vst.msk [vmem:[#allocation3 + $0x1f8] sm:$0xff] %vm1015, %v1548
  %1581 = vst.msk [vmem:[#allocation3 + $0x200] sm:$0xff] %vm1015, %v1549
  %1582 = vst.msk [vmem:[#allocation3 + $0x208] sm:$0xff] %vm1015, %v1550
  %1583 = vst.msk [vmem:[#allocation3 + $0x210] sm:$0xff] %vm1015, %v1551
  %1584 = vst.msk [vmem:[#allocation3 + $0x218] sm:$0xff] %vm1015, %v1552
  %1585 = vst.msk [vmem:[#allocation3 + $0x220] sm:$0xff] %vm1015, %v1553
  %1586 = vst.msk [vmem:[#allocation3 + $0x228] sm:$0xff] %vm1015, %v1554
  %v1587 = vmul.f32 %v951, %v1301
  %v1588 = vmul.f32 %v952, %v1305
  %v1589 = vmul.f32 %v953, %v1309
  %v1590 = vmul.f32 %v954, %v1313
  %v1591 = vmul.f32 %v955, %v1317
  %v1592 = vmul.f32 %v956, %v1321
  %v1593 = vmul.f32 %v957, %v1325
  %v1594 = vmul.f32 %v958, %v1329
  %v1595 = vmul.f32 %v959, %v1333
  %v1596 = vmul.f32 %v960, %v1337
  %v1597 = vmul.f32 %v961, %v1341
  %v1598 = vmul.f32 %v962, %v1345
  %v1599 = vmul.f32 %v963, %v1349
  %v1600 = vmul.f32 %v964, %v1353
  %v1601 = vmul.f32 %v965, %v1357
  %v1602 = vmul.f32 %v966, %v1361
  %v1603 = vmul.f32 %v967, %v1365
  %v1604 = vmul.f32 %v968, %v1369
  %v1605 = vmul.f32 %v969, %v1373
  %v1606 = vmul.f32 %v970, %v1377
  %v1607 = vmul.f32 %v971, %v1381
  %v1608 = vmul.f32 %v972, %v1385
  %v1609 = vmul.f32 %v973, %v1389
  %v1610 = vmul.f32 %v974, %v1393
  %v1611 = vmul.f32 %v975, %v1397
  %v1612 = vmul.f32 %v976, %v1401
  %v1613 = vmul.f32 %v977, %v1405
  %v1614 = vmul.f32 %v978, %v1409
  %v1615 = vmul.f32 %v979, %v1413
  %v1616 = vmul.f32 %v980, %v1417
  %v1617 = vmul.f32 %v981, %v1421
  %v1618 = vmul.f32 %v982, %v1425
  %1619 = vst.msk [vmem:[#allocation4 + $0x130] sm:$0xff] %vm1015, %v1587
  %1620 = vst.msk [vmem:[#allocation4 + $0x138] sm:$0xff] %vm1015, %v1588
  %1621 = vst.msk [vmem:[#allocation4 + $0x140] sm:$0xff] %vm1015, %v1589
  %1622 = vst.msk [vmem:[#allocation4 + $0x148] sm:$0xff] %vm1015, %v1590
  %1623 = vst.msk [vmem:[#allocation4 + $0x150] sm:$0xff] %vm1015, %v1591
  %1624 = vst.msk [vmem:[#allocation4 + $0x158] sm:$0xff] %vm1015, %v1592
  %1625 = vst.msk [vmem:[#allocation4 + $0x160] sm:$0xff] %vm1015, %v1593
  %1626 = vst.msk [vmem:[#allocation4 + $0x168] sm:$0xff] %vm1015, %v1594
  %1627 = vst.msk [vmem:[#allocation4 + $0x170] sm:$0xff] %vm1015, %v1595
  %1628 = vst.msk [vmem:[#allocation4 + $0x178] sm:$0xff] %vm1015, %v1596
  %1629 = vst.msk [vmem:[#allocation4 + $0x180] sm:$0xff] %vm1015, %v1597
  %1630 = vst.msk [vmem:[#allocation4 + $0x188] sm:$0xff] %vm1015, %v1598
  %1631 = vst.msk [vmem:[#allocation4 + $0x190] sm:$0xff] %vm1015, %v1599
  %1632 = vst.msk [vmem:[#allocation4 + $0x198] sm:$0xff] %vm1015, %v1600
  %1633 = vst.msk [vmem:[#allocation4 + $0x1a0] sm:$0xff] %vm1015, %v1601
  %1634 = vst.msk [vmem:[#allocation4 + $0x1a8] sm:$0xff] %vm1015, %v1602
  %1635 = vst.msk [vmem:[#allocation4 + $0x1b0] sm:$0xff] %vm1015, %v1603
  %1636 = vst.msk [vmem:[#allocation4 + $0x1b8] sm:$0xff] %vm1015, %v1604
  %1637 = vst.msk [vmem:[#allocation4 + $0x1c0] sm:$0xff] %vm1015, %v1605
  %1638 = vst.msk [vmem:[#allocation4 + $0x1c8] sm:$0xff] %vm1015, %v1606
  %1639 = vst.msk [vmem:[#allocation4 + $0x1d0] sm:$0xff] %vm1015, %v1607
  %1640 = vst.msk [vmem:[#allocation4 + $0x1d8] sm:$0xff] %vm1015, %v1608
  %1641 = vst.msk [vmem:[#allocation4 + $0x1e0] sm:$0xff] %vm1015, %v1609
  %1642 = vst.msk [vmem:[#allocation4 + $0x1e8] sm:$0xff] %vm1015, %v1610
  %1643 = vst.msk [vmem:[#allocation4 + $0x1f0] sm:$0xff] %vm1015, %v1611
  %1644 = vst.msk [vmem:[#allocation4 + $0x1f8] sm:$0xff] %vm1015, %v1612
  %1645 = vst.msk [vmem:[#allocation4 + $0x200] sm:$0xff] %vm1015, %v1613
  %1646 = vst.msk [vmem:[#allocation4 + $0x208] sm:$0xff] %vm1015, %v1614
  %1647 = vst.msk [vmem:[#allocation4 + $0x210] sm:$0xff] %vm1015, %v1615
  %1648 = vst.msk [vmem:[#allocation4 + $0x218] sm:$0xff] %vm1015, %v1616
  %1649 = vst.msk [vmem:[#allocation4 + $0x220] sm:$0xff] %vm1015, %v1617
  %1650 = vst.msk [vmem:[#allocation4 + $0x228] sm:$0xff] %vm1015, %v1618
  %v1651 = vld [vmem:[#allocation3 + $0x7] sm:$0xff]
  %v1652 = vld [vmem:[#allocation3 + $0xf] sm:$0xff]
  %v1653 = vld [vmem:[#allocation3 + $0x17] sm:$0xff]
  %v1654 = vld [vmem:[#allocation3 + $0x1f] sm:$0xff]
  %v1655 = vld [vmem:[#allocation3 + $0x27] sm:$0xff]
  %v1656 = vld [vmem:[#allocation3 + $0x2f] sm:$0xff]
  %v1657 = vld [vmem:[#allocation3 + $0x37] sm:$0xff]
  %v1658 = vld [vmem:[#allocation3 + $0x3f] sm:$0xff]
  %v1659 = vld [vmem:[#allocation3 + $0x47] sm:$0xff]
  %v1660 = vld [vmem:[#allocation3 + $0x4f] sm:$0xff]
  %v1661 = vld [vmem:[#allocation3 + $0x57] sm:$0xff]
  %v1662 = vld [vmem:[#allocation3 + $0x5f] sm:$0xff]
  %v1663 = vld [vmem:[#allocation3 + $0x67] sm:$0xff]
  %v1664 = vld [vmem:[#allocation3 + $0x6f] sm:$0xff]
  %v1665 = vld [vmem:[#allocation3 + $0x77] sm:$0xff]
  %v1666 = vld [vmem:[#allocation3 + $0x7f] sm:$0xff]
  %v1667 = vld [vmem:[#allocation3 + $0x87] sm:$0xff]
  %v1668 = vld [vmem:[#allocation3 + $0x8f] sm:$0xff]
  %v1669 = vld [vmem:[#allocation3 + $0x97] sm:$0xff]
  %v1670 = vld [vmem:[#allocation3 + $0x9f] sm:$0xff]
  %v1671 = vld [vmem:[#allocation3 + $0xa7] sm:$0xff]
  %v1672 = vld [vmem:[#allocation3 + $0xaf] sm:$0xff]
  %v1673 = vld [vmem:[#allocation3 + $0xb7] sm:$0xff]
  %v1674 = vld [vmem:[#allocation3 + $0xbf] sm:$0xff]
  %v1675 = vld [vmem:[#allocation3 + $0xc7] sm:$0xff]
  %v1676 = vld [vmem:[#allocation3 + $0xcf] sm:$0xff]
  %v1677 = vld [vmem:[#allocation3 + $0xd7] sm:$0xff]
  %v1678 = vld [vmem:[#allocation3 + $0xdf] sm:$0xff]
  %v1679 = vld [vmem:[#allocation3 + $0xe7] sm:$0xff]
  %v1680 = vld [vmem:[#allocation3 + $0xef] sm:$0xff]
  %v1681 = vld [vmem:[#allocation3 + $0xf7] sm:$0xff]
  %v1682 = vld [vmem:[#allocation3 + $0xff] sm:$0xff]
  %v1683 = vld [vmem:[%s2] sm:$0xff]
  %v1684 = vld [vmem:[%s2 + $0x8] sm:$0xff]
  %v1685 = vld [vmem:[%s2 + $0x10] sm:$0xff]
  %v1686 = vld [vmem:[%s2 + $0x18] sm:$0xff]
  %v1687 = vld [vmem:[%s2 + $0x20] sm:$0xff]
  %v1688 = vld [vmem:[%s2 + $0x28] sm:$0xff]
  %v1689 = vld [vmem:[%s2 + $0x30] sm:$0xff]
  %v1690 = vld [vmem:[%s2 + $0x38] sm:$0xff]
  %v1691 = vld [vmem:[#allocation2 + $0x8] sm:$0xff]
  %v1692 = vld [vmem:[#allocation2 + $0x10] sm:$0xff]
  %v1693 = vld [vmem:[#allocation2 + $0x18] sm:$0xff]
  %v1694 = vld [vmem:[#allocation2 + $0x20] sm:$0xff]
  %v1695 = vld [vmem:[#allocation2 + $0x28] sm:$0xff]
  %v1696 = vld [vmem:[#allocation2 + $0x30] sm:$0xff]
  %v1697 = vld [vmem:[#allocation2 + $0x38] sm:$0xff]
  %v1698 = vld [vmem:[#allocation2 + $0x40] sm:$0xff]
  %v1699 = vld [vmem:[#allocation2 + $0x48] sm:$0xff]
  %v1700 = vld [vmem:[#allocation2 + $0x50] sm:$0xff]
  %v1701 = vld [vmem:[#allocation2 + $0x58] sm:$0xff]
  %v1702 = vld [vmem:[#allocation2 + $0x60] sm:$0xff]
  %v1703 = vld [vmem:[#allocation2 + $0x68] sm:$0xff]
  %v1704 = vld [vmem:[#allocation2 + $0x70] sm:$0xff]
  %v1705 = vld [vmem:[#allocation2 + $0x78] sm:$0xff]
  %v1706 = vld [vmem:[#allocation2 + $0x80] sm:$0xff]
  %v1707 = vld [vmem:[#allocation2 + $0x88] sm:$0xff]
  %v1708 = vld [vmem:[#allocation2 + $0x90] sm:$0xff]
  %v1709 = vld [vmem:[#allocation2 + $0x98] sm:$0xff]
  %v1710 = vld [vmem:[#allocation2 + $0xa0] sm:$0xff]
  %v1711 = vld [vmem:[#allocation2 + $0xa8] sm:$0xff]
  %v1712 = vld [vmem:[#allocation2 + $0xb0] sm:$0xff]
  %v1713 = vld [vmem:[#allocation2 + $0xb8] sm:$0xff]
  %v1714 = vld [vmem:[#allocation2 + $0xc0] sm:$0xff]
  %v1715 = vld [vmem:[#allocation2 + $0xc8] sm:$0xff]
  %v1716 = vld [vmem:[#allocation2 + $0xd0] sm:$0xff]
  %v1717 = vld [vmem:[#allocation2 + $0xd8] sm:$0xff]
  %v1718 = vld [vmem:[#allocation2 + $0xe0] sm:$0xff]
  %v1719 = vld [vmem:[#allocation2 + $0xe8] sm:$0xff]
  %v1720 = vld [vmem:[#allocation2 + $0xf0] sm:$0xff]
  %v1721 = vld [vmem:[#allocation2 + $0xf8] sm:$0xff]
  %v1722 = vld [vmem:[#allocation2 + $0x100] sm:$0xff]
  %v1723 = vld [vmem:[%s2 + $0x40] sm:$0xff]
  %v1724 = vld [vmem:[%s2 + $0x48] sm:$0xff]
  %v1725 = vld [vmem:[%s2 + $0x50] sm:$0xff]
  %v1726 = vld [vmem:[%s2 + $0x58] sm:$0xff]
  %v1727 = vld [vmem:[%s2 + $0x60] sm:$0xff]
  %v1728 = vld [vmem:[%s2 + $0x68] sm:$0xff]
  %v1729 = vld [vmem:[%s2 + $0x70] sm:$0xff]
  %v1730 = vld [vmem:[%s2 + $0x78] sm:$0xff]
  %v1732 = vsel %vm1015, %v1691, 0
  %v1735 = vsel %vm1015, %v1692, 0
  %v1738 = vsel %vm1015, %v1693, 0
  %v1741 = vsel %vm1015, %v1694, 0
  %v1744 = vsel %vm1015, %v1695, 0
  %v1747 = vsel %vm1015, %v1696, 0
  %v1750 = vsel %vm1015, %v1697, 0
  %v1753 = vsel %vm1015, %v1698, 0
  %v1756 = vsel %vm1015, %v1699, 0
  %v1759 = vsel %vm1015, %v1700, 0
  %v1762 = vsel %vm1015, %v1701, 0
  %v1765 = vsel %vm1015, %v1702, 0
  %v1768 = vsel %vm1015, %v1703, 0
  %v1771 = vsel %vm1015, %v1704, 0
  %v1774 = vsel %vm1015, %v1705, 0
  %v1777 = vsel %vm1015, %v1706, 0
  %v1780 = vsel %vm1015, %v1707, 0
  %v1783 = vsel %vm1015, %v1708, 0
  %v1786 = vsel %vm1015, %v1709, 0
  %v1789 = vsel %vm1015, %v1710, 0
  %v1792 = vsel %vm1015, %v1711, 0
  %v1795 = vsel %vm1015, %v1712, 0
  %v1798 = vsel %vm1015, %v1713, 0
  %v1801 = vsel %vm1015, %v1714, 0
  %v1804 = vsel %vm1015, %v1715, 0
  %v1807 = vsel %vm1015, %v1716, 0
  %v1810 = vsel %vm1015, %v1717, 0
  %v1813 = vsel %vm1015, %v1718, 0
  %v1816 = vsel %vm1015, %v1719, 0
  %v1819 = vsel %vm1015, %v1720, 0
  %v1822 = vsel %vm1015, %v1721, 0
  %v1825 = vsel %vm1015, %v1722, 0
  %1827 = vmatprep.subr.mxu0 0.0
  %1828 = vmatpush1.msra.mxu0 0.0
  %1829 = vmatprep.subr.mxu0 0.0
  %1830 = vmatpush1.msra.mxu0 0.0
  %1831 = vmatprep.subr.mxu0 0.0
  %1832 = vmatpush1.msra.mxu0 0.0
  %1833 = vmatprep.subr.mxu0 0.0
  %1834 = vmatpush1.msra.mxu0 0.0
  %1835 = vmatprep.subr.mxu0 0.0
  %1836 = vmatpush1.msra.mxu0 0.0
  %1837 = vmatprep.subr.mxu0 0.0
  %1838 = vmatpush1.msra.mxu0 0.0
  %1839 = vmatprep.subr.mxu0 0.0
  %1840 = vmatpush1.msra.mxu0 0.0
  %1841 = vmatprep.subr.mxu0 0.0
  %1842 = vmatpush1.msra.mxu0 0.0
  %1843 = vmatprep.subr.mxu0 0.0
  %1844 = vmatpush1.msra.mxu0 %v1730
  %1845 = vmatprep.subr.mxu0 0.0
  %1846 = vmatpush1.msra.mxu0 %v1729
  %1847 = vmatprep.subr.mxu0 0.0
  %1848 = vmatpush1.msra.mxu0 %v1728
  %1849 = vmatprep.subr.mxu0 0.0
  %1850 = vmatpush1.msra.mxu0 %v1727
  %1851 = vmatprep.subr.mxu0 0.0
  %1852 = vmatpush1.msra.mxu0 %v1726
  %1853 = vmatprep.subr.mxu0 0.0
  %1854 = vmatpush1.msra.mxu0 %v1725
  %1855 = vmatprep.subr.mxu0 0.0
  %1856 = vmatpush1.msra.mxu0 %v1724
  %1857 = vmatprep.subr.mxu0 0.0
  %1858 = vmatpush1.msra.mxu0 %v1723
  %1859 = vmatprep.subr.mxu0 0.0
  %1860 = vmatpush2.msra.mxu0 0.0
  %1861 = vmatprep.subr.mxu0 0.0
  %1862 = vmatpush2.msra.mxu0 0.0
  %1863 = vmatprep.subr.mxu0 0.0
  %1864 = vmatpush2.msra.mxu0 0.0
  %1865 = vmatprep.subr.mxu0 0.0
  %1866 = vmatpush2.msra.mxu0 0.0
  %1867 = vmatprep.subr.mxu0 0.0
  %1868 = vmatpush2.msra.mxu0 0.0
  %1869 = vmatprep.subr.mxu0 0.0
  %1870 = vmatpush2.msra.mxu0 0.0
  %1871 = vmatprep.subr.mxu0 0.0
  %1872 = vmatpush2.msra.mxu0 0.0
  %1873 = vmatprep.subr.mxu0 0.0
  %1874 = vmatpush2.msra.mxu0 0.0
  %1875 = vmatprep.subr.mxu0 0.0
  %1876 = vmatpush2.msra.mxu0 0.0
  %1877 = vmatprep.subr.mxu0 0.0
  %1878 = vmatpush2.msra.mxu0 0.0
  %1879 = vmatprep.subr.mxu0 0.0
  %1880 = vmatpush2.msra.mxu0 0.0
  %1881 = vmatprep.subr.mxu0 0.0
  %1882 = vmatpush2.msra.mxu0 0.0
  %1883 = vmatprep.subr.mxu0 0.0
  %1884 = vmatpush2.msra.mxu0 0.0
  %1885 = vmatprep.subr.mxu0 0.0
  %1886 = vmatpush2.msra.mxu0 0.0
  %1887 = vmatprep.subr.mxu0 0.0
  %1888 = vmatpush2.msra.mxu0 0.0
  %1889 = vmatprep.subr.mxu0 0.0
  %1890 = vmatpush2.msra.mxu0 0.0
  %1891 = vmatprep.mubr.f32.mxu0 0.0
  %1892 = vmatmul.mubr.f32.gmra.mxu0 %v1732
  %v1893 = vpop.f32.mrf.mxu0
  %v1894 = vadd.f32 0.0, %v1893
  %v1895 = vpop.f32.mrf.mxu0
  %1896 = vmatprep.mubr.f32.mxu0 0.0
  %1897 = vmatmul.mubr.f32.gmra.mxu0 %v1735
  %v1898 = vpop.f32.mrf.mxu0
  %v1899 = vadd.f32 0.0, %v1898
  %v1900 = vpop.f32.mrf.mxu0
  %1901 = vmatprep.mubr.f32.mxu0 0.0
  %1902 = vmatmul.mubr.f32.gmra.mxu0 %v1738
  %v1903 = vpop.f32.mrf.mxu0
  %v1904 = vadd.f32 0.0, %v1903
  %v1905 = vpop.f32.mrf.mxu0
  %1906 = vmatprep.mubr.f32.mxu0 0.0
  %1907 = vmatmul.mubr.f32.gmra.mxu0 %v1741
  %v1908 = vpop.f32.mrf.mxu0
  %v1909 = vadd.f32 0.0, %v1908
  %v1910 = vpop.f32.mrf.mxu0
  %1911 = vmatprep.mubr.f32.mxu0 0.0
  %1912 = vmatmul.mubr.f32.gmra.mxu0 %v1744
  %v1913 = vpop.f32.mrf.mxu0
  %v1914 = vadd.f32 0.0, %v1913
  %v1915 = vpop.f32.mrf.mxu0
  %1916 = vmatprep.mubr.f32.mxu0 0.0
  %1917 = vmatmul.mubr.f32.gmra.mxu0 %v1747
  %v1918 = vpop.f32.mrf.mxu0
  %v1919 = vadd.f32 0.0, %v1918
  %v1920 = vpop.f32.mrf.mxu0
  %1921 = vmatprep.mubr.f32.mxu0 0.0
  %1922 = vmatmul.mubr.f32.gmra.mxu0 %v1750
  %v1923 = vpop.f32.mrf.mxu0
  %v1924 = vadd.f32 0.0, %v1923
  %v1925 = vpop.f32.mrf.mxu0
  %1926 = vmatprep.mubr.f32.mxu0 0.0
  %1927 = vmatmul.mubr.f32.gmra.mxu0 %v1753
  %v1928 = vpop.f32.mrf.mxu0
  %v1929 = vadd.f32 0.0, %v1928
  %v1930 = vpop.f32.mrf.mxu0
  %1931 = vmatprep.mubr.f32.mxu0 0.0
  %1932 = vmatmul.mubr.f32.gmra.mxu0 %v1756
  %v1933 = vpop.f32.mrf.mxu0
  %v1934 = vadd.f32 0.0, %v1933
  %v1935 = vpop.f32.mrf.mxu0
  %1936 = vmatprep.mubr.f32.mxu0 0.0
  %1937 = vmatmul.mubr.f32.gmra.mxu0 %v1759
  %v1938 = vpop.f32.mrf.mxu0
  %v1939 = vadd.f32 0.0, %v1938
  %v1940 = vpop.f32.mrf.mxu0
  %1941 = vmatprep.mubr.f32.mxu0 0.0
  %1942 = vmatmul.mubr.f32.gmra.mxu0 %v1762
  %v1943 = vpop.f32.mrf.mxu0
  %v1944 = vadd.f32 0.0, %v1943
  %v1945 = vpop.f32.mrf.mxu0
  %1946 = vmatprep.mubr.f32.mxu0 0.0
  %1947 = vmatmul.mubr.f32.gmra.mxu0 %v1765
  %v1948 = vpop.f32.mrf.mxu0
  %v1949 = vadd.f32 0.0, %v1948
  %v1950 = vpop.f32.mrf.mxu0
  %1951 = vmatprep.mubr.f32.mxu0 0.0
  %1952 = vmatmul.mubr.f32.gmra.mxu0 %v1768
  %v1953 = vpop.f32.mrf.mxu0
  %v1954 = vadd.f32 0.0, %v1953
  %v1955 = vpop.f32.mrf.mxu0
  %1956 = vmatprep.mubr.f32.mxu0 0.0
  %1957 = vmatmul.mubr.f32.gmra.mxu0 %v1771
  %v1958 = vpop.f32.mrf.mxu0
  %v1959 = vadd.f32 0.0, %v1958
  %v1960 = vpop.f32.mrf.mxu0
  %1961 = vmatprep.mubr.f32.mxu0 0.0
  %1962 = vmatmul.mubr.f32.gmra.mxu0 %v1774
  %v1963 = vpop.f32.mrf.mxu0
  %v1964 = vadd.f32 0.0, %v1963
  %v1965 = vpop.f32.mrf.mxu0
  %1966 = vmatprep.mubr.f32.mxu0 0.0
  %1967 = vmatmul.mubr.f32.gmra.mxu0 %v1777
  %v1968 = vpop.f32.mrf.mxu0
  %v1969 = vadd.f32 0.0, %v1968
  %v1970 = vpop.f32.mrf.mxu0
  %1971 = vmatprep.mubr.f32.mxu0 0.0
  %1972 = vmatmul.mubr.f32.gmra.mxu0 %v1780
  %v1973 = vpop.f32.mrf.mxu0
  %v1974 = vadd.f32 0.0, %v1973
  %v1975 = vpop.f32.mrf.mxu0
  %1976 = vmatprep.mubr.f32.mxu0 0.0
  %1977 = vmatmul.mubr.f32.gmra.mxu0 %v1783
  %v1978 = vpop.f32.mrf.mxu0
  %v1979 = vadd.f32 0.0, %v1978
  %v1980 = vpop.f32.mrf.mxu0
  %1981 = vmatprep.mubr.f32.mxu0 0.0
  %1982 = vmatmul.mubr.f32.gmra.mxu0 %v1786
  %v1983 = vpop.f32.mrf.mxu0
  %v1984 = vadd.f32 0.0, %v1983
  %v1985 = vpop.f32.mrf.mxu0
  %1986 = vmatprep.mubr.f32.mxu0 0.0
  %1987 = vmatmul.mubr.f32.gmra.mxu0 %v1789
  %v1988 = vpop.f32.mrf.mxu0
  %v1989 = vadd.f32 0.0, %v1988
  %v1990 = vpop.f32.mrf.mxu0
  %1991 = vmatprep.mubr.f32.mxu0 0.0
  %1992 = vmatmul.mubr.f32.gmra.mxu0 %v1792
  %v1993 = vpop.f32.mrf.mxu0
  %v1994 = vadd.f32 0.0, %v1993
  %v1995 = vpop.f32.mrf.mxu0
  %1996 = vmatprep.mubr.f32.mxu0 0.0
  %1997 = vmatmul.mubr.f32.gmra.mxu0 %v1795
  %v1998 = vpop.f32.mrf.mxu0
  %v1999 = vadd.f32 0.0, %v1998
  %v2000 = vpop.f32.mrf.mxu0
  %2001 = vmatprep.mubr.f32.mxu0 0.0
  %2002 = vmatmul.mubr.f32.gmra.mxu0 %v1798
  %v2003 = vpop.f32.mrf.mxu0
  %v2004 = vadd.f32 0.0, %v2003
  %v2005 = vpop.f32.mrf.mxu0
  %2006 = vmatprep.mubr.f32.mxu0 0.0
  %2007 = vmatmul.mubr.f32.gmra.mxu0 %v1801
  %v2008 = vpop.f32.mrf.mxu0
  %v2009 = vadd.f32 0.0, %v2008
  %v2010 = vpop.f32.mrf.mxu0
  %2011 = vmatprep.mubr.f32.mxu0 0.0
  %2012 = vmatmul.mubr.f32.gmra.mxu0 %v1804
  %v2013 = vpop.f32.mrf.mxu0
  %v2014 = vadd.f32 0.0, %v2013
  %v2015 = vpop.f32.mrf.mxu0
  %2016 = vmatprep.mubr.f32.mxu0 0.0
  %2017 = vmatmul.mubr.f32.gmra.mxu0 %v1807
  %v2018 = vpop.f32.mrf.mxu0
  %v2019 = vadd.f32 0.0, %v2018
  %v2020 = vpop.f32.mrf.mxu0
  %2021 = vmatprep.mubr.f32.mxu0 0.0
  %2022 = vmatmul.mubr.f32.gmra.mxu0 %v1810
  %v2023 = vpop.f32.mrf.mxu0
  %v2024 = vadd.f32 0.0, %v2023
  %v2025 = vpop.f32.mrf.mxu0
  %2026 = vmatprep.mubr.f32.mxu0 0.0
  %2027 = vmatmul.mubr.f32.gmra.mxu0 %v1813
  %v2028 = vpop.f32.mrf.mxu0
  %v2029 = vadd.f32 0.0, %v2028
  %v2030 = vpop.f32.mrf.mxu0
  %2031 = vmatprep.mubr.f32.mxu0 0.0
  %2032 = vmatmul.mubr.f32.gmra.mxu0 %v1816
  %v2033 = vpop.f32.mrf.mxu0
  %v2034 = vadd.f32 0.0, %v2033
  %v2035 = vpop.f32.mrf.mxu0
  %2036 = vmatprep.mubr.f32.mxu0 0.0
  %2037 = vmatmul.mubr.f32.gmra.mxu0 %v1819
  %v2038 = vpop.f32.mrf.mxu0
  %v2039 = vadd.f32 0.0, %v2038
  %v2040 = vpop.f32.mrf.mxu0
  %2041 = vmatprep.mubr.f32.mxu0 0.0
  %2042 = vmatmul.mubr.f32.gmra.mxu0 %v1822
  %v2043 = vpop.f32.mrf.mxu0
  %v2044 = vadd.f32 0.0, %v2043
  %v2045 = vpop.f32.mrf.mxu0
  %2046 = vmatprep.mubr.f32.mxu0 0.0
  %2047 = vmatmul.mubr.f32.gmra.mxu0 %v1825
  %v2048 = vpop.f32.mrf.mxu0
  %v2049 = vadd.f32 0.0, %v2048
  %v2050 = vpop.f32.mrf.mxu0
  %2051 = vdwg.mxu0
  %v2053 = vsel %vm1015, %v1651, 0
  %v2056 = vsel %vm1015, %v1652, 0
  %v2059 = vsel %vm1015, %v1653, 0
  %v2062 = vsel %vm1015, %v1654, 0
  %v2065 = vsel %vm1015, %v1655, 0
  %v2068 = vsel %vm1015, %v1656, 0
  %v2071 = vsel %vm1015, %v1657, 0
  %v2074 = vsel %vm1015, %v1658, 0
  %v2077 = vsel %vm1015, %v1659, 0
  %v2080 = vsel %vm1015, %v1660, 0
  %v2083 = vsel %vm1015, %v1661, 0
  %v2086 = vsel %vm1015, %v1662, 0
  %v2089 = vsel %vm1015, %v1663, 0
  %v2092 = vsel %vm1015, %v1664, 0
  %v2095 = vsel %vm1015, %v1665, 0
  %v2098 = vsel %vm1015, %v1666, 0
  %v2101 = vsel %vm1015, %v1667, 0
  %v2104 = vsel %vm1015, %v1668, 0
  %v2107 = vsel %vm1015, %v1669, 0
  %v2110 = vsel %vm1015, %v1670, 0
  %v2113 = vsel %vm1015, %v1671, 0
  %v2116 = vsel %vm1015, %v1672, 0
  %v2119 = vsel %vm1015, %v1673, 0
  %v2122 = vsel %vm1015, %v1674, 0
  %v2125 = vsel %vm1015, %v1675, 0
  %v2128 = vsel %vm1015, %v1676, 0
  %v2131 = vsel %vm1015, %v1677, 0
  %v2134 = vsel %vm1015, %v1678, 0
  %v2137 = vsel %vm1015, %v1679, 0
  %v2140 = vsel %vm1015, %v1680, 0
  %v2143 = vsel %vm1015, %v1681, 0
  %v2146 = vsel %vm1015, %v1682, 0
  %2148 = vmatprep.subr.mxu0 0.0
  %2149 = vmatpush1.msra.mxu0 0.0
  %2150 = vmatprep.subr.mxu0 0.0
  %2151 = vmatpush1.msra.mxu0 0.0
  %2152 = vmatprep.subr.mxu0 0.0
  %2153 = vmatpush1.msra.mxu0 0.0
  %2154 = vmatprep.subr.mxu0 0.0
  %2155 = vmatpush1.msra.mxu0 0.0
  %2156 = vmatprep.subr.mxu0 0.0
  %2157 = vmatpush1.msra.mxu0 0.0
  %2158 = vmatprep.subr.mxu0 0.0
  %2159 = vmatpush1.msra.mxu0 0.0
  %2160 = vmatprep.subr.mxu0 0.0
  %2161 = vmatpush1.msra.mxu0 0.0
  %2162 = vmatprep.subr.mxu0 0.0
  %2163 = vmatpush1.msra.mxu0 0.0
  %2164 = vmatprep.subr.mxu0 0.0
  %2165 = vmatpush1.msra.mxu0 %v1690
  %2166 = vmatprep.subr.mxu0 0.0
  %2167 = vmatpush1.msra.mxu0 %v1689
  %2168 = vmatprep.subr.mxu0 0.0
  %2169 = vmatpush1.msra.mxu0 %v1688
  %2170 = vmatprep.subr.mxu0 0.0
  %2171 = vmatpush1.msra.mxu0 %v1687
  %2172 = vmatprep.subr.mxu0 0.0
  %2173 = vmatpush1.msra.mxu0 %v1686
  %2174 = vmatprep.subr.mxu0 0.0
  %2175 = vmatpush1.msra.mxu0 %v1685
  %2176 = vmatprep.subr.mxu0 0.0
  %2177 = vmatpush1.msra.mxu0 %v1684
  %2178 = vmatprep.subr.mxu0 0.0
  %2179 = vmatpush1.msra.mxu0 %v1683
  %2180 = vmatprep.subr.mxu0 0.0
  %2181 = vmatpush2.msra.mxu0 0.0
  %2182 = vmatprep.subr.mxu0 0.0
  %2183 = vmatpush2.msra.mxu0 0.0
  %2184 = vmatprep.subr.mxu0 0.0
  %2185 = vmatpush2.msra.mxu0 0.0
  %2186 = vmatprep.subr.mxu0 0.0
  %2187 = vmatpush2.msra.mxu0 0.0
  %2188 = vmatprep.subr.mxu0 0.0
  %2189 = vmatpush2.msra.mxu0 0.0
  %2190 = vmatprep.subr.mxu0 0.0
  %2191 = vmatpush2.msra.mxu0 0.0
  %2192 = vmatprep.subr.mxu0 0.0
  %2193 = vmatpush2.msra.mxu0 0.0
  %2194 = vmatprep.subr.mxu0 0.0
  %2195 = vmatpush2.msra.mxu0 0.0
  %2196 = vmatprep.subr.mxu0 0.0
  %2197 = vmatpush2.msra.mxu0 0.0
  %2198 = vmatprep.subr.mxu0 0.0
  %2199 = vmatpush2.msra.mxu0 0.0
  %2200 = vmatprep.subr.mxu0 0.0
  %2201 = vmatpush2.msra.mxu0 0.0
  %2202 = vmatprep.subr.mxu0 0.0
  %2203 = vmatpush2.msra.mxu0 0.0
  %2204 = vmatprep.subr.mxu0 0.0
  %2205 = vmatpush2.msra.mxu0 0.0
  %2206 = vmatprep.subr.mxu0 0.0
  %2207 = vmatpush2.msra.mxu0 0.0
  %2208 = vmatprep.subr.mxu0 0.0
  %2209 = vmatpush2.msra.mxu0 0.0
  %2210 = vmatprep.subr.mxu0 0.0
  %2211 = vmatpush2.msra.mxu0 0.0
  %2212 = vmatprep.mubr.f32.mxu0 0.0
  %2213 = vmatmul.mubr.f32.gmra.mxu0 %v2053
  %v2214 = vpop.f32.mrf.mxu0
  %v2215 = vadd.f32 %v1894, %v2214
  %v2216 = vpop.f32.mrf.mxu0
  %2217 = vmatprep.mubr.f32.mxu0 0.0
  %2218 = vmatmul.mubr.f32.gmra.mxu0 %v2056
  %v2219 = vpop.f32.mrf.mxu0
  %v2220 = vadd.f32 %v1899, %v2219
  %v2221 = vpop.f32.mrf.mxu0
  %2222 = vmatprep.mubr.f32.mxu0 0.0
  %2223 = vmatmul.mubr.f32.gmra.mxu0 %v2059
  %v2224 = vpop.f32.mrf.mxu0
  %v2225 = vadd.f32 %v1904, %v2224
  %v2226 = vpop.f32.mrf.mxu0
  %2227 = vmatprep.mubr.f32.mxu0 0.0
  %2228 = vmatmul.mubr.f32.gmra.mxu0 %v2062
  %v2229 = vpop.f32.mrf.mxu0
  %v2230 = vadd.f32 %v1909, %v2229
  %v2231 = vpop.f32.mrf.mxu0
  %2232 = vmatprep.mubr.f32.mxu0 0.0
  %2233 = vmatmul.mubr.f32.gmra.mxu0 %v2065
  %v2234 = vpop.f32.mrf.mxu0
  %v2235 = vadd.f32 %v1914, %v2234
  %v2236 = vpop.f32.mrf.mxu0
  %2237 = vmatprep.mubr.f32.mxu0 0.0
  %2238 = vmatmul.mubr.f32.gmra.mxu0 %v2068
  %v2239 = vpop.f32.mrf.mxu0
  %v2240 = vadd.f32 %v1919, %v2239
  %v2241 = vpop.f32.mrf.mxu0
  %2242 = vmatprep.mubr.f32.mxu0 0.0
  %2243 = vmatmul.mubr.f32.gmra.mxu0 %v2071
  %v2244 = vpop.f32.mrf.mxu0
  %v2245 = vadd.f32 %v1924, %v2244
  %v2246 = vpop.f32.mrf.mxu0
  %2247 = vmatprep.mubr.f32.mxu0 0.0
  %2248 = vmatmul.mubr.f32.gmra.mxu0 %v2074
  %v2249 = vpop.f32.mrf.mxu0
  %v2250 = vadd.f32 %v1929, %v2249
  %v2251 = vpop.f32.mrf.mxu0
  %2252 = vmatprep.mubr.f32.mxu0 0.0
  %2253 = vmatmul.mubr.f32.gmra.mxu0 %v2077
  %v2254 = vpop.f32.mrf.mxu0
  %v2255 = vadd.f32 %v1934, %v2254
  %v2256 = vpop.f32.mrf.mxu0
  %2257 = vmatprep.mubr.f32.mxu0 0.0
  %2258 = vmatmul.mubr.f32.gmra.mxu0 %v2080
  %v2259 = vpop.f32.mrf.mxu0
  %v2260 = vadd.f32 %v1939, %v2259
  %v2261 = vpop.f32.mrf.mxu0
  %2262 = vmatprep.mubr.f32.mxu0 0.0
  %2263 = vmatmul.mubr.f32.gmra.mxu0 %v2083
  %v2264 = vpop.f32.mrf.mxu0
  %v2265 = vadd.f32 %v1944, %v2264
  %v2266 = vpop.f32.mrf.mxu0
  %2267 = vmatprep.mubr.f32.mxu0 0.0
  %2268 = vmatmul.mubr.f32.gmra.mxu0 %v2086
  %v2269 = vpop.f32.mrf.mxu0
  %v2270 = vadd.f32 %v1949, %v2269
  %v2271 = vpop.f32.mrf.mxu0
  %2272 = vmatprep.mubr.f32.mxu0 0.0
  %2273 = vmatmul.mubr.f32.gmra.mxu0 %v2089
  %v2274 = vpop.f32.mrf.mxu0
  %v2275 = vadd.f32 %v1954, %v2274
  %v2276 = vpop.f32.mrf.mxu0
  %2277 = vmatprep.mubr.f32.mxu0 0.0
  %2278 = vmatmul.mubr.f32.gmra.mxu0 %v2092
  %v2279 = vpop.f32.mrf.mxu0
  %v2280 = vadd.f32 %v1959, %v2279
  %v2281 = vpop.f32.mrf.mxu0
  %2282 = vmatprep.mubr.f32.mxu0 0.0
  %2283 = vmatmul.mubr.f32.gmra.mxu0 %v2095
  %v2284 = vpop.f32.mrf.mxu0
  %v2285 = vadd.f32 %v1964, %v2284
  %v2286 = vpop.f32.mrf.mxu0
  %2287 = vmatprep.mubr.f32.mxu0 0.0
  %2288 = vmatmul.mubr.f32.gmra.mxu0 %v2098
  %v2289 = vpop.f32.mrf.mxu0
  %v2290 = vadd.f32 %v1969, %v2289
  %v2291 = vpop.f32.mrf.mxu0
  %2292 = vmatprep.mubr.f32.mxu0 0.0
  %2293 = vmatmul.mubr.f32.gmra.mxu0 %v2101
  %v2294 = vpop.f32.mrf.mxu0
  %v2295 = vadd.f32 %v1974, %v2294
  %v2296 = vpop.f32.mrf.mxu0
  %2297 = vmatprep.mubr.f32.mxu0 0.0
  %2298 = vmatmul.mubr.f32.gmra.mxu0 %v2104
  %v2299 = vpop.f32.mrf.mxu0
  %v2300 = vadd.f32 %v1979, %v2299
  %v2301 = vpop.f32.mrf.mxu0
  %2302 = vmatprep.mubr.f32.mxu0 0.0
  %2303 = vmatmul.mubr.f32.gmra.mxu0 %v2107
  %v2304 = vpop.f32.mrf.mxu0
  %v2305 = vadd.f32 %v1984, %v2304
  %v2306 = vpop.f32.mrf.mxu0
  %2307 = vmatprep.mubr.f32.mxu0 0.0
  %2308 = vmatmul.mubr.f32.gmra.mxu0 %v2110
  %v2309 = vpop.f32.mrf.mxu0
  %v2310 = vadd.f32 %v1989, %v2309
  %v2311 = vpop.f32.mrf.mxu0
  %2312 = vmatprep.mubr.f32.mxu0 0.0
  %2313 = vmatmul.mubr.f32.gmra.mxu0 %v2113
  %v2314 = vpop.f32.mrf.mxu0
  %v2315 = vadd.f32 %v1994, %v2314
  %v2316 = vpop.f32.mrf.mxu0
  %2317 = vmatprep.mubr.f32.mxu0 0.0
  %2318 = vmatmul.mubr.f32.gmra.mxu0 %v2116
  %v2319 = vpop.f32.mrf.mxu0
  %v2320 = vadd.f32 %v1999, %v2319
  %v2321 = vpop.f32.mrf.mxu0
  %2322 = vmatprep.mubr.f32.mxu0 0.0
  %2323 = vmatmul.mubr.f32.gmra.mxu0 %v2119
  %v2324 = vpop.f32.mrf.mxu0
  %v2325 = vadd.f32 %v2004, %v2324
  %v2326 = vpop.f32.mrf.mxu0
  %2327 = vmatprep.mubr.f32.mxu0 0.0
  %2328 = vmatmul.mubr.f32.gmra.mxu0 %v2122
  %v2329 = vpop.f32.mrf.mxu0
  %v2330 = vadd.f32 %v2009, %v2329
  %v2331 = vpop.f32.mrf.mxu0
  %2332 = vmatprep.mubr.f32.mxu0 0.0
  %2333 = vmatmul.mubr.f32.gmra.mxu0 %v2125
  %v2334 = vpop.f32.mrf.mxu0
  %v2335 = vadd.f32 %v2014, %v2334
  %v2336 = vpop.f32.mrf.mxu0
  %2337 = vmatprep.mubr.f32.mxu0 0.0
  %2338 = vmatmul.mubr.f32.gmra.mxu0 %v2128
  %v2339 = vpop.f32.mrf.mxu0
  %v2340 = vadd.f32 %v2019, %v2339
  %v2341 = vpop.f32.mrf.mxu0
  %2342 = vmatprep.mubr.f32.mxu0 0.0
  %2343 = vmatmul.mubr.f32.gmra.mxu0 %v2131
  %v2344 = vpop.f32.mrf.mxu0
  %v2345 = vadd.f32 %v2024, %v2344
  %v2346 = vpop.f32.mrf.mxu0
  %2347 = vmatprep.mubr.f32.mxu0 0.0
  %2348 = vmatmul.mubr.f32.gmra.mxu0 %v2134
  %v2349 = vpop.f32.mrf.mxu0
  %v2350 = vadd.f32 %v2029, %v2349
  %v2351 = vpop.f32.mrf.mxu0
  %2352 = vmatprep.mubr.f32.mxu0 0.0
  %2353 = vmatmul.mubr.f32.gmra.mxu0 %v2137
  %v2354 = vpop.f32.mrf.mxu0
  %v2355 = vadd.f32 %v2034, %v2354
  %v2356 = vpop.f32.mrf.mxu0
  %2357 = vmatprep.mubr.f32.mxu0 0.0
  %2358 = vmatmul.mubr.f32.gmra.mxu0 %v2140
  %v2359 = vpop.f32.mrf.mxu0
  %v2360 = vadd.f32 %v2039, %v2359
  %v2361 = vpop.f32.mrf.mxu0
  %2362 = vmatprep.mubr.f32.mxu0 0.0
  %2363 = vmatmul.mubr.f32.gmra.mxu0 %v2143
  %v2364 = vpop.f32.mrf.mxu0
  %v2365 = vadd.f32 %v2044, %v2364
  %v2366 = vpop.f32.mrf.mxu0
  %2367 = vmatprep.mubr.f32.mxu0 0.0
  %2368 = vmatmul.mubr.f32.gmra.mxu0 %v2146
  %v2369 = vpop.f32.mrf.mxu0
  %v2370 = vadd.f32 %v2049, %v2369
  %v2371 = vpop.f32.mrf.mxu0
  %2372 = vdwg.mxu0
  %v2373 = vld [vmem:[#allocation4 + $0x9] sm:$0xff]
  %v2374 = vld [vmem:[#allocation4 + $0x11] sm:$0xff]
  %v2375 = vld [vmem:[#allocation4 + $0x19] sm:$0xff]
  %v2376 = vld [vmem:[#allocation4 + $0x21] sm:$0xff]
  %v2377 = vld [vmem:[#allocation4 + $0x29] sm:$0xff]
  %v2378 = vld [vmem:[#allocation4 + $0x31] sm:$0xff]
  %v2379 = vld [vmem:[#allocation4 + $0x39] sm:$0xff]
  %v2380 = vld [vmem:[#allocation4 + $0x41] sm:$0xff]
  %v2381 = vld [vmem:[#allocation4 + $0x49] sm:$0xff]
  %v2382 = vld [vmem:[#allocation4 + $0x51] sm:$0xff]
  %v2383 = vld [vmem:[#allocation4 + $0x59] sm:$0xff]
  %v2384 = vld [vmem:[#allocation4 + $0x61] sm:$0xff]
  %v2385 = vld [vmem:[#allocation4 + $0x69] sm:$0xff]
  %v2386 = vld [vmem:[#allocation4 + $0x71] sm:$0xff]
  %v2387 = vld [vmem:[#allocation4 + $0x79] sm:$0xff]
  %v2388 = vld [vmem:[#allocation4 + $0x81] sm:$0xff]
  %v2389 = vld [vmem:[#allocation4 + $0x89] sm:$0xff]
  %v2390 = vld [vmem:[#allocation4 + $0x91] sm:$0xff]
  %v2391 = vld [vmem:[#allocation4 + $0x99] sm:$0xff]
  %v2392 = vld [vmem:[#allocation4 + $0xa1] sm:$0xff]
  %v2393 = vld [vmem:[#allocation4 + $0xa9] sm:$0xff]
  %v2394 = vld [vmem:[#allocation4 + $0xb1] sm:$0xff]
  %v2395 = vld [vmem:[#allocation4 + $0xb9] sm:$0xff]
  %v2396 = vld [vmem:[#allocation4 + $0xc1] sm:$0xff]
  %v2397 = vld [vmem:[#allocation4 + $0xc9] sm:$0xff]
  %v2398 = vld [vmem:[#allocation4 + $0xd1] sm:$0xff]
  %v2399 = vld [vmem:[#allocation4 + $0xd9] sm:$0xff]
  %v2400 = vld [vmem:[#allocation4 + $0xe1] sm:$0xff]
  %v2401 = vld [vmem:[#allocation4 + $0xe9] sm:$0xff]
  %v2402 = vld [vmem:[#allocation4 + $0xf1] sm:$0xff]
  %v2403 = vld [vmem:[#allocation4 + $0xf9] sm:$0xff]
  %v2404 = vld [vmem:[#allocation4 + $0x101] sm:$0xff]
  %v2405 = vld [vmem:[%s2 + $0x80] sm:$0xff]
  %v2406 = vld [vmem:[%s2 + $0x88] sm:$0xff]
  %v2407 = vld [vmem:[%s2 + $0x90] sm:$0xff]
  %v2408 = vld [vmem:[%s2 + $0x98] sm:$0xff]
  %v2409 = vld [vmem:[%s2 + $0xa0] sm:$0xff]
  %v2410 = vld [vmem:[%s2 + $0xa8] sm:$0xff]
  %v2411 = vld [vmem:[%s2 + $0xb0] sm:$0xff]
  %v2412 = vld [vmem:[%s2 + $0xb8] sm:$0xff]
  %v2414 = vsel %vm1015, %v2373, 0
  %v2417 = vsel %vm1015, %v2374, 0
  %v2420 = vsel %vm1015, %v2375, 0
  %v2423 = vsel %vm1015, %v2376, 0
  %v2426 = vsel %vm1015, %v2377, 0
  %v2429 = vsel %vm1015, %v2378, 0
  %v2432 = vsel %vm1015, %v2379, 0
  %v2435 = vsel %vm1015, %v2380, 0
  %v2438 = vsel %vm1015, %v2381, 0
  %v2441 = vsel %vm1015, %v2382, 0
  %v2444 = vsel %vm1015, %v2383, 0
  %v2447 = vsel %vm1015, %v2384, 0
  %v2450 = vsel %vm1015, %v2385, 0
  %v2453 = vsel %vm1015, %v2386, 0
  %v2456 = vsel %vm1015, %v2387, 0
  %v2459 = vsel %vm1015, %v2388, 0
  %v2462 = vsel %vm1015, %v2389, 0
  %v2465 = vsel %vm1015, %v2390, 0
  %v2468 = vsel %vm1015, %v2391, 0
  %v2471 = vsel %vm1015, %v2392, 0
  %v2474 = vsel %vm1015, %v2393, 0
  %v2477 = vsel %vm1015, %v2394, 0
  %v2480 = vsel %vm1015, %v2395, 0
  %v2483 = vsel %vm1015, %v2396, 0
  %v2486 = vsel %vm1015, %v2397, 0
  %v2489 = vsel %vm1015, %v2398, 0
  %v2492 = vsel %vm1015, %v2399, 0
  %v2495 = vsel %vm1015, %v2400, 0
  %v2498 = vsel %vm1015, %v2401, 0
  %v2501 = vsel %vm1015, %v2402, 0
  %v2504 = vsel %vm1015, %v2403, 0
  %v2507 = vsel %vm1015, %v2404, 0
  %2509 = vmatprep.subr.mxu0 0.0
  %2510 = vmatpush1.msra.mxu0 0.0
  %2511 = vmatprep.subr.mxu0 0.0
  %2512 = vmatpush1.msra.mxu0 0.0
  %2513 = vmatprep.subr.mxu0 0.0
  %2514 = vmatpush1.msra.mxu0 0.0
  %2515 = vmatprep.subr.mxu0 0.0
  %2516 = vmatpush1.msra.mxu0 0.0
  %2517 = vmatprep.subr.mxu0 0.0
  %2518 = vmatpush1.msra.mxu0 0.0
  %2519 = vmatprep.subr.mxu0 0.0
  %2520 = vmatpush1.msra.mxu0 0.0
  %2521 = vmatprep.subr.mxu0 0.0
  %2522 = vmatpush1.msra.mxu0 0.0
  %2523 = vmatprep.subr.mxu0 0.0
  %2524 = vmatpush1.msra.mxu0 0.0
  %2525 = vmatprep.subr.mxu0 0.0
  %2526 = vmatpush1.msra.mxu0 %v2412
  %2527 = vmatprep.subr.mxu0 0.0
  %2528 = vmatpush1.msra.mxu0 %v2411
  %2529 = vmatprep.subr.mxu0 0.0
  %2530 = vmatpush1.msra.mxu0 %v2410
  %2531 = vmatprep.subr.mxu0 0.0
  %2532 = vmatpush1.msra.mxu0 %v2409
  %2533 = vmatprep.subr.mxu0 0.0
  %2534 = vmatpush1.msra.mxu0 %v2408
  %2535 = vmatprep.subr.mxu0 0.0
  %2536 = vmatpush1.msra.mxu0 %v2407
  %2537 = vmatprep.subr.mxu0 0.0
  %2538 = vmatpush1.msra.mxu0 %v2406
  %2539 = vmatprep.subr.mxu0 0.0
  %2540 = vmatpush1.msra.mxu0 %v2405
  %2541 = vmatprep.subr.mxu0 0.0
  %2542 = vmatpush2.msra.mxu0 0.0
  %2543 = vmatprep.subr.mxu0 0.0
  %2544 = vmatpush2.msra.mxu0 0.0
  %2545 = vmatprep.subr.mxu0 0.0
  %2546 = vmatpush2.msra.mxu0 0.0
  %2547 = vmatprep.subr.mxu0 0.0
  %2548 = vmatpush2.msra.mxu0 0.0
  %2549 = vmatprep.subr.mxu0 0.0
  %2550 = vmatpush2.msra.mxu0 0.0
  %2551 = vmatprep.subr.mxu0 0.0
  %2552 = vmatpush2.msra.mxu0 0.0
  %2553 = vmatprep.subr.mxu0 0.0
  %2554 = vmatpush2.msra.mxu0 0.0
  %2555 = vmatprep.subr.mxu0 0.0
  %2556 = vmatpush2.msra.mxu0 0.0
  %2557 = vmatprep.subr.mxu0 0.0
  %2558 = vmatpush2.msra.mxu0 0.0
  %2559 = vmatprep.subr.mxu0 0.0
  %2560 = vmatpush2.msra.mxu0 0.0
  %2561 = vmatprep.subr.mxu0 0.0
  %2562 = vmatpush2.msra.mxu0 0.0
  %2563 = vmatprep.subr.mxu0 0.0
  %2564 = vmatpush2.msra.mxu0 0.0
  %2565 = vmatprep.subr.mxu0 0.0
  %2566 = vmatpush2.msra.mxu0 0.0
  %2567 = vmatprep.subr.mxu0 0.0
  %2568 = vmatpush2.msra.mxu0 0.0
  %2569 = vmatprep.subr.mxu0 0.0
  %2570 = vmatpush2.msra.mxu0 0.0
  %2571 = vmatprep.subr.mxu0 0.0
  %2572 = vmatpush2.msra.mxu0 0.0
  %2573 = vmatprep.mubr.f32.mxu0 0.0
  %2574 = vmatmul.mubr.f32.gmra.mxu0 %v2414
  %v2575 = vpop.f32.mrf.mxu0
  %v2576 = vadd.f32 0.0, %v2575
  %v2577 = vpop.f32.mrf.mxu0
  %2578 = vmatprep.mubr.f32.mxu0 0.0
  %2579 = vmatmul.mubr.f32.gmra.mxu0 %v2417
  %v2580 = vpop.f32.mrf.mxu0
  %v2581 = vadd.f32 0.0, %v2580
  %v2582 = vpop.f32.mrf.mxu0
  %2583 = vmatprep.mubr.f32.mxu0 0.0
  %2584 = vmatmul.mubr.f32.gmra.mxu0 %v2420
  %v2585 = vpop.f32.mrf.mxu0
  %v2586 = vadd.f32 0.0, %v2585
  %v2587 = vpop.f32.mrf.mxu0
  %2588 = vmatprep.mubr.f32.mxu0 0.0
  %2589 = vmatmul.mubr.f32.gmra.mxu0 %v2423
  %v2590 = vpop.f32.mrf.mxu0
  %v2591 = vadd.f32 0.0, %v2590
  %v2592 = vpop.f32.mrf.mxu0
  %2593 = vmatprep.mubr.f32.mxu0 0.0
  %2594 = vmatmul.mubr.f32.gmra.mxu0 %v2426
  %v2595 = vpop.f32.mrf.mxu0
  %v2596 = vadd.f32 0.0, %v2595
  %v2597 = vpop.f32.mrf.mxu0
  %2598 = vmatprep.mubr.f32.mxu0 0.0
  %2599 = vmatmul.mubr.f32.gmra.mxu0 %v2429
  %v2600 = vpop.f32.mrf.mxu0
  %v2601 = vadd.f32 0.0, %v2600
  %v2602 = vpop.f32.mrf.mxu0
  %2603 = vmatprep.mubr.f32.mxu0 0.0
  %2604 = vmatmul.mubr.f32.gmra.mxu0 %v2432
  %v2605 = vpop.f32.mrf.mxu0
  %v2606 = vadd.f32 0.0, %v2605
  %v2607 = vpop.f32.mrf.mxu0
  %2608 = vmatprep.mubr.f32.mxu0 0.0
  %2609 = vmatmul.mubr.f32.gmra.mxu0 %v2435
  %v2610 = vpop.f32.mrf.mxu0
  %v2611 = vadd.f32 0.0, %v2610
  %v2612 = vpop.f32.mrf.mxu0
  %2613 = vmatprep.mubr.f32.mxu0 0.0
  %2614 = vmatmul.mubr.f32.gmra.mxu0 %v2438
  %v2615 = vpop.f32.mrf.mxu0
  %v2616 = vadd.f32 0.0, %v2615
  %v2617 = vpop.f32.mrf.mxu0
  %2618 = vmatprep.mubr.f32.mxu0 0.0
  %2619 = vmatmul.mubr.f32.gmra.mxu0 %v2441
  %v2620 = vpop.f32.mrf.mxu0
  %v2621 = vadd.f32 0.0, %v2620
  %v2622 = vpop.f32.mrf.mxu0
  %2623 = vmatprep.mubr.f32.mxu0 0.0
  %2624 = vmatmul.mubr.f32.gmra.mxu0 %v2444
  %v2625 = vpop.f32.mrf.mxu0
  %v2626 = vadd.f32 0.0, %v2625
  %v2627 = vpop.f32.mrf.mxu0
  %2628 = vmatprep.mubr.f32.mxu0 0.0
  %2629 = vmatmul.mubr.f32.gmra.mxu0 %v2447
  %v2630 = vpop.f32.mrf.mxu0
  %v2631 = vadd.f32 0.0, %v2630
  %v2632 = vpop.f32.mrf.mxu0
  %2633 = vmatprep.mubr.f32.mxu0 0.0
  %2634 = vmatmul.mubr.f32.gmra.mxu0 %v2450
  %v2635 = vpop.f32.mrf.mxu0
  %v2636 = vadd.f32 0.0, %v2635
  %v2637 = vpop.f32.mrf.mxu0
  %2638 = vmatprep.mubr.f32.mxu0 0.0
  %2639 = vmatmul.mubr.f32.gmra.mxu0 %v2453
  %v2640 = vpop.f32.mrf.mxu0
  %v2641 = vadd.f32 0.0, %v2640
  %v2642 = vpop.f32.mrf.mxu0
  %2643 = vmatprep.mubr.f32.mxu0 0.0
  %2644 = vmatmul.mubr.f32.gmra.mxu0 %v2456
  %v2645 = vpop.f32.mrf.mxu0
  %v2646 = vadd.f32 0.0, %v2645
  %v2647 = vpop.f32.mrf.mxu0
  %2648 = vmatprep.mubr.f32.mxu0 0.0
  %2649 = vmatmul.mubr.f32.gmra.mxu0 %v2459
  %v2650 = vpop.f32.mrf.mxu0
  %v2651 = vadd.f32 0.0, %v2650
  %v2652 = vpop.f32.mrf.mxu0
  %2653 = vmatprep.mubr.f32.mxu0 0.0
  %2654 = vmatmul.mubr.f32.gmra.mxu0 %v2462
  %v2655 = vpop.f32.mrf.mxu0
  %v2656 = vadd.f32 0.0, %v2655
  %v2657 = vpop.f32.mrf.mxu0
  %2658 = vmatprep.mubr.f32.mxu0 0.0
  %2659 = vmatmul.mubr.f32.gmra.mxu0 %v2465
  %v2660 = vpop.f32.mrf.mxu0
  %v2661 = vadd.f32 0.0, %v2660
  %v2662 = vpop.f32.mrf.mxu0
  %2663 = vmatprep.mubr.f32.mxu0 0.0
  %2664 = vmatmul.mubr.f32.gmra.mxu0 %v2468
  %v2665 = vpop.f32.mrf.mxu0
  %v2666 = vadd.f32 0.0, %v2665
  %v2667 = vpop.f32.mrf.mxu0
  %2668 = vmatprep.mubr.f32.mxu0 0.0
  %2669 = vmatmul.mubr.f32.gmra.mxu0 %v2471
  %v2670 = vpop.f32.mrf.mxu0
  %v2671 = vadd.f32 0.0, %v2670
  %v2672 = vpop.f32.mrf.mxu0
  %2673 = vmatprep.mubr.f32.mxu0 0.0
  %2674 = vmatmul.mubr.f32.gmra.mxu0 %v2474
  %v2675 = vpop.f32.mrf.mxu0
  %v2676 = vadd.f32 0.0, %v2675
  %v2677 = vpop.f32.mrf.mxu0
  %2678 = vmatprep.mubr.f32.mxu0 0.0
  %2679 = vmatmul.mubr.f32.gmra.mxu0 %v2477
  %v2680 = vpop.f32.mrf.mxu0
  %v2681 = vadd.f32 0.0, %v2680
  %v2682 = vpop.f32.mrf.mxu0
  %2683 = vmatprep.mubr.f32.mxu0 0.0
  %2684 = vmatmul.mubr.f32.gmra.mxu0 %v2480
  %v2685 = vpop.f32.mrf.mxu0
  %v2686 = vadd.f32 0.0, %v2685
  %v2687 = vpop.f32.mrf.mxu0
  %2688 = vmatprep.mubr.f32.mxu0 0.0
  %2689 = vmatmul.mubr.f32.gmra.mxu0 %v2483
  %v2690 = vpop.f32.mrf.mxu0
  %v2691 = vadd.f32 0.0, %v2690
  %v2692 = vpop.f32.mrf.mxu0
  %2693 = vmatprep.mubr.f32.mxu0 0.0
  %2694 = vmatmul.mubr.f32.gmra.mxu0 %v2486
  %v2695 = vpop.f32.mrf.mxu0
  %v2696 = vadd.f32 0.0, %v2695
  %v2697 = vpop.f32.mrf.mxu0
  %2698 = vmatprep.mubr.f32.mxu0 0.0
  %2699 = vmatmul.mubr.f32.gmra.mxu0 %v2489
  %v2700 = vpop.f32.mrf.mxu0
  %v2701 = vadd.f32 0.0, %v2700
  %v2702 = vpop.f32.mrf.mxu0
  %2703 = vmatprep.mubr.f32.mxu0 0.0
  %2704 = vmatmul.mubr.f32.gmra.mxu0 %v2492
  %v2705 = vpop.f32.mrf.mxu0
  %v2706 = vadd.f32 0.0, %v2705
  %v2707 = vpop.f32.mrf.mxu0
  %2708 = vmatprep.mubr.f32.mxu0 0.0
  %2709 = vmatmul.mubr.f32.gmra.mxu0 %v2495
  %v2710 = vpop.f32.mrf.mxu0
  %v2711 = vadd.f32 0.0, %v2710
  %v2712 = vpop.f32.mrf.mxu0
  %2713 = vmatprep.mubr.f32.mxu0 0.0
  %2714 = vmatmul.mubr.f32.gmra.mxu0 %v2498
  %v2715 = vpop.f32.mrf.mxu0
  %v2716 = vadd.f32 0.0, %v2715
  %v2717 = vpop.f32.mrf.mxu0
  %2718 = vmatprep.mubr.f32.mxu0 0.0
  %2719 = vmatmul.mubr.f32.gmra.mxu0 %v2501
  %v2720 = vpop.f32.mrf.mxu0
  %v2721 = vadd.f32 0.0, %v2720
  %v2722 = vpop.f32.mrf.mxu0
  %2723 = vmatprep.mubr.f32.mxu0 0.0
  %2724 = vmatmul.mubr.f32.gmra.mxu0 %v2504
  %v2725 = vpop.f32.mrf.mxu0
  %v2726 = vadd.f32 0.0, %v2725
  %v2727 = vpop.f32.mrf.mxu0
  %2728 = vmatprep.mubr.f32.mxu0 0.0
  %2729 = vmatmul.mubr.f32.gmra.mxu0 %v2507
  %v2730 = vpop.f32.mrf.mxu0
  %v2731 = vadd.f32 0.0, %v2730
  %v2732 = vpop.f32.mrf.mxu0
  %2733 = vdwg.mxu0
  %v2734 = vadd.f32 %v2215, %v2576
  %v2735 = vadd.f32 %v2220, %v2581
  %v2736 = vadd.f32 %v2225, %v2586
  %v2737 = vadd.f32 %v2230, %v2591
  %v2738 = vadd.f32 %v2235, %v2596
  %v2739 = vadd.f32 %v2240, %v2601
  %v2740 = vadd.f32 %v2245, %v2606
  %v2741 = vadd.f32 %v2250, %v2611
  %v2742 = vadd.f32 %v2255, %v2616
  %v2743 = vadd.f32 %v2260, %v2621
  %v2744 = vadd.f32 %v2265, %v2626
  %v2745 = vadd.f32 %v2270, %v2631
  %v2746 = vadd.f32 %v2275, %v2636
  %v2747 = vadd.f32 %v2280, %v2641
  %v2748 = vadd.f32 %v2285, %v2646
  %v2749 = vadd.f32 %v2290, %v2651
  %v2750 = vadd.f32 %v2295, %v2656
  %v2751 = vadd.f32 %v2300, %v2661
  %v2752 = vadd.f32 %v2305, %v2666
  %v2753 = vadd.f32 %v2310, %v2671
  %v2754 = vadd.f32 %v2315, %v2676
  %v2755 = vadd.f32 %v2320, %v2681
  %v2756 = vadd.f32 %v2325, %v2686
  %v2757 = vadd.f32 %v2330, %v2691
  %v2758 = vadd.f32 %v2335, %v2696
  %v2759 = vadd.f32 %v2340, %v2701
  %v2760 = vadd.f32 %v2345, %v2706
  %v2761 = vadd.f32 %v2350, %v2711
  %v2762 = vadd.f32 %v2355, %v2716
  %v2763 = vadd.f32 %v2360, %v2721
  %v2764 = vadd.f32 %v2365, %v2726
  %v2765 = vadd.f32 %v2370, %v2731
  %v2766 = vld [vmem:[#allocation3 + $0x17] sm:$0xff]
  %v2767 = vld [vmem:[#allocation3 + $0x1f] sm:$0xff]
  %v2768 = vld [vmem:[#allocation3 + $0x27] sm:$0xff]
  %v2769 = vld [vmem:[#allocation3 + $0x2f] sm:$0xff]
  %v2770 = vld [vmem:[#allocation3 + $0x37] sm:$0xff]
  %v2771 = vld [vmem:[#allocation3 + $0x3f] sm:$0xff]
  %v2772 = vld [vmem:[#allocation3 + $0x47] sm:$0xff]
  %v2773 = vld [vmem:[#allocation3 + $0x4f] sm:$0xff]
  %v2774 = vld [vmem:[#allocation3 + $0x57] sm:$0xff]
  %v2775 = vld [vmem:[#allocation3 + $0x5f] sm:$0xff]
  %v2776 = vld [vmem:[#allocation3 + $0x67] sm:$0xff]
  %v2777 = vld [vmem:[#allocation3 + $0x6f] sm:$0xff]
  %v2778 = vld [vmem:[#allocation3 + $0x77] sm:$0xff]
  %v2779 = vld [vmem:[#allocation3 + $0x7f] sm:$0xff]
  %v2780 = vld [vmem:[#allocation3 + $0x87] sm:$0xff]
  %v2781 = vld [vmem:[#allocation3 + $0x8f] sm:$0xff]
  %v2782 = vld [vmem:[#allocation3 + $0x97] sm:$0xff]
  %v2783 = vld [vmem:[#allocation3 + $0x9f] sm:$0xff]
  %v2784 = vld [vmem:[#allocation3 + $0xa7] sm:$0xff]
  %v2785 = vld [vmem:[#allocation3 + $0xaf] sm:$0xff]
  %v2786 = vld [vmem:[#allocation3 + $0xb7] sm:$0xff]
  %v2787 = vld [vmem:[#allocation3 + $0xbf] sm:$0xff]
  %v2788 = vld [vmem:[#allocation3 + $0xc7] sm:$0xff]
  %v2789 = vld [vmem:[#allocation3 + $0xcf] sm:$0xff]
  %v2790 = vld [vmem:[#allocation3 + $0xd7] sm:$0xff]
  %v2791 = vld [vmem:[#allocation3 + $0xdf] sm:$0xff]
  %v2792 = vld [vmem:[#allocation3 + $0xe7] sm:$0xff]
  %v2793 = vld [vmem:[#allocation3 + $0xef] sm:$0xff]
  %v2794 = vld [vmem:[#allocation3 + $0xf7] sm:$0xff]
  %v2795 = vld [vmem:[#allocation3 + $0xff] sm:$0xff]
  %v2796 = vld [vmem:[#allocation3 + $0x107] sm:$0xff]
  %v2797 = vld [vmem:[#allocation3 + $0x10f] sm:$0xff]
  %v2798 = vld [vmem:[%s2 + $0xc0] sm:$0xff]
  %v2799 = vld [vmem:[%s2 + $0xc8] sm:$0xff]
  %v2800 = vld [vmem:[%s2 + $0xd0] sm:$0xff]
  %v2801 = vld [vmem:[%s2 + $0xd8] sm:$0xff]
  %v2802 = vld [vmem:[%s2 + $0xe0] sm:$0xff]
  %v2803 = vld [vmem:[%s2 + $0xe8] sm:$0xff]
  %v2804 = vld [vmem:[%s2 + $0xf0] sm:$0xff]
  %v2805 = vld [vmem:[%s2 + $0xf8] sm:$0xff]
  %v2807 = vsel %vm1015, %v2766, 0
  %v2810 = vsel %vm1015, %v2767, 0
  %v2813 = vsel %vm1015, %v2768, 0
  %v2816 = vsel %vm1015, %v2769, 0
  %v2819 = vsel %vm1015, %v2770, 0
  %v2822 = vsel %vm1015, %v2771, 0
  %v2825 = vsel %vm1015, %v2772, 0
  %v2828 = vsel %vm1015, %v2773, 0
  %v2831 = vsel %vm1015, %v2774, 0
  %v2834 = vsel %vm1015, %v2775, 0
  %v2837 = vsel %vm1015, %v2776, 0
  %v2840 = vsel %vm1015, %v2777, 0
  %v2843 = vsel %vm1015, %v2778, 0
  %v2846 = vsel %vm1015, %v2779, 0
  %v2849 = vsel %vm1015, %v2780, 0
  %v2852 = vsel %vm1015, %v2781, 0
  %v2855 = vsel %vm1015, %v2782, 0
  %v2858 = vsel %vm1015, %v2783, 0
  %v2861 = vsel %vm1015, %v2784, 0
  %v2864 = vsel %vm1015, %v2785, 0
  %v2867 = vsel %vm1015, %v2786, 0
  %v2870 = vsel %vm1015, %v2787, 0
  %v2873 = vsel %vm1015, %v2788, 0
  %v2876 = vsel %vm1015, %v2789, 0
  %v2879 = vsel %vm1015, %v2790, 0
  %v2882 = vsel %vm1015, %v2791, 0
  %v2885 = vsel %vm1015, %v2792, 0
  %v2888 = vsel %vm1015, %v2793, 0
  %v2891 = vsel %vm1015, %v2794, 0
  %v2894 = vsel %vm1015, %v2795, 0
  %v2897 = vsel %vm1015, %v2796, 0
  %v2900 = vsel %vm1015, %v2797, 0
  %2902 = vmatprep.subr.mxu0 0.0
  %2903 = vmatpush1.msra.mxu0 0.0
  %2904 = vmatprep.subr.mxu0 0.0
  %2905 = vmatpush1.msra.mxu0 0.0
  %2906 = vmatprep.subr.mxu0 0.0
  %2907 = vmatpush1.msra.mxu0 0.0
  %2908 = vmatprep.subr.mxu0 0.0
  %2909 = vmatpush1.msra.mxu0 0.0
  %2910 = vmatprep.subr.mxu0 0.0
  %2911 = vmatpush1.msra.mxu0 0.0
  %2912 = vmatprep.subr.mxu0 0.0
  %2913 = vmatpush1.msra.mxu0 0.0
  %2914 = vmatprep.subr.mxu0 0.0
  %2915 = vmatpush1.msra.mxu0 0.0
  %2916 = vmatprep.subr.mxu0 0.0
  %2917 = vmatpush1.msra.mxu0 0.0
  %2918 = vmatprep.subr.mxu0 0.0
  %2919 = vmatpush1.msra.mxu0 %v2805
  %2920 = vmatprep.subr.mxu0 0.0
  %2921 = vmatpush1.msra.mxu0 %v2804
  %2922 = vmatprep.subr.mxu0 0.0
  %2923 = vmatpush1.msra.mxu0 %v2803
  %2924 = vmatprep.subr.mxu0 0.0
  %2925 = vmatpush1.msra.mxu0 %v2802
  %2926 = vmatprep.subr.mxu0 0.0
  %2927 = vmatpush1.msra.mxu0 %v2801
  %2928 = vmatprep.subr.mxu0 0.0
  %2929 = vmatpush1.msra.mxu0 %v2800
  %2930 = vmatprep.subr.mxu0 0.0
  %2931 = vmatpush1.msra.mxu0 %v2799
  %2932 = vmatprep.subr.mxu0 0.0
  %2933 = vmatpush1.msra.mxu0 %v2798
  %2934 = vmatprep.subr.mxu0 0.0
  %2935 = vmatpush2.msra.mxu0 0.0
  %2936 = vmatprep.subr.mxu0 0.0
  %2937 = vmatpush2.msra.mxu0 0.0
  %2938 = vmatprep.subr.mxu0 0.0
  %2939 = vmatpush2.msra.mxu0 0.0
  %2940 = vmatprep.subr.mxu0 0.0
  %2941 = vmatpush2.msra.mxu0 0.0
  %2942 = vmatprep.subr.mxu0 0.0
  %2943 = vmatpush2.msra.mxu0 0.0
  %2944 = vmatprep.subr.mxu0 0.0
  %2945 = vmatpush2.msra.mxu0 0.0
  %2946 = vmatprep.subr.mxu0 0.0
  %2947 = vmatpush2.msra.mxu0 0.0
  %2948 = vmatprep.subr.mxu0 0.0
  %2949 = vmatpush2.msra.mxu0 0.0
  %2950 = vmatprep.subr.mxu0 0.0
  %2951 = vmatpush2.msra.mxu0 0.0
  %2952 = vmatprep.subr.mxu0 0.0
  %2953 = vmatpush2.msra.mxu0 0.0
  %2954 = vmatprep.subr.mxu0 0.0
  %2955 = vmatpush2.msra.mxu0 0.0
  %2956 = vmatprep.subr.mxu0 0.0
  %2957 = vmatpush2.msra.mxu0 0.0
  %2958 = vmatprep.subr.mxu0 0.0
  %2959 = vmatpush2.msra.mxu0 0.0
  %2960 = vmatprep.subr.mxu0 0.0
  %2961 = vmatpush2.msra.mxu0 0.0
  %2962 = vmatprep.subr.mxu0 0.0
  %2963 = vmatpush2.msra.mxu0 0.0
  %2964 = vmatprep.subr.mxu0 0.0
  %2965 = vmatpush2.msra.mxu0 0.0
  %2966 = vmatprep.mubr.f32.mxu0 0.0
  %2967 = vmatmul.mubr.f32.gmra.mxu0 %v2807
  %v2968 = vpop.f32.mrf.mxu0
  %v2969 = vadd.f32 0.0, %v2968
  %v2970 = vpop.f32.mrf.mxu0
  %2971 = vmatprep.mubr.f32.mxu0 0.0
  %2972 = vmatmul.mubr.f32.gmra.mxu0 %v2810
  %v2973 = vpop.f32.mrf.mxu0
  %v2974 = vadd.f32 0.0, %v2973
  %v2975 = vpop.f32.mrf.mxu0
  %2976 = vmatprep.mubr.f32.mxu0 0.0
  %2977 = vmatmul.mubr.f32.gmra.mxu0 %v2813
  %v2978 = vpop.f32.mrf.mxu0
  %v2979 = vadd.f32 0.0, %v2978
  %v2980 = vpop.f32.mrf.mxu0
  %2981 = vmatprep.mubr.f32.mxu0 0.0
  %2982 = vmatmul.mubr.f32.gmra.mxu0 %v2816
  %v2983 = vpop.f32.mrf.mxu0
  %v2984 = vadd.f32 0.0, %v2983
  %v2985 = vpop.f32.mrf.mxu0
  %2986 = vmatprep.mubr.f32.mxu0 0.0
  %2987 = vmatmul.mubr.f32.gmra.mxu0 %v2819
  %v2988 = vpop.f32.mrf.mxu0
  %v2989 = vadd.f32 0.0, %v2988
  %v2990 = vpop.f32.mrf.mxu0
  %2991 = vmatprep.mubr.f32.mxu0 0.0
  %2992 = vmatmul.mubr.f32.gmra.mxu0 %v2822
  %v2993 = vpop.f32.mrf.mxu0
  %v2994 = vadd.f32 0.0, %v2993
  %v2995 = vpop.f32.mrf.mxu0
  %2996 = vmatprep.mubr.f32.mxu0 0.0
  %2997 = vmatmul.mubr.f32.gmra.mxu0 %v2825
  %v2998 = vpop.f32.mrf.mxu0
  %v2999 = vadd.f32 0.0, %v2998
  %v3000 = vpop.f32.mrf.mxu0
  %3001 = vmatprep.mubr.f32.mxu0 0.0
  %3002 = vmatmul.mubr.f32.gmra.mxu0 %v2828
  %v3003 = vpop.f32.mrf.mxu0
  %v3004 = vadd.f32 0.0, %v3003
  %v3005 = vpop.f32.mrf.mxu0
  %3006 = vmatprep.mubr.f32.mxu0 0.0
  %3007 = vmatmul.mubr.f32.gmra.mxu0 %v2831
  %v3008 = vpop.f32.mrf.mxu0
  %v3009 = vadd.f32 0.0, %v3008
  %v3010 = vpop.f32.mrf.mxu0
  %3011 = vmatprep.mubr.f32.mxu0 0.0
  %3012 = vmatmul.mubr.f32.gmra.mxu0 %v2834
  %v3013 = vpop.f32.mrf.mxu0
  %v3014 = vadd.f32 0.0, %v3013
  %v3015 = vpop.f32.mrf.mxu0
  %3016 = vmatprep.mubr.f32.mxu0 0.0
  %3017 = vmatmul.mubr.f32.gmra.mxu0 %v2837
  %v3018 = vpop.f32.mrf.mxu0
  %v3019 = vadd.f32 0.0, %v3018
  %v3020 = vpop.f32.mrf.mxu0
  %3021 = vmatprep.mubr.f32.mxu0 0.0
  %3022 = vmatmul.mubr.f32.gmra.mxu0 %v2840
  %v3023 = vpop.f32.mrf.mxu0
  %v3024 = vadd.f32 0.0, %v3023
  %v3025 = vpop.f32.mrf.mxu0
  %3026 = vmatprep.mubr.f32.mxu0 0.0
  %3027 = vmatmul.mubr.f32.gmra.mxu0 %v2843
  %v3028 = vpop.f32.mrf.mxu0
  %v3029 = vadd.f32 0.0, %v3028
  %v3030 = vpop.f32.mrf.mxu0
  %3031 = vmatprep.mubr.f32.mxu0 0.0
  %3032 = vmatmul.mubr.f32.gmra.mxu0 %v2846
  %v3033 = vpop.f32.mrf.mxu0
  %v3034 = vadd.f32 0.0, %v3033
  %v3035 = vpop.f32.mrf.mxu0
  %3036 = vmatprep.mubr.f32.mxu0 0.0
  %3037 = vmatmul.mubr.f32.gmra.mxu0 %v2849
  %v3038 = vpop.f32.mrf.mxu0
  %v3039 = vadd.f32 0.0, %v3038
  %v3040 = vpop.f32.mrf.mxu0
  %3041 = vmatprep.mubr.f32.mxu0 0.0
  %3042 = vmatmul.mubr.f32.gmra.mxu0 %v2852
  %v3043 = vpop.f32.mrf.mxu0
  %v3044 = vadd.f32 0.0, %v3043
  %v3045 = vpop.f32.mrf.mxu0
  %3046 = vmatprep.mubr.f32.mxu0 0.0
  %3047 = vmatmul.mubr.f32.gmra.mxu0 %v2855
  %v3048 = vpop.f32.mrf.mxu0
  %v3049 = vadd.f32 0.0, %v3048
  %v3050 = vpop.f32.mrf.mxu0
  %3051 = vmatprep.mubr.f32.mxu0 0.0
  %3052 = vmatmul.mubr.f32.gmra.mxu0 %v2858
  %v3053 = vpop.f32.mrf.mxu0
  %v3054 = vadd.f32 0.0, %v3053
  %v3055 = vpop.f32.mrf.mxu0
  %3056 = vmatprep.mubr.f32.mxu0 0.0
  %3057 = vmatmul.mubr.f32.gmra.mxu0 %v2861
  %v3058 = vpop.f32.mrf.mxu0
  %v3059 = vadd.f32 0.0, %v3058
  %v3060 = vpop.f32.mrf.mxu0
  %3061 = vmatprep.mubr.f32.mxu0 0.0
  %3062 = vmatmul.mubr.f32.gmra.mxu0 %v2864
  %v3063 = vpop.f32.mrf.mxu0
  %v3064 = vadd.f32 0.0, %v3063
  %v3065 = vpop.f32.mrf.mxu0
  %3066 = vmatprep.mubr.f32.mxu0 0.0
  %3067 = vmatmul.mubr.f32.gmra.mxu0 %v2867
  %v3068 = vpop.f32.mrf.mxu0
  %v3069 = vadd.f32 0.0, %v3068
  %v3070 = vpop.f32.mrf.mxu0
  %3071 = vmatprep.mubr.f32.mxu0 0.0
  %3072 = vmatmul.mubr.f32.gmra.mxu0 %v2870
  %v3073 = vpop.f32.mrf.mxu0
  %v3074 = vadd.f32 0.0, %v3073
  %v3075 = vpop.f32.mrf.mxu0
  %3076 = vmatprep.mubr.f32.mxu0 0.0
  %3077 = vmatmul.mubr.f32.gmra.mxu0 %v2873
  %v3078 = vpop.f32.mrf.mxu0
  %v3079 = vadd.f32 0.0, %v3078
  %v3080 = vpop.f32.mrf.mxu0
  %3081 = vmatprep.mubr.f32.mxu0 0.0
  %3082 = vmatmul.mubr.f32.gmra.mxu0 %v2876
  %v3083 = vpop.f32.mrf.mxu0
  %v3084 = vadd.f32 0.0, %v3083
  %v3085 = vpop.f32.mrf.mxu0
  %3086 = vmatprep.mubr.f32.mxu0 0.0
  %3087 = vmatmul.mubr.f32.gmra.mxu0 %v2879
  %v3088 = vpop.f32.mrf.mxu0
  %v3089 = vadd.f32 0.0, %v3088
  %v3090 = vpop.f32.mrf.mxu0
  %3091 = vmatprep.mubr.f32.mxu0 0.0
  %3092 = vmatmul.mubr.f32.gmra.mxu0 %v2882
  %v3093 = vpop.f32.mrf.mxu0
  %v3094 = vadd.f32 0.0, %v3093
  %v3095 = vpop.f32.mrf.mxu0
  %3096 = vmatprep.mubr.f32.mxu0 0.0
  %3097 = vmatmul.mubr.f32.gmra.mxu0 %v2885
  %v3098 = vpop.f32.mrf.mxu0
  %v3099 = vadd.f32 0.0, %v3098
  %v3100 = vpop.f32.mrf.mxu0
  %3101 = vmatprep.mubr.f32.mxu0 0.0
  %3102 = vmatmul.mubr.f32.gmra.mxu0 %v2888
  %v3103 = vpop.f32.mrf.mxu0
  %v3104 = vadd.f32 0.0, %v3103
  %v3105 = vpop.f32.mrf.mxu0
  %3106 = vmatprep.mubr.f32.mxu0 0.0
  %3107 = vmatmul.mubr.f32.gmra.mxu0 %v2891
  %v3108 = vpop.f32.mrf.mxu0
  %v3109 = vadd.f32 0.0, %v3108
  %v3110 = vpop.f32.mrf.mxu0
  %3111 = vmatprep.mubr.f32.mxu0 0.0
  %3112 = vmatmul.mubr.f32.gmra.mxu0 %v2894
  %v3113 = vpop.f32.mrf.mxu0
  %v3114 = vadd.f32 0.0, %v3113
  %v3115 = vpop.f32.mrf.mxu0
  %3116 = vmatprep.mubr.f32.mxu0 0.0
  %3117 = vmatmul.mubr.f32.gmra.mxu0 %v2897
  %v3118 = vpop.f32.mrf.mxu0
  %v3119 = vadd.f32 0.0, %v3118
  %v3120 = vpop.f32.mrf.mxu0
  %3121 = vmatprep.mubr.f32.mxu0 0.0
  %3122 = vmatmul.mubr.f32.gmra.mxu0 %v2900
  %v3123 = vpop.f32.mrf.mxu0
  %v3124 = vadd.f32 0.0, %v3123
  %v3125 = vpop.f32.mrf.mxu0
  %3126 = vdwg.mxu0
  %v3127 = vadd.f32 %v2734, %v2969
  %v3128 = vadd.f32 %v2735, %v2974
  %v3129 = vadd.f32 %v2736, %v2979
  %v3130 = vadd.f32 %v2737, %v2984
  %v3131 = vadd.f32 %v2738, %v2989
  %v3132 = vadd.f32 %v2739, %v2994
  %v3133 = vadd.f32 %v2740, %v2999
  %v3134 = vadd.f32 %v2741, %v3004
  %v3135 = vadd.f32 %v2742, %v3009
  %v3136 = vadd.f32 %v2743, %v3014
  %v3137 = vadd.f32 %v2744, %v3019
  %v3138 = vadd.f32 %v2745, %v3024
  %v3139 = vadd.f32 %v2746, %v3029
  %v3140 = vadd.f32 %v2747, %v3034
  %v3141 = vadd.f32 %v2748, %v3039
  %v3142 = vadd.f32 %v2749, %v3044
  %v3143 = vadd.f32 %v2750, %v3049
  %v3144 = vadd.f32 %v2751, %v3054
  %v3145 = vadd.f32 %v2752, %v3059
  %v3146 = vadd.f32 %v2753, %v3064
  %v3147 = vadd.f32 %v2754, %v3069
  %v3148 = vadd.f32 %v2755, %v3074
  %v3149 = vadd.f32 %v2756, %v3079
  %v3150 = vadd.f32 %v2757, %v3084
  %v3151 = vadd.f32 %v2758, %v3089
  %v3152 = vadd.f32 %v2759, %v3094
  %v3153 = vadd.f32 %v2760, %v3099
  %v3154 = vadd.f32 %v2761, %v3104
  %v3155 = vadd.f32 %v2762, %v3109
  %v3156 = vadd.f32 %v2763, %v3114
  %v3157 = vadd.f32 %v2764, %v3119
  %v3158 = vadd.f32 %v2765, %v3124
  %v3159 = vld [vmem:[#allocation2 + $0x18] sm:$0xff]
  %v3160 = vld [vmem:[#allocation2 + $0x20] sm:$0xff]
  %v3161 = vld [vmem:[#allocation2 + $0x28] sm:$0xff]
  %v3162 = vld [vmem:[#allocation2 + $0x30] sm:$0xff]
  %v3163 = vld [vmem:[#allocation2 + $0x38] sm:$0xff]
  %v3164 = vld [vmem:[#allocation2 + $0x40] sm:$0xff]
  %v3165 = vld [vmem:[#allocation2 + $0x48] sm:$0xff]
  %v3166 = vld [vmem:[#allocation2 + $0x50] sm:$0xff]
  %v3167 = vld [vmem:[#allocation2 + $0x58] sm:$0xff]
  %v3168 = vld [vmem:[#allocation2 + $0x60] sm:$0xff]
  %v3169 = vld [vmem:[#allocation2 + $0x68] sm:$0xff]
  %v3170 = vld [vmem:[#allocation2 + $0x70] sm:$0xff]
  %v3171 = vld [vmem:[#allocation2 + $0x78] sm:$0xff]
  %v3172 = vld [vmem:[#allocation2 + $0x80] sm:$0xff]
  %v3173 = vld [vmem:[#allocation2 + $0x88] sm:$0xff]
  %v3174 = vld [vmem:[#allocation2 + $0x90] sm:$0xff]
  %v3175 = vld [vmem:[#allocation2 + $0x98] sm:$0xff]
  %v3176 = vld [vmem:[#allocation2 + $0xa0] sm:$0xff]
  %v3177 = vld [vmem:[#allocation2 + $0xa8] sm:$0xff]
  %v3178 = vld [vmem:[#allocation2 + $0xb0] sm:$0xff]
  %v3179 = vld [vmem:[#allocation2 + $0xb8] sm:$0xff]
  %v3180 = vld [vmem:[#allocation2 + $0xc0] sm:$0xff]
  %v3181 = vld [vmem:[#allocation2 + $0xc8] sm:$0xff]
  %v3182 = vld [vmem:[#allocation2 + $0xd0] sm:$0xff]
  %v3183 = vld [vmem:[#allocation2 + $0xd8] sm:$0xff]
  %v3184 = vld [vmem:[#allocation2 + $0xe0] sm:$0xff]
  %v3185 = vld [vmem:[#allocation2 + $0xe8] sm:$0xff]
  %v3186 = vld [vmem:[#allocation2 + $0xf0] sm:$0xff]
  %v3187 = vld [vmem:[#allocation2 + $0xf8] sm:$0xff]
  %v3188 = vld [vmem:[#allocation2 + $0x100] sm:$0xff]
  %v3189 = vld [vmem:[#allocation2 + $0x108] sm:$0xff]
  %v3190 = vld [vmem:[#allocation2 + $0x110] sm:$0xff]
  %v3191 = vld [vmem:[%s2 + $0x100] sm:$0xff]
  %v3192 = vld [vmem:[%s2 + $0x108] sm:$0xff]
  %v3193 = vld [vmem:[%s2 + $0x110] sm:$0xff]
  %v3194 = vld [vmem:[%s2 + $0x118] sm:$0xff]
  %v3195 = vld [vmem:[%s2 + $0x120] sm:$0xff]
  %v3196 = vld [vmem:[%s2 + $0x128] sm:$0xff]
  %v3197 = vld [vmem:[%s2 + $0x130] sm:$0xff]
  %v3198 = vld [vmem:[%s2 + $0x138] sm:$0xff]
  %v3200 = vsel %vm1015, %v3159, 0
  %v3203 = vsel %vm1015, %v3160, 0
  %v3206 = vsel %vm1015, %v3161, 0
  %v3209 = vsel %vm1015, %v3162, 0
  %v3212 = vsel %vm1015, %v3163, 0
  %v3215 = vsel %vm1015, %v3164, 0
  %v3218 = vsel %vm1015, %v3165, 0
  %v3221 = vsel %vm1015, %v3166, 0
  %v3224 = vsel %vm1015, %v3167, 0
  %v3227 = vsel %vm1015, %v3168, 0
  %v3230 = vsel %vm1015, %v3169, 0
  %v3233 = vsel %vm1015, %v3170, 0
  %v3236 = vsel %vm1015, %v3171, 0
  %v3239 = vsel %vm1015, %v3172, 0
  %v3242 = vsel %vm1015, %v3173, 0
  %v3245 = vsel %vm1015, %v3174, 0
  %v3248 = vsel %vm1015, %v3175, 0
  %v3251 = vsel %vm1015, %v3176, 0
  %v3254 = vsel %vm1015, %v3177, 0
  %v3257 = vsel %vm1015, %v3178, 0
  %v3260 = vsel %vm1015, %v3179, 0
  %v3263 = vsel %vm1015, %v3180, 0
  %v3266 = vsel %vm1015, %v3181, 0
  %v3269 = vsel %vm1015, %v3182, 0
  %v3272 = vsel %vm1015, %v3183, 0
  %v3275 = vsel %vm1015, %v3184, 0
  %v3278 = vsel %vm1015, %v3185, 0
  %v3281 = vsel %vm1015, %v3186, 0
  %v3284 = vsel %vm1015, %v3187, 0
  %v3287 = vsel %vm1015, %v3188, 0
  %v3290 = vsel %vm1015, %v3189, 0
  %v3293 = vsel %vm1015, %v3190, 0
  %3295 = vmatprep.subr.mxu0 0.0
  %3296 = vmatpush1.msra.mxu0 0.0
  %3297 = vmatprep.subr.mxu0 0.0
  %3298 = vmatpush1.msra.mxu0 0.0
  %3299 = vmatprep.subr.mxu0 0.0
  %3300 = vmatpush1.msra.mxu0 0.0
  %3301 = vmatprep.subr.mxu0 0.0
  %3302 = vmatpush1.msra.mxu0 0.0
  %3303 = vmatprep.subr.mxu0 0.0
  %3304 = vmatpush1.msra.mxu0 0.0
  %3305 = vmatprep.subr.mxu0 0.0
  %3306 = vmatpush1.msra.mxu0 0.0
  %3307 = vmatprep.subr.mxu0 0.0
  %3308 = vmatpush1.msra.mxu0 0.0
  %3309 = vmatprep.subr.mxu0 0.0
  %3310 = vmatpush1.msra.mxu0 0.0
  %3311 = vmatprep.subr.mxu0 0.0
  %3312 = vmatpush1.msra.mxu0 %v3198
  %3313 = vmatprep.subr.mxu0 0.0
  %3314 = vmatpush1.msra.mxu0 %v3197
  %3315 = vmatprep.subr.mxu0 0.0
  %3316 = vmatpush1.msra.mxu0 %v3196
  %3317 = vmatprep.subr.mxu0 0.0
  %3318 = vmatpush1.msra.mxu0 %v3195
  %3319 = vmatprep.subr.mxu0 0.0
  %3320 = vmatpush1.msra.mxu0 %v3194
  %3321 = vmatprep.subr.mxu0 0.0
  %3322 = vmatpush1.msra.mxu0 %v3193
  %3323 = vmatprep.subr.mxu0 0.0
  %3324 = vmatpush1.msra.mxu0 %v3192
  %3325 = vmatprep.subr.mxu0 0.0
  %3326 = vmatpush1.msra.mxu0 %v3191
  %3327 = vmatprep.subr.mxu0 0.0
  %3328 = vmatpush2.msra.mxu0 0.0
  %3329 = vmatprep.subr.mxu0 0.0
  %3330 = vmatpush2.msra.mxu0 0.0
  %3331 = vmatprep.subr.mxu0 0.0
  %3332 = vmatpush2.msra.mxu0 0.0
  %3333 = vmatprep.subr.mxu0 0.0
  %3334 = vmatpush2.msra.mxu0 0.0
  %3335 = vmatprep.subr.mxu0 0.0
  %3336 = vmatpush2.msra.mxu0 0.0
  %3337 = vmatprep.subr.mxu0 0.0
  %3338 = vmatpush2.msra.mxu0 0.0
  %3339 = vmatprep.subr.mxu0 0.0
  %3340 = vmatpush2.msra.mxu0 0.0
  %3341 = vmatprep.subr.mxu0 0.0
  %3342 = vmatpush2.msra.mxu0 0.0
  %3343 = vmatprep.subr.mxu0 0.0
  %3344 = vmatpush2.msra.mxu0 0.0
  %3345 = vmatprep.subr.mxu0 0.0
  %3346 = vmatpush2.msra.mxu0 0.0
  %3347 = vmatprep.subr.mxu0 0.0
  %3348 = vmatpush2.msra.mxu0 0.0
  %3349 = vmatprep.subr.mxu0 0.0
  %3350 = vmatpush2.msra.mxu0 0.0
  %3351 = vmatprep.subr.mxu0 0.0
  %3352 = vmatpush2.msra.mxu0 0.0
  %3353 = vmatprep.subr.mxu0 0.0
  %3354 = vmatpush2.msra.mxu0 0.0
  %3355 = vmatprep.subr.mxu0 0.0
  %3356 = vmatpush2.msra.mxu0 0.0
  %3357 = vmatprep.subr.mxu0 0.0
  %3358 = vmatpush2.msra.mxu0 0.0
  %3359 = vmatprep.mubr.f32.mxu0 0.0
  %3360 = vmatmul.mubr.f32.gmra.mxu0 %v3200
  %v3361 = vpop.f32.mrf.mxu0
  %v3362 = vadd.f32 0.0, %v3361
  %v3363 = vpop.f32.mrf.mxu0
  %3364 = vmatprep.mubr.f32.mxu0 0.0
  %3365 = vmatmul.mubr.f32.gmra.mxu0 %v3203
  %v3366 = vpop.f32.mrf.mxu0
  %v3367 = vadd.f32 0.0, %v3366
  %v3368 = vpop.f32.mrf.mxu0
  %3369 = vmatprep.mubr.f32.mxu0 0.0
  %3370 = vmatmul.mubr.f32.gmra.mxu0 %v3206
  %v3371 = vpop.f32.mrf.mxu0
  %v3372 = vadd.f32 0.0, %v3371
  %v3373 = vpop.f32.mrf.mxu0
  %3374 = vmatprep.mubr.f32.mxu0 0.0
  %3375 = vmatmul.mubr.f32.gmra.mxu0 %v3209
  %v3376 = vpop.f32.mrf.mxu0
  %v3377 = vadd.f32 0.0, %v3376
  %v3378 = vpop.f32.mrf.mxu0
  %3379 = vmatprep.mubr.f32.mxu0 0.0
  %3380 = vmatmul.mubr.f32.gmra.mxu0 %v3212
  %v3381 = vpop.f32.mrf.mxu0
  %v3382 = vadd.f32 0.0, %v3381
  %v3383 = vpop.f32.mrf.mxu0
  %3384 = vmatprep.mubr.f32.mxu0 0.0
  %3385 = vmatmul.mubr.f32.gmra.mxu0 %v3215
  %v3386 = vpop.f32.mrf.mxu0
  %v3387 = vadd.f32 0.0, %v3386
  %v3388 = vpop.f32.mrf.mxu0
  %3389 = vmatprep.mubr.f32.mxu0 0.0
  %3390 = vmatmul.mubr.f32.gmra.mxu0 %v3218
  %v3391 = vpop.f32.mrf.mxu0
  %v3392 = vadd.f32 0.0, %v3391
  %v3393 = vpop.f32.mrf.mxu0
  %3394 = vmatprep.mubr.f32.mxu0 0.0
  %3395 = vmatmul.mubr.f32.gmra.mxu0 %v3221
  %v3396 = vpop.f32.mrf.mxu0
  %v3397 = vadd.f32 0.0, %v3396
  %v3398 = vpop.f32.mrf.mxu0
  %3399 = vmatprep.mubr.f32.mxu0 0.0
  %3400 = vmatmul.mubr.f32.gmra.mxu0 %v3224
  %v3401 = vpop.f32.mrf.mxu0
  %v3402 = vadd.f32 0.0, %v3401
  %v3403 = vpop.f32.mrf.mxu0
  %3404 = vmatprep.mubr.f32.mxu0 0.0
  %3405 = vmatmul.mubr.f32.gmra.mxu0 %v3227
  %v3406 = vpop.f32.mrf.mxu0
  %v3407 = vadd.f32 0.0, %v3406
  %v3408 = vpop.f32.mrf.mxu0
  %3409 = vmatprep.mubr.f32.mxu0 0.0
  %3410 = vmatmul.mubr.f32.gmra.mxu0 %v3230
  %v3411 = vpop.f32.mrf.mxu0
  %v3412 = vadd.f32 0.0, %v3411
  %v3413 = vpop.f32.mrf.mxu0
  %3414 = vmatprep.mubr.f32.mxu0 0.0
  %3415 = vmatmul.mubr.f32.gmra.mxu0 %v3233
  %v3416 = vpop.f32.mrf.mxu0
  %v3417 = vadd.f32 0.0, %v3416
  %v3418 = vpop.f32.mrf.mxu0
  %3419 = vmatprep.mubr.f32.mxu0 0.0
  %3420 = vmatmul.mubr.f32.gmra.mxu0 %v3236
  %v3421 = vpop.f32.mrf.mxu0
  %v3422 = vadd.f32 0.0, %v3421
  %v3423 = vpop.f32.mrf.mxu0
  %3424 = vmatprep.mubr.f32.mxu0 0.0
  %3425 = vmatmul.mubr.f32.gmra.mxu0 %v3239
  %v3426 = vpop.f32.mrf.mxu0
  %v3427 = vadd.f32 0.0, %v3426
  %v3428 = vpop.f32.mrf.mxu0
  %3429 = vmatprep.mubr.f32.mxu0 0.0
  %3430 = vmatmul.mubr.f32.gmra.mxu0 %v3242
  %v3431 = vpop.f32.mrf.mxu0
  %v3432 = vadd.f32 0.0, %v3431
  %v3433 = vpop.f32.mrf.mxu0
  %3434 = vmatprep.mubr.f32.mxu0 0.0
  %3435 = vmatmul.mubr.f32.gmra.mxu0 %v3245
  %v3436 = vpop.f32.mrf.mxu0
  %v3437 = vadd.f32 0.0, %v3436
  %v3438 = vpop.f32.mrf.mxu0
  %3439 = vmatprep.mubr.f32.mxu0 0.0
  %3440 = vmatmul.mubr.f32.gmra.mxu0 %v3248
  %v3441 = vpop.f32.mrf.mxu0
  %v3442 = vadd.f32 0.0, %v3441
  %v3443 = vpop.f32.mrf.mxu0
  %3444 = vmatprep.mubr.f32.mxu0 0.0
  %3445 = vmatmul.mubr.f32.gmra.mxu0 %v3251
  %v3446 = vpop.f32.mrf.mxu0
  %v3447 = vadd.f32 0.0, %v3446
  %v3448 = vpop.f32.mrf.mxu0
  %3449 = vmatprep.mubr.f32.mxu0 0.0
  %3450 = vmatmul.mubr.f32.gmra.mxu0 %v3254
  %v3451 = vpop.f32.mrf.mxu0
  %v3452 = vadd.f32 0.0, %v3451
  %v3453 = vpop.f32.mrf.mxu0
  %3454 = vmatprep.mubr.f32.mxu0 0.0
  %3455 = vmatmul.mubr.f32.gmra.mxu0 %v3257
  %v3456 = vpop.f32.mrf.mxu0
  %v3457 = vadd.f32 0.0, %v3456
  %v3458 = vpop.f32.mrf.mxu0
  %3459 = vmatprep.mubr.f32.mxu0 0.0
  %3460 = vmatmul.mubr.f32.gmra.mxu0 %v3260
  %v3461 = vpop.f32.mrf.mxu0
  %v3462 = vadd.f32 0.0, %v3461
  %v3463 = vpop.f32.mrf.mxu0
  %3464 = vmatprep.mubr.f32.mxu0 0.0
  %3465 = vmatmul.mubr.f32.gmra.mxu0 %v3263
  %v3466 = vpop.f32.mrf.mxu0
  %v3467 = vadd.f32 0.0, %v3466
  %v3468 = vpop.f32.mrf.mxu0
  %3469 = vmatprep.mubr.f32.mxu0 0.0
  %3470 = vmatmul.mubr.f32.gmra.mxu0 %v3266
  %v3471 = vpop.f32.mrf.mxu0
  %v3472 = vadd.f32 0.0, %v3471
  %v3473 = vpop.f32.mrf.mxu0
  %3474 = vmatprep.mubr.f32.mxu0 0.0
  %3475 = vmatmul.mubr.f32.gmra.mxu0 %v3269
  %v3476 = vpop.f32.mrf.mxu0
  %v3477 = vadd.f32 0.0, %v3476
  %v3478 = vpop.f32.mrf.mxu0
  %3479 = vmatprep.mubr.f32.mxu0 0.0
  %3480 = vmatmul.mubr.f32.gmra.mxu0 %v3272
  %v3481 = vpop.f32.mrf.mxu0
  %v3482 = vadd.f32 0.0, %v3481
  %v3483 = vpop.f32.mrf.mxu0
  %3484 = vmatprep.mubr.f32.mxu0 0.0
  %3485 = vmatmul.mubr.f32.gmra.mxu0 %v3275
  %v3486 = vpop.f32.mrf.mxu0
  %v3487 = vadd.f32 0.0, %v3486
  %v3488 = vpop.f32.mrf.mxu0
  %3489 = vmatprep.mubr.f32.mxu0 0.0
  %3490 = vmatmul.mubr.f32.gmra.mxu0 %v3278
  %v3491 = vpop.f32.mrf.mxu0
  %v3492 = vadd.f32 0.0, %v3491
  %v3493 = vpop.f32.mrf.mxu0
  %3494 = vmatprep.mubr.f32.mxu0 0.0
  %3495 = vmatmul.mubr.f32.gmra.mxu0 %v3281
  %v3496 = vpop.f32.mrf.mxu0
  %v3497 = vadd.f32 0.0, %v3496
  %v3498 = vpop.f32.mrf.mxu0
  %3499 = vmatprep.mubr.f32.mxu0 0.0
  %3500 = vmatmul.mubr.f32.gmra.mxu0 %v3284
  %v3501 = vpop.f32.mrf.mxu0
  %v3502 = vadd.f32 0.0, %v3501
  %v3503 = vpop.f32.mrf.mxu0
  %3504 = vmatprep.mubr.f32.mxu0 0.0
  %3505 = vmatmul.mubr.f32.gmra.mxu0 %v3287
  %v3506 = vpop.f32.mrf.mxu0
  %v3507 = vadd.f32 0.0, %v3506
  %v3508 = vpop.f32.mrf.mxu0
  %3509 = vmatprep.mubr.f32.mxu0 0.0
  %3510 = vmatmul.mubr.f32.gmra.mxu0 %v3290
  %v3511 = vpop.f32.mrf.mxu0
  %v3512 = vadd.f32 0.0, %v3511
  %v3513 = vpop.f32.mrf.mxu0
  %3514 = vmatprep.mubr.f32.mxu0 0.0
  %3515 = vmatmul.mubr.f32.gmra.mxu0 %v3293
  %v3516 = vpop.f32.mrf.mxu0
  %v3517 = vadd.f32 0.0, %v3516
  %v3518 = vpop.f32.mrf.mxu0
  %3519 = vdwg.mxu0
  %v3520 = vadd.f32 %v3127, %v3362
  %v3521 = vadd.f32 %v3128, %v3367
  %v3522 = vadd.f32 %v3129, %v3372
  %v3523 = vadd.f32 %v3130, %v3377
  %v3524 = vadd.f32 %v3131, %v3382
  %v3525 = vadd.f32 %v3132, %v3387
  %v3526 = vadd.f32 %v3133, %v3392
  %v3527 = vadd.f32 %v3134, %v3397
  %v3528 = vadd.f32 %v3135, %v3402
  %v3529 = vadd.f32 %v3136, %v3407
  %v3530 = vadd.f32 %v3137, %v3412
  %v3531 = vadd.f32 %v3138, %v3417
  %v3532 = vadd.f32 %v3139, %v3422
  %v3533 = vadd.f32 %v3140, %v3427
  %v3534 = vadd.f32 %v3141, %v3432
  %v3535 = vadd.f32 %v3142, %v3437
  %v3536 = vadd.f32 %v3143, %v3442
  %v3537 = vadd.f32 %v3144, %v3447
  %v3538 = vadd.f32 %v3145, %v3452
  %v3539 = vadd.f32 %v3146, %v3457
  %v3540 = vadd.f32 %v3147, %v3462
  %v3541 = vadd.f32 %v3148, %v3467
  %v3542 = vadd.f32 %v3149, %v3472
  %v3543 = vadd.f32 %v3150, %v3477
  %v3544 = vadd.f32 %v3151, %v3482
  %v3545 = vadd.f32 %v3152, %v3487
  %v3546 = vadd.f32 %v3153, %v3492
  %v3547 = vadd.f32 %v3154, %v3497
  %v3548 = vadd.f32 %v3155, %v3502
  %v3549 = vadd.f32 %v3156, %v3507
  %v3550 = vadd.f32 %v3157, %v3512
  %v3551 = vadd.f32 %v3158, %v3517
  %v3552 = vld [vmem:[#allocation4 + $0x19] sm:$0xff]
  %v3553 = vld [vmem:[#allocation4 + $0x21] sm:$0xff]
  %v3554 = vld [vmem:[#allocation4 + $0x29] sm:$0xff]
  %v3555 = vld [vmem:[#allocation4 + $0x31] sm:$0xff]
  %v3556 = vld [vmem:[#allocation4 + $0x39] sm:$0xff]
  %v3557 = vld [vmem:[#allocation4 + $0x41] sm:$0xff]
  %v3558 = vld [vmem:[#allocation4 + $0x49] sm:$0xff]
  %v3559 = vld [vmem:[#allocation4 + $0x51] sm:$0xff]
  %v3560 = vld [vmem:[#allocation4 + $0x59] sm:$0xff]
  %v3561 = vld [vmem:[#allocation4 + $0x61] sm:$0xff]
  %v3562 = vld [vmem:[#allocation4 + $0x69] sm:$0xff]
  %v3563 = vld [vmem:[#allocation4 + $0x71] sm:$0xff]
  %v3564 = vld [vmem:[#allocation4 + $0x79] sm:$0xff]
  %v3565 = vld [vmem:[#allocation4 + $0x81] sm:$0xff]
  %v3566 = vld [vmem:[#allocation4 + $0x89] sm:$0xff]
  %v3567 = vld [vmem:[#allocation4 + $0x91] sm:$0xff]
  %v3568 = vld [vmem:[#allocation4 + $0x99] sm:$0xff]
  %v3569 = vld [vmem:[#allocation4 + $0xa1] sm:$0xff]
  %v3570 = vld [vmem:[#allocation4 + $0xa9] sm:$0xff]
  %v3571 = vld [vmem:[#allocation4 + $0xb1] sm:$0xff]
  %v3572 = vld [vmem:[#allocation4 + $0xb9] sm:$0xff]
  %v3573 = vld [vmem:[#allocation4 + $0xc1] sm:$0xff]
  %v3574 = vld [vmem:[#allocation4 + $0xc9] sm:$0xff]
  %v3575 = vld [vmem:[#allocation4 + $0xd1] sm:$0xff]
  %v3576 = vld [vmem:[#allocation4 + $0xd9] sm:$0xff]
  %v3577 = vld [vmem:[#allocation4 + $0xe1] sm:$0xff]
  %v3578 = vld [vmem:[#allocation4 + $0xe9] sm:$0xff]
  %v3579 = vld [vmem:[#allocation4 + $0xf1] sm:$0xff]
  %v3580 = vld [vmem:[#allocation4 + $0xf9] sm:$0xff]
  %v3581 = vld [vmem:[#allocation4 + $0x101] sm:$0xff]
  %v3582 = vld [vmem:[#allocation4 + $0x109] sm:$0xff]
  %v3583 = vld [vmem:[#allocation4 + $0x111] sm:$0xff]
  %v3584 = vld [vmem:[%s2 + $0x140] sm:$0xff]
  %v3585 = vld [vmem:[%s2 + $0x148] sm:$0xff]
  %v3586 = vld [vmem:[%s2 + $0x150] sm:$0xff]
  %v3587 = vld [vmem:[%s2 + $0x158] sm:$0xff]
  %v3588 = vld [vmem:[%s2 + $0x160] sm:$0xff]
  %v3589 = vld [vmem:[%s2 + $0x168] sm:$0xff]
  %v3590 = vld [vmem:[%s2 + $0x170] sm:$0xff]
  %v3591 = vld [vmem:[%s2 + $0x178] sm:$0xff]
  %v3593 = vsel %vm1015, %v3552, 0
  %v3596 = vsel %vm1015, %v3553, 0
  %v3599 = vsel %vm1015, %v3554, 0
  %v3602 = vsel %vm1015, %v3555, 0
  %v3605 = vsel %vm1015, %v3556, 0
  %v3608 = vsel %vm1015, %v3557, 0
  %v3611 = vsel %vm1015, %v3558, 0
  %v3614 = vsel %vm1015, %v3559, 0
  %v3617 = vsel %vm1015, %v3560, 0
  %v3620 = vsel %vm1015, %v3561, 0
  %v3623 = vsel %vm1015, %v3562, 0
  %v3626 = vsel %vm1015, %v3563, 0
  %v3629 = vsel %vm1015, %v3564, 0
  %v3632 = vsel %vm1015, %v3565, 0
  %v3635 = vsel %vm1015, %v3566, 0
  %v3638 = vsel %vm1015, %v3567, 0
  %v3641 = vsel %vm1015, %v3568, 0
  %v3644 = vsel %vm1015, %v3569, 0
  %v3647 = vsel %vm1015, %v3570, 0
  %v3650 = vsel %vm1015, %v3571, 0
  %v3653 = vsel %vm1015, %v3572, 0
  %v3656 = vsel %vm1015, %v3573, 0
  %v3659 = vsel %vm1015, %v3574, 0
  %v3662 = vsel %vm1015, %v3575, 0
  %v3665 = vsel %vm1015, %v3576, 0
  %v3668 = vsel %vm1015, %v3577, 0
  %v3671 = vsel %vm1015, %v3578, 0
  %v3674 = vsel %vm1015, %v3579, 0
  %v3677 = vsel %vm1015, %v3580, 0
  %v3680 = vsel %vm1015, %v3581, 0
  %v3683 = vsel %vm1015, %v3582, 0
  %v3686 = vsel %vm1015, %v3583, 0
  %3688 = vmatprep.subr.mxu0 0.0
  %3689 = vmatpush1.msra.mxu0 0.0
  %3690 = vmatprep.subr.mxu0 0.0
  %3691 = vmatpush1.msra.mxu0 0.0
  %3692 = vmatprep.subr.mxu0 0.0
  %3693 = vmatpush1.msra.mxu0 0.0
  %3694 = vmatprep.subr.mxu0 0.0
  %3695 = vmatpush1.msra.mxu0 0.0
  %3696 = vmatprep.subr.mxu0 0.0
  %3697 = vmatpush1.msra.mxu0 0.0
  %3698 = vmatprep.subr.mxu0 0.0
  %3699 = vmatpush1.msra.mxu0 0.0
  %3700 = vmatprep.subr.mxu0 0.0
  %3701 = vmatpush1.msra.mxu0 0.0
  %3702 = vmatprep.subr.mxu0 0.0
  %3703 = vmatpush1.msra.mxu0 0.0
  %3704 = vmatprep.subr.mxu0 0.0
  %3705 = vmatpush1.msra.mxu0 %v3591
  %3706 = vmatprep.subr.mxu0 0.0
  %3707 = vmatpush1.msra.mxu0 %v3590
  %3708 = vmatprep.subr.mxu0 0.0
  %3709 = vmatpush1.msra.mxu0 %v3589
  %3710 = vmatprep.subr.mxu0 0.0
  %3711 = vmatpush1.msra.mxu0 %v3588
  %3712 = vmatprep.subr.mxu0 0.0
  %3713 = vmatpush1.msra.mxu0 %v3587
  %3714 = vmatprep.subr.mxu0 0.0
  %3715 = vmatpush1.msra.mxu0 %v3586
  %3716 = vmatprep.subr.mxu0 0.0
  %3717 = vmatpush1.msra.mxu0 %v3585
  %3718 = vmatprep.subr.mxu0 0.0
  %3719 = vmatpush1.msra.mxu0 %v3584
  %3720 = vmatprep.subr.mxu0 0.0
  %3721 = vmatpush2.msra.mxu0 0.0
  %3722 = vmatprep.subr.mxu0 0.0
  %3723 = vmatpush2.msra.mxu0 0.0
  %3724 = vmatprep.subr.mxu0 0.0
  %3725 = vmatpush2.msra.mxu0 0.0
  %3726 = vmatprep.subr.mxu0 0.0
  %3727 = vmatpush2.msra.mxu0 0.0
  %3728 = vmatprep.subr.mxu0 0.0
  %3729 = vmatpush2.msra.mxu0 0.0
  %3730 = vmatprep.subr.mxu0 0.0
  %3731 = vmatpush2.msra.mxu0 0.0
  %3732 = vmatprep.subr.mxu0 0.0
  %3733 = vmatpush2.msra.mxu0 0.0
  %3734 = vmatprep.subr.mxu0 0.0
  %3735 = vmatpush2.msra.mxu0 0.0
  %3736 = vmatprep.subr.mxu0 0.0
  %3737 = vmatpush2.msra.mxu0 0.0
  %3738 = vmatprep.subr.mxu0 0.0
  %3739 = vmatpush2.msra.mxu0 0.0
  %3740 = vmatprep.subr.mxu0 0.0
  %3741 = vmatpush2.msra.mxu0 0.0
  %3742 = vmatprep.subr.mxu0 0.0
  %3743 = vmatpush2.msra.mxu0 0.0
  %3744 = vmatprep.subr.mxu0 0.0
  %3745 = vmatpush2.msra.mxu0 0.0
  %3746 = vmatprep.subr.mxu0 0.0
  %3747 = vmatpush2.msra.mxu0 0.0
  %3748 = vmatprep.subr.mxu0 0.0
  %3749 = vmatpush2.msra.mxu0 0.0
  %3750 = vmatprep.subr.mxu0 0.0
  %3751 = vmatpush2.msra.mxu0 0.0
  %3752 = vmatprep.mubr.f32.mxu0 0.0
  %3753 = vmatmul.mubr.f32.gmra.mxu0 %v3593
  %v3754 = vpop.f32.mrf.mxu0
  %v3755 = vadd.f32 0.0, %v3754
  %v3756 = vpop.f32.mrf.mxu0
  %3757 = vmatprep.mubr.f32.mxu0 0.0
  %3758 = vmatmul.mubr.f32.gmra.mxu0 %v3596
  %v3759 = vpop.f32.mrf.mxu0
  %v3760 = vadd.f32 0.0, %v3759
  %v3761 = vpop.f32.mrf.mxu0
  %3762 = vmatprep.mubr.f32.mxu0 0.0
  %3763 = vmatmul.mubr.f32.gmra.mxu0 %v3599
  %v3764 = vpop.f32.mrf.mxu0
  %v3765 = vadd.f32 0.0, %v3764
  %v3766 = vpop.f32.mrf.mxu0
  %3767 = vmatprep.mubr.f32.mxu0 0.0
  %3768 = vmatmul.mubr.f32.gmra.mxu0 %v3602
  %v3769 = vpop.f32.mrf.mxu0
  %v3770 = vadd.f32 0.0, %v3769
  %v3771 = vpop.f32.mrf.mxu0
  %3772 = vmatprep.mubr.f32.mxu0 0.0
  %3773 = vmatmul.mubr.f32.gmra.mxu0 %v3605
  %v3774 = vpop.f32.mrf.mxu0
  %v3775 = vadd.f32 0.0, %v3774
  %v3776 = vpop.f32.mrf.mxu0
  %3777 = vmatprep.mubr.f32.mxu0 0.0
  %3778 = vmatmul.mubr.f32.gmra.mxu0 %v3608
  %v3779 = vpop.f32.mrf.mxu0
  %v3780 = vadd.f32 0.0, %v3779
  %v3781 = vpop.f32.mrf.mxu0
  %3782 = vmatprep.mubr.f32.mxu0 0.0
  %3783 = vmatmul.mubr.f32.gmra.mxu0 %v3611
  %v3784 = vpop.f32.mrf.mxu0
  %v3785 = vadd.f32 0.0, %v3784
  %v3786 = vpop.f32.mrf.mxu0
  %3787 = vmatprep.mubr.f32.mxu0 0.0
  %3788 = vmatmul.mubr.f32.gmra.mxu0 %v3614
  %v3789 = vpop.f32.mrf.mxu0
  %v3790 = vadd.f32 0.0, %v3789
  %v3791 = vpop.f32.mrf.mxu0
  %3792 = vmatprep.mubr.f32.mxu0 0.0
  %3793 = vmatmul.mubr.f32.gmra.mxu0 %v3617
  %v3794 = vpop.f32.mrf.mxu0
  %v3795 = vadd.f32 0.0, %v3794
  %v3796 = vpop.f32.mrf.mxu0
  %3797 = vmatprep.mubr.f32.mxu0 0.0
  %3798 = vmatmul.mubr.f32.gmra.mxu0 %v3620
  %v3799 = vpop.f32.mrf.mxu0
  %v3800 = vadd.f32 0.0, %v3799
  %v3801 = vpop.f32.mrf.mxu0
  %3802 = vmatprep.mubr.f32.mxu0 0.0
  %3803 = vmatmul.mubr.f32.gmra.mxu0 %v3623
  %v3804 = vpop.f32.mrf.mxu0
  %v3805 = vadd.f32 0.0, %v3804
  %v3806 = vpop.f32.mrf.mxu0
  %3807 = vmatprep.mubr.f32.mxu0 0.0
  %3808 = vmatmul.mubr.f32.gmra.mxu0 %v3626
  %v3809 = vpop.f32.mrf.mxu0
  %v3810 = vadd.f32 0.0, %v3809
  %v3811 = vpop.f32.mrf.mxu0
  %3812 = vmatprep.mubr.f32.mxu0 0.0
  %3813 = vmatmul.mubr.f32.gmra.mxu0 %v3629
  %v3814 = vpop.f32.mrf.mxu0
  %v3815 = vadd.f32 0.0, %v3814
  %v3816 = vpop.f32.mrf.mxu0
  %3817 = vmatprep.mubr.f32.mxu0 0.0
  %3818 = vmatmul.mubr.f32.gmra.mxu0 %v3632
  %v3819 = vpop.f32.mrf.mxu0
  %v3820 = vadd.f32 0.0, %v3819
  %v3821 = vpop.f32.mrf.mxu0
  %3822 = vmatprep.mubr.f32.mxu0 0.0
  %3823 = vmatmul.mubr.f32.gmra.mxu0 %v3635
  %v3824 = vpop.f32.mrf.mxu0
  %v3825 = vadd.f32 0.0, %v3824
  %v3826 = vpop.f32.mrf.mxu0
  %3827 = vmatprep.mubr.f32.mxu0 0.0
  %3828 = vmatmul.mubr.f32.gmra.mxu0 %v3638
  %v3829 = vpop.f32.mrf.mxu0
  %v3830 = vadd.f32 0.0, %v3829
  %v3831 = vpop.f32.mrf.mxu0
  %3832 = vmatprep.mubr.f32.mxu0 0.0
  %3833 = vmatmul.mubr.f32.gmra.mxu0 %v3641
  %v3834 = vpop.f32.mrf.mxu0
  %v3835 = vadd.f32 0.0, %v3834
  %v3836 = vpop.f32.mrf.mxu0
  %3837 = vmatprep.mubr.f32.mxu0 0.0
  %3838 = vmatmul.mubr.f32.gmra.mxu0 %v3644
  %v3839 = vpop.f32.mrf.mxu0
  %v3840 = vadd.f32 0.0, %v3839
  %v3841 = vpop.f32.mrf.mxu0
  %3842 = vmatprep.mubr.f32.mxu0 0.0
  %3843 = vmatmul.mubr.f32.gmra.mxu0 %v3647
  %v3844 = vpop.f32.mrf.mxu0
  %v3845 = vadd.f32 0.0, %v3844
  %v3846 = vpop.f32.mrf.mxu0
  %3847 = vmatprep.mubr.f32.mxu0 0.0
  %3848 = vmatmul.mubr.f32.gmra.mxu0 %v3650
  %v3849 = vpop.f32.mrf.mxu0
  %v3850 = vadd.f32 0.0, %v3849
  %v3851 = vpop.f32.mrf.mxu0
  %3852 = vmatprep.mubr.f32.mxu0 0.0
  %3853 = vmatmul.mubr.f32.gmra.mxu0 %v3653
  %v3854 = vpop.f32.mrf.mxu0
  %v3855 = vadd.f32 0.0, %v3854
  %v3856 = vpop.f32.mrf.mxu0
  %3857 = vmatprep.mubr.f32.mxu0 0.0
  %3858 = vmatmul.mubr.f32.gmra.mxu0 %v3656
  %v3859 = vpop.f32.mrf.mxu0
  %v3860 = vadd.f32 0.0, %v3859
  %v3861 = vpop.f32.mrf.mxu0
  %3862 = vmatprep.mubr.f32.mxu0 0.0
  %3863 = vmatmul.mubr.f32.gmra.mxu0 %v3659
  %v3864 = vpop.f32.mrf.mxu0
  %v3865 = vadd.f32 0.0, %v3864
  %v3866 = vpop.f32.mrf.mxu0
  %3867 = vmatprep.mubr.f32.mxu0 0.0
  %3868 = vmatmul.mubr.f32.gmra.mxu0 %v3662
  %v3869 = vpop.f32.mrf.mxu0
  %v3870 = vadd.f32 0.0, %v3869
  %v3871 = vpop.f32.mrf.mxu0
  %3872 = vmatprep.mubr.f32.mxu0 0.0
  %3873 = vmatmul.mubr.f32.gmra.mxu0 %v3665
  %v3874 = vpop.f32.mrf.mxu0
  %v3875 = vadd.f32 0.0, %v3874
  %v3876 = vpop.f32.mrf.mxu0
  %3877 = vmatprep.mubr.f32.mxu0 0.0
  %3878 = vmatmul.mubr.f32.gmra.mxu0 %v3668
  %v3879 = vpop.f32.mrf.mxu0
  %v3880 = vadd.f32 0.0, %v3879
  %v3881 = vpop.f32.mrf.mxu0
  %3882 = vmatprep.mubr.f32.mxu0 0.0
  %3883 = vmatmul.mubr.f32.gmra.mxu0 %v3671
  %v3884 = vpop.f32.mrf.mxu0
  %v3885 = vadd.f32 0.0, %v3884
  %v3886 = vpop.f32.mrf.mxu0
  %3887 = vmatprep.mubr.f32.mxu0 0.0
  %3888 = vmatmul.mubr.f32.gmra.mxu0 %v3674
  %v3889 = vpop.f32.mrf.mxu0
  %v3890 = vadd.f32 0.0, %v3889
  %v3891 = vpop.f32.mrf.mxu0
  %3892 = vmatprep.mubr.f32.mxu0 0.0
  %3893 = vmatmul.mubr.f32.gmra.mxu0 %v3677
  %v3894 = vpop.f32.mrf.mxu0
  %v3895 = vadd.f32 0.0, %v3894
  %v3896 = vpop.f32.mrf.mxu0
  %3897 = vmatprep.mubr.f32.mxu0 0.0
  %3898 = vmatmul.mubr.f32.gmra.mxu0 %v3680
  %v3899 = vpop.f32.mrf.mxu0
  %v3900 = vadd.f32 0.0, %v3899
  %v3901 = vpop.f32.mrf.mxu0
  %3902 = vmatprep.mubr.f32.mxu0 0.0
  %3903 = vmatmul.mubr.f32.gmra.mxu0 %v3683
  %v3904 = vpop.f32.mrf.mxu0
  %v3905 = vadd.f32 0.0, %v3904
  %v3906 = vpop.f32.mrf.mxu0
  %3907 = vmatprep.mubr.f32.mxu0 0.0
  %3908 = vmatmul.mubr.f32.gmra.mxu0 %v3686
  %v3909 = vpop.f32.mrf.mxu0
  %v3910 = vadd.f32 0.0, %v3909
  %v3911 = vpop.f32.mrf.mxu0
  %3912 = vdwg.mxu0
  %v3913 = vadd.f32 %v3520, %v3755
  %v3914 = vadd.f32 %v3521, %v3760
  %v3915 = vadd.f32 %v3522, %v3765
  %v3916 = vadd.f32 %v3523, %v3770
  %v3917 = vadd.f32 %v3524, %v3775
  %v3918 = vadd.f32 %v3525, %v3780
  %v3919 = vadd.f32 %v3526, %v3785
  %v3920 = vadd.f32 %v3527, %v3790
  %v3921 = vadd.f32 %v3528, %v3795
  %v3922 = vadd.f32 %v3529, %v3800
  %v3923 = vadd.f32 %v3530, %v3805
  %v3924 = vadd.f32 %v3531, %v3810
  %v3925 = vadd.f32 %v3532, %v3815
  %v3926 = vadd.f32 %v3533, %v3820
  %v3927 = vadd.f32 %v3534, %v3825
  %v3928 = vadd.f32 %v3535, %v3830
  %v3929 = vadd.f32 %v3536, %v3835
  %v3930 = vadd.f32 %v3537, %v3840
  %v3931 = vadd.f32 %v3538, %v3845
  %v3932 = vadd.f32 %v3539, %v3850
  %v3933 = vadd.f32 %v3540, %v3855
  %v3934 = vadd.f32 %v3541, %v3860
  %v3935 = vadd.f32 %v3542, %v3865
  %v3936 = vadd.f32 %v3543, %v3870
  %v3937 = vadd.f32 %v3544, %v3875
  %v3938 = vadd.f32 %v3545, %v3880
  %v3939 = vadd.f32 %v3546, %v3885
  %v3940 = vadd.f32 %v3547, %v3890
  %v3941 = vadd.f32 %v3548, %v3895
  %v3942 = vadd.f32 %v3549, %v3900
  %v3943 = vadd.f32 %v3550, %v3905
  %v3944 = vadd.f32 %v3551, %v3910
  %v3945 = vld [vmem:[#allocation3 + $0x27] sm:$0xff]
  %v3946 = vld [vmem:[#allocation3 + $0x2f] sm:$0xff]
  %v3947 = vld [vmem:[#allocation3 + $0x37] sm:$0xff]
  %v3948 = vld [vmem:[#allocation3 + $0x3f] sm:$0xff]
  %v3949 = vld [vmem:[#allocation3 + $0x47] sm:$0xff]
  %v3950 = vld [vmem:[#allocation3 + $0x4f] sm:$0xff]
  %v3951 = vld [vmem:[#allocation3 + $0x57] sm:$0xff]
  %v3952 = vld [vmem:[#allocation3 + $0x5f] sm:$0xff]
  %v3953 = vld [vmem:[#allocation3 + $0x67] sm:$0xff]
  %v3954 = vld [vmem:[#allocation3 + $0x6f] sm:$0xff]
  %v3955 = vld [vmem:[#allocation3 + $0x77] sm:$0xff]
  %v3956 = vld [vmem:[#allocation3 + $0x7f] sm:$0xff]
  %v3957 = vld [vmem:[#allocation3 + $0x87] sm:$0xff]
  %v3958 = vld [vmem:[#allocation3 + $0x8f] sm:$0xff]
  %v3959 = vld [vmem:[#allocation3 + $0x97] sm:$0xff]
  %v3960 = vld [vmem:[#allocation3 + $0x9f] sm:$0xff]
  %v3961 = vld [vmem:[#allocation3 + $0xa7] sm:$0xff]
  %v3962 = vld [vmem:[#allocation3 + $0xaf] sm:$0xff]
  %v3963 = vld [vmem:[#allocation3 + $0xb7] sm:$0xff]
  %v3964 = vld [vmem:[#allocation3 + $0xbf] sm:$0xff]
  %v3965 = vld [vmem:[#allocation3 + $0xc7] sm:$0xff]
  %v3966 = vld [vmem:[#allocation3 + $0xcf] sm:$0xff]
  %v3967 = vld [vmem:[#allocation3 + $0xd7] sm:$0xff]
  %v3968 = vld [vmem:[#allocation3 + $0xdf] sm:$0xff]
  %v3969 = vld [vmem:[#allocation3 + $0xe7] sm:$0xff]
  %v3970 = vld [vmem:[#allocation3 + $0xef] sm:$0xff]
  %v3971 = vld [vmem:[#allocation3 + $0xf7] sm:$0xff]
  %v3972 = vld [vmem:[#allocation3 + $0xff] sm:$0xff]
  %v3973 = vld [vmem:[#allocation3 + $0x107] sm:$0xff]
  %v3974 = vld [vmem:[#allocation3 + $0x10f] sm:$0xff]
  %v3975 = vld [vmem:[#allocation3 + $0x117] sm:$0xff]
  %v3976 = vld [vmem:[#allocation3 + $0x11f] sm:$0xff]
  %v3977 = vld [vmem:[%s2 + $0x180] sm:$0xff]
  %v3978 = vld [vmem:[%s2 + $0x188] sm:$0xff]
  %v3979 = vld [vmem:[%s2 + $0x190] sm:$0xff]
  %v3980 = vld [vmem:[%s2 + $0x198] sm:$0xff]
  %v3981 = vld [vmem:[%s2 + $0x1a0] sm:$0xff]
  %v3982 = vld [vmem:[%s2 + $0x1a8] sm:$0xff]
  %v3983 = vld [vmem:[%s2 + $0x1b0] sm:$0xff]
  %v3984 = vld [vmem:[%s2 + $0x1b8] sm:$0xff]
  %v3986 = vsel %vm1015, %v3945, 0
  %v3989 = vsel %vm1015, %v3946, 0
  %v3992 = vsel %vm1015, %v3947, 0
  %v3995 = vsel %vm1015, %v3948, 0
  %v3998 = vsel %vm1015, %v3949, 0
  %v4001 = vsel %vm1015, %v3950, 0
  %v4004 = vsel %vm1015, %v3951, 0
  %v4007 = vsel %vm1015, %v3952, 0
  %v4010 = vsel %vm1015, %v3953, 0
  %v4013 = vsel %vm1015, %v3954, 0
  %v4016 = vsel %vm1015, %v3955, 0
  %v4019 = vsel %vm1015, %v3956, 0
  %v4022 = vsel %vm1015, %v3957, 0
  %v4025 = vsel %vm1015, %v3958, 0
  %v4028 = vsel %vm1015, %v3959, 0
  %v4031 = vsel %vm1015, %v3960, 0
  %v4034 = vsel %vm1015, %v3961, 0
  %v4037 = vsel %vm1015, %v3962, 0
  %v4040 = vsel %vm1015, %v3963, 0
  %v4043 = vsel %vm1015, %v3964, 0
  %v4046 = vsel %vm1015, %v3965, 0
  %v4049 = vsel %vm1015, %v3966, 0
  %v4052 = vsel %vm1015, %v3967, 0
  %v4055 = vsel %vm1015, %v3968, 0
  %v4058 = vsel %vm1015, %v3969, 0
  %v4061 = vsel %vm1015, %v3970, 0
  %v4064 = vsel %vm1015, %v3971, 0
  %v4067 = vsel %vm1015, %v3972, 0
  %v4070 = vsel %vm1015, %v3973, 0
  %v4073 = vsel %vm1015, %v3974, 0
  %v4076 = vsel %vm1015, %v3975, 0
  %v4079 = vsel %vm1015, %v3976, 0
  %4081 = vmatprep.subr.mxu0 0.0
  %4082 = vmatpush1.msra.mxu0 0.0
  %4083 = vmatprep.subr.mxu0 0.0
  %4084 = vmatpush1.msra.mxu0 0.0
  %4085 = vmatprep.subr.mxu0 0.0
  %4086 = vmatpush1.msra.mxu0 0.0
  %4087 = vmatprep.subr.mxu0 0.0
  %4088 = vmatpush1.msra.mxu0 0.0
  %4089 = vmatprep.subr.mxu0 0.0
  %4090 = vmatpush1.msra.mxu0 0.0
  %4091 = vmatprep.subr.mxu0 0.0
  %4092 = vmatpush1.msra.mxu0 0.0
  %4093 = vmatprep.subr.mxu0 0.0
  %4094 = vmatpush1.msra.mxu0 0.0
  %4095 = vmatprep.subr.mxu0 0.0
  %4096 = vmatpush1.msra.mxu0 0.0
  %4097 = vmatprep.subr.mxu0 0.0
  %4098 = vmatpush1.msra.mxu0 %v3984
  %4099 = vmatprep.subr.mxu0 0.0
  %4100 = vmatpush1.msra.mxu0 %v3983
  %4101 = vmatprep.subr.mxu0 0.0
  %4102 = vmatpush1.msra.mxu0 %v3982
  %4103 = vmatprep.subr.mxu0 0.0
  %4104 = vmatpush1.msra.mxu0 %v3981
  %4105 = vmatprep.subr.mxu0 0.0
  %4106 = vmatpush1.msra.mxu0 %v3980
  %4107 = vmatprep.subr.mxu0 0.0
  %4108 = vmatpush1.msra.mxu0 %v3979
  %4109 = vmatprep.subr.mxu0 0.0
  %4110 = vmatpush1.msra.mxu0 %v3978
  %4111 = vmatprep.subr.mxu0 0.0
  %4112 = vmatpush1.msra.mxu0 %v3977
  %4113 = vmatprep.subr.mxu0 0.0
  %4114 = vmatpush2.msra.mxu0 0.0
  %4115 = vmatprep.subr.mxu0 0.0
  %4116 = vmatpush2.msra.mxu0 0.0
  %4117 = vmatprep.subr.mxu0 0.0
  %4118 = vmatpush2.msra.mxu0 0.0
  %4119 = vmatprep.subr.mxu0 0.0
  %4120 = vmatpush2.msra.mxu0 0.0
  %4121 = vmatprep.subr.mxu0 0.0
  %4122 = vmatpush2.msra.mxu0 0.0
  %4123 = vmatprep.subr.mxu0 0.0
  %4124 = vmatpush2.msra.mxu0 0.0
  %4125 = vmatprep.subr.mxu0 0.0
  %4126 = vmatpush2.msra.mxu0 0.0
  %4127 = vmatprep.subr.mxu0 0.0
  %4128 = vmatpush2.msra.mxu0 0.0
  %4129 = vmatprep.subr.mxu0 0.0
  %4130 = vmatpush2.msra.mxu0 0.0
  %4131 = vmatprep.subr.mxu0 0.0
  %4132 = vmatpush2.msra.mxu0 0.0
  %4133 = vmatprep.subr.mxu0 0.0
  %4134 = vmatpush2.msra.mxu0 0.0
  %4135 = vmatprep.subr.mxu0 0.0
  %4136 = vmatpush2.msra.mxu0 0.0
  %4137 = vmatprep.subr.mxu0 0.0
  %4138 = vmatpush2.msra.mxu0 0.0
  %4139 = vmatprep.subr.mxu0 0.0
  %4140 = vmatpush2.msra.mxu0 0.0
  %4141 = vmatprep.subr.mxu0 0.0
  %4142 = vmatpush2.msra.mxu0 0.0
  %4143 = vmatprep.subr.mxu0 0.0
  %4144 = vmatpush2.msra.mxu0 0.0
  %4145 = vmatprep.mubr.f32.mxu0 0.0
  %4146 = vmatmul.mubr.f32.gmra.mxu0 %v3986
  %v4147 = vpop.f32.mrf.mxu0
  %v4148 = vadd.f32 0.0, %v4147
  %v4149 = vpop.f32.mrf.mxu0
  %4150 = vmatprep.mubr.f32.mxu0 0.0
  %4151 = vmatmul.mubr.f32.gmra.mxu0 %v3989
  %v4152 = vpop.f32.mrf.mxu0
  %v4153 = vadd.f32 0.0, %v4152
  %v4154 = vpop.f32.mrf.mxu0
  %4155 = vmatprep.mubr.f32.mxu0 0.0
  %4156 = vmatmul.mubr.f32.gmra.mxu0 %v3992
  %v4157 = vpop.f32.mrf.mxu0
  %v4158 = vadd.f32 0.0, %v4157
  %v4159 = vpop.f32.mrf.mxu0
  %4160 = vmatprep.mubr.f32.mxu0 0.0
  %4161 = vmatmul.mubr.f32.gmra.mxu0 %v3995
  %v4162 = vpop.f32.mrf.mxu0
  %v4163 = vadd.f32 0.0, %v4162
  %v4164 = vpop.f32.mrf.mxu0
  %4165 = vmatprep.mubr.f32.mxu0 0.0
  %4166 = vmatmul.mubr.f32.gmra.mxu0 %v3998
  %v4167 = vpop.f32.mrf.mxu0
  %v4168 = vadd.f32 0.0, %v4167
  %v4169 = vpop.f32.mrf.mxu0
  %4170 = vmatprep.mubr.f32.mxu0 0.0
  %4171 = vmatmul.mubr.f32.gmra.mxu0 %v4001
  %v4172 = vpop.f32.mrf.mxu0
  %v4173 = vadd.f32 0.0, %v4172
  %v4174 = vpop.f32.mrf.mxu0
  %4175 = vmatprep.mubr.f32.mxu0 0.0
  %4176 = vmatmul.mubr.f32.gmra.mxu0 %v4004
  %v4177 = vpop.f32.mrf.mxu0
  %v4178 = vadd.f32 0.0, %v4177
  %v4179 = vpop.f32.mrf.mxu0
  %4180 = vmatprep.mubr.f32.mxu0 0.0
  %4181 = vmatmul.mubr.f32.gmra.mxu0 %v4007
  %v4182 = vpop.f32.mrf.mxu0
  %v4183 = vadd.f32 0.0, %v4182
  %v4184 = vpop.f32.mrf.mxu0
  %4185 = vmatprep.mubr.f32.mxu0 0.0
  %4186 = vmatmul.mubr.f32.gmra.mxu0 %v4010
  %v4187 = vpop.f32.mrf.mxu0
  %v4188 = vadd.f32 0.0, %v4187
  %v4189 = vpop.f32.mrf.mxu0
  %4190 = vmatprep.mubr.f32.mxu0 0.0
  %4191 = vmatmul.mubr.f32.gmra.mxu0 %v4013
  %v4192 = vpop.f32.mrf.mxu0
  %v4193 = vadd.f32 0.0, %v4192
  %v4194 = vpop.f32.mrf.mxu0
  %4195 = vmatprep.mubr.f32.mxu0 0.0
  %4196 = vmatmul.mubr.f32.gmra.mxu0 %v4016
  %v4197 = vpop.f32.mrf.mxu0
  %v4198 = vadd.f32 0.0, %v4197
  %v4199 = vpop.f32.mrf.mxu0
  %4200 = vmatprep.mubr.f32.mxu0 0.0
  %4201 = vmatmul.mubr.f32.gmra.mxu0 %v4019
  %v4202 = vpop.f32.mrf.mxu0
  %v4203 = vadd.f32 0.0, %v4202
  %v4204 = vpop.f32.mrf.mxu0
  %4205 = vmatprep.mubr.f32.mxu0 0.0
  %4206 = vmatmul.mubr.f32.gmra.mxu0 %v4022
  %v4207 = vpop.f32.mrf.mxu0
  %v4208 = vadd.f32 0.0, %v4207
  %v4209 = vpop.f32.mrf.mxu0
  %4210 = vmatprep.mubr.f32.mxu0 0.0
  %4211 = vmatmul.mubr.f32.gmra.mxu0 %v4025
  %v4212 = vpop.f32.mrf.mxu0
  %v4213 = vadd.f32 0.0, %v4212
  %v4214 = vpop.f32.mrf.mxu0
  %4215 = vmatprep.mubr.f32.mxu0 0.0
  %4216 = vmatmul.mubr.f32.gmra.mxu0 %v4028
  %v4217 = vpop.f32.mrf.mxu0
  %v4218 = vadd.f32 0.0, %v4217
  %v4219 = vpop.f32.mrf.mxu0
  %4220 = vmatprep.mubr.f32.mxu0 0.0
  %4221 = vmatmul.mubr.f32.gmra.mxu0 %v4031
  %v4222 = vpop.f32.mrf.mxu0
  %v4223 = vadd.f32 0.0, %v4222
  %v4224 = vpop.f32.mrf.mxu0
  %4225 = vmatprep.mubr.f32.mxu0 0.0
  %4226 = vmatmul.mubr.f32.gmra.mxu0 %v4034
  %v4227 = vpop.f32.mrf.mxu0
  %v4228 = vadd.f32 0.0, %v4227
  %v4229 = vpop.f32.mrf.mxu0
  %4230 = vmatprep.mubr.f32.mxu0 0.0
  %4231 = vmatmul.mubr.f32.gmra.mxu0 %v4037
  %v4232 = vpop.f32.mrf.mxu0
  %v4233 = vadd.f32 0.0, %v4232
  %v4234 = vpop.f32.mrf.mxu0
  %4235 = vmatprep.mubr.f32.mxu0 0.0
  %4236 = vmatmul.mubr.f32.gmra.mxu0 %v4040
  %v4237 = vpop.f32.mrf.mxu0
  %v4238 = vadd.f32 0.0, %v4237
  %v4239 = vpop.f32.mrf.mxu0
  %4240 = vmatprep.mubr.f32.mxu0 0.0
  %4241 = vmatmul.mubr.f32.gmra.mxu0 %v4043
  %v4242 = vpop.f32.mrf.mxu0
  %v4243 = vadd.f32 0.0, %v4242
  %v4244 = vpop.f32.mrf.mxu0
  %4245 = vmatprep.mubr.f32.mxu0 0.0
  %4246 = vmatmul.mubr.f32.gmra.mxu0 %v4046
  %v4247 = vpop.f32.mrf.mxu0
  %v4248 = vadd.f32 0.0, %v4247
  %v4249 = vpop.f32.mrf.mxu0
  %4250 = vmatprep.mubr.f32.mxu0 0.0
  %4251 = vmatmul.mubr.f32.gmra.mxu0 %v4049
  %v4252 = vpop.f32.mrf.mxu0
  %v4253 = vadd.f32 0.0, %v4252
  %v4254 = vpop.f32.mrf.mxu0
  %4255 = vmatprep.mubr.f32.mxu0 0.0
  %4256 = vmatmul.mubr.f32.gmra.mxu0 %v4052
  %v4257 = vpop.f32.mrf.mxu0
  %v4258 = vadd.f32 0.0, %v4257
  %v4259 = vpop.f32.mrf.mxu0
  %4260 = vmatprep.mubr.f32.mxu0 0.0
  %4261 = vmatmul.mubr.f32.gmra.mxu0 %v4055
  %v4262 = vpop.f32.mrf.mxu0
  %v4263 = vadd.f32 0.0, %v4262
  %v4264 = vpop.f32.mrf.mxu0
  %4265 = vmatprep.mubr.f32.mxu0 0.0
  %4266 = vmatmul.mubr.f32.gmra.mxu0 %v4058
  %v4267 = vpop.f32.mrf.mxu0
  %v4268 = vadd.f32 0.0, %v4267
  %v4269 = vpop.f32.mrf.mxu0
  %4270 = vmatprep.mubr.f32.mxu0 0.0
  %4271 = vmatmul.mubr.f32.gmra.mxu0 %v4061
  %v4272 = vpop.f32.mrf.mxu0
  %v4273 = vadd.f32 0.0, %v4272
  %v4274 = vpop.f32.mrf.mxu0
  %4275 = vmatprep.mubr.f32.mxu0 0.0
  %4276 = vmatmul.mubr.f32.gmra.mxu0 %v4064
  %v4277 = vpop.f32.mrf.mxu0
  %v4278 = vadd.f32 0.0, %v4277
  %v4279 = vpop.f32.mrf.mxu0
  %4280 = vmatprep.mubr.f32.mxu0 0.0
  %4281 = vmatmul.mubr.f32.gmra.mxu0 %v4067
  %v4282 = vpop.f32.mrf.mxu0
  %v4283 = vadd.f32 0.0, %v4282
  %v4284 = vpop.f32.mrf.mxu0
  %4285 = vmatprep.mubr.f32.mxu0 0.0
  %4286 = vmatmul.mubr.f32.gmra.mxu0 %v4070
  %v4287 = vpop.f32.mrf.mxu0
  %v4288 = vadd.f32 0.0, %v4287
  %v4289 = vpop.f32.mrf.mxu0
  %4290 = vmatprep.mubr.f32.mxu0 0.0
  %4291 = vmatmul.mubr.f32.gmra.mxu0 %v4073
  %v4292 = vpop.f32.mrf.mxu0
  %v4293 = vadd.f32 0.0, %v4292
  %v4294 = vpop.f32.mrf.mxu0
  %4295 = vmatprep.mubr.f32.mxu0 0.0
  %4296 = vmatmul.mubr.f32.gmra.mxu0 %v4076
  %v4297 = vpop.f32.mrf.mxu0
  %v4298 = vadd.f32 0.0, %v4297
  %v4299 = vpop.f32.mrf.mxu0
  %4300 = vmatprep.mubr.f32.mxu0 0.0
  %4301 = vmatmul.mubr.f32.gmra.mxu0 %v4079
  %v4302 = vpop.f32.mrf.mxu0
  %v4303 = vadd.f32 0.0, %v4302
  %v4304 = vpop.f32.mrf.mxu0
  %4305 = vdwg.mxu0
  %v4306 = vadd.f32 %v3913, %v4148
  %v4307 = vadd.f32 %v3914, %v4153
  %v4308 = vadd.f32 %v3915, %v4158
  %v4309 = vadd.f32 %v3916, %v4163
  %v4310 = vadd.f32 %v3917, %v4168
  %v4311 = vadd.f32 %v3918, %v4173
  %v4312 = vadd.f32 %v3919, %v4178
  %v4313 = vadd.f32 %v3920, %v4183
  %v4314 = vadd.f32 %v3921, %v4188
  %v4315 = vadd.f32 %v3922, %v4193
  %v4316 = vadd.f32 %v3923, %v4198
  %v4317 = vadd.f32 %v3924, %v4203
  %v4318 = vadd.f32 %v3925, %v4208
  %v4319 = vadd.f32 %v3926, %v4213
  %v4320 = vadd.f32 %v3927, %v4218
  %v4321 = vadd.f32 %v3928, %v4223
  %v4322 = vadd.f32 %v3929, %v4228
  %v4323 = vadd.f32 %v3930, %v4233
  %v4324 = vadd.f32 %v3931, %v4238
  %v4325 = vadd.f32 %v3932, %v4243
  %v4326 = vadd.f32 %v3933, %v4248
  %v4327 = vadd.f32 %v3934, %v4253
  %v4328 = vadd.f32 %v3935, %v4258
  %v4329 = vadd.f32 %v3936, %v4263
  %v4330 = vadd.f32 %v3937, %v4268
  %v4331 = vadd.f32 %v3938, %v4273
  %v4332 = vadd.f32 %v3939, %v4278
  %v4333 = vadd.f32 %v3940, %v4283
  %v4334 = vadd.f32 %v3941, %v4288
  %v4335 = vadd.f32 %v3942, %v4293
  %v4336 = vadd.f32 %v3943, %v4298
  %v4337 = vadd.f32 %v3944, %v4303
  %v4338 = vld [vmem:[#allocation2 + $0x28] sm:$0xff]
  %v4339 = vld [vmem:[#allocation2 + $0x30] sm:$0xff]
  %v4340 = vld [vmem:[#allocation2 + $0x38] sm:$0xff]
  %v4341 = vld [vmem:[#allocation2 + $0x40] sm:$0xff]
  %v4342 = vld [vmem:[#allocation2 + $0x48] sm:$0xff]
  %v4343 = vld [vmem:[#allocation2 + $0x50] sm:$0xff]
  %v4344 = vld [vmem:[#allocation2 + $0x58] sm:$0xff]
  %v4345 = vld [vmem:[#allocation2 + $0x60] sm:$0xff]
  %v4346 = vld [vmem:[#allocation2 + $0x68] sm:$0xff]
  %v4347 = vld [vmem:[#allocation2 + $0x70] sm:$0xff]
  %v4348 = vld [vmem:[#allocation2 + $0x78] sm:$0xff]
  %v4349 = vld [vmem:[#allocation2 + $0x80] sm:$0xff]
  %v4350 = vld [vmem:[#allocation2 + $0x88] sm:$0xff]
  %v4351 = vld [vmem:[#allocation2 + $0x90] sm:$0xff]
  %v4352 = vld [vmem:[#allocation2 + $0x98] sm:$0xff]
  %v4353 = vld [vmem:[#allocation2 + $0xa0] sm:$0xff]
  %v4354 = vld [vmem:[#allocation2 + $0xa8] sm:$0xff]
  %v4355 = vld [vmem:[#allocation2 + $0xb0] sm:$0xff]
  %v4356 = vld [vmem:[#allocation2 + $0xb8] sm:$0xff]
  %v4357 = vld [vmem:[#allocation2 + $0xc0] sm:$0xff]
  %v4358 = vld [vmem:[#allocation2 + $0xc8] sm:$0xff]
  %v4359 = vld [vmem:[#allocation2 + $0xd0] sm:$0xff]
  %v4360 = vld [vmem:[#allocation2 + $0xd8] sm:$0xff]
  %v4361 = vld [vmem:[#allocation2 + $0xe0] sm:$0xff]
  %v4362 = vld [vmem:[#allocation2 + $0xe8] sm:$0xff]
  %v4363 = vld [vmem:[#allocation2 + $0xf0] sm:$0xff]
  %v4364 = vld [vmem:[#allocation2 + $0xf8] sm:$0xff]
  %v4365 = vld [vmem:[#allocation2 + $0x100] sm:$0xff]
  %v4366 = vld [vmem:[#allocation2 + $0x108] sm:$0xff]
  %v4367 = vld [vmem:[#allocation2 + $0x110] sm:$0xff]
  %v4368 = vld [vmem:[#allocation2 + $0x118] sm:$0xff]
  %v4369 = vld [vmem:[#allocation2 + $0x120] sm:$0xff]
  %v4370 = vld [vmem:[%s2 + $0x1c0] sm:$0xff]
  %v4371 = vld [vmem:[%s2 + $0x1c8] sm:$0xff]
  %v4372 = vld [vmem:[%s2 + $0x1d0] sm:$0xff]
  %v4373 = vld [vmem:[%s2 + $0x1d8] sm:$0xff]
  %v4374 = vld [vmem:[%s2 + $0x1e0] sm:$0xff]
  %v4375 = vld [vmem:[%s2 + $0x1e8] sm:$0xff]
  %v4376 = vld [vmem:[%s2 + $0x1f0] sm:$0xff]
  %v4377 = vld [vmem:[%s2 + $0x1f8] sm:$0xff]
  %v4379 = vsel %vm1015, %v4338, 0
  %v4382 = vsel %vm1015, %v4339, 0
  %v4385 = vsel %vm1015, %v4340, 0
  %v4388 = vsel %vm1015, %v4341, 0
  %v4391 = vsel %vm1015, %v4342, 0
  %v4394 = vsel %vm1015, %v4343, 0
  %v4397 = vsel %vm1015, %v4344, 0
  %v4400 = vsel %vm1015, %v4345, 0
  %v4403 = vsel %vm1015, %v4346, 0
  %v4406 = vsel %vm1015, %v4347, 0
  %v4409 = vsel %vm1015, %v4348, 0
  %v4412 = vsel %vm1015, %v4349, 0
  %v4415 = vsel %vm1015, %v4350, 0
  %v4418 = vsel %vm1015, %v4351, 0
  %v4421 = vsel %vm1015, %v4352, 0
  %v4424 = vsel %vm1015, %v4353, 0
  %v4427 = vsel %vm1015, %v4354, 0
  %v4430 = vsel %vm1015, %v4355, 0
  %v4433 = vsel %vm1015, %v4356, 0
  %v4436 = vsel %vm1015, %v4357, 0
  %v4439 = vsel %vm1015, %v4358, 0
  %v4442 = vsel %vm1015, %v4359, 0
  %v4445 = vsel %vm1015, %v4360, 0
  %v4448 = vsel %vm1015, %v4361, 0
  %v4451 = vsel %vm1015, %v4362, 0
  %v4454 = vsel %vm1015, %v4363, 0
  %v4457 = vsel %vm1015, %v4364, 0
  %v4460 = vsel %vm1015, %v4365, 0
  %v4463 = vsel %vm1015, %v4366, 0
  %v4466 = vsel %vm1015, %v4367, 0
  %v4469 = vsel %vm1015, %v4368, 0
  %v4472 = vsel %vm1015, %v4369, 0
  %4474 = vmatprep.subr.mxu0 0.0
  %4475 = vmatpush1.msra.mxu0 0.0
  %4476 = vmatprep.subr.mxu0 0.0
  %4477 = vmatpush1.msra.mxu0 0.0
  %4478 = vmatprep.subr.mxu0 0.0
  %4479 = vmatpush1.msra.mxu0 0.0
  %4480 = vmatprep.subr.mxu0 0.0
  %4481 = vmatpush1.msra.mxu0 0.0
  %4482 = vmatprep.subr.mxu0 0.0
  %4483 = vmatpush1.msra.mxu0 0.0
  %4484 = vmatprep.subr.mxu0 0.0
  %4485 = vmatpush1.msra.mxu0 0.0
  %4486 = vmatprep.subr.mxu0 0.0
  %4487 = vmatpush1.msra.mxu0 0.0
  %4488 = vmatprep.subr.mxu0 0.0
  %4489 = vmatpush1.msra.mxu0 0.0
  %4490 = vmatprep.subr.mxu0 0.0
  %4491 = vmatpush1.msra.mxu0 %v4377
  %4492 = vmatprep.subr.mxu0 0.0
  %4493 = vmatpush1.msra.mxu0 %v4376
  %4494 = vmatprep.subr.mxu0 0.0
  %4495 = vmatpush1.msra.mxu0 %v4375
  %4496 = vmatprep.subr.mxu0 0.0
  %4497 = vmatpush1.msra.mxu0 %v4374
  %4498 = vmatprep.subr.mxu0 0.0
  %4499 = vmatpush1.msra.mxu0 %v4373
  %4500 = vmatprep.subr.mxu0 0.0
  %4501 = vmatpush1.msra.mxu0 %v4372
  %4502 = vmatprep.subr.mxu0 0.0
  %4503 = vmatpush1.msra.mxu0 %v4371
  %4504 = vmatprep.subr.mxu0 0.0
  %4505 = vmatpush1.msra.mxu0 %v4370
  %4506 = vmatprep.subr.mxu0 0.0
  %4507 = vmatpush2.msra.mxu0 0.0
  %4508 = vmatprep.subr.mxu0 0.0
  %4509 = vmatpush2.msra.mxu0 0.0
  %4510 = vmatprep.subr.mxu0 0.0
  %4511 = vmatpush2.msra.mxu0 0.0
  %4512 = vmatprep.subr.mxu0 0.0
  %4513 = vmatpush2.msra.mxu0 0.0
  %4514 = vmatprep.subr.mxu0 0.0
  %4515 = vmatpush2.msra.mxu0 0.0
  %4516 = vmatprep.subr.mxu0 0.0
  %4517 = vmatpush2.msra.mxu0 0.0
  %4518 = vmatprep.subr.mxu0 0.0
  %4519 = vmatpush2.msra.mxu0 0.0
  %4520 = vmatprep.subr.mxu0 0.0
  %4521 = vmatpush2.msra.mxu0 0.0
  %4522 = vmatprep.subr.mxu0 0.0
  %4523 = vmatpush2.msra.mxu0 0.0
  %4524 = vmatprep.subr.mxu0 0.0
  %4525 = vmatpush2.msra.mxu0 0.0
  %4526 = vmatprep.subr.mxu0 0.0
  %4527 = vmatpush2.msra.mxu0 0.0
  %4528 = vmatprep.subr.mxu0 0.0
  %4529 = vmatpush2.msra.mxu0 0.0
  %4530 = vmatprep.subr.mxu0 0.0
  %4531 = vmatpush2.msra.mxu0 0.0
  %4532 = vmatprep.subr.mxu0 0.0
  %4533 = vmatpush2.msra.mxu0 0.0
  %4534 = vmatprep.subr.mxu0 0.0
  %4535 = vmatpush2.msra.mxu0 0.0
  %4536 = vmatprep.subr.mxu0 0.0
  %4537 = vmatpush2.msra.mxu0 0.0
  %4538 = vmatprep.mubr.f32.mxu0 0.0
  %4539 = vmatmul.mubr.f32.gmra.mxu0 %v4379
  %v4540 = vpop.f32.mrf.mxu0
  %v4541 = vadd.f32 0.0, %v4540
  %v4542 = vpop.f32.mrf.mxu0
  %4543 = vmatprep.mubr.f32.mxu0 0.0
  %4544 = vmatmul.mubr.f32.gmra.mxu0 %v4382
  %v4545 = vpop.f32.mrf.mxu0
  %v4546 = vadd.f32 0.0, %v4545
  %v4547 = vpop.f32.mrf.mxu0
  %4548 = vmatprep.mubr.f32.mxu0 0.0
  %4549 = vmatmul.mubr.f32.gmra.mxu0 %v4385
  %v4550 = vpop.f32.mrf.mxu0
  %v4551 = vadd.f32 0.0, %v4550
  %v4552 = vpop.f32.mrf.mxu0
  %4553 = vmatprep.mubr.f32.mxu0 0.0
  %4554 = vmatmul.mubr.f32.gmra.mxu0 %v4388
  %v4555 = vpop.f32.mrf.mxu0
  %v4556 = vadd.f32 0.0, %v4555
  %v4557 = vpop.f32.mrf.mxu0
  %4558 = vmatprep.mubr.f32.mxu0 0.0
  %4559 = vmatmul.mubr.f32.gmra.mxu0 %v4391
  %v4560 = vpop.f32.mrf.mxu0
  %v4561 = vadd.f32 0.0, %v4560
  %v4562 = vpop.f32.mrf.mxu0
  %4563 = vmatprep.mubr.f32.mxu0 0.0
  %4564 = vmatmul.mubr.f32.gmra.mxu0 %v4394
  %v4565 = vpop.f32.mrf.mxu0
  %v4566 = vadd.f32 0.0, %v4565
  %v4567 = vpop.f32.mrf.mxu0
  %4568 = vmatprep.mubr.f32.mxu0 0.0
  %4569 = vmatmul.mubr.f32.gmra.mxu0 %v4397
  %v4570 = vpop.f32.mrf.mxu0
  %v4571 = vadd.f32 0.0, %v4570
  %v4572 = vpop.f32.mrf.mxu0
  %4573 = vmatprep.mubr.f32.mxu0 0.0
  %4574 = vmatmul.mubr.f32.gmra.mxu0 %v4400
  %v4575 = vpop.f32.mrf.mxu0
  %v4576 = vadd.f32 0.0, %v4575
  %v4577 = vpop.f32.mrf.mxu0
  %4578 = vmatprep.mubr.f32.mxu0 0.0
  %4579 = vmatmul.mubr.f32.gmra.mxu0 %v4403
  %v4580 = vpop.f32.mrf.mxu0
  %v4581 = vadd.f32 0.0, %v4580
  %v4582 = vpop.f32.mrf.mxu0
  %4583 = vmatprep.mubr.f32.mxu0 0.0
  %4584 = vmatmul.mubr.f32.gmra.mxu0 %v4406
  %v4585 = vpop.f32.mrf.mxu0
  %v4586 = vadd.f32 0.0, %v4585
  %v4587 = vpop.f32.mrf.mxu0
  %4588 = vmatprep.mubr.f32.mxu0 0.0
  %4589 = vmatmul.mubr.f32.gmra.mxu0 %v4409
  %v4590 = vpop.f32.mrf.mxu0
  %v4591 = vadd.f32 0.0, %v4590
  %v4592 = vpop.f32.mrf.mxu0
  %4593 = vmatprep.mubr.f32.mxu0 0.0
  %4594 = vmatmul.mubr.f32.gmra.mxu0 %v4412
  %v4595 = vpop.f32.mrf.mxu0
  %v4596 = vadd.f32 0.0, %v4595
  %v4597 = vpop.f32.mrf.mxu0
  %4598 = vmatprep.mubr.f32.mxu0 0.0
  %4599 = vmatmul.mubr.f32.gmra.mxu0 %v4415
  %v4600 = vpop.f32.mrf.mxu0
  %v4601 = vadd.f32 0.0, %v4600
  %v4602 = vpop.f32.mrf.mxu0
  %4603 = vmatprep.mubr.f32.mxu0 0.0
  %4604 = vmatmul.mubr.f32.gmra.mxu0 %v4418
  %v4605 = vpop.f32.mrf.mxu0
  %v4606 = vadd.f32 0.0, %v4605
  %v4607 = vpop.f32.mrf.mxu0
  %4608 = vmatprep.mubr.f32.mxu0 0.0
  %4609 = vmatmul.mubr.f32.gmra.mxu0 %v4421
  %v4610 = vpop.f32.mrf.mxu0
  %v4611 = vadd.f32 0.0, %v4610
  %v4612 = vpop.f32.mrf.mxu0
  %4613 = vmatprep.mubr.f32.mxu0 0.0
  %4614 = vmatmul.mubr.f32.gmra.mxu0 %v4424
  %v4615 = vpop.f32.mrf.mxu0
  %v4616 = vadd.f32 0.0, %v4615
  %v4617 = vpop.f32.mrf.mxu0
  %4618 = vmatprep.mubr.f32.mxu0 0.0
  %4619 = vmatmul.mubr.f32.gmra.mxu0 %v4427
  %v4620 = vpop.f32.mrf.mxu0
  %v4621 = vadd.f32 0.0, %v4620
  %v4622 = vpop.f32.mrf.mxu0
  %4623 = vmatprep.mubr.f32.mxu0 0.0
  %4624 = vmatmul.mubr.f32.gmra.mxu0 %v4430
  %v4625 = vpop.f32.mrf.mxu0
  %v4626 = vadd.f32 0.0, %v4625
  %v4627 = vpop.f32.mrf.mxu0
  %4628 = vmatprep.mubr.f32.mxu0 0.0
  %4629 = vmatmul.mubr.f32.gmra.mxu0 %v4433
  %v4630 = vpop.f32.mrf.mxu0
  %v4631 = vadd.f32 0.0, %v4630
  %v4632 = vpop.f32.mrf.mxu0
  %4633 = vmatprep.mubr.f32.mxu0 0.0
  %4634 = vmatmul.mubr.f32.gmra.mxu0 %v4436
  %v4635 = vpop.f32.mrf.mxu0
  %v4636 = vadd.f32 0.0, %v4635
  %v4637 = vpop.f32.mrf.mxu0
  %4638 = vmatprep.mubr.f32.mxu0 0.0
  %4639 = vmatmul.mubr.f32.gmra.mxu0 %v4439
  %v4640 = vpop.f32.mrf.mxu0
  %v4641 = vadd.f32 0.0, %v4640
  %v4642 = vpop.f32.mrf.mxu0
  %4643 = vmatprep.mubr.f32.mxu0 0.0
  %4644 = vmatmul.mubr.f32.gmra.mxu0 %v4442
  %v4645 = vpop.f32.mrf.mxu0
  %v4646 = vadd.f32 0.0, %v4645
  %v4647 = vpop.f32.mrf.mxu0
  %4648 = vmatprep.mubr.f32.mxu0 0.0
  %4649 = vmatmul.mubr.f32.gmra.mxu0 %v4445
  %v4650 = vpop.f32.mrf.mxu0
  %v4651 = vadd.f32 0.0, %v4650
  %v4652 = vpop.f32.mrf.mxu0
  %4653 = vmatprep.mubr.f32.mxu0 0.0
  %4654 = vmatmul.mubr.f32.gmra.mxu0 %v4448
  %v4655 = vpop.f32.mrf.mxu0
  %v4656 = vadd.f32 0.0, %v4655
  %v4657 = vpop.f32.mrf.mxu0
  %4658 = vmatprep.mubr.f32.mxu0 0.0
  %4659 = vmatmul.mubr.f32.gmra.mxu0 %v4451
  %v4660 = vpop.f32.mrf.mxu0
  %v4661 = vadd.f32 0.0, %v4660
  %v4662 = vpop.f32.mrf.mxu0
  %4663 = vmatprep.mubr.f32.mxu0 0.0
  %4664 = vmatmul.mubr.f32.gmra.mxu0 %v4454
  %v4665 = vpop.f32.mrf.mxu0
  %v4666 = vadd.f32 0.0, %v4665
  %v4667 = vpop.f32.mrf.mxu0
  %4668 = vmatprep.mubr.f32.mxu0 0.0
  %4669 = vmatmul.mubr.f32.gmra.mxu0 %v4457
  %v4670 = vpop.f32.mrf.mxu0
  %v4671 = vadd.f32 0.0, %v4670
  %v4672 = vpop.f32.mrf.mxu0
  %4673 = vmatprep.mubr.f32.mxu0 0.0
  %4674 = vmatmul.mubr.f32.gmra.mxu0 %v4460
  %v4675 = vpop.f32.mrf.mxu0
  %v4676 = vadd.f32 0.0, %v4675
  %v4677 = vpop.f32.mrf.mxu0
  %4678 = vmatprep.mubr.f32.mxu0 0.0
  %4679 = vmatmul.mubr.f32.gmra.mxu0 %v4463
  %v4680 = vpop.f32.mrf.mxu0
  %v4681 = vadd.f32 0.0, %v4680
  %v4682 = vpop.f32.mrf.mxu0
  %4683 = vmatprep.mubr.f32.mxu0 0.0
  %4684 = vmatmul.mubr.f32.gmra.mxu0 %v4466
  %v4685 = vpop.f32.mrf.mxu0
  %v4686 = vadd.f32 0.0, %v4685
  %v4687 = vpop.f32.mrf.mxu0
  %4688 = vmatprep.mubr.f32.mxu0 0.0
  %4689 = vmatmul.mubr.f32.gmra.mxu0 %v4469
  %v4690 = vpop.f32.mrf.mxu0
  %v4691 = vadd.f32 0.0, %v4690
  %v4692 = vpop.f32.mrf.mxu0
  %4693 = vmatprep.mubr.f32.mxu0 0.0
  %4694 = vmatmul.mubr.f32.gmra.mxu0 %v4472
  %v4695 = vpop.f32.mrf.mxu0
  %v4696 = vadd.f32 0.0, %v4695
  %v4697 = vpop.f32.mrf.mxu0
  %4698 = vdwg.mxu0
  %v4699 = vadd.f32 %v4306, %v4541
  %v4700 = vadd.f32 %v4307, %v4546
  %v4701 = vadd.f32 %v4308, %v4551
  %v4702 = vadd.f32 %v4309, %v4556
  %v4703 = vadd.f32 %v4310, %v4561
  %v4704 = vadd.f32 %v4311, %v4566
  %v4705 = vadd.f32 %v4312, %v4571
  %v4706 = vadd.f32 %v4313, %v4576
  %v4707 = vadd.f32 %v4314, %v4581
  %v4708 = vadd.f32 %v4315, %v4586
  %v4709 = vadd.f32 %v4316, %v4591
  %v4710 = vadd.f32 %v4317, %v4596
  %v4711 = vadd.f32 %v4318, %v4601
  %v4712 = vadd.f32 %v4319, %v4606
  %v4713 = vadd.f32 %v4320, %v4611
  %v4714 = vadd.f32 %v4321, %v4616
  %v4715 = vadd.f32 %v4322, %v4621
  %v4716 = vadd.f32 %v4323, %v4626
  %v4717 = vadd.f32 %v4324, %v4631
  %v4718 = vadd.f32 %v4325, %v4636
  %v4719 = vadd.f32 %v4326, %v4641
  %v4720 = vadd.f32 %v4327, %v4646
  %v4721 = vadd.f32 %v4328, %v4651
  %v4722 = vadd.f32 %v4329, %v4656
  %v4723 = vadd.f32 %v4330, %v4661
  %v4724 = vadd.f32 %v4331, %v4666
  %v4725 = vadd.f32 %v4332, %v4671
  %v4726 = vadd.f32 %v4333, %v4676
  %v4727 = vadd.f32 %v4334, %v4681
  %v4728 = vadd.f32 %v4335, %v4686
  %v4729 = vadd.f32 %v4336, %v4691
  %v4730 = vadd.f32 %v4337, %v4696
  %v4731 = vld [vmem:[#allocation4 + $0x29] sm:$0xff]
  %v4732 = vld [vmem:[#allocation4 + $0x31] sm:$0xff]
  %v4733 = vld [vmem:[#allocation4 + $0x39] sm:$0xff]
  %v4734 = vld [vmem:[#allocation4 + $0x41] sm:$0xff]
  %v4735 = vld [vmem:[#allocation4 + $0x49] sm:$0xff]
  %v4736 = vld [vmem:[#allocation4 + $0x51] sm:$0xff]
  %v4737 = vld [vmem:[#allocation4 + $0x59] sm:$0xff]
  %v4738 = vld [vmem:[#allocation4 + $0x61] sm:$0xff]
  %v4739 = vld [vmem:[#allocation4 + $0x69] sm:$0xff]
  %v4740 = vld [vmem:[#allocation4 + $0x71] sm:$0xff]
  %v4741 = vld [vmem:[#allocation4 + $0x79] sm:$0xff]
  %v4742 = vld [vmem:[#allocation4 + $0x81] sm:$0xff]
  %v4743 = vld [vmem:[#allocation4 + $0x89] sm:$0xff]
  %v4744 = vld [vmem:[#allocation4 + $0x91] sm:$0xff]
  %v4745 = vld [vmem:[#allocation4 + $0x99] sm:$0xff]
  %v4746 = vld [vmem:[#allocation4 + $0xa1] sm:$0xff]
  %v4747 = vld [vmem:[#allocation4 + $0xa9] sm:$0xff]
  %v4748 = vld [vmem:[#allocation4 + $0xb1] sm:$0xff]
  %v4749 = vld [vmem:[#allocation4 + $0xb9] sm:$0xff]
  %v4750 = vld [vmem:[#allocation4 + $0xc1] sm:$0xff]
  %v4751 = vld [vmem:[#allocation4 + $0xc9] sm:$0xff]
  %v4752 = vld [vmem:[#allocation4 + $0xd1] sm:$0xff]
  %v4753 = vld [vmem:[#allocation4 + $0xd9] sm:$0xff]
  %v4754 = vld [vmem:[#allocation4 + $0xe1] sm:$0xff]
  %v4755 = vld [vmem:[#allocation4 + $0xe9] sm:$0xff]
  %v4756 = vld [vmem:[#allocation4 + $0xf1] sm:$0xff]
  %v4757 = vld [vmem:[#allocation4 + $0xf9] sm:$0xff]
  %v4758 = vld [vmem:[#allocation4 + $0x101] sm:$0xff]
  %v4759 = vld [vmem:[#allocation4 + $0x109] sm:$0xff]
  %v4760 = vld [vmem:[#allocation4 + $0x111] sm:$0xff]
  %v4761 = vld [vmem:[#allocation4 + $0x119] sm:$0xff]
  %v4762 = vld [vmem:[#allocation4 + $0x121] sm:$0xff]
  %v4763 = vld [vmem:[%s2 + $0x200] sm:$0xff]
  %v4764 = vld [vmem:[%s2 + $0x208] sm:$0xff]
  %v4765 = vld [vmem:[%s2 + $0x210] sm:$0xff]
  %v4766 = vld [vmem:[%s2 + $0x218] sm:$0xff]
  %v4767 = vld [vmem:[%s2 + $0x220] sm:$0xff]
  %v4768 = vld [vmem:[%s2 + $0x228] sm:$0xff]
  %v4769 = vld [vmem:[%s2 + $0x230] sm:$0xff]
  %v4770 = vld [vmem:[%s2 + $0x238] sm:$0xff]
  %v4772 = vsel %vm1015, %v4731, 0
  %v4775 = vsel %vm1015, %v4732, 0
  %v4778 = vsel %vm1015, %v4733, 0
  %v4781 = vsel %vm1015, %v4734, 0
  %v4784 = vsel %vm1015, %v4735, 0
  %v4787 = vsel %vm1015, %v4736, 0
  %v4790 = vsel %vm1015, %v4737, 0
  %v4793 = vsel %vm1015, %v4738, 0
  %v4796 = vsel %vm1015, %v4739, 0
  %v4799 = vsel %vm1015, %v4740, 0
  %v4802 = vsel %vm1015, %v4741, 0
  %v4805 = vsel %vm1015, %v4742, 0
  %v4808 = vsel %vm1015, %v4743, 0
  %v4811 = vsel %vm1015, %v4744, 0
  %v4814 = vsel %vm1015, %v4745, 0
  %v4817 = vsel %vm1015, %v4746, 0
  %v4820 = vsel %vm1015, %v4747, 0
  %v4823 = vsel %vm1015, %v4748, 0
  %v4826 = vsel %vm1015, %v4749, 0
  %v4829 = vsel %vm1015, %v4750, 0
  %v4832 = vsel %vm1015, %v4751, 0
  %v4835 = vsel %vm1015, %v4752, 0
  %v4838 = vsel %vm1015, %v4753, 0
  %v4841 = vsel %vm1015, %v4754, 0
  %v4844 = vsel %vm1015, %v4755, 0
  %v4847 = vsel %vm1015, %v4756, 0
  %v4850 = vsel %vm1015, %v4757, 0
  %v4853 = vsel %vm1015, %v4758, 0
  %v4856 = vsel %vm1015, %v4759, 0
  %v4859 = vsel %vm1015, %v4760, 0
  %v4862 = vsel %vm1015, %v4761, 0
  %v4865 = vsel %vm1015, %v4762, 0
  %4867 = vmatprep.subr.mxu0 0.0
  %4868 = vmatpush1.msra.mxu0 0.0
  %4869 = vmatprep.subr.mxu0 0.0
  %4870 = vmatpush1.msra.mxu0 0.0
  %4871 = vmatprep.subr.mxu0 0.0
  %4872 = vmatpush1.msra.mxu0 0.0
  %4873 = vmatprep.subr.mxu0 0.0
  %4874 = vmatpush1.msra.mxu0 0.0
  %4875 = vmatprep.subr.mxu0 0.0
  %4876 = vmatpush1.msra.mxu0 0.0
  %4877 = vmatprep.subr.mxu0 0.0
  %4878 = vmatpush1.msra.mxu0 0.0
  %4879 = vmatprep.subr.mxu0 0.0
  %4880 = vmatpush1.msra.mxu0 0.0
  %4881 = vmatprep.subr.mxu0 0.0
  %4882 = vmatpush1.msra.mxu0 0.0
  %4883 = vmatprep.subr.mxu0 0.0
  %4884 = vmatpush1.msra.mxu0 %v4770
  %4885 = vmatprep.subr.mxu0 0.0
  %4886 = vmatpush1.msra.mxu0 %v4769
  %4887 = vmatprep.subr.mxu0 0.0
  %4888 = vmatpush1.msra.mxu0 %v4768
  %4889 = vmatprep.subr.mxu0 0.0
  %4890 = vmatpush1.msra.mxu0 %v4767
  %4891 = vmatprep.subr.mxu0 0.0
  %4892 = vmatpush1.msra.mxu0 %v4766
  %4893 = vmatprep.subr.mxu0 0.0
  %4894 = vmatpush1.msra.mxu0 %v4765
  %4895 = vmatprep.subr.mxu0 0.0
  %4896 = vmatpush1.msra.mxu0 %v4764
  %4897 = vmatprep.subr.mxu0 0.0
  %4898 = vmatpush1.msra.mxu0 %v4763
  %4899 = vmatprep.subr.mxu0 0.0
  %4900 = vmatpush2.msra.mxu0 0.0
  %4901 = vmatprep.subr.mxu0 0.0
  %4902 = vmatpush2.msra.mxu0 0.0
  %4903 = vmatprep.subr.mxu0 0.0
  %4904 = vmatpush2.msra.mxu0 0.0
  %4905 = vmatprep.subr.mxu0 0.0
  %4906 = vmatpush2.msra.mxu0 0.0
  %4907 = vmatprep.subr.mxu0 0.0
  %4908 = vmatpush2.msra.mxu0 0.0
  %4909 = vmatprep.subr.mxu0 0.0
  %4910 = vmatpush2.msra.mxu0 0.0
  %4911 = vmatprep.subr.mxu0 0.0
  %4912 = vmatpush2.msra.mxu0 0.0
  %4913 = vmatprep.subr.mxu0 0.0
  %4914 = vmatpush2.msra.mxu0 0.0
  %4915 = vmatprep.subr.mxu0 0.0
  %4916 = vmatpush2.msra.mxu0 0.0
  %4917 = vmatprep.subr.mxu0 0.0
  %4918 = vmatpush2.msra.mxu0 0.0
  %4919 = vmatprep.subr.mxu0 0.0
  %4920 = vmatpush2.msra.mxu0 0.0
  %4921 = vmatprep.subr.mxu0 0.0
  %4922 = vmatpush2.msra.mxu0 0.0
  %4923 = vmatprep.subr.mxu0 0.0
  %4924 = vmatpush2.msra.mxu0 0.0
  %4925 = vmatprep.subr.mxu0 0.0
  %4926 = vmatpush2.msra.mxu0 0.0
  %4927 = vmatprep.subr.mxu0 0.0
  %4928 = vmatpush2.msra.mxu0 0.0
  %4929 = vmatprep.subr.mxu0 0.0
  %4930 = vmatpush2.msra.mxu0 0.0
  %4931 = vmatprep.mubr.f32.mxu0 0.0
  %4932 = vmatmul.mubr.f32.gmra.mxu0 %v4772
  %v4933 = vpop.f32.mrf.mxu0
  %v4934 = vadd.f32 0.0, %v4933
  %v4935 = vpop.f32.mrf.mxu0
  %4936 = vmatprep.mubr.f32.mxu0 0.0
  %4937 = vmatmul.mubr.f32.gmra.mxu0 %v4775
  %v4938 = vpop.f32.mrf.mxu0
  %v4939 = vadd.f32 0.0, %v4938
  %v4940 = vpop.f32.mrf.mxu0
  %4941 = vmatprep.mubr.f32.mxu0 0.0
  %4942 = vmatmul.mubr.f32.gmra.mxu0 %v4778
  %v4943 = vpop.f32.mrf.mxu0
  %v4944 = vadd.f32 0.0, %v4943
  %v4945 = vpop.f32.mrf.mxu0
  %4946 = vmatprep.mubr.f32.mxu0 0.0
  %4947 = vmatmul.mubr.f32.gmra.mxu0 %v4781
  %v4948 = vpop.f32.mrf.mxu0
  %v4949 = vadd.f32 0.0, %v4948
  %v4950 = vpop.f32.mrf.mxu0
  %4951 = vmatprep.mubr.f32.mxu0 0.0
  %4952 = vmatmul.mubr.f32.gmra.mxu0 %v4784
  %v4953 = vpop.f32.mrf.mxu0
  %v4954 = vadd.f32 0.0, %v4953
  %v4955 = vpop.f32.mrf.mxu0
  %4956 = vmatprep.mubr.f32.mxu0 0.0
  %4957 = vmatmul.mubr.f32.gmra.mxu0 %v4787
  %v4958 = vpop.f32.mrf.mxu0
  %v4959 = vadd.f32 0.0, %v4958
  %v4960 = vpop.f32.mrf.mxu0
  %4961 = vmatprep.mubr.f32.mxu0 0.0
  %4962 = vmatmul.mubr.f32.gmra.mxu0 %v4790
  %v4963 = vpop.f32.mrf.mxu0
  %v4964 = vadd.f32 0.0, %v4963
  %v4965 = vpop.f32.mrf.mxu0
  %4966 = vmatprep.mubr.f32.mxu0 0.0
  %4967 = vmatmul.mubr.f32.gmra.mxu0 %v4793
  %v4968 = vpop.f32.mrf.mxu0
  %v4969 = vadd.f32 0.0, %v4968
  %v4970 = vpop.f32.mrf.mxu0
  %4971 = vmatprep.mubr.f32.mxu0 0.0
  %4972 = vmatmul.mubr.f32.gmra.mxu0 %v4796
  %v4973 = vpop.f32.mrf.mxu0
  %v4974 = vadd.f32 0.0, %v4973
  %v4975 = vpop.f32.mrf.mxu0
  %4976 = vmatprep.mubr.f32.mxu0 0.0
  %4977 = vmatmul.mubr.f32.gmra.mxu0 %v4799
  %v4978 = vpop.f32.mrf.mxu0
  %v4979 = vadd.f32 0.0, %v4978
  %v4980 = vpop.f32.mrf.mxu0
  %4981 = vmatprep.mubr.f32.mxu0 0.0
  %4982 = vmatmul.mubr.f32.gmra.mxu0 %v4802
  %v4983 = vpop.f32.mrf.mxu0
  %v4984 = vadd.f32 0.0, %v4983
  %v4985 = vpop.f32.mrf.mxu0
  %4986 = vmatprep.mubr.f32.mxu0 0.0
  %4987 = vmatmul.mubr.f32.gmra.mxu0 %v4805
  %v4988 = vpop.f32.mrf.mxu0
  %v4989 = vadd.f32 0.0, %v4988
  %v4990 = vpop.f32.mrf.mxu0
  %4991 = vmatprep.mubr.f32.mxu0 0.0
  %4992 = vmatmul.mubr.f32.gmra.mxu0 %v4808
  %v4993 = vpop.f32.mrf.mxu0
  %v4994 = vadd.f32 0.0, %v4993
  %v4995 = vpop.f32.mrf.mxu0
  %4996 = vmatprep.mubr.f32.mxu0 0.0
  %4997 = vmatmul.mubr.f32.gmra.mxu0 %v4811
  %v4998 = vpop.f32.mrf.mxu0
  %v4999 = vadd.f32 0.0, %v4998
  %v5000 = vpop.f32.mrf.mxu0
  %5001 = vmatprep.mubr.f32.mxu0 0.0
  %5002 = vmatmul.mubr.f32.gmra.mxu0 %v4814
  %v5003 = vpop.f32.mrf.mxu0
  %v5004 = vadd.f32 0.0, %v5003
  %v5005 = vpop.f32.mrf.mxu0
  %5006 = vmatprep.mubr.f32.mxu0 0.0
  %5007 = vmatmul.mubr.f32.gmra.mxu0 %v4817
  %v5008 = vpop.f32.mrf.mxu0
  %v5009 = vadd.f32 0.0, %v5008
  %v5010 = vpop.f32.mrf.mxu0
  %5011 = vmatprep.mubr.f32.mxu0 0.0
  %5012 = vmatmul.mubr.f32.gmra.mxu0 %v4820
  %v5013 = vpop.f32.mrf.mxu0
  %v5014 = vadd.f32 0.0, %v5013
  %v5015 = vpop.f32.mrf.mxu0
  %5016 = vmatprep.mubr.f32.mxu0 0.0
  %5017 = vmatmul.mubr.f32.gmra.mxu0 %v4823
  %v5018 = vpop.f32.mrf.mxu0
  %v5019 = vadd.f32 0.0, %v5018
  %v5020 = vpop.f32.mrf.mxu0
  %5021 = vmatprep.mubr.f32.mxu0 0.0
  %5022 = vmatmul.mubr.f32.gmra.mxu0 %v4826
  %v5023 = vpop.f32.mrf.mxu0
  %v5024 = vadd.f32 0.0, %v5023
  %v5025 = vpop.f32.mrf.mxu0
  %5026 = vmatprep.mubr.f32.mxu0 0.0
  %5027 = vmatmul.mubr.f32.gmra.mxu0 %v4829
  %v5028 = vpop.f32.mrf.mxu0
  %v5029 = vadd.f32 0.0, %v5028
  %v5030 = vpop.f32.mrf.mxu0
  %5031 = vmatprep.mubr.f32.mxu0 0.0
  %5032 = vmatmul.mubr.f32.gmra.mxu0 %v4832
  %v5033 = vpop.f32.mrf.mxu0
  %v5034 = vadd.f32 0.0, %v5033
  %v5035 = vpop.f32.mrf.mxu0
  %5036 = vmatprep.mubr.f32.mxu0 0.0
  %5037 = vmatmul.mubr.f32.gmra.mxu0 %v4835
  %v5038 = vpop.f32.mrf.mxu0
  %v5039 = vadd.f32 0.0, %v5038
  %v5040 = vpop.f32.mrf.mxu0
  %5041 = vmatprep.mubr.f32.mxu0 0.0
  %5042 = vmatmul.mubr.f32.gmra.mxu0 %v4838
  %v5043 = vpop.f32.mrf.mxu0
  %v5044 = vadd.f32 0.0, %v5043
  %v5045 = vpop.f32.mrf.mxu0
  %5046 = vmatprep.mubr.f32.mxu0 0.0
  %5047 = vmatmul.mubr.f32.gmra.mxu0 %v4841
  %v5048 = vpop.f32.mrf.mxu0
  %v5049 = vadd.f32 0.0, %v5048
  %v5050 = vpop.f32.mrf.mxu0
  %5051 = vmatprep.mubr.f32.mxu0 0.0
  %5052 = vmatmul.mubr.f32.gmra.mxu0 %v4844
  %v5053 = vpop.f32.mrf.mxu0
  %v5054 = vadd.f32 0.0, %v5053
  %v5055 = vpop.f32.mrf.mxu0
  %5056 = vmatprep.mubr.f32.mxu0 0.0
  %5057 = vmatmul.mubr.f32.gmra.mxu0 %v4847
  %v5058 = vpop.f32.mrf.mxu0
  %v5059 = vadd.f32 0.0, %v5058
  %v5060 = vpop.f32.mrf.mxu0
  %5061 = vmatprep.mubr.f32.mxu0 0.0
  %5062 = vmatmul.mubr.f32.gmra.mxu0 %v4850
  %v5063 = vpop.f32.mrf.mxu0
  %v5064 = vadd.f32 0.0, %v5063
  %v5065 = vpop.f32.mrf.mxu0
  %5066 = vmatprep.mubr.f32.mxu0 0.0
  %5067 = vmatmul.mubr.f32.gmra.mxu0 %v4853
  %v5068 = vpop.f32.mrf.mxu0
  %v5069 = vadd.f32 0.0, %v5068
  %v5070 = vpop.f32.mrf.mxu0
  %5071 = vmatprep.mubr.f32.mxu0 0.0
  %5072 = vmatmul.mubr.f32.gmra.mxu0 %v4856
  %v5073 = vpop.f32.mrf.mxu0
  %v5074 = vadd.f32 0.0, %v5073
  %v5075 = vpop.f32.mrf.mxu0
  %5076 = vmatprep.mubr.f32.mxu0 0.0
  %5077 = vmatmul.mubr.f32.gmra.mxu0 %v4859
  %v5078 = vpop.f32.mrf.mxu0
  %v5079 = vadd.f32 0.0, %v5078
  %v5080 = vpop.f32.mrf.mxu0
  %5081 = vmatprep.mubr.f32.mxu0 0.0
  %5082 = vmatmul.mubr.f32.gmra.mxu0 %v4862
  %v5083 = vpop.f32.mrf.mxu0
  %v5084 = vadd.f32 0.0, %v5083
  %v5085 = vpop.f32.mrf.mxu0
  %5086 = vmatprep.mubr.f32.mxu0 0.0
  %5087 = vmatmul.mubr.f32.gmra.mxu0 %v4865
  %v5088 = vpop.f32.mrf.mxu0
  %v5089 = vadd.f32 0.0, %v5088
  %v5090 = vpop.f32.mrf.mxu0
  %5091 = vdwg.mxu0
  %v5092 = vadd.f32 %v4699, %v4934
  %v5093 = vadd.f32 %v4700, %v4939
  %v5094 = vadd.f32 %v4701, %v4944
  %v5095 = vadd.f32 %v4702, %v4949
  %v5096 = vadd.f32 %v4703, %v4954
  %v5097 = vadd.f32 %v4704, %v4959
  %v5098 = vadd.f32 %v4705, %v4964
  %v5099 = vadd.f32 %v4706, %v4969
  %v5100 = vadd.f32 %v4707, %v4974
  %v5101 = vadd.f32 %v4708, %v4979
  %v5102 = vadd.f32 %v4709, %v4984
  %v5103 = vadd.f32 %v4710, %v4989
  %v5104 = vadd.f32 %v4711, %v4994
  %v5105 = vadd.f32 %v4712, %v4999
  %v5106 = vadd.f32 %v4713, %v5004
  %v5107 = vadd.f32 %v4714, %v5009
  %v5108 = vadd.f32 %v4715, %v5014
  %v5109 = vadd.f32 %v4716, %v5019
  %v5110 = vadd.f32 %v4717, %v5024
  %v5111 = vadd.f32 %v4718, %v5029
  %v5112 = vadd.f32 %v4719, %v5034
  %v5113 = vadd.f32 %v4720, %v5039
  %v5114 = vadd.f32 %v4721, %v5044
  %v5115 = vadd.f32 %v4722, %v5049
  %v5116 = vadd.f32 %v4723, %v5054
  %v5117 = vadd.f32 %v4724, %v5059
  %v5118 = vadd.f32 %v4725, %v5064
  %v5119 = vadd.f32 %v4726, %v5069
  %v5120 = vadd.f32 %v4727, %v5074
  %v5121 = vadd.f32 %v4728, %v5079
  %v5122 = vadd.f32 %v4729, %v5084
  %v5123 = vadd.f32 %v4730, %v5089
  %5124 = vst.msk [vmem:[%s4] sm:$0xff] %vm85, %v5092
  %5125 = vst.msk [vmem:[%s4 + $0x8] sm:$0xff] %vm85, %v5093
  %5126 = vst.msk [vmem:[%s4 + $0x10] sm:$0xff] %vm85, %v5094
  %5127 = vst.msk [vmem:[%s4 + $0x18] sm:$0xff] %vm85, %v5095
  %5128 = vst.msk [vmem:[%s4 + $0x20] sm:$0xff] %vm85, %v5096
  %5129 = vst.msk [vmem:[%s4 + $0x28] sm:$0xff] %vm85, %v5097
  %5130 = vst.msk [vmem:[%s4 + $0x30] sm:$0xff] %vm85, %v5098
  %5131 = vst.msk [vmem:[%s4 + $0x38] sm:$0xff] %vm85, %v5099
  %5132 = vst.msk [vmem:[%s4 + $0x40] sm:$0xff] %vm85, %v5100
  %5133 = vst.msk [vmem:[%s4 + $0x48] sm:$0xff] %vm85, %v5101
  %5134 = vst.msk [vmem:[%s4 + $0x50] sm:$0xff] %vm85, %v5102
  %5135 = vst.msk [vmem:[%s4 + $0x58] sm:$0xff] %vm85, %v5103
  %5136 = vst.msk [vmem:[%s4 + $0x60] sm:$0xff] %vm85, %v5104
  %5137 = vst.msk [vmem:[%s4 + $0x68] sm:$0xff] %vm85, %v5105
  %5138 = vst.msk [vmem:[%s4 + $0x70] sm:$0xff] %vm85, %v5106
  %5139 = vst.msk [vmem:[%s4 + $0x78] sm:$0xff] %vm85, %v5107
  %5140 = vst.msk [vmem:[%s4 + $0x80] sm:$0xff] %vm85, %v5108
  %5141 = vst.msk [vmem:[%s4 + $0x88] sm:$0xff] %vm85, %v5109
  %5142 = vst.msk [vmem:[%s4 + $0x90] sm:$0xff] %vm85, %v5110
  %5143 = vst.msk [vmem:[%s4 + $0x98] sm:$0xff] %vm85, %v5111
  %5144 = vst.msk [vmem:[%s4 + $0xa0] sm:$0xff] %vm85, %v5112
  %5145 = vst.msk [vmem:[%s4 + $0xa8] sm:$0xff] %vm85, %v5113
  %5146 = vst.msk [vmem:[%s4 + $0xb0] sm:$0xff] %vm85, %v5114
  %5147 = vst.msk [vmem:[%s4 + $0xb8] sm:$0xff] %vm85, %v5115
  %5148 = vst.msk [vmem:[%s4 + $0xc0] sm:$0xff] %vm85, %v5116
  %5149 = vst.msk [vmem:[%s4 + $0xc8] sm:$0xff] %vm85, %v5117
  %5150 = vst.msk [vmem:[%s4 + $0xd0] sm:$0xff] %vm85, %v5118
  %5151 = vst.msk [vmem:[%s4 + $0xd8] sm:$0xff] %vm85, %v5119
  %5152 = vst.msk [vmem:[%s4 + $0xe0] sm:$0xff] %vm85, %v5120
  %5153 = vst.msk [vmem:[%s4 + $0xe8] sm:$0xff] %vm85, %v5121
  %5154 = vst.msk [vmem:[%s4 + $0xf0] sm:$0xff] %vm85, %v5122
  %5155 = vst.msk [vmem:[%s4 + $0xf8] sm:$0xff] %vm85, %v5123
  %v5156 = vld [vmem:[#allocation3 + $0x11f] sm:$0xff]
  %v5157 = vld [vmem:[#allocation3 + $0x127] sm:$0xff]
  %v5158 = vld [vmem:[#allocation3 + $0x12f] sm:$0xff]
  %v5159 = vld [vmem:[#allocation3 + $0x137] sm:$0xff]
  %v5160 = vld [vmem:[#allocation3 + $0x13f] sm:$0xff]
  %v5161 = vld [vmem:[#allocation3 + $0x147] sm:$0xff]
  %v5162 = vld [vmem:[#allocation3 + $0x14f] sm:$0xff]
  %v5163 = vld [vmem:[#allocation3 + $0x157] sm:$0xff]
  %v5164 = vld [vmem:[#allocation3 + $0x15f] sm:$0xff]
  %v5165 = vld [vmem:[#allocation3 + $0x167] sm:$0xff]
  %v5166 = vld [vmem:[#allocation3 + $0x16f] sm:$0xff]
  %v5167 = vld [vmem:[#allocation3 + $0x177] sm:$0xff]
  %v5168 = vld [vmem:[#allocation3 + $0x17f] sm:$0xff]
  %v5169 = vld [vmem:[#allocation3 + $0x187] sm:$0xff]
  %v5170 = vld [vmem:[#allocation3 + $0x18f] sm:$0xff]
  %v5171 = vld [vmem:[#allocation3 + $0x197] sm:$0xff]
  %v5172 = vld [vmem:[#allocation3 + $0x19f] sm:$0xff]
  %v5173 = vld [vmem:[#allocation3 + $0x1a7] sm:$0xff]
  %v5174 = vld [vmem:[#allocation3 + $0x1af] sm:$0xff]
  %v5175 = vld [vmem:[#allocation3 + $0x1b7] sm:$0xff]
  %v5176 = vld [vmem:[#allocation3 + $0x1bf] sm:$0xff]
  %v5177 = vld [vmem:[#allocation3 + $0x1c7] sm:$0xff]
  %v5178 = vld [vmem:[#allocation3 + $0x1cf] sm:$0xff]
  %v5179 = vld [vmem:[#allocation3 + $0x1d7] sm:$0xff]
  %v5180 = vld [vmem:[#allocation3 + $0x1df] sm:$0xff]
  %v5181 = vld [vmem:[#allocation3 + $0x1e7] sm:$0xff]
  %v5182 = vld [vmem:[#allocation3 + $0x1ef] sm:$0xff]
  %v5183 = vld [vmem:[#allocation3 + $0x1f7] sm:$0xff]
  %v5184 = vld [vmem:[#allocation3 + $0x1ff] sm:$0xff]
  %v5185 = vld [vmem:[#allocation3 + $0x207] sm:$0xff]
  %v5186 = vld [vmem:[#allocation3 + $0x20f] sm:$0xff]
  %v5187 = vld [vmem:[#allocation3 + $0x217] sm:$0xff]
  %v5188 = vld [vmem:[%s2] sm:$0xff]
  %v5189 = vld [vmem:[%s2 + $0x8] sm:$0xff]
  %v5190 = vld [vmem:[%s2 + $0x10] sm:$0xff]
  %v5191 = vld [vmem:[%s2 + $0x18] sm:$0xff]
  %v5192 = vld [vmem:[%s2 + $0x20] sm:$0xff]
  %v5193 = vld [vmem:[%s2 + $0x28] sm:$0xff]
  %v5194 = vld [vmem:[%s2 + $0x30] sm:$0xff]
  %v5195 = vld [vmem:[%s2 + $0x38] sm:$0xff]
  %v5196 = vld [vmem:[#allocation2 + $0x120] sm:$0xff]
  %v5197 = vld [vmem:[#allocation2 + $0x128] sm:$0xff]
  %v5198 = vld [vmem:[#allocation2 + $0x130] sm:$0xff]
  %v5199 = vld [vmem:[#allocation2 + $0x138] sm:$0xff]
  %v5200 = vld [vmem:[#allocation2 + $0x140] sm:$0xff]
  %v5201 = vld [vmem:[#allocation2 + $0x148] sm:$0xff]
  %v5202 = vld [vmem:[#allocation2 + $0x150] sm:$0xff]
  %v5203 = vld [vmem:[#allocation2 + $0x158] sm:$0xff]
  %v5204 = vld [vmem:[#allocation2 + $0x160] sm:$0xff]
  %v5205 = vld [vmem:[#allocation2 + $0x168] sm:$0xff]
  %v5206 = vld [vmem:[#allocation2 + $0x170] sm:$0xff]
  %v5207 = vld [vmem:[#allocation2 + $0x178] sm:$0xff]
  %v5208 = vld [vmem:[#allocation2 + $0x180] sm:$0xff]
  %v5209 = vld [vmem:[#allocation2 + $0x188] sm:$0xff]
  %v5210 = vld [vmem:[#allocation2 + $0x190] sm:$0xff]
  %v5211 = vld [vmem:[#allocation2 + $0x198] sm:$0xff]
  %v5212 = vld [vmem:[#allocation2 + $0x1a0] sm:$0xff]
  %v5213 = vld [vmem:[#allocation2 + $0x1a8] sm:$0xff]
  %v5214 = vld [vmem:[#allocation2 + $0x1b0] sm:$0xff]
  %v5215 = vld [vmem:[#allocation2 + $0x1b8] sm:$0xff]
  %v5216 = vld [vmem:[#allocation2 + $0x1c0] sm:$0xff]
  %v5217 = vld [vmem:[#allocation2 + $0x1c8] sm:$0xff]
  %v5218 = vld [vmem:[#allocation2 + $0x1d0] sm:$0xff]
  %v5219 = vld [vmem:[#allocation2 + $0x1d8] sm:$0xff]
  %v5220 = vld [vmem:[#allocation2 + $0x1e0] sm:$0xff]
  %v5221 = vld [vmem:[#allocation2 + $0x1e8] sm:$0xff]
  %v5222 = vld [vmem:[#allocation2 + $0x1f0] sm:$0xff]
  %v5223 = vld [vmem:[#allocation2 + $0x1f8] sm:$0xff]
  %v5224 = vld [vmem:[#allocation2 + $0x200] sm:$0xff]
  %v5225 = vld [vmem:[#allocation2 + $0x208] sm:$0xff]
  %v5226 = vld [vmem:[#allocation2 + $0x210] sm:$0xff]
  %v5227 = vld [vmem:[#allocation2 + $0x218] sm:$0xff]
  %v5228 = vld [vmem:[%s2 + $0x40] sm:$0xff]
  %v5229 = vld [vmem:[%s2 + $0x48] sm:$0xff]
  %v5230 = vld [vmem:[%s2 + $0x50] sm:$0xff]
  %v5231 = vld [vmem:[%s2 + $0x58] sm:$0xff]
  %v5232 = vld [vmem:[%s2 + $0x60] sm:$0xff]
  %v5233 = vld [vmem:[%s2 + $0x68] sm:$0xff]
  %v5234 = vld [vmem:[%s2 + $0x70] sm:$0xff]
  %v5235 = vld [vmem:[%s2 + $0x78] sm:$0xff]
  %v5237 = vsel %vm1015, %v5196, 0
  %v5240 = vsel %vm1015, %v5197, 0
  %v5243 = vsel %vm1015, %v5198, 0
  %v5246 = vsel %vm1015, %v5199, 0
  %v5249 = vsel %vm1015, %v5200, 0
  %v5252 = vsel %vm1015, %v5201, 0
  %v5255 = vsel %vm1015, %v5202, 0
  %v5258 = vsel %vm1015, %v5203, 0
  %v5261 = vsel %vm1015, %v5204, 0
  %v5264 = vsel %vm1015, %v5205, 0
  %v5267 = vsel %vm1015, %v5206, 0
  %v5270 = vsel %vm1015, %v5207, 0
  %v5273 = vsel %vm1015, %v5208, 0
  %v5276 = vsel %vm1015, %v5209, 0
  %v5279 = vsel %vm1015, %v5210, 0
  %v5282 = vsel %vm1015, %v5211, 0
  %v5285 = vsel %vm1015, %v5212, 0
  %v5288 = vsel %vm1015, %v5213, 0
  %v5291 = vsel %vm1015, %v5214, 0
  %v5294 = vsel %vm1015, %v5215, 0
  %v5297 = vsel %vm1015, %v5216, 0
  %v5300 = vsel %vm1015, %v5217, 0
  %v5303 = vsel %vm1015, %v5218, 0
  %v5306 = vsel %vm1015, %v5219, 0
  %v5309 = vsel %vm1015, %v5220, 0
  %v5312 = vsel %vm1015, %v5221, 0
  %v5315 = vsel %vm1015, %v5222, 0
  %v5318 = vsel %vm1015, %v5223, 0
  %v5321 = vsel %vm1015, %v5224, 0
  %v5324 = vsel %vm1015, %v5225, 0
  %v5327 = vsel %vm1015, %v5226, 0
  %v5330 = vsel %vm1015, %v5227, 0
  %5332 = vmatprep.subr.mxu0 0.0
  %5333 = vmatpush1.msra.mxu0 0.0
  %5334 = vmatprep.subr.mxu0 0.0
  %5335 = vmatpush1.msra.mxu0 0.0
  %5336 = vmatprep.subr.mxu0 0.0
  %5337 = vmatpush1.msra.mxu0 0.0
  %5338 = vmatprep.subr.mxu0 0.0
  %5339 = vmatpush1.msra.mxu0 0.0
  %5340 = vmatprep.subr.mxu0 0.0
  %5341 = vmatpush1.msra.mxu0 0.0
  %5342 = vmatprep.subr.mxu0 0.0
  %5343 = vmatpush1.msra.mxu0 0.0
  %5344 = vmatprep.subr.mxu0 0.0
  %5345 = vmatpush1.msra.mxu0 0.0
  %5346 = vmatprep.subr.mxu0 0.0
  %5347 = vmatpush1.msra.mxu0 0.0
  %5348 = vmatprep.subr.mxu0 0.0
  %5349 = vmatpush1.msra.mxu0 %v5235
  %5350 = vmatprep.subr.mxu0 0.0
  %5351 = vmatpush1.msra.mxu0 %v5234
  %5352 = vmatprep.subr.mxu0 0.0
  %5353 = vmatpush1.msra.mxu0 %v5233
  %5354 = vmatprep.subr.mxu0 0.0
  %5355 = vmatpush1.msra.mxu0 %v5232
  %5356 = vmatprep.subr.mxu0 0.0
  %5357 = vmatpush1.msra.mxu0 %v5231
  %5358 = vmatprep.subr.mxu0 0.0
  %5359 = vmatpush1.msra.mxu0 %v5230
  %5360 = vmatprep.subr.mxu0 0.0
  %5361 = vmatpush1.msra.mxu0 %v5229
  %5362 = vmatprep.subr.mxu0 0.0
  %5363 = vmatpush1.msra.mxu0 %v5228
  %5364 = vmatprep.subr.mxu0 0.0
  %5365 = vmatpush2.msra.mxu0 0.0
  %5366 = vmatprep.subr.mxu0 0.0
  %5367 = vmatpush2.msra.mxu0 0.0
  %5368 = vmatprep.subr.mxu0 0.0
  %5369 = vmatpush2.msra.mxu0 0.0
  %5370 = vmatprep.subr.mxu0 0.0
  %5371 = vmatpush2.msra.mxu0 0.0
  %5372 = vmatprep.subr.mxu0 0.0
  %5373 = vmatpush2.msra.mxu0 0.0
  %5374 = vmatprep.subr.mxu0 0.0
  %5375 = vmatpush2.msra.mxu0 0.0
  %5376 = vmatprep.subr.mxu0 0.0
  %5377 = vmatpush2.msra.mxu0 0.0
  %5378 = vmatprep.subr.mxu0 0.0
  %5379 = vmatpush2.msra.mxu0 0.0
  %5380 = vmatprep.subr.mxu0 0.0
  %5381 = vmatpush2.msra.mxu0 0.0
  %5382 = vmatprep.subr.mxu0 0.0
  %5383 = vmatpush2.msra.mxu0 0.0
  %5384 = vmatprep.subr.mxu0 0.0
  %5385 = vmatpush2.msra.mxu0 0.0
  %5386 = vmatprep.subr.mxu0 0.0
  %5387 = vmatpush2.msra.mxu0 0.0
  %5388 = vmatprep.subr.mxu0 0.0
  %5389 = vmatpush2.msra.mxu0 0.0
  %5390 = vmatprep.subr.mxu0 0.0
  %5391 = vmatpush2.msra.mxu0 0.0
  %5392 = vmatprep.subr.mxu0 0.0
  %5393 = vmatpush2.msra.mxu0 0.0
  %5394 = vmatprep.subr.mxu0 0.0
  %5395 = vmatpush2.msra.mxu0 0.0
  %5396 = vmatprep.mubr.f32.mxu0 0.0
  %5397 = vmatmul.mubr.f32.gmra.mxu0 %v5237
  %v5398 = vpop.f32.mrf.mxu0
  %v5399 = vadd.f32 0.0, %v5398
  %v5400 = vpop.f32.mrf.mxu0
  %5401 = vmatprep.mubr.f32.mxu0 0.0
  %5402 = vmatmul.mubr.f32.gmra.mxu0 %v5240
  %v5403 = vpop.f32.mrf.mxu0
  %v5404 = vadd.f32 0.0, %v5403
  %v5405 = vpop.f32.mrf.mxu0
  %5406 = vmatprep.mubr.f32.mxu0 0.0
  %5407 = vmatmul.mubr.f32.gmra.mxu0 %v5243
  %v5408 = vpop.f32.mrf.mxu0
  %v5409 = vadd.f32 0.0, %v5408
  %v5410 = vpop.f32.mrf.mxu0
  %5411 = vmatprep.mubr.f32.mxu0 0.0
  %5412 = vmatmul.mubr.f32.gmra.mxu0 %v5246
  %v5413 = vpop.f32.mrf.mxu0
  %v5414 = vadd.f32 0.0, %v5413
  %v5415 = vpop.f32.mrf.mxu0
  %5416 = vmatprep.mubr.f32.mxu0 0.0
  %5417 = vmatmul.mubr.f32.gmra.mxu0 %v5249
  %v5418 = vpop.f32.mrf.mxu0
  %v5419 = vadd.f32 0.0, %v5418
  %v5420 = vpop.f32.mrf.mxu0
  %5421 = vmatprep.mubr.f32.mxu0 0.0
  %5422 = vmatmul.mubr.f32.gmra.mxu0 %v5252
  %v5423 = vpop.f32.mrf.mxu0
  %v5424 = vadd.f32 0.0, %v5423
  %v5425 = vpop.f32.mrf.mxu0
  %5426 = vmatprep.mubr.f32.mxu0 0.0
  %5427 = vmatmul.mubr.f32.gmra.mxu0 %v5255
  %v5428 = vpop.f32.mrf.mxu0
  %v5429 = vadd.f32 0.0, %v5428
  %v5430 = vpop.f32.mrf.mxu0
  %5431 = vmatprep.mubr.f32.mxu0 0.0
  %5432 = vmatmul.mubr.f32.gmra.mxu0 %v5258
  %v5433 = vpop.f32.mrf.mxu0
  %v5434 = vadd.f32 0.0, %v5433
  %v5435 = vpop.f32.mrf.mxu0
  %5436 = vmatprep.mubr.f32.mxu0 0.0
  %5437 = vmatmul.mubr.f32.gmra.mxu0 %v5261
  %v5438 = vpop.f32.mrf.mxu0
  %v5439 = vadd.f32 0.0, %v5438
  %v5440 = vpop.f32.mrf.mxu0
  %5441 = vmatprep.mubr.f32.mxu0 0.0
  %5442 = vmatmul.mubr.f32.gmra.mxu0 %v5264
  %v5443 = vpop.f32.mrf.mxu0
  %v5444 = vadd.f32 0.0, %v5443
  %v5445 = vpop.f32.mrf.mxu0
  %5446 = vmatprep.mubr.f32.mxu0 0.0
  %5447 = vmatmul.mubr.f32.gmra.mxu0 %v5267
  %v5448 = vpop.f32.mrf.mxu0
  %v5449 = vadd.f32 0.0, %v5448
  %v5450 = vpop.f32.mrf.mxu0
  %5451 = vmatprep.mubr.f32.mxu0 0.0
  %5452 = vmatmul.mubr.f32.gmra.mxu0 %v5270
  %v5453 = vpop.f32.mrf.mxu0
  %v5454 = vadd.f32 0.0, %v5453
  %v5455 = vpop.f32.mrf.mxu0
  %5456 = vmatprep.mubr.f32.mxu0 0.0
  %5457 = vmatmul.mubr.f32.gmra.mxu0 %v5273
  %v5458 = vpop.f32.mrf.mxu0
  %v5459 = vadd.f32 0.0, %v5458
  %v5460 = vpop.f32.mrf.mxu0
  %5461 = vmatprep.mubr.f32.mxu0 0.0
  %5462 = vmatmul.mubr.f32.gmra.mxu0 %v5276
  %v5463 = vpop.f32.mrf.mxu0
  %v5464 = vadd.f32 0.0, %v5463
  %v5465 = vpop.f32.mrf.mxu0
  %5466 = vmatprep.mubr.f32.mxu0 0.0
  %5467 = vmatmul.mubr.f32.gmra.mxu0 %v5279
  %v5468 = vpop.f32.mrf.mxu0
  %v5469 = vadd.f32 0.0, %v5468
  %v5470 = vpop.f32.mrf.mxu0
  %5471 = vmatprep.mubr.f32.mxu0 0.0
  %5472 = vmatmul.mubr.f32.gmra.mxu0 %v5282
  %v5473 = vpop.f32.mrf.mxu0
  %v5474 = vadd.f32 0.0, %v5473
  %v5475 = vpop.f32.mrf.mxu0
  %5476 = vmatprep.mubr.f32.mxu0 0.0
  %5477 = vmatmul.mubr.f32.gmra.mxu0 %v5285
  %v5478 = vpop.f32.mrf.mxu0
  %v5479 = vadd.f32 0.0, %v5478
  %v5480 = vpop.f32.mrf.mxu0
  %5481 = vmatprep.mubr.f32.mxu0 0.0
  %5482 = vmatmul.mubr.f32.gmra.mxu0 %v5288
  %v5483 = vpop.f32.mrf.mxu0
  %v5484 = vadd.f32 0.0, %v5483
  %v5485 = vpop.f32.mrf.mxu0
  %5486 = vmatprep.mubr.f32.mxu0 0.0
  %5487 = vmatmul.mubr.f32.gmra.mxu0 %v5291
  %v5488 = vpop.f32.mrf.mxu0
  %v5489 = vadd.f32 0.0, %v5488
  %v5490 = vpop.f32.mrf.mxu0
  %5491 = vmatprep.mubr.f32.mxu0 0.0
  %5492 = vmatmul.mubr.f32.gmra.mxu0 %v5294
  %v5493 = vpop.f32.mrf.mxu0
  %v5494 = vadd.f32 0.0, %v5493
  %v5495 = vpop.f32.mrf.mxu0
  %5496 = vmatprep.mubr.f32.mxu0 0.0
  %5497 = vmatmul.mubr.f32.gmra.mxu0 %v5297
  %v5498 = vpop.f32.mrf.mxu0
  %v5499 = vadd.f32 0.0, %v5498
  %v5500 = vpop.f32.mrf.mxu0
  %5501 = vmatprep.mubr.f32.mxu0 0.0
  %5502 = vmatmul.mubr.f32.gmra.mxu0 %v5300
  %v5503 = vpop.f32.mrf.mxu0
  %v5504 = vadd.f32 0.0, %v5503
  %v5505 = vpop.f32.mrf.mxu0
  %5506 = vmatprep.mubr.f32.mxu0 0.0
  %5507 = vmatmul.mubr.f32.gmra.mxu0 %v5303
  %v5508 = vpop.f32.mrf.mxu0
  %v5509 = vadd.f32 0.0, %v5508
  %v5510 = vpop.f32.mrf.mxu0
  %5511 = vmatprep.mubr.f32.mxu0 0.0
  %5512 = vmatmul.mubr.f32.gmra.mxu0 %v5306
  %v5513 = vpop.f32.mrf.mxu0
  %v5514 = vadd.f32 0.0, %v5513
  %v5515 = vpop.f32.mrf.mxu0
  %5516 = vmatprep.mubr.f32.mxu0 0.0
  %5517 = vmatmul.mubr.f32.gmra.mxu0 %v5309
  %v5518 = vpop.f32.mrf.mxu0
  %v5519 = vadd.f32 0.0, %v5518
  %v5520 = vpop.f32.mrf.mxu0
  %5521 = vmatprep.mubr.f32.mxu0 0.0
  %5522 = vmatmul.mubr.f32.gmra.mxu0 %v5312
  %v5523 = vpop.f32.mrf.mxu0
  %v5524 = vadd.f32 0.0, %v5523
  %v5525 = vpop.f32.mrf.mxu0
  %5526 = vmatprep.mubr.f32.mxu0 0.0
  %5527 = vmatmul.mubr.f32.gmra.mxu0 %v5315
  %v5528 = vpop.f32.mrf.mxu0
  %v5529 = vadd.f32 0.0, %v5528
  %v5530 = vpop.f32.mrf.mxu0
  %5531 = vmatprep.mubr.f32.mxu0 0.0
  %5532 = vmatmul.mubr.f32.gmra.mxu0 %v5318
  %v5533 = vpop.f32.mrf.mxu0
  %v5534 = vadd.f32 0.0, %v5533
  %v5535 = vpop.f32.mrf.mxu0
  %5536 = vmatprep.mubr.f32.mxu0 0.0
  %5537 = vmatmul.mubr.f32.gmra.mxu0 %v5321
  %v5538 = vpop.f32.mrf.mxu0
  %v5539 = vadd.f32 0.0, %v5538
  %v5540 = vpop.f32.mrf.mxu0
  %5541 = vmatprep.mubr.f32.mxu0 0.0
  %5542 = vmatmul.mubr.f32.gmra.mxu0 %v5324
  %v5543 = vpop.f32.mrf.mxu0
  %v5544 = vadd.f32 0.0, %v5543
  %v5545 = vpop.f32.mrf.mxu0
  %5546 = vmatprep.mubr.f32.mxu0 0.0
  %5547 = vmatmul.mubr.f32.gmra.mxu0 %v5327
  %v5548 = vpop.f32.mrf.mxu0
  %v5549 = vadd.f32 0.0, %v5548
  %v5550 = vpop.f32.mrf.mxu0
  %5551 = vmatprep.mubr.f32.mxu0 0.0
  %5552 = vmatmul.mubr.f32.gmra.mxu0 %v5330
  %v5553 = vpop.f32.mrf.mxu0
  %v5554 = vadd.f32 0.0, %v5553
  %v5555 = vpop.f32.mrf.mxu0
  %5556 = vdwg.mxu0
  %v5558 = vsel %vm1015, %v5156, 0
  %v5561 = vsel %vm1015, %v5157, 0
  %v5564 = vsel %vm1015, %v5158, 0
  %v5567 = vsel %vm1015, %v5159, 0
  %v5570 = vsel %vm1015, %v5160, 0
  %v5573 = vsel %vm1015, %v5161, 0
  %v5576 = vsel %vm1015, %v5162, 0
  %v5579 = vsel %vm1015, %v5163, 0
  %v5582 = vsel %vm1015, %v5164, 0
  %v5585 = vsel %vm1015, %v5165, 0
  %v5588 = vsel %vm1015, %v5166, 0
  %v5591 = vsel %vm1015, %v5167, 0
  %v5594 = vsel %vm1015, %v5168, 0
  %v5597 = vsel %vm1015, %v5169, 0
  %v5600 = vsel %vm1015, %v5170, 0
  %v5603 = vsel %vm1015, %v5171, 0
  %v5606 = vsel %vm1015, %v5172, 0
  %v5609 = vsel %vm1015, %v5173, 0
  %v5612 = vsel %vm1015, %v5174, 0
  %v5615 = vsel %vm1015, %v5175, 0
  %v5618 = vsel %vm1015, %v5176, 0
  %v5621 = vsel %vm1015, %v5177, 0
  %v5624 = vsel %vm1015, %v5178, 0
  %v5627 = vsel %vm1015, %v5179, 0
  %v5630 = vsel %vm1015, %v5180, 0
  %v5633 = vsel %vm1015, %v5181, 0
  %v5636 = vsel %vm1015, %v5182, 0
  %v5639 = vsel %vm1015, %v5183, 0
  %v5642 = vsel %vm1015, %v5184, 0
  %v5645 = vsel %vm1015, %v5185, 0
  %v5648 = vsel %vm1015, %v5186, 0
  %v5651 = vsel %vm1015, %v5187, 0
  %5653 = vmatprep.subr.mxu0 0.0
  %5654 = vmatpush1.msra.mxu0 0.0
  %5655 = vmatprep.subr.mxu0 0.0
  %5656 = vmatpush1.msra.mxu0 0.0
  %5657 = vmatprep.subr.mxu0 0.0
  %5658 = vmatpush1.msra.mxu0 0.0
  %5659 = vmatprep.subr.mxu0 0.0
  %5660 = vmatpush1.msra.mxu0 0.0
  %5661 = vmatprep.subr.mxu0 0.0
  %5662 = vmatpush1.msra.mxu0 0.0
  %5663 = vmatprep.subr.mxu0 0.0
  %5664 = vmatpush1.msra.mxu0 0.0
  %5665 = vmatprep.subr.mxu0 0.0
  %5666 = vmatpush1.msra.mxu0 0.0
  %5667 = vmatprep.subr.mxu0 0.0
  %5668 = vmatpush1.msra.mxu0 0.0
  %5669 = vmatprep.subr.mxu0 0.0
  %5670 = vmatpush1.msra.mxu0 %v5195
  %5671 = vmatprep.subr.mxu0 0.0
  %5672 = vmatpush1.msra.mxu0 %v5194
  %5673 = vmatprep.subr.mxu0 0.0
  %5674 = vmatpush1.msra.mxu0 %v5193
  %5675 = vmatprep.subr.mxu0 0.0
  %5676 = vmatpush1.msra.mxu0 %v5192
  %5677 = vmatprep.subr.mxu0 0.0
  %5678 = vmatpush1.msra.mxu0 %v5191
  %5679 = vmatprep.subr.mxu0 0.0
  %5680 = vmatpush1.msra.mxu0 %v5190
  %5681 = vmatprep.subr.mxu0 0.0
  %5682 = vmatpush1.msra.mxu0 %v5189
  %5683 = vmatprep.subr.mxu0 0.0
  %5684 = vmatpush1.msra.mxu0 %v5188
  %5685 = vmatprep.subr.mxu0 0.0
  %5686 = vmatpush2.msra.mxu0 0.0
  %5687 = vmatprep.subr.mxu0 0.0
  %5688 = vmatpush2.msra.mxu0 0.0
  %5689 = vmatprep.subr.mxu0 0.0
  %5690 = vmatpush2.msra.mxu0 0.0
  %5691 = vmatprep.subr.mxu0 0.0
  %5692 = vmatpush2.msra.mxu0 0.0
  %5693 = vmatprep.subr.mxu0 0.0
  %5694 = vmatpush2.msra.mxu0 0.0
  %5695 = vmatprep.subr.mxu0 0.0
  %5696 = vmatpush2.msra.mxu0 0.0
  %5697 = vmatprep.subr.mxu0 0.0
  %5698 = vmatpush2.msra.mxu0 0.0
  %5699 = vmatprep.subr.mxu0 0.0
  %5700 = vmatpush2.msra.mxu0 0.0
  %5701 = vmatprep.subr.mxu0 0.0
  %5702 = vmatpush2.msra.mxu0 0.0
  %5703 = vmatprep.subr.mxu0 0.0
  %5704 = vmatpush2.msra.mxu0 0.0
  %5705 = vmatprep.subr.mxu0 0.0
  %5706 = vmatpush2.msra.mxu0 0.0
  %5707 = vmatprep.subr.mxu0 0.0
  %5708 = vmatpush2.msra.mxu0 0.0
  %5709 = vmatprep.subr.mxu0 0.0
  %5710 = vmatpush2.msra.mxu0 0.0
  %5711 = vmatprep.subr.mxu0 0.0
  %5712 = vmatpush2.msra.mxu0 0.0
  %5713 = vmatprep.subr.mxu0 0.0
  %5714 = vmatpush2.msra.mxu0 0.0
  %5715 = vmatprep.subr.mxu0 0.0
  %5716 = vmatpush2.msra.mxu0 0.0
  %5717 = vmatprep.mubr.f32.mxu0 0.0
  %5718 = vmatmul.mubr.f32.gmra.mxu0 %v5558
  %v5719 = vpop.f32.mrf.mxu0
  %v5720 = vadd.f32 %v5399, %v5719
  %v5721 = vpop.f32.mrf.mxu0
  %5722 = vmatprep.mubr.f32.mxu0 0.0
  %5723 = vmatmul.mubr.f32.gmra.mxu0 %v5561
  %v5724 = vpop.f32.mrf.mxu0
  %v5725 = vadd.f32 %v5404, %v5724
  %v5726 = vpop.f32.mrf.mxu0
  %5727 = vmatprep.mubr.f32.mxu0 0.0
  %5728 = vmatmul.mubr.f32.gmra.mxu0 %v5564
  %v5729 = vpop.f32.mrf.mxu0
  %v5730 = vadd.f32 %v5409, %v5729
  %v5731 = vpop.f32.mrf.mxu0
  %5732 = vmatprep.mubr.f32.mxu0 0.0
  %5733 = vmatmul.mubr.f32.gmra.mxu0 %v5567
  %v5734 = vpop.f32.mrf.mxu0
  %v5735 = vadd.f32 %v5414, %v5734
  %v5736 = vpop.f32.mrf.mxu0
  %5737 = vmatprep.mubr.f32.mxu0 0.0
  %5738 = vmatmul.mubr.f32.gmra.mxu0 %v5570
  %v5739 = vpop.f32.mrf.mxu0
  %v5740 = vadd.f32 %v5419, %v5739
  %v5741 = vpop.f32.mrf.mxu0
  %5742 = vmatprep.mubr.f32.mxu0 0.0
  %5743 = vmatmul.mubr.f32.gmra.mxu0 %v5573
  %v5744 = vpop.f32.mrf.mxu0
  %v5745 = vadd.f32 %v5424, %v5744
  %v5746 = vpop.f32.mrf.mxu0
  %5747 = vmatprep.mubr.f32.mxu0 0.0
  %5748 = vmatmul.mubr.f32.gmra.mxu0 %v5576
  %v5749 = vpop.f32.mrf.mxu0
  %v5750 = vadd.f32 %v5429, %v5749
  %v5751 = vpop.f32.mrf.mxu0
  %5752 = vmatprep.mubr.f32.mxu0 0.0
  %5753 = vmatmul.mubr.f32.gmra.mxu0 %v5579
  %v5754 = vpop.f32.mrf.mxu0
  %v5755 = vadd.f32 %v5434, %v5754
  %v5756 = vpop.f32.mrf.mxu0
  %5757 = vmatprep.mubr.f32.mxu0 0.0
  %5758 = vmatmul.mubr.f32.gmra.mxu0 %v5582
  %v5759 = vpop.f32.mrf.mxu0
  %v5760 = vadd.f32 %v5439, %v5759
  %v5761 = vpop.f32.mrf.mxu0
  %5762 = vmatprep.mubr.f32.mxu0 0.0
  %5763 = vmatmul.mubr.f32.gmra.mxu0 %v5585
  %v5764 = vpop.f32.mrf.mxu0
  %v5765 = vadd.f32 %v5444, %v5764
  %v5766 = vpop.f32.mrf.mxu0
  %5767 = vmatprep.mubr.f32.mxu0 0.0
  %5768 = vmatmul.mubr.f32.gmra.mxu0 %v5588
  %v5769 = vpop.f32.mrf.mxu0
  %v5770 = vadd.f32 %v5449, %v5769
  %v5771 = vpop.f32.mrf.mxu0
  %5772 = vmatprep.mubr.f32.mxu0 0.0
  %5773 = vmatmul.mubr.f32.gmra.mxu0 %v5591
  %v5774 = vpop.f32.mrf.mxu0
  %v5775 = vadd.f32 %v5454, %v5774
  %v5776 = vpop.f32.mrf.mxu0
  %5777 = vmatprep.mubr.f32.mxu0 0.0
  %5778 = vmatmul.mubr.f32.gmra.mxu0 %v5594
  %v5779 = vpop.f32.mrf.mxu0
  %v5780 = vadd.f32 %v5459, %v5779
  %v5781 = vpop.f32.mrf.mxu0
  %5782 = vmatprep.mubr.f32.mxu0 0.0
  %5783 = vmatmul.mubr.f32.gmra.mxu0 %v5597
  %v5784 = vpop.f32.mrf.mxu0
  %v5785 = vadd.f32 %v5464, %v5784
  %v5786 = vpop.f32.mrf.mxu0
  %5787 = vmatprep.mubr.f32.mxu0 0.0
  %5788 = vmatmul.mubr.f32.gmra.mxu0 %v5600
  %v5789 = vpop.f32.mrf.mxu0
  %v5790 = vadd.f32 %v5469, %v5789
  %v5791 = vpop.f32.mrf.mxu0
  %5792 = vmatprep.mubr.f32.mxu0 0.0
  %5793 = vmatmul.mubr.f32.gmra.mxu0 %v5603
  %v5794 = vpop.f32.mrf.mxu0
  %v5795 = vadd.f32 %v5474, %v5794
  %v5796 = vpop.f32.mrf.mxu0
  %5797 = vmatprep.mubr.f32.mxu0 0.0
  %5798 = vmatmul.mubr.f32.gmra.mxu0 %v5606
  %v5799 = vpop.f32.mrf.mxu0
  %v5800 = vadd.f32 %v5479, %v5799
  %v5801 = vpop.f32.mrf.mxu0
  %5802 = vmatprep.mubr.f32.mxu0 0.0
  %5803 = vmatmul.mubr.f32.gmra.mxu0 %v5609
  %v5804 = vpop.f32.mrf.mxu0
  %v5805 = vadd.f32 %v5484, %v5804
  %v5806 = vpop.f32.mrf.mxu0
  %5807 = vmatprep.mubr.f32.mxu0 0.0
  %5808 = vmatmul.mubr.f32.gmra.mxu0 %v5612
  %v5809 = vpop.f32.mrf.mxu0
  %v5810 = vadd.f32 %v5489, %v5809
  %v5811 = vpop.f32.mrf.mxu0
  %5812 = vmatprep.mubr.f32.mxu0 0.0
  %5813 = vmatmul.mubr.f32.gmra.mxu0 %v5615
  %v5814 = vpop.f32.mrf.mxu0
  %v5815 = vadd.f32 %v5494, %v5814
  %v5816 = vpop.f32.mrf.mxu0
  %5817 = vmatprep.mubr.f32.mxu0 0.0
  %5818 = vmatmul.mubr.f32.gmra.mxu0 %v5618
  %v5819 = vpop.f32.mrf.mxu0
  %v5820 = vadd.f32 %v5499, %v5819
  %v5821 = vpop.f32.mrf.mxu0
  %5822 = vmatprep.mubr.f32.mxu0 0.0
  %5823 = vmatmul.mubr.f32.gmra.mxu0 %v5621
  %v5824 = vpop.f32.mrf.mxu0
  %v5825 = vadd.f32 %v5504, %v5824
  %v5826 = vpop.f32.mrf.mxu0
  %5827 = vmatprep.mubr.f32.mxu0 0.0
  %5828 = vmatmul.mubr.f32.gmra.mxu0 %v5624
  %v5829 = vpop.f32.mrf.mxu0
  %v5830 = vadd.f32 %v5509, %v5829
  %v5831 = vpop.f32.mrf.mxu0
  %5832 = vmatprep.mubr.f32.mxu0 0.0
  %5833 = vmatmul.mubr.f32.gmra.mxu0 %v5627
  %v5834 = vpop.f32.mrf.mxu0
  %v5835 = vadd.f32 %v5514, %v5834
  %v5836 = vpop.f32.mrf.mxu0
  %5837 = vmatprep.mubr.f32.mxu0 0.0
  %5838 = vmatmul.mubr.f32.gmra.mxu0 %v5630
  %v5839 = vpop.f32.mrf.mxu0
  %v5840 = vadd.f32 %v5519, %v5839
  %v5841 = vpop.f32.mrf.mxu0
  %5842 = vmatprep.mubr.f32.mxu0 0.0
  %5843 = vmatmul.mubr.f32.gmra.mxu0 %v5633
  %v5844 = vpop.f32.mrf.mxu0
  %v5845 = vadd.f32 %v5524, %v5844
  %v5846 = vpop.f32.mrf.mxu0
  %5847 = vmatprep.mubr.f32.mxu0 0.0
  %5848 = vmatmul.mubr.f32.gmra.mxu0 %v5636
  %v5849 = vpop.f32.mrf.mxu0
  %v5850 = vadd.f32 %v5529, %v5849
  %v5851 = vpop.f32.mrf.mxu0
  %5852 = vmatprep.mubr.f32.mxu0 0.0
  %5853 = vmatmul.mubr.f32.gmra.mxu0 %v5639
  %v5854 = vpop.f32.mrf.mxu0
  %v5855 = vadd.f32 %v5534, %v5854
  %v5856 = vpop.f32.mrf.mxu0
  %5857 = vmatprep.mubr.f32.mxu0 0.0
  %5858 = vmatmul.mubr.f32.gmra.mxu0 %v5642
  %v5859 = vpop.f32.mrf.mxu0
  %v5860 = vadd.f32 %v5539, %v5859
  %v5861 = vpop.f32.mrf.mxu0
  %5862 = vmatprep.mubr.f32.mxu0 0.0
  %5863 = vmatmul.mubr.f32.gmra.mxu0 %v5645
  %v5864 = vpop.f32.mrf.mxu0
  %v5865 = vadd.f32 %v5544, %v5864
  %v5866 = vpop.f32.mrf.mxu0
  %5867 = vmatprep.mubr.f32.mxu0 0.0
  %5868 = vmatmul.mubr.f32.gmra.mxu0 %v5648
  %v5869 = vpop.f32.mrf.mxu0
  %v5870 = vadd.f32 %v5549, %v5869
  %v5871 = vpop.f32.mrf.mxu0
  %5872 = vmatprep.mubr.f32.mxu0 0.0
  %5873 = vmatmul.mubr.f32.gmra.mxu0 %v5651
  %v5874 = vpop.f32.mrf.mxu0
  %v5875 = vadd.f32 %v5554, %v5874
  %v5876 = vpop.f32.mrf.mxu0
  %5877 = vdwg.mxu0
  %v5878 = vld [vmem:[#allocation4 + $0x121] sm:$0xff]
  %v5879 = vld [vmem:[#allocation4 + $0x129] sm:$0xff]
  %v5880 = vld [vmem:[#allocation4 + $0x131] sm:$0xff]
  %v5881 = vld [vmem:[#allocation4 + $0x139] sm:$0xff]
  %v5882 = vld [vmem:[#allocation4 + $0x141] sm:$0xff]
  %v5883 = vld [vmem:[#allocation4 + $0x149] sm:$0xff]
  %v5884 = vld [vmem:[#allocation4 + $0x151] sm:$0xff]
  %v5885 = vld [vmem:[#allocation4 + $0x159] sm:$0xff]
  %v5886 = vld [vmem:[#allocation4 + $0x161] sm:$0xff]
  %v5887 = vld [vmem:[#allocation4 + $0x169] sm:$0xff]
  %v5888 = vld [vmem:[#allocation4 + $0x171] sm:$0xff]
  %v5889 = vld [vmem:[#allocation4 + $0x179] sm:$0xff]
  %v5890 = vld [vmem:[#allocation4 + $0x181] sm:$0xff]
  %v5891 = vld [vmem:[#allocation4 + $0x189] sm:$0xff]
  %v5892 = vld [vmem:[#allocation4 + $0x191] sm:$0xff]
  %v5893 = vld [vmem:[#allocation4 + $0x199] sm:$0xff]
  %v5894 = vld [vmem:[#allocation4 + $0x1a1] sm:$0xff]
  %v5895 = vld [vmem:[#allocation4 + $0x1a9] sm:$0xff]
  %v5896 = vld [vmem:[#allocation4 + $0x1b1] sm:$0xff]
  %v5897 = vld [vmem:[#allocation4 + $0x1b9] sm:$0xff]
  %v5898 = vld [vmem:[#allocation4 + $0x1c1] sm:$0xff]
  %v5899 = vld [vmem:[#allocation4 + $0x1c9] sm:$0xff]
  %v5900 = vld [vmem:[#allocation4 + $0x1d1] sm:$0xff]
  %v5901 = vld [vmem:[#allocation4 + $0x1d9] sm:$0xff]
  %v5902 = vld [vmem:[#allocation4 + $0x1e1] sm:$0xff]
  %v5903 = vld [vmem:[#allocation4 + $0x1e9] sm:$0xff]
  %v5904 = vld [vmem:[#allocation4 + $0x1f1] sm:$0xff]
  %v5905 = vld [vmem:[#allocation4 + $0x1f9] sm:$0xff]
  %v5906 = vld [vmem:[#allocation4 + $0x201] sm:$0xff]
  %v5907 = vld [vmem:[#allocation4 + $0x209] sm:$0xff]
  %v5908 = vld [vmem:[#allocation4 + $0x211] sm:$0xff]
  %v5909 = vld [vmem:[#allocation4 + $0x219] sm:$0xff]
  %v5910 = vld [vmem:[%s2 + $0x80] sm:$0xff]
  %v5911 = vld [vmem:[%s2 + $0x88] sm:$0xff]
  %v5912 = vld [vmem:[%s2 + $0x90] sm:$0xff]
  %v5913 = vld [vmem:[%s2 + $0x98] sm:$0xff]
  %v5914 = vld [vmem:[%s2 + $0xa0] sm:$0xff]
  %v5915 = vld [vmem:[%s2 + $0xa8] sm:$0xff]
  %v5916 = vld [vmem:[%s2 + $0xb0] sm:$0xff]
  %v5917 = vld [vmem:[%s2 + $0xb8] sm:$0xff]
  %v5919 = vsel %vm1015, %v5878, 0
  %v5922 = vsel %vm1015, %v5879, 0
  %v5925 = vsel %vm1015, %v5880, 0
  %v5928 = vsel %vm1015, %v5881, 0
  %v5931 = vsel %vm1015, %v5882, 0
  %v5934 = vsel %vm1015, %v5883, 0
  %v5937 = vsel %vm1015, %v5884, 0
  %v5940 = vsel %vm1015, %v5885, 0
  %v5943 = vsel %vm1015, %v5886, 0
  %v5946 = vsel %vm1015, %v5887, 0
  %v5949 = vsel %vm1015, %v5888, 0
  %v5952 = vsel %vm1015, %v5889, 0
  %v5955 = vsel %vm1015, %v5890, 0
  %v5958 = vsel %vm1015, %v5891, 0
  %v5961 = vsel %vm1015, %v5892, 0
  %v5964 = vsel %vm1015, %v5893, 0
  %v5967 = vsel %vm1015, %v5894, 0
  %v5970 = vsel %vm1015, %v5895, 0
  %v5973 = vsel %vm1015, %v5896, 0
  %v5976 = vsel %vm1015, %v5897, 0
  %v5979 = vsel %vm1015, %v5898, 0
  %v5982 = vsel %vm1015, %v5899, 0
  %v5985 = vsel %vm1015, %v5900, 0
  %v5988 = vsel %vm1015, %v5901, 0
  %v5991 = vsel %vm1015, %v5902, 0
  %v5994 = vsel %vm1015, %v5903, 0
  %v5997 = vsel %vm1015, %v5904, 0
  %v6000 = vsel %vm1015, %v5905, 0
  %v6003 = vsel %vm1015, %v5906, 0
  %v6006 = vsel %vm1015, %v5907, 0
  %v6009 = vsel %vm1015, %v5908, 0
  %v6012 = vsel %vm1015, %v5909, 0
  %6014 = vmatprep.subr.mxu0 0.0
  %6015 = vmatpush1.msra.mxu0 0.0
  %6016 = vmatprep.subr.mxu0 0.0
  %6017 = vmatpush1.msra.mxu0 0.0
  %6018 = vmatprep.subr.mxu0 0.0
  %6019 = vmatpush1.msra.mxu0 0.0
  %6020 = vmatprep.subr.mxu0 0.0
  %6021 = vmatpush1.msra.mxu0 0.0
  %6022 = vmatprep.subr.mxu0 0.0
  %6023 = vmatpush1.msra.mxu0 0.0
  %6024 = vmatprep.subr.mxu0 0.0
  %6025 = vmatpush1.msra.mxu0 0.0
  %6026 = vmatprep.subr.mxu0 0.0
  %6027 = vmatpush1.msra.mxu0 0.0
  %6028 = vmatprep.subr.mxu0 0.0
  %6029 = vmatpush1.msra.mxu0 0.0
  %6030 = vmatprep.subr.mxu0 0.0
  %6031 = vmatpush1.msra.mxu0 %v5917
  %6032 = vmatprep.subr.mxu0 0.0
  %6033 = vmatpush1.msra.mxu0 %v5916
  %6034 = vmatprep.subr.mxu0 0.0
  %6035 = vmatpush1.msra.mxu0 %v5915
  %6036 = vmatprep.subr.mxu0 0.0
  %6037 = vmatpush1.msra.mxu0 %v5914
  %6038 = vmatprep.subr.mxu0 0.0
  %6039 = vmatpush1.msra.mxu0 %v5913
  %6040 = vmatprep.subr.mxu0 0.0
  %6041 = vmatpush1.msra.mxu0 %v5912
  %6042 = vmatprep.subr.mxu0 0.0
  %6043 = vmatpush1.msra.mxu0 %v5911
  %6044 = vmatprep.subr.mxu0 0.0
  %6045 = vmatpush1.msra.mxu0 %v5910
  %6046 = vmatprep.subr.mxu0 0.0
  %6047 = vmatpush2.msra.mxu0 0.0
  %6048 = vmatprep.subr.mxu0 0.0
  %6049 = vmatpush2.msra.mxu0 0.0
  %6050 = vmatprep.subr.mxu0 0.0
  %6051 = vmatpush2.msra.mxu0 0.0
  %6052 = vmatprep.subr.mxu0 0.0
  %6053 = vmatpush2.msra.mxu0 0.0
  %6054 = vmatprep.subr.mxu0 0.0
  %6055 = vmatpush2.msra.mxu0 0.0
  %6056 = vmatprep.subr.mxu0 0.0
  %6057 = vmatpush2.msra.mxu0 0.0
  %6058 = vmatprep.subr.mxu0 0.0
  %6059 = vmatpush2.msra.mxu0 0.0
  %6060 = vmatprep.subr.mxu0 0.0
  %6061 = vmatpush2.msra.mxu0 0.0
  %6062 = vmatprep.subr.mxu0 0.0
  %6063 = vmatpush2.msra.mxu0 0.0
  %6064 = vmatprep.subr.mxu0 0.0
  %6065 = vmatpush2.msra.mxu0 0.0
  %6066 = vmatprep.subr.mxu0 0.0
  %6067 = vmatpush2.msra.mxu0 0.0
  %6068 = vmatprep.subr.mxu0 0.0
  %6069 = vmatpush2.msra.mxu0 0.0
  %6070 = vmatprep.subr.mxu0 0.0
  %6071 = vmatpush2.msra.mxu0 0.0
  %6072 = vmatprep.subr.mxu0 0.0
  %6073 = vmatpush2.msra.mxu0 0.0
  %6074 = vmatprep.subr.mxu0 0.0
  %6075 = vmatpush2.msra.mxu0 0.0
  %6076 = vmatprep.subr.mxu0 0.0
  %6077 = vmatpush2.msra.mxu0 0.0
  %6078 = vmatprep.mubr.f32.mxu0 0.0
  %6079 = vmatmul.mubr.f32.gmra.mxu0 %v5919
  %v6080 = vpop.f32.mrf.mxu0
  %v6081 = vadd.f32 0.0, %v6080
  %v6082 = vpop.f32.mrf.mxu0
  %6083 = vmatprep.mubr.f32.mxu0 0.0
  %6084 = vmatmul.mubr.f32.gmra.mxu0 %v5922
  %v6085 = vpop.f32.mrf.mxu0
  %v6086 = vadd.f32 0.0, %v6085
  %v6087 = vpop.f32.mrf.mxu0
  %6088 = vmatprep.mubr.f32.mxu0 0.0
  %6089 = vmatmul.mubr.f32.gmra.mxu0 %v5925
  %v6090 = vpop.f32.mrf.mxu0
  %v6091 = vadd.f32 0.0, %v6090
  %v6092 = vpop.f32.mrf.mxu0
  %6093 = vmatprep.mubr.f32.mxu0 0.0
  %6094 = vmatmul.mubr.f32.gmra.mxu0 %v5928
  %v6095 = vpop.f32.mrf.mxu0
  %v6096 = vadd.f32 0.0, %v6095
  %v6097 = vpop.f32.mrf.mxu0
  %6098 = vmatprep.mubr.f32.mxu0 0.0
  %6099 = vmatmul.mubr.f32.gmra.mxu0 %v5931
  %v6100 = vpop.f32.mrf.mxu0
  %v6101 = vadd.f32 0.0, %v6100
  %v6102 = vpop.f32.mrf.mxu0
  %6103 = vmatprep.mubr.f32.mxu0 0.0
  %6104 = vmatmul.mubr.f32.gmra.mxu0 %v5934
  %v6105 = vpop.f32.mrf.mxu0
  %v6106 = vadd.f32 0.0, %v6105
  %v6107 = vpop.f32.mrf.mxu0
  %6108 = vmatprep.mubr.f32.mxu0 0.0
  %6109 = vmatmul.mubr.f32.gmra.mxu0 %v5937
  %v6110 = vpop.f32.mrf.mxu0
  %v6111 = vadd.f32 0.0, %v6110
  %v6112 = vpop.f32.mrf.mxu0
  %6113 = vmatprep.mubr.f32.mxu0 0.0
  %6114 = vmatmul.mubr.f32.gmra.mxu0 %v5940
  %v6115 = vpop.f32.mrf.mxu0
  %v6116 = vadd.f32 0.0, %v6115
  %v6117 = vpop.f32.mrf.mxu0
  %6118 = vmatprep.mubr.f32.mxu0 0.0
  %6119 = vmatmul.mubr.f32.gmra.mxu0 %v5943
  %v6120 = vpop.f32.mrf.mxu0
  %v6121 = vadd.f32 0.0, %v6120
  %v6122 = vpop.f32.mrf.mxu0
  %6123 = vmatprep.mubr.f32.mxu0 0.0
  %6124 = vmatmul.mubr.f32.gmra.mxu0 %v5946
  %v6125 = vpop.f32.mrf.mxu0
  %v6126 = vadd.f32 0.0, %v6125
  %v6127 = vpop.f32.mrf.mxu0
  %6128 = vmatprep.mubr.f32.mxu0 0.0
  %6129 = vmatmul.mubr.f32.gmra.mxu0 %v5949
  %v6130 = vpop.f32.mrf.mxu0
  %v6131 = vadd.f32 0.0, %v6130
  %v6132 = vpop.f32.mrf.mxu0
  %6133 = vmatprep.mubr.f32.mxu0 0.0
  %6134 = vmatmul.mubr.f32.gmra.mxu0 %v5952
  %v6135 = vpop.f32.mrf.mxu0
  %v6136 = vadd.f32 0.0, %v6135
  %v6137 = vpop.f32.mrf.mxu0
  %6138 = vmatprep.mubr.f32.mxu0 0.0
  %6139 = vmatmul.mubr.f32.gmra.mxu0 %v5955
  %v6140 = vpop.f32.mrf.mxu0
  %v6141 = vadd.f32 0.0, %v6140
  %v6142 = vpop.f32.mrf.mxu0
  %6143 = vmatprep.mubr.f32.mxu0 0.0
  %6144 = vmatmul.mubr.f32.gmra.mxu0 %v5958
  %v6145 = vpop.f32.mrf.mxu0
  %v6146 = vadd.f32 0.0, %v6145
  %v6147 = vpop.f32.mrf.mxu0
  %6148 = vmatprep.mubr.f32.mxu0 0.0
  %6149 = vmatmul.mubr.f32.gmra.mxu0 %v5961
  %v6150 = vpop.f32.mrf.mxu0
  %v6151 = vadd.f32 0.0, %v6150
  %v6152 = vpop.f32.mrf.mxu0
  %6153 = vmatprep.mubr.f32.mxu0 0.0
  %6154 = vmatmul.mubr.f32.gmra.mxu0 %v5964
  %v6155 = vpop.f32.mrf.mxu0
  %v6156 = vadd.f32 0.0, %v6155
  %v6157 = vpop.f32.mrf.mxu0
  %6158 = vmatprep.mubr.f32.mxu0 0.0
  %6159 = vmatmul.mubr.f32.gmra.mxu0 %v5967
  %v6160 = vpop.f32.mrf.mxu0
  %v6161 = vadd.f32 0.0, %v6160
  %v6162 = vpop.f32.mrf.mxu0
  %6163 = vmatprep.mubr.f32.mxu0 0.0
  %6164 = vmatmul.mubr.f32.gmra.mxu0 %v5970
  %v6165 = vpop.f32.mrf.mxu0
  %v6166 = vadd.f32 0.0, %v6165
  %v6167 = vpop.f32.mrf.mxu0
  %6168 = vmatprep.mubr.f32.mxu0 0.0
  %6169 = vmatmul.mubr.f32.gmra.mxu0 %v5973
  %v6170 = vpop.f32.mrf.mxu0
  %v6171 = vadd.f32 0.0, %v6170
  %v6172 = vpop.f32.mrf.mxu0
  %6173 = vmatprep.mubr.f32.mxu0 0.0
  %6174 = vmatmul.mubr.f32.gmra.mxu0 %v5976
  %v6175 = vpop.f32.mrf.mxu0
  %v6176 = vadd.f32 0.0, %v6175
  %v6177 = vpop.f32.mrf.mxu0
  %6178 = vmatprep.mubr.f32.mxu0 0.0
  %6179 = vmatmul.mubr.f32.gmra.mxu0 %v5979
  %v6180 = vpop.f32.mrf.mxu0
  %v6181 = vadd.f32 0.0, %v6180
  %v6182 = vpop.f32.mrf.mxu0
  %6183 = vmatprep.mubr.f32.mxu0 0.0
  %6184 = vmatmul.mubr.f32.gmra.mxu0 %v5982
  %v6185 = vpop.f32.mrf.mxu0
  %v6186 = vadd.f32 0.0, %v6185
  %v6187 = vpop.f32.mrf.mxu0
  %6188 = vmatprep.mubr.f32.mxu0 0.0
  %6189 = vmatmul.mubr.f32.gmra.mxu0 %v5985
  %v6190 = vpop.f32.mrf.mxu0
  %v6191 = vadd.f32 0.0, %v6190
  %v6192 = vpop.f32.mrf.mxu0
  %6193 = vmatprep.mubr.f32.mxu0 0.0
  %6194 = vmatmul.mubr.f32.gmra.mxu0 %v5988
  %v6195 = vpop.f32.mrf.mxu0
  %v6196 = vadd.f32 0.0, %v6195
  %v6197 = vpop.f32.mrf.mxu0
  %6198 = vmatprep.mubr.f32.mxu0 0.0
  %6199 = vmatmul.mubr.f32.gmra.mxu0 %v5991
  %v6200 = vpop.f32.mrf.mxu0
  %v6201 = vadd.f32 0.0, %v6200
  %v6202 = vpop.f32.mrf.mxu0
  %6203 = vmatprep.mubr.f32.mxu0 0.0
  %6204 = vmatmul.mubr.f32.gmra.mxu0 %v5994
  %v6205 = vpop.f32.mrf.mxu0
  %v6206 = vadd.f32 0.0, %v6205
  %v6207 = vpop.f32.mrf.mxu0
  %6208 = vmatprep.mubr.f32.mxu0 0.0
  %6209 = vmatmul.mubr.f32.gmra.mxu0 %v5997
  %v6210 = vpop.f32.mrf.mxu0
  %v6211 = vadd.f32 0.0, %v6210
  %v6212 = vpop.f32.mrf.mxu0
  %6213 = vmatprep.mubr.f32.mxu0 0.0
  %6214 = vmatmul.mubr.f32.gmra.mxu0 %v6000
  %v6215 = vpop.f32.mrf.mxu0
  %v6216 = vadd.f32 0.0, %v6215
  %v6217 = vpop.f32.mrf.mxu0
  %6218 = vmatprep.mubr.f32.mxu0 0.0
  %6219 = vmatmul.mubr.f32.gmra.mxu0 %v6003
  %v6220 = vpop.f32.mrf.mxu0
  %v6221 = vadd.f32 0.0, %v6220
  %v6222 = vpop.f32.mrf.mxu0
  %6223 = vmatprep.mubr.f32.mxu0 0.0
  %6224 = vmatmul.mubr.f32.gmra.mxu0 %v6006
  %v6225 = vpop.f32.mrf.mxu0
  %v6226 = vadd.f32 0.0, %v6225
  %v6227 = vpop.f32.mrf.mxu0
  %6228 = vmatprep.mubr.f32.mxu0 0.0
  %6229 = vmatmul.mubr.f32.gmra.mxu0 %v6009
  %v6230 = vpop.f32.mrf.mxu0
  %v6231 = vadd.f32 0.0, %v6230
  %v6232 = vpop.f32.mrf.mxu0
  %6233 = vmatprep.mubr.f32.mxu0 0.0
  %6234 = vmatmul.mubr.f32.gmra.mxu0 %v6012
  %v6235 = vpop.f32.mrf.mxu0
  %v6236 = vadd.f32 0.0, %v6235
  %v6237 = vpop.f32.mrf.mxu0
  %6238 = vdwg.mxu0
  %v6239 = vadd.f32 %v5720, %v6081
  %v6240 = vadd.f32 %v5725, %v6086
  %v6241 = vadd.f32 %v5730, %v6091
  %v6242 = vadd.f32 %v5735, %v6096
  %v6243 = vadd.f32 %v5740, %v6101
  %v6244 = vadd.f32 %v5745, %v6106
  %v6245 = vadd.f32 %v5750, %v6111
  %v6246 = vadd.f32 %v5755, %v6116
  %v6247 = vadd.f32 %v5760, %v6121
  %v6248 = vadd.f32 %v5765, %v6126
  %v6249 = vadd.f32 %v5770, %v6131
  %v6250 = vadd.f32 %v5775, %v6136
  %v6251 = vadd.f32 %v5780, %v6141
  %v6252 = vadd.f32 %v5785, %v6146
  %v6253 = vadd.f32 %v5790, %v6151
  %v6254 = vadd.f32 %v5795, %v6156
  %v6255 = vadd.f32 %v5800, %v6161
  %v6256 = vadd.f32 %v5805, %v6166
  %v6257 = vadd.f32 %v5810, %v6171
  %v6258 = vadd.f32 %v5815, %v6176
  %v6259 = vadd.f32 %v5820, %v6181
  %v6260 = vadd.f32 %v5825, %v6186
  %v6261 = vadd.f32 %v5830, %v6191
  %v6262 = vadd.f32 %v5835, %v6196
  %v6263 = vadd.f32 %v5840, %v6201
  %v6264 = vadd.f32 %v5845, %v6206
  %v6265 = vadd.f32 %v5850, %v6211
  %v6266 = vadd.f32 %v5855, %v6216
  %v6267 = vadd.f32 %v5860, %v6221
  %v6268 = vadd.f32 %v5865, %v6226
  %v6269 = vadd.f32 %v5870, %v6231
  %v6270 = vadd.f32 %v5875, %v6236
  %v6271 = vld [vmem:[#allocation3 + $0x12f] sm:$0xff]
  %v6272 = vld [vmem:[#allocation3 + $0x137] sm:$0xff]
  %v6273 = vld [vmem:[#allocation3 + $0x13f] sm:$0xff]
  %v6274 = vld [vmem:[#allocation3 + $0x147] sm:$0xff]
  %v6275 = vld [vmem:[#allocation3 + $0x14f] sm:$0xff]
  %v6276 = vld [vmem:[#allocation3 + $0x157] sm:$0xff]
  %v6277 = vld [vmem:[#allocation3 + $0x15f] sm:$0xff]
  %v6278 = vld [vmem:[#allocation3 + $0x167] sm:$0xff]
  %v6279 = vld [vmem:[#allocation3 + $0x16f] sm:$0xff]
  %v6280 = vld [vmem:[#allocation3 + $0x177] sm:$0xff]
  %v6281 = vld [vmem:[#allocation3 + $0x17f] sm:$0xff]
  %v6282 = vld [vmem:[#allocation3 + $0x187] sm:$0xff]
  %v6283 = vld [vmem:[#allocation3 + $0x18f] sm:$0xff]
  %v6284 = vld [vmem:[#allocation3 + $0x197] sm:$0xff]
  %v6285 = vld [vmem:[#allocation3 + $0x19f] sm:$0xff]
  %v6286 = vld [vmem:[#allocation3 + $0x1a7] sm:$0xff]
  %v6287 = vld [vmem:[#allocation3 + $0x1af] sm:$0xff]
  %v6288 = vld [vmem:[#allocation3 + $0x1b7] sm:$0xff]
  %v6289 = vld [vmem:[#allocation3 + $0x1bf] sm:$0xff]
  %v6290 = vld [vmem:[#allocation3 + $0x1c7] sm:$0xff]
  %v6291 = vld [vmem:[#allocation3 + $0x1cf] sm:$0xff]
  %v6292 = vld [vmem:[#allocation3 + $0x1d7] sm:$0xff]
  %v6293 = vld [vmem:[#allocation3 + $0x1df] sm:$0xff]
  %v6294 = vld [vmem:[#allocation3 + $0x1e7] sm:$0xff]
  %v6295 = vld [vmem:[#allocation3 + $0x1ef] sm:$0xff]
  %v6296 = vld [vmem:[#allocation3 + $0x1f7] sm:$0xff]
  %v6297 = vld [vmem:[#allocation3 + $0x1ff] sm:$0xff]
  %v6298 = vld [vmem:[#allocation3 + $0x207] sm:$0xff]
  %v6299 = vld [vmem:[#allocation3 + $0x20f] sm:$0xff]
  %v6300 = vld [vmem:[#allocation3 + $0x217] sm:$0xff]
  %v6301 = vld [vmem:[#allocation3 + $0x21f] sm:$0xff]
  %v6302 = vld [vmem:[#allocation3 + $0x227] sm:$0xff]
  %v6303 = vld [vmem:[%s2 + $0xc0] sm:$0xff]
  %v6304 = vld [vmem:[%s2 + $0xc8] sm:$0xff]
  %v6305 = vld [vmem:[%s2 + $0xd0] sm:$0xff]
  %v6306 = vld [vmem:[%s2 + $0xd8] sm:$0xff]
  %v6307 = vld [vmem:[%s2 + $0xe0] sm:$0xff]
  %v6308 = vld [vmem:[%s2 + $0xe8] sm:$0xff]
  %v6309 = vld [vmem:[%s2 + $0xf0] sm:$0xff]
  %v6310 = vld [vmem:[%s2 + $0xf8] sm:$0xff]
  %v6312 = vsel %vm1015, %v6271, 0
  %v6315 = vsel %vm1015, %v6272, 0
  %v6318 = vsel %vm1015, %v6273, 0
  %v6321 = vsel %vm1015, %v6274, 0
  %v6324 = vsel %vm1015, %v6275, 0
  %v6327 = vsel %vm1015, %v6276, 0
  %v6330 = vsel %vm1015, %v6277, 0
  %v6333 = vsel %vm1015, %v6278, 0
  %v6336 = vsel %vm1015, %v6279, 0
  %v6339 = vsel %vm1015, %v6280, 0
  %v6342 = vsel %vm1015, %v6281, 0
  %v6345 = vsel %vm1015, %v6282, 0
  %v6348 = vsel %vm1015, %v6283, 0
  %v6351 = vsel %vm1015, %v6284, 0
  %v6354 = vsel %vm1015, %v6285, 0
  %v6357 = vsel %vm1015, %v6286, 0
  %v6360 = vsel %vm1015, %v6287, 0
  %v6363 = vsel %vm1015, %v6288, 0
  %v6366 = vsel %vm1015, %v6289, 0
  %v6369 = vsel %vm1015, %v6290, 0
  %v6372 = vsel %vm1015, %v6291, 0
  %v6375 = vsel %vm1015, %v6292, 0
  %v6378 = vsel %vm1015, %v6293, 0
  %v6381 = vsel %vm1015, %v6294, 0
  %v6384 = vsel %vm1015, %v6295, 0
  %v6387 = vsel %vm1015, %v6296, 0
  %v6390 = vsel %vm1015, %v6297, 0
  %v6393 = vsel %vm1015, %v6298, 0
  %v6396 = vsel %vm1015, %v6299, 0
  %v6399 = vsel %vm1015, %v6300, 0
  %v6402 = vsel %vm1015, %v6301, 0
  %v6405 = vsel %vm1015, %v6302, 0
  %6407 = vmatprep.subr.mxu0 0.0
  %6408 = vmatpush1.msra.mxu0 0.0
  %6409 = vmatprep.subr.mxu0 0.0
  %6410 = vmatpush1.msra.mxu0 0.0
  %6411 = vmatprep.subr.mxu0 0.0
  %6412 = vmatpush1.msra.mxu0 0.0
  %6413 = vmatprep.subr.mxu0 0.0
  %6414 = vmatpush1.msra.mxu0 0.0
  %6415 = vmatprep.subr.mxu0 0.0
  %6416 = vmatpush1.msra.mxu0 0.0
  %6417 = vmatprep.subr.mxu0 0.0
  %6418 = vmatpush1.msra.mxu0 0.0
  %6419 = vmatprep.subr.mxu0 0.0
  %6420 = vmatpush1.msra.mxu0 0.0
  %6421 = vmatprep.subr.mxu0 0.0
  %6422 = vmatpush1.msra.mxu0 0.0
  %6423 = vmatprep.subr.mxu0 0.0
  %6424 = vmatpush1.msra.mxu0 %v6310
  %6425 = vmatprep.subr.mxu0 0.0
  %6426 = vmatpush1.msra.mxu0 %v6309
  %6427 = vmatprep.subr.mxu0 0.0
  %6428 = vmatpush1.msra.mxu0 %v6308
  %6429 = vmatprep.subr.mxu0 0.0
  %6430 = vmatpush1.msra.mxu0 %v6307
  %6431 = vmatprep.subr.mxu0 0.0
  %6432 = vmatpush1.msra.mxu0 %v6306
  %6433 = vmatprep.subr.mxu0 0.0
  %6434 = vmatpush1.msra.mxu0 %v6305
  %6435 = vmatprep.subr.mxu0 0.0
  %6436 = vmatpush1.msra.mxu0 %v6304
  %6437 = vmatprep.subr.mxu0 0.0
  %6438 = vmatpush1.msra.mxu0 %v6303
  %6439 = vmatprep.subr.mxu0 0.0
  %6440 = vmatpush2.msra.mxu0 0.0
  %6441 = vmatprep.subr.mxu0 0.0
  %6442 = vmatpush2.msra.mxu0 0.0
  %6443 = vmatprep.subr.mxu0 0.0
  %6444 = vmatpush2.msra.mxu0 0.0
  %6445 = vmatprep.subr.mxu0 0.0
  %6446 = vmatpush2.msra.mxu0 0.0
  %6447 = vmatprep.subr.mxu0 0.0
  %6448 = vmatpush2.msra.mxu0 0.0
  %6449 = vmatprep.subr.mxu0 0.0
  %6450 = vmatpush2.msra.mxu0 0.0
  %6451 = vmatprep.subr.mxu0 0.0
  %6452 = vmatpush2.msra.mxu0 0.0
  %6453 = vmatprep.subr.mxu0 0.0
  %6454 = vmatpush2.msra.mxu0 0.0
  %6455 = vmatprep.subr.mxu0 0.0
  %6456 = vmatpush2.msra.mxu0 0.0
  %6457 = vmatprep.subr.mxu0 0.0
  %6458 = vmatpush2.msra.mxu0 0.0
  %6459 = vmatprep.subr.mxu0 0.0
  %6460 = vmatpush2.msra.mxu0 0.0
  %6461 = vmatprep.subr.mxu0 0.0
  %6462 = vmatpush2.msra.mxu0 0.0
  %6463 = vmatprep.subr.mxu0 0.0
  %6464 = vmatpush2.msra.mxu0 0.0
  %6465 = vmatprep.subr.mxu0 0.0
  %6466 = vmatpush2.msra.mxu0 0.0
  %6467 = vmatprep.subr.mxu0 0.0
  %6468 = vmatpush2.msra.mxu0 0.0
  %6469 = vmatprep.subr.mxu0 0.0
  %6470 = vmatpush2.msra.mxu0 0.0
  %6471 = vmatprep.mubr.f32.mxu0 0.0
  %6472 = vmatmul.mubr.f32.gmra.mxu0 %v6312
  %v6473 = vpop.f32.mrf.mxu0
  %v6474 = vadd.f32 0.0, %v6473
  %v6475 = vpop.f32.mrf.mxu0
  %6476 = vmatprep.mubr.f32.mxu0 0.0
  %6477 = vmatmul.mubr.f32.gmra.mxu0 %v6315
  %v6478 = vpop.f32.mrf.mxu0
  %v6479 = vadd.f32 0.0, %v6478
  %v6480 = vpop.f32.mrf.mxu0
  %6481 = vmatprep.mubr.f32.mxu0 0.0
  %6482 = vmatmul.mubr.f32.gmra.mxu0 %v6318
  %v6483 = vpop.f32.mrf.mxu0
  %v6484 = vadd.f32 0.0, %v6483
  %v6485 = vpop.f32.mrf.mxu0
  %6486 = vmatprep.mubr.f32.mxu0 0.0
  %6487 = vmatmul.mubr.f32.gmra.mxu0 %v6321
  %v6488 = vpop.f32.mrf.mxu0
  %v6489 = vadd.f32 0.0, %v6488
  %v6490 = vpop.f32.mrf.mxu0
  %6491 = vmatprep.mubr.f32.mxu0 0.0
  %6492 = vmatmul.mubr.f32.gmra.mxu0 %v6324
  %v6493 = vpop.f32.mrf.mxu0
  %v6494 = vadd.f32 0.0, %v6493
  %v6495 = vpop.f32.mrf.mxu0
  %6496 = vmatprep.mubr.f32.mxu0 0.0
  %6497 = vmatmul.mubr.f32.gmra.mxu0 %v6327
  %v6498 = vpop.f32.mrf.mxu0
  %v6499 = vadd.f32 0.0, %v6498
  %v6500 = vpop.f32.mrf.mxu0
  %6501 = vmatprep.mubr.f32.mxu0 0.0
  %6502 = vmatmul.mubr.f32.gmra.mxu0 %v6330
  %v6503 = vpop.f32.mrf.mxu0
  %v6504 = vadd.f32 0.0, %v6503
  %v6505 = vpop.f32.mrf.mxu0
  %6506 = vmatprep.mubr.f32.mxu0 0.0
  %6507 = vmatmul.mubr.f32.gmra.mxu0 %v6333
  %v6508 = vpop.f32.mrf.mxu0
  %v6509 = vadd.f32 0.0, %v6508
  %v6510 = vpop.f32.mrf.mxu0
  %6511 = vmatprep.mubr.f32.mxu0 0.0
  %6512 = vmatmul.mubr.f32.gmra.mxu0 %v6336
  %v6513 = vpop.f32.mrf.mxu0
  %v6514 = vadd.f32 0.0, %v6513
  %v6515 = vpop.f32.mrf.mxu0
  %6516 = vmatprep.mubr.f32.mxu0 0.0
  %6517 = vmatmul.mubr.f32.gmra.mxu0 %v6339
  %v6518 = vpop.f32.mrf.mxu0
  %v6519 = vadd.f32 0.0, %v6518
  %v6520 = vpop.f32.mrf.mxu0
  %6521 = vmatprep.mubr.f32.mxu0 0.0
  %6522 = vmatmul.mubr.f32.gmra.mxu0 %v6342
  %v6523 = vpop.f32.mrf.mxu0
  %v6524 = vadd.f32 0.0, %v6523
  %v6525 = vpop.f32.mrf.mxu0
  %6526 = vmatprep.mubr.f32.mxu0 0.0
  %6527 = vmatmul.mubr.f32.gmra.mxu0 %v6345
  %v6528 = vpop.f32.mrf.mxu0
  %v6529 = vadd.f32 0.0, %v6528
  %v6530 = vpop.f32.mrf.mxu0
  %6531 = vmatprep.mubr.f32.mxu0 0.0
  %6532 = vmatmul.mubr.f32.gmra.mxu0 %v6348
  %v6533 = vpop.f32.mrf.mxu0
  %v6534 = vadd.f32 0.0, %v6533
  %v6535 = vpop.f32.mrf.mxu0
  %6536 = vmatprep.mubr.f32.mxu0 0.0
  %6537 = vmatmul.mubr.f32.gmra.mxu0 %v6351
  %v6538 = vpop.f32.mrf.mxu0
  %v6539 = vadd.f32 0.0, %v6538
  %v6540 = vpop.f32.mrf.mxu0
  %6541 = vmatprep.mubr.f32.mxu0 0.0
  %6542 = vmatmul.mubr.f32.gmra.mxu0 %v6354
  %v6543 = vpop.f32.mrf.mxu0
  %v6544 = vadd.f32 0.0, %v6543
  %v6545 = vpop.f32.mrf.mxu0
  %6546 = vmatprep.mubr.f32.mxu0 0.0
  %6547 = vmatmul.mubr.f32.gmra.mxu0 %v6357
  %v6548 = vpop.f32.mrf.mxu0
  %v6549 = vadd.f32 0.0, %v6548
  %v6550 = vpop.f32.mrf.mxu0
  %6551 = vmatprep.mubr.f32.mxu0 0.0
  %6552 = vmatmul.mubr.f32.gmra.mxu0 %v6360
  %v6553 = vpop.f32.mrf.mxu0
  %v6554 = vadd.f32 0.0, %v6553
  %v6555 = vpop.f32.mrf.mxu0
  %6556 = vmatprep.mubr.f32.mxu0 0.0
  %6557 = vmatmul.mubr.f32.gmra.mxu0 %v6363
  %v6558 = vpop.f32.mrf.mxu0
  %v6559 = vadd.f32 0.0, %v6558
  %v6560 = vpop.f32.mrf.mxu0
  %6561 = vmatprep.mubr.f32.mxu0 0.0
  %6562 = vmatmul.mubr.f32.gmra.mxu0 %v6366
  %v6563 = vpop.f32.mrf.mxu0
  %v6564 = vadd.f32 0.0, %v6563
  %v6565 = vpop.f32.mrf.mxu0
  %6566 = vmatprep.mubr.f32.mxu0 0.0
  %6567 = vmatmul.mubr.f32.gmra.mxu0 %v6369
  %v6568 = vpop.f32.mrf.mxu0
  %v6569 = vadd.f32 0.0, %v6568
  %v6570 = vpop.f32.mrf.mxu0
  %6571 = vmatprep.mubr.f32.mxu0 0.0
  %6572 = vmatmul.mubr.f32.gmra.mxu0 %v6372
  %v6573 = vpop.f32.mrf.mxu0
  %v6574 = vadd.f32 0.0, %v6573
  %v6575 = vpop.f32.mrf.mxu0
  %6576 = vmatprep.mubr.f32.mxu0 0.0
  %6577 = vmatmul.mubr.f32.gmra.mxu0 %v6375
  %v6578 = vpop.f32.mrf.mxu0
  %v6579 = vadd.f32 0.0, %v6578
  %v6580 = vpop.f32.mrf.mxu0
  %6581 = vmatprep.mubr.f32.mxu0 0.0
  %6582 = vmatmul.mubr.f32.gmra.mxu0 %v6378
  %v6583 = vpop.f32.mrf.mxu0
  %v6584 = vadd.f32 0.0, %v6583
  %v6585 = vpop.f32.mrf.mxu0
  %6586 = vmatprep.mubr.f32.mxu0 0.0
  %6587 = vmatmul.mubr.f32.gmra.mxu0 %v6381
  %v6588 = vpop.f32.mrf.mxu0
  %v6589 = vadd.f32 0.0, %v6588
  %v6590 = vpop.f32.mrf.mxu0
  %6591 = vmatprep.mubr.f32.mxu0 0.0
  %6592 = vmatmul.mubr.f32.gmra.mxu0 %v6384
  %v6593 = vpop.f32.mrf.mxu0
  %v6594 = vadd.f32 0.0, %v6593
  %v6595 = vpop.f32.mrf.mxu0
  %6596 = vmatprep.mubr.f32.mxu0 0.0
  %6597 = vmatmul.mubr.f32.gmra.mxu0 %v6387
  %v6598 = vpop.f32.mrf.mxu0
  %v6599 = vadd.f32 0.0, %v6598
  %v6600 = vpop.f32.mrf.mxu0
  %6601 = vmatprep.mubr.f32.mxu0 0.0
  %6602 = vmatmul.mubr.f32.gmra.mxu0 %v6390
  %v6603 = vpop.f32.mrf.mxu0
  %v6604 = vadd.f32 0.0, %v6603
  %v6605 = vpop.f32.mrf.mxu0
  %6606 = vmatprep.mubr.f32.mxu0 0.0
  %6607 = vmatmul.mubr.f32.gmra.mxu0 %v6393
  %v6608 = vpop.f32.mrf.mxu0
  %v6609 = vadd.f32 0.0, %v6608
  %v6610 = vpop.f32.mrf.mxu0
  %6611 = vmatprep.mubr.f32.mxu0 0.0
  %6612 = vmatmul.mubr.f32.gmra.mxu0 %v6396
  %v6613 = vpop.f32.mrf.mxu0
  %v6614 = vadd.f32 0.0, %v6613
  %v6615 = vpop.f32.mrf.mxu0
  %6616 = vmatprep.mubr.f32.mxu0 0.0
  %6617 = vmatmul.mubr.f32.gmra.mxu0 %v6399
  %v6618 = vpop.f32.mrf.mxu0
  %v6619 = vadd.f32 0.0, %v6618
  %v6620 = vpop.f32.mrf.mxu0
  %6621 = vmatprep.mubr.f32.mxu0 0.0
  %6622 = vmatmul.mubr.f32.gmra.mxu0 %v6402
  %v6623 = vpop.f32.mrf.mxu0
  %v6624 = vadd.f32 0.0, %v6623
  %v6625 = vpop.f32.mrf.mxu0
  %6626 = vmatprep.mubr.f32.mxu0 0.0
  %6627 = vmatmul.mubr.f32.gmra.mxu0 %v6405
  %v6628 = vpop.f32.mrf.mxu0
  %v6629 = vadd.f32 0.0, %v6628
  %v6630 = vpop.f32.mrf.mxu0
  %6631 = vdwg.mxu0
  %v6632 = vadd.f32 %v6239, %v6474
  %v6633 = vadd.f32 %v6240, %v6479
  %v6634 = vadd.f32 %v6241, %v6484
  %v6635 = vadd.f32 %v6242, %v6489
  %v6636 = vadd.f32 %v6243, %v6494
  %v6637 = vadd.f32 %v6244, %v6499
  %v6638 = vadd.f32 %v6245, %v6504
  %v6639 = vadd.f32 %v6246, %v6509
  %v6640 = vadd.f32 %v6247, %v6514
  %v6641 = vadd.f32 %v6248, %v6519
  %v6642 = vadd.f32 %v6249, %v6524
  %v6643 = vadd.f32 %v6250, %v6529
  %v6644 = vadd.f32 %v6251, %v6534
  %v6645 = vadd.f32 %v6252, %v6539
  %v6646 = vadd.f32 %v6253, %v6544
  %v6647 = vadd.f32 %v6254, %v6549
  %v6648 = vadd.f32 %v6255, %v6554
  %v6649 = vadd.f32 %v6256, %v6559
  %v6650 = vadd.f32 %v6257, %v6564
  %v6651 = vadd.f32 %v6258, %v6569
  %v6652 = vadd.f32 %v6259, %v6574
  %v6653 = vadd.f32 %v6260, %v6579
  %v6654 = vadd.f32 %v6261, %v6584
  %v6655 = vadd.f32 %v6262, %v6589
  %v6656 = vadd.f32 %v6263, %v6594
  %v6657 = vadd.f32 %v6264, %v6599
  %v6658 = vadd.f32 %v6265, %v6604
  %v6659 = vadd.f32 %v6266, %v6609
  %v6660 = vadd.f32 %v6267, %v6614
  %v6661 = vadd.f32 %v6268, %v6619
  %v6662 = vadd.f32 %v6269, %v6624
  %v6663 = vadd.f32 %v6270, %v6629
  %v6664 = vld [vmem:[#allocation2 + $0x130] sm:$0xff]
  %v6665 = vld [vmem:[#allocation2 + $0x138] sm:$0xff]
  %v6666 = vld [vmem:[#allocation2 + $0x140] sm:$0xff]
  %v6667 = vld [vmem:[#allocation2 + $0x148] sm:$0xff]
  %v6668 = vld [vmem:[#allocation2 + $0x150] sm:$0xff]
  %v6669 = vld [vmem:[#allocation2 + $0x158] sm:$0xff]
  %v6670 = vld [vmem:[#allocation2 + $0x160] sm:$0xff]
  %v6671 = vld [vmem:[#allocation2 + $0x168] sm:$0xff]
  %v6672 = vld [vmem:[#allocation2 + $0x170] sm:$0xff]
  %v6673 = vld [vmem:[#allocation2 + $0x178] sm:$0xff]
  %v6674 = vld [vmem:[#allocation2 + $0x180] sm:$0xff]
  %v6675 = vld [vmem:[#allocation2 + $0x188] sm:$0xff]
  %v6676 = vld [vmem:[#allocation2 + $0x190] sm:$0xff]
  %v6677 = vld [vmem:[#allocation2 + $0x198] sm:$0xff]
  %v6678 = vld [vmem:[#allocation2 + $0x1a0] sm:$0xff]
  %v6679 = vld [vmem:[#allocation2 + $0x1a8] sm:$0xff]
  %v6680 = vld [vmem:[#allocation2 + $0x1b0] sm:$0xff]
  %v6681 = vld [vmem:[#allocation2 + $0x1b8] sm:$0xff]
  %v6682 = vld [vmem:[#allocation2 + $0x1c0] sm:$0xff]
  %v6683 = vld [vmem:[#allocation2 + $0x1c8] sm:$0xff]
  %v6684 = vld [vmem:[#allocation2 + $0x1d0] sm:$0xff]
  %v6685 = vld [vmem:[#allocation2 + $0x1d8] sm:$0xff]
  %v6686 = vld [vmem:[#allocation2 + $0x1e0] sm:$0xff]
  %v6687 = vld [vmem:[#allocation2 + $0x1e8] sm:$0xff]
  %v6688 = vld [vmem:[#allocation2 + $0x1f0] sm:$0xff]
  %v6689 = vld [vmem:[#allocation2 + $0x1f8] sm:$0xff]
  %v6690 = vld [vmem:[#allocation2 + $0x200] sm:$0xff]
  %v6691 = vld [vmem:[#allocation2 + $0x208] sm:$0xff]
  %v6692 = vld [vmem:[#allocation2 + $0x210] sm:$0xff]
  %v6693 = vld [vmem:[#allocation2 + $0x218] sm:$0xff]
  %v6694 = vld [vmem:[#allocation2 + $0x220] sm:$0xff]
  %v6695 = vld [vmem:[#allocation2 + $0x228] sm:$0xff]
  %v6696 = vld [vmem:[%s2 + $0x100] sm:$0xff]
  %v6697 = vld [vmem:[%s2 + $0x108] sm:$0xff]
  %v6698 = vld [vmem:[%s2 + $0x110] sm:$0xff]
  %v6699 = vld [vmem:[%s2 + $0x118] sm:$0xff]
  %v6700 = vld [vmem:[%s2 + $0x120] sm:$0xff]
  %v6701 = vld [vmem:[%s2 + $0x128] sm:$0xff]
  %v6702 = vld [vmem:[%s2 + $0x130] sm:$0xff]
  %v6703 = vld [vmem:[%s2 + $0x138] sm:$0xff]
  %v6705 = vsel %vm1015, %v6664, 0
  %v6708 = vsel %vm1015, %v6665, 0
  %v6711 = vsel %vm1015, %v6666, 0
  %v6714 = vsel %vm1015, %v6667, 0
  %v6717 = vsel %vm1015, %v6668, 0
  %v6720 = vsel %vm1015, %v6669, 0
  %v6723 = vsel %vm1015, %v6670, 0
  %v6726 = vsel %vm1015, %v6671, 0
  %v6729 = vsel %vm1015, %v6672, 0
  %v6732 = vsel %vm1015, %v6673, 0
  %v6735 = vsel %vm1015, %v6674, 0
  %v6738 = vsel %vm1015, %v6675, 0
  %v6741 = vsel %vm1015, %v6676, 0
  %v6744 = vsel %vm1015, %v6677, 0
  %v6747 = vsel %vm1015, %v6678, 0
  %v6750 = vsel %vm1015, %v6679, 0
  %v6753 = vsel %vm1015, %v6680, 0
  %v6756 = vsel %vm1015, %v6681, 0
  %v6759 = vsel %vm1015, %v6682, 0
  %v6762 = vsel %vm1015, %v6683, 0
  %v6765 = vsel %vm1015, %v6684, 0
  %v6768 = vsel %vm1015, %v6685, 0
  %v6771 = vsel %vm1015, %v6686, 0
  %v6774 = vsel %vm1015, %v6687, 0
  %v6777 = vsel %vm1015, %v6688, 0
  %v6780 = vsel %vm1015, %v6689, 0
  %v6783 = vsel %vm1015, %v6690, 0
  %v6786 = vsel %vm1015, %v6691, 0
  %v6789 = vsel %vm1015, %v6692, 0
  %v6792 = vsel %vm1015, %v6693, 0
  %v6795 = vsel %vm1015, %v6694, 0
  %v6798 = vsel %vm1015, %v6695, 0
  %6800 = vmatprep.subr.mxu0 0.0
  %6801 = vmatpush1.msra.mxu0 0.0
  %6802 = vmatprep.subr.mxu0 0.0
  %6803 = vmatpush1.msra.mxu0 0.0
  %6804 = vmatprep.subr.mxu0 0.0
  %6805 = vmatpush1.msra.mxu0 0.0
  %6806 = vmatprep.subr.mxu0 0.0
  %6807 = vmatpush1.msra.mxu0 0.0
  %6808 = vmatprep.subr.mxu0 0.0
  %6809 = vmatpush1.msra.mxu0 0.0
  %6810 = vmatprep.subr.mxu0 0.0
  %6811 = vmatpush1.msra.mxu0 0.0
  %6812 = vmatprep.subr.mxu0 0.0
  %6813 = vmatpush1.msra.mxu0 0.0
  %6814 = vmatprep.subr.mxu0 0.0
  %6815 = vmatpush1.msra.mxu0 0.0
  %6816 = vmatprep.subr.mxu0 0.0
  %6817 = vmatpush1.msra.mxu0 %v6703
  %6818 = vmatprep.subr.mxu0 0.0
  %6819 = vmatpush1.msra.mxu0 %v6702
  %6820 = vmatprep.subr.mxu0 0.0
  %6821 = vmatpush1.msra.mxu0 %v6701
  %6822 = vmatprep.subr.mxu0 0.0
  %6823 = vmatpush1.msra.mxu0 %v6700
  %6824 = vmatprep.subr.mxu0 0.0
  %6825 = vmatpush1.msra.mxu0 %v6699
  %6826 = vmatprep.subr.mxu0 0.0
  %6827 = vmatpush1.msra.mxu0 %v6698
  %6828 = vmatprep.subr.mxu0 0.0
  %6829 = vmatpush1.msra.mxu0 %v6697
  %6830 = vmatprep.subr.mxu0 0.0
  %6831 = vmatpush1.msra.mxu0 %v6696
  %6832 = vmatprep.subr.mxu0 0.0
  %6833 = vmatpush2.msra.mxu0 0.0
  %6834 = vmatprep.subr.mxu0 0.0
  %6835 = vmatpush2.msra.mxu0 0.0
  %6836 = vmatprep.subr.mxu0 0.0
  %6837 = vmatpush2.msra.mxu0 0.0
  %6838 = vmatprep.subr.mxu0 0.0
  %6839 = vmatpush2.msra.mxu0 0.0
  %6840 = vmatprep.subr.mxu0 0.0
  %6841 = vmatpush2.msra.mxu0 0.0
  %6842 = vmatprep.subr.mxu0 0.0
  %6843 = vmatpush2.msra.mxu0 0.0
  %6844 = vmatprep.subr.mxu0 0.0
  %6845 = vmatpush2.msra.mxu0 0.0
  %6846 = vmatprep.subr.mxu0 0.0
  %6847 = vmatpush2.msra.mxu0 0.0
  %6848 = vmatprep.subr.mxu0 0.0
  %6849 = vmatpush2.msra.mxu0 0.0
  %6850 = vmatprep.subr.mxu0 0.0
  %6851 = vmatpush2.msra.mxu0 0.0
  %6852 = vmatprep.subr.mxu0 0.0
  %6853 = vmatpush2.msra.mxu0 0.0
  %6854 = vmatprep.subr.mxu0 0.0
  %6855 = vmatpush2.msra.mxu0 0.0
  %6856 = vmatprep.subr.mxu0 0.0
  %6857 = vmatpush2.msra.mxu0 0.0
  %6858 = vmatprep.subr.mxu0 0.0
  %6859 = vmatpush2.msra.mxu0 0.0
  %6860 = vmatprep.subr.mxu0 0.0
  %6861 = vmatpush2.msra.mxu0 0.0
  %6862 = vmatprep.subr.mxu0 0.0
  %6863 = vmatpush2.msra.mxu0 0.0
  %6864 = vmatprep.mubr.f32.mxu0 0.0
  %6865 = vmatmul.mubr.f32.gmra.mxu0 %v6705
  %v6866 = vpop.f32.mrf.mxu0
  %v6867 = vadd.f32 0.0, %v6866
  %v6868 = vpop.f32.mrf.mxu0
  %6869 = vmatprep.mubr.f32.mxu0 0.0
  %6870 = vmatmul.mubr.f32.gmra.mxu0 %v6708
  %v6871 = vpop.f32.mrf.mxu0
  %v6872 = vadd.f32 0.0, %v6871
  %v6873 = vpop.f32.mrf.mxu0
  %6874 = vmatprep.mubr.f32.mxu0 0.0
  %6875 = vmatmul.mubr.f32.gmra.mxu0 %v6711
  %v6876 = vpop.f32.mrf.mxu0
  %v6877 = vadd.f32 0.0, %v6876
  %v6878 = vpop.f32.mrf.mxu0
  %6879 = vmatprep.mubr.f32.mxu0 0.0
  %6880 = vmatmul.mubr.f32.gmra.mxu0 %v6714
  %v6881 = vpop.f32.mrf.mxu0
  %v6882 = vadd.f32 0.0, %v6881
  %v6883 = vpop.f32.mrf.mxu0
  %6884 = vmatprep.mubr.f32.mxu0 0.0
  %6885 = vmatmul.mubr.f32.gmra.mxu0 %v6717
  %v6886 = vpop.f32.mrf.mxu0
  %v6887 = vadd.f32 0.0, %v6886
  %v6888 = vpop.f32.mrf.mxu0
  %6889 = vmatprep.mubr.f32.mxu0 0.0
  %6890 = vmatmul.mubr.f32.gmra.mxu0 %v6720
  %v6891 = vpop.f32.mrf.mxu0
  %v6892 = vadd.f32 0.0, %v6891
  %v6893 = vpop.f32.mrf.mxu0
  %6894 = vmatprep.mubr.f32.mxu0 0.0
  %6895 = vmatmul.mubr.f32.gmra.mxu0 %v6723
  %v6896 = vpop.f32.mrf.mxu0
  %v6897 = vadd.f32 0.0, %v6896
  %v6898 = vpop.f32.mrf.mxu0
  %6899 = vmatprep.mubr.f32.mxu0 0.0
  %6900 = vmatmul.mubr.f32.gmra.mxu0 %v6726
  %v6901 = vpop.f32.mrf.mxu0
  %v6902 = vadd.f32 0.0, %v6901
  %v6903 = vpop.f32.mrf.mxu0
  %6904 = vmatprep.mubr.f32.mxu0 0.0
  %6905 = vmatmul.mubr.f32.gmra.mxu0 %v6729
  %v6906 = vpop.f32.mrf.mxu0
  %v6907 = vadd.f32 0.0, %v6906
  %v6908 = vpop.f32.mrf.mxu0
  %6909 = vmatprep.mubr.f32.mxu0 0.0
  %6910 = vmatmul.mubr.f32.gmra.mxu0 %v6732
  %v6911 = vpop.f32.mrf.mxu0
  %v6912 = vadd.f32 0.0, %v6911
  %v6913 = vpop.f32.mrf.mxu0
  %6914 = vmatprep.mubr.f32.mxu0 0.0
  %6915 = vmatmul.mubr.f32.gmra.mxu0 %v6735
  %v6916 = vpop.f32.mrf.mxu0
  %v6917 = vadd.f32 0.0, %v6916
  %v6918 = vpop.f32.mrf.mxu0
  %6919 = vmatprep.mubr.f32.mxu0 0.0
  %6920 = vmatmul.mubr.f32.gmra.mxu0 %v6738
  %v6921 = vpop.f32.mrf.mxu0
  %v6922 = vadd.f32 0.0, %v6921
  %v6923 = vpop.f32.mrf.mxu0
  %6924 = vmatprep.mubr.f32.mxu0 0.0
  %6925 = vmatmul.mubr.f32.gmra.mxu0 %v6741
  %v6926 = vpop.f32.mrf.mxu0
  %v6927 = vadd.f32 0.0, %v6926
  %v6928 = vpop.f32.mrf.mxu0
  %6929 = vmatprep.mubr.f32.mxu0 0.0
  %6930 = vmatmul.mubr.f32.gmra.mxu0 %v6744
  %v6931 = vpop.f32.mrf.mxu0
  %v6932 = vadd.f32 0.0, %v6931
  %v6933 = vpop.f32.mrf.mxu0
  %6934 = vmatprep.mubr.f32.mxu0 0.0
  %6935 = vmatmul.mubr.f32.gmra.mxu0 %v6747
  %v6936 = vpop.f32.mrf.mxu0
  %v6937 = vadd.f32 0.0, %v6936
  %v6938 = vpop.f32.mrf.mxu0
  %6939 = vmatprep.mubr.f32.mxu0 0.0
  %6940 = vmatmul.mubr.f32.gmra.mxu0 %v6750
  %v6941 = vpop.f32.mrf.mxu0
  %v6942 = vadd.f32 0.0, %v6941
  %v6943 = vpop.f32.mrf.mxu0
  %6944 = vmatprep.mubr.f32.mxu0 0.0
  %6945 = vmatmul.mubr.f32.gmra.mxu0 %v6753
  %v6946 = vpop.f32.mrf.mxu0
  %v6947 = vadd.f32 0.0, %v6946
  %v6948 = vpop.f32.mrf.mxu0
  %6949 = vmatprep.mubr.f32.mxu0 0.0
  %6950 = vmatmul.mubr.f32.gmra.mxu0 %v6756
  %v6951 = vpop.f32.mrf.mxu0
  %v6952 = vadd.f32 0.0, %v6951
  %v6953 = vpop.f32.mrf.mxu0
  %6954 = vmatprep.mubr.f32.mxu0 0.0
  %6955 = vmatmul.mubr.f32.gmra.mxu0 %v6759
  %v6956 = vpop.f32.mrf.mxu0
  %v6957 = vadd.f32 0.0, %v6956
  %v6958 = vpop.f32.mrf.mxu0
  %6959 = vmatprep.mubr.f32.mxu0 0.0
  %6960 = vmatmul.mubr.f32.gmra.mxu0 %v6762
  %v6961 = vpop.f32.mrf.mxu0
  %v6962 = vadd.f32 0.0, %v6961
  %v6963 = vpop.f32.mrf.mxu0
  %6964 = vmatprep.mubr.f32.mxu0 0.0
  %6965 = vmatmul.mubr.f32.gmra.mxu0 %v6765
  %v6966 = vpop.f32.mrf.mxu0
  %v6967 = vadd.f32 0.0, %v6966
  %v6968 = vpop.f32.mrf.mxu0
  %6969 = vmatprep.mubr.f32.mxu0 0.0
  %6970 = vmatmul.mubr.f32.gmra.mxu0 %v6768
  %v6971 = vpop.f32.mrf.mxu0
  %v6972 = vadd.f32 0.0, %v6971
  %v6973 = vpop.f32.mrf.mxu0
  %6974 = vmatprep.mubr.f32.mxu0 0.0
  %6975 = vmatmul.mubr.f32.gmra.mxu0 %v6771
  %v6976 = vpop.f32.mrf.mxu0
  %v6977 = vadd.f32 0.0, %v6976
  %v6978 = vpop.f32.mrf.mxu0
  %6979 = vmatprep.mubr.f32.mxu0 0.0
  %6980 = vmatmul.mubr.f32.gmra.mxu0 %v6774
  %v6981 = vpop.f32.mrf.mxu0
  %v6982 = vadd.f32 0.0, %v6981
  %v6983 = vpop.f32.mrf.mxu0
  %6984 = vmatprep.mubr.f32.mxu0 0.0
  %6985 = vmatmul.mubr.f32.gmra.mxu0 %v6777
  %v6986 = vpop.f32.mrf.mxu0
  %v6987 = vadd.f32 0.0, %v6986
  %v6988 = vpop.f32.mrf.mxu0
  %6989 = vmatprep.mubr.f32.mxu0 0.0
  %6990 = vmatmul.mubr.f32.gmra.mxu0 %v6780
  %v6991 = vpop.f32.mrf.mxu0
  %v6992 = vadd.f32 0.0, %v6991
  %v6993 = vpop.f32.mrf.mxu0
  %6994 = vmatprep.mubr.f32.mxu0 0.0
  %6995 = vmatmul.mubr.f32.gmra.mxu0 %v6783
  %v6996 = vpop.f32.mrf.mxu0
  %v6997 = vadd.f32 0.0, %v6996
  %v6998 = vpop.f32.mrf.mxu0
  %6999 = vmatprep.mubr.f32.mxu0 0.0
  %7000 = vmatmul.mubr.f32.gmra.mxu0 %v6786
  %v7001 = vpop.f32.mrf.mxu0
  %v7002 = vadd.f32 0.0, %v7001
  %v7003 = vpop.f32.mrf.mxu0
  %7004 = vmatprep.mubr.f32.mxu0 0.0
  %7005 = vmatmul.mubr.f32.gmra.mxu0 %v6789
  %v7006 = vpop.f32.mrf.mxu0
  %v7007 = vadd.f32 0.0, %v7006
  %v7008 = vpop.f32.mrf.mxu0
  %7009 = vmatprep.mubr.f32.mxu0 0.0
  %7010 = vmatmul.mubr.f32.gmra.mxu0 %v6792
  %v7011 = vpop.f32.mrf.mxu0
  %v7012 = vadd.f32 0.0, %v7011
  %v7013 = vpop.f32.mrf.mxu0
  %7014 = vmatprep.mubr.f32.mxu0 0.0
  %7015 = vmatmul.mubr.f32.gmra.mxu0 %v6795
  %v7016 = vpop.f32.mrf.mxu0
  %v7017 = vadd.f32 0.0, %v7016
  %v7018 = vpop.f32.mrf.mxu0
  %7019 = vmatprep.mubr.f32.mxu0 0.0
  %7020 = vmatmul.mubr.f32.gmra.mxu0 %v6798
  %v7021 = vpop.f32.mrf.mxu0
  %v7022 = vadd.f32 0.0, %v7021
  %v7023 = vpop.f32.mrf.mxu0
  %7024 = vdwg.mxu0
  %v7025 = vadd.f32 %v6632, %v6867
  %v7026 = vadd.f32 %v6633, %v6872
  %v7027 = vadd.f32 %v6634, %v6877
  %v7028 = vadd.f32 %v6635, %v6882
  %v7029 = vadd.f32 %v6636, %v6887
  %v7030 = vadd.f32 %v6637, %v6892
  %v7031 = vadd.f32 %v6638, %v6897
  %v7032 = vadd.f32 %v6639, %v6902
  %v7033 = vadd.f32 %v6640, %v6907
  %v7034 = vadd.f32 %v6641, %v6912
  %v7035 = vadd.f32 %v6642, %v6917
  %v7036 = vadd.f32 %v6643, %v6922
  %v7037 = vadd.f32 %v6644, %v6927
  %v7038 = vadd.f32 %v6645, %v6932
  %v7039 = vadd.f32 %v6646, %v6937
  %v7040 = vadd.f32 %v6647, %v6942
  %v7041 = vadd.f32 %v6648, %v6947
  %v7042 = vadd.f32 %v6649, %v6952
  %v7043 = vadd.f32 %v6650, %v6957
  %v7044 = vadd.f32 %v6651, %v6962
  %v7045 = vadd.f32 %v6652, %v6967
  %v7046 = vadd.f32 %v6653, %v6972
  %v7047 = vadd.f32 %v6654, %v6977
  %v7048 = vadd.f32 %v6655, %v6982
  %v7049 = vadd.f32 %v6656, %v6987
  %v7050 = vadd.f32 %v6657, %v6992
  %v7051 = vadd.f32 %v6658, %v6997
  %v7052 = vadd.f32 %v6659, %v7002
  %v7053 = vadd.f32 %v6660, %v7007
  %v7054 = vadd.f32 %v6661, %v7012
  %v7055 = vadd.f32 %v6662, %v7017
  %v7056 = vadd.f32 %v6663, %v7022
  %v7057 = vld [vmem:[#allocation4 + $0x131] sm:$0xff]
  %v7058 = vld [vmem:[#allocation4 + $0x139] sm:$0xff]
  %v7059 = vld [vmem:[#allocation4 + $0x141] sm:$0xff]
  %v7060 = vld [vmem:[#allocation4 + $0x149] sm:$0xff]
  %v7061 = vld [vmem:[#allocation4 + $0x151] sm:$0xff]
  %v7062 = vld [vmem:[#allocation4 + $0x159] sm:$0xff]
  %v7063 = vld [vmem:[#allocation4 + $0x161] sm:$0xff]
  %v7064 = vld [vmem:[#allocation4 + $0x169] sm:$0xff]
  %v7065 = vld [vmem:[#allocation4 + $0x171] sm:$0xff]
  %v7066 = vld [vmem:[#allocation4 + $0x179] sm:$0xff]
  %v7067 = vld [vmem:[#allocation4 + $0x181] sm:$0xff]
  %v7068 = vld [vmem:[#allocation4 + $0x189] sm:$0xff]
  %v7069 = vld [vmem:[#allocation4 + $0x191] sm:$0xff]
  %v7070 = vld [vmem:[#allocation4 + $0x199] sm:$0xff]
  %v7071 = vld [vmem:[#allocation4 + $0x1a1] sm:$0xff]
  %v7072 = vld [vmem:[#allocation4 + $0x1a9] sm:$0xff]
  %v7073 = vld [vmem:[#allocation4 + $0x1b1] sm:$0xff]
  %v7074 = vld [vmem:[#allocation4 + $0x1b9] sm:$0xff]
  %v7075 = vld [vmem:[#allocation4 + $0x1c1] sm:$0xff]
  %v7076 = vld [vmem:[#allocation4 + $0x1c9] sm:$0xff]
  %v7077 = vld [vmem:[#allocation4 + $0x1d1] sm:$0xff]
  %v7078 = vld [vmem:[#allocation4 + $0x1d9] sm:$0xff]
  %v7079 = vld [vmem:[#allocation4 + $0x1e1] sm:$0xff]
  %v7080 = vld [vmem:[#allocation4 + $0x1e9] sm:$0xff]
  %v7081 = vld [vmem:[#allocation4 + $0x1f1] sm:$0xff]
  %v7082 = vld [vmem:[#allocation4 + $0x1f9] sm:$0xff]
  %v7083 = vld [vmem:[#allocation4 + $0x201] sm:$0xff]
  %v7084 = vld [vmem:[#allocation4 + $0x209] sm:$0xff]
  %v7085 = vld [vmem:[#allocation4 + $0x211] sm:$0xff]
  %v7086 = vld [vmem:[#allocation4 + $0x219] sm:$0xff]
  %v7087 = vld [vmem:[#allocation4 + $0x221] sm:$0xff]
  %v7088 = vld [vmem:[#allocation4 + $0x229] sm:$0xff]
  %v7089 = vld [vmem:[%s2 + $0x140] sm:$0xff]
  %v7090 = vld [vmem:[%s2 + $0x148] sm:$0xff]
  %v7091 = vld [vmem:[%s2 + $0x150] sm:$0xff]
  %v7092 = vld [vmem:[%s2 + $0x158] sm:$0xff]
  %v7093 = vld [vmem:[%s2 + $0x160] sm:$0xff]
  %v7094 = vld [vmem:[%s2 + $0x168] sm:$0xff]
  %v7095 = vld [vmem:[%s2 + $0x170] sm:$0xff]
  %v7096 = vld [vmem:[%s2 + $0x178] sm:$0xff]
  %v7098 = vsel %vm1015, %v7057, 0
  %v7101 = vsel %vm1015, %v7058, 0
  %v7104 = vsel %vm1015, %v7059, 0
  %v7107 = vsel %vm1015, %v7060, 0
  %v7110 = vsel %vm1015, %v7061, 0
  %v7113 = vsel %vm1015, %v7062, 0
  %v7116 = vsel %vm1015, %v7063, 0
  %v7119 = vsel %vm1015, %v7064, 0
  %v7122 = vsel %vm1015, %v7065, 0
  %v7125 = vsel %vm1015, %v7066, 0
  %v7128 = vsel %vm1015, %v7067, 0
  %v7131 = vsel %vm1015, %v7068, 0
  %v7134 = vsel %vm1015, %v7069, 0
  %v7137 = vsel %vm1015, %v7070, 0
  %v7140 = vsel %vm1015, %v7071, 0
  %v7143 = vsel %vm1015, %v7072, 0
  %v7146 = vsel %vm1015, %v7073, 0
  %v7149 = vsel %vm1015, %v7074, 0
  %v7152 = vsel %vm1015, %v7075, 0
  %v7155 = vsel %vm1015, %v7076, 0
  %v7158 = vsel %vm1015, %v7077, 0
  %v7161 = vsel %vm1015, %v7078, 0
  %v7164 = vsel %vm1015, %v7079, 0
  %v7167 = vsel %vm1015, %v7080, 0
  %v7170 = vsel %vm1015, %v7081, 0
  %v7173 = vsel %vm1015, %v7082, 0
  %v7176 = vsel %vm1015, %v7083, 0
  %v7179 = vsel %vm1015, %v7084, 0
  %v7182 = vsel %vm1015, %v7085, 0
  %v7185 = vsel %vm1015, %v7086, 0
  %v7188 = vsel %vm1015, %v7087, 0
  %v7191 = vsel %vm1015, %v7088, 0
  %7193 = vmatprep.subr.mxu0 0.0
  %7194 = vmatpush1.msra.mxu0 0.0
  %7195 = vmatprep.subr.mxu0 0.0
  %7196 = vmatpush1.msra.mxu0 0.0
  %7197 = vmatprep.subr.mxu0 0.0
  %7198 = vmatpush1.msra.mxu0 0.0
  %7199 = vmatprep.subr.mxu0 0.0
  %7200 = vmatpush1.msra.mxu0 0.0
  %7201 = vmatprep.subr.mxu0 0.0
  %7202 = vmatpush1.msra.mxu0 0.0
  %7203 = vmatprep.subr.mxu0 0.0
  %7204 = vmatpush1.msra.mxu0 0.0
  %7205 = vmatprep.subr.mxu0 0.0
  %7206 = vmatpush1.msra.mxu0 0.0
  %7207 = vmatprep.subr.mxu0 0.0
  %7208 = vmatpush1.msra.mxu0 0.0
  %7209 = vmatprep.subr.mxu0 0.0
  %7210 = vmatpush1.msra.mxu0 %v7096
  %7211 = vmatprep.subr.mxu0 0.0
  %7212 = vmatpush1.msra.mxu0 %v7095
  %7213 = vmatprep.subr.mxu0 0.0
  %7214 = vmatpush1.msra.mxu0 %v7094
  %7215 = vmatprep.subr.mxu0 0.0
  %7216 = vmatpush1.msra.mxu0 %v7093
  %7217 = vmatprep.subr.mxu0 0.0
  %7218 = vmatpush1.msra.mxu0 %v7092
  %7219 = vmatprep.subr.mxu0 0.0
  %7220 = vmatpush1.msra.mxu0 %v7091
  %7221 = vmatprep.subr.mxu0 0.0
  %7222 = vmatpush1.msra.mxu0 %v7090
  %7223 = vmatprep.subr.mxu0 0.0
  %7224 = vmatpush1.msra.mxu0 %v7089
  %7225 = vmatprep.subr.mxu0 0.0
  %7226 = vmatpush2.msra.mxu0 0.0
  %7227 = vmatprep.subr.mxu0 0.0
  %7228 = vmatpush2.msra.mxu0 0.0
  %7229 = vmatprep.subr.mxu0 0.0
  %7230 = vmatpush2.msra.mxu0 0.0
  %7231 = vmatprep.subr.mxu0 0.0
  %7232 = vmatpush2.msra.mxu0 0.0
  %7233 = vmatprep.subr.mxu0 0.0
  %7234 = vmatpush2.msra.mxu0 0.0
  %7235 = vmatprep.subr.mxu0 0.0
  %7236 = vmatpush2.msra.mxu0 0.0
  %7237 = vmatprep.subr.mxu0 0.0
  %7238 = vmatpush2.msra.mxu0 0.0
  %7239 = vmatprep.subr.mxu0 0.0
  %7240 = vmatpush2.msra.mxu0 0.0
  %7241 = vmatprep.subr.mxu0 0.0
  %7242 = vmatpush2.msra.mxu0 0.0
  %7243 = vmatprep.subr.mxu0 0.0
  %7244 = vmatpush2.msra.mxu0 0.0
  %7245 = vmatprep.subr.mxu0 0.0
  %7246 = vmatpush2.msra.mxu0 0.0
  %7247 = vmatprep.subr.mxu0 0.0
  %7248 = vmatpush2.msra.mxu0 0.0
  %7249 = vmatprep.subr.mxu0 0.0
  %7250 = vmatpush2.msra.mxu0 0.0
  %7251 = vmatprep.subr.mxu0 0.0
  %7252 = vmatpush2.msra.mxu0 0.0
  %7253 = vmatprep.subr.mxu0 0.0
  %7254 = vmatpush2.msra.mxu0 0.0
  %7255 = vmatprep.subr.mxu0 0.0
  %7256 = vmatpush2.msra.mxu0 0.0
  %7257 = vmatprep.mubr.f32.mxu0 0.0
  %7258 = vmatmul.mubr.f32.gmra.mxu0 %v7098
  %v7259 = vpop.f32.mrf.mxu0
  %v7260 = vadd.f32 0.0, %v7259
  %v7261 = vpop.f32.mrf.mxu0
  %7262 = vmatprep.mubr.f32.mxu0 0.0
  %7263 = vmatmul.mubr.f32.gmra.mxu0 %v7101
  %v7264 = vpop.f32.mrf.mxu0
  %v7265 = vadd.f32 0.0, %v7264
  %v7266 = vpop.f32.mrf.mxu0
  %7267 = vmatprep.mubr.f32.mxu0 0.0
  %7268 = vmatmul.mubr.f32.gmra.mxu0 %v7104
  %v7269 = vpop.f32.mrf.mxu0
  %v7270 = vadd.f32 0.0, %v7269
  %v7271 = vpop.f32.mrf.mxu0
  %7272 = vmatprep.mubr.f32.mxu0 0.0
  %7273 = vmatmul.mubr.f32.gmra.mxu0 %v7107
  %v7274 = vpop.f32.mrf.mxu0
  %v7275 = vadd.f32 0.0, %v7274
  %v7276 = vpop.f32.mrf.mxu0
  %7277 = vmatprep.mubr.f32.mxu0 0.0
  %7278 = vmatmul.mubr.f32.gmra.mxu0 %v7110
  %v7279 = vpop.f32.mrf.mxu0
  %v7280 = vadd.f32 0.0, %v7279
  %v7281 = vpop.f32.mrf.mxu0
  %7282 = vmatprep.mubr.f32.mxu0 0.0
  %7283 = vmatmul.mubr.f32.gmra.mxu0 %v7113
  %v7284 = vpop.f32.mrf.mxu0
  %v7285 = vadd.f32 0.0, %v7284
  %v7286 = vpop.f32.mrf.mxu0
  %7287 = vmatprep.mubr.f32.mxu0 0.0
  %7288 = vmatmul.mubr.f32.gmra.mxu0 %v7116
  %v7289 = vpop.f32.mrf.mxu0
  %v7290 = vadd.f32 0.0, %v7289
  %v7291 = vpop.f32.mrf.mxu0
  %7292 = vmatprep.mubr.f32.mxu0 0.0
  %7293 = vmatmul.mubr.f32.gmra.mxu0 %v7119
  %v7294 = vpop.f32.mrf.mxu0
  %v7295 = vadd.f32 0.0, %v7294
  %v7296 = vpop.f32.mrf.mxu0
  %7297 = vmatprep.mubr.f32.mxu0 0.0
  %7298 = vmatmul.mubr.f32.gmra.mxu0 %v7122
  %v7299 = vpop.f32.mrf.mxu0
  %v7300 = vadd.f32 0.0, %v7299
  %v7301 = vpop.f32.mrf.mxu0
  %7302 = vmatprep.mubr.f32.mxu0 0.0
  %7303 = vmatmul.mubr.f32.gmra.mxu0 %v7125
  %v7304 = vpop.f32.mrf.mxu0
  %v7305 = vadd.f32 0.0, %v7304
  %v7306 = vpop.f32.mrf.mxu0
  %7307 = vmatprep.mubr.f32.mxu0 0.0
  %7308 = vmatmul.mubr.f32.gmra.mxu0 %v7128
  %v7309 = vpop.f32.mrf.mxu0
  %v7310 = vadd.f32 0.0, %v7309
  %v7311 = vpop.f32.mrf.mxu0
  %7312 = vmatprep.mubr.f32.mxu0 0.0
  %7313 = vmatmul.mubr.f32.gmra.mxu0 %v7131
  %v7314 = vpop.f32.mrf.mxu0
  %v7315 = vadd.f32 0.0, %v7314
  %v7316 = vpop.f32.mrf.mxu0
  %7317 = vmatprep.mubr.f32.mxu0 0.0
  %7318 = vmatmul.mubr.f32.gmra.mxu0 %v7134
  %v7319 = vpop.f32.mrf.mxu0
  %v7320 = vadd.f32 0.0, %v7319
  %v7321 = vpop.f32.mrf.mxu0
  %7322 = vmatprep.mubr.f32.mxu0 0.0
  %7323 = vmatmul.mubr.f32.gmra.mxu0 %v7137
  %v7324 = vpop.f32.mrf.mxu0
  %v7325 = vadd.f32 0.0, %v7324
  %v7326 = vpop.f32.mrf.mxu0
  %7327 = vmatprep.mubr.f32.mxu0 0.0
  %7328 = vmatmul.mubr.f32.gmra.mxu0 %v7140
  %v7329 = vpop.f32.mrf.mxu0
  %v7330 = vadd.f32 0.0, %v7329
  %v7331 = vpop.f32.mrf.mxu0
  %7332 = vmatprep.mubr.f32.mxu0 0.0
  %7333 = vmatmul.mubr.f32.gmra.mxu0 %v7143
  %v7334 = vpop.f32.mrf.mxu0
  %v7335 = vadd.f32 0.0, %v7334
  %v7336 = vpop.f32.mrf.mxu0
  %7337 = vmatprep.mubr.f32.mxu0 0.0
  %7338 = vmatmul.mubr.f32.gmra.mxu0 %v7146
  %v7339 = vpop.f32.mrf.mxu0
  %v7340 = vadd.f32 0.0, %v7339
  %v7341 = vpop.f32.mrf.mxu0
  %7342 = vmatprep.mubr.f32.mxu0 0.0
  %7343 = vmatmul.mubr.f32.gmra.mxu0 %v7149
  %v7344 = vpop.f32.mrf.mxu0
  %v7345 = vadd.f32 0.0, %v7344
  %v7346 = vpop.f32.mrf.mxu0
  %7347 = vmatprep.mubr.f32.mxu0 0.0
  %7348 = vmatmul.mubr.f32.gmra.mxu0 %v7152
  %v7349 = vpop.f32.mrf.mxu0
  %v7350 = vadd.f32 0.0, %v7349
  %v7351 = vpop.f32.mrf.mxu0
  %7352 = vmatprep.mubr.f32.mxu0 0.0
  %7353 = vmatmul.mubr.f32.gmra.mxu0 %v7155
  %v7354 = vpop.f32.mrf.mxu0
  %v7355 = vadd.f32 0.0, %v7354
  %v7356 = vpop.f32.mrf.mxu0
  %7357 = vmatprep.mubr.f32.mxu0 0.0
  %7358 = vmatmul.mubr.f32.gmra.mxu0 %v7158
  %v7359 = vpop.f32.mrf.mxu0
  %v7360 = vadd.f32 0.0, %v7359
  %v7361 = vpop.f32.mrf.mxu0
  %7362 = vmatprep.mubr.f32.mxu0 0.0
  %7363 = vmatmul.mubr.f32.gmra.mxu0 %v7161
  %v7364 = vpop.f32.mrf.mxu0
  %v7365 = vadd.f32 0.0, %v7364
  %v7366 = vpop.f32.mrf.mxu0
  %7367 = vmatprep.mubr.f32.mxu0 0.0
  %7368 = vmatmul.mubr.f32.gmra.mxu0 %v7164
  %v7369 = vpop.f32.mrf.mxu0
  %v7370 = vadd.f32 0.0, %v7369
  %v7371 = vpop.f32.mrf.mxu0
  %7372 = vmatprep.mubr.f32.mxu0 0.0
  %7373 = vmatmul.mubr.f32.gmra.mxu0 %v7167
  %v7374 = vpop.f32.mrf.mxu0
  %v7375 = vadd.f32 0.0, %v7374
  %v7376 = vpop.f32.mrf.mxu0
  %7377 = vmatprep.mubr.f32.mxu0 0.0
  %7378 = vmatmul.mubr.f32.gmra.mxu0 %v7170
  %v7379 = vpop.f32.mrf.mxu0
  %v7380 = vadd.f32 0.0, %v7379
  %v7381 = vpop.f32.mrf.mxu0
  %7382 = vmatprep.mubr.f32.mxu0 0.0
  %7383 = vmatmul.mubr.f32.gmra.mxu0 %v7173
  %v7384 = vpop.f32.mrf.mxu0
  %v7385 = vadd.f32 0.0, %v7384
  %v7386 = vpop.f32.mrf.mxu0
  %7387 = vmatprep.mubr.f32.mxu0 0.0
  %7388 = vmatmul.mubr.f32.gmra.mxu0 %v7176
  %v7389 = vpop.f32.mrf.mxu0
  %v7390 = vadd.f32 0.0, %v7389
  %v7391 = vpop.f32.mrf.mxu0
  %7392 = vmatprep.mubr.f32.mxu0 0.0
  %7393 = vmatmul.mubr.f32.gmra.mxu0 %v7179
  %v7394 = vpop.f32.mrf.mxu0
  %v7395 = vadd.f32 0.0, %v7394
  %v7396 = vpop.f32.mrf.mxu0
  %7397 = vmatprep.mubr.f32.mxu0 0.0
  %7398 = vmatmul.mubr.f32.gmra.mxu0 %v7182
  %v7399 = vpop.f32.mrf.mxu0
  %v7400 = vadd.f32 0.0, %v7399
  %v7401 = vpop.f32.mrf.mxu0
  %7402 = vmatprep.mubr.f32.mxu0 0.0
  %7403 = vmatmul.mubr.f32.gmra.mxu0 %v7185
  %v7404 = vpop.f32.mrf.mxu0
  %v7405 = vadd.f32 0.0, %v7404
  %v7406 = vpop.f32.mrf.mxu0
  %7407 = vmatprep.mubr.f32.mxu0 0.0
  %7408 = vmatmul.mubr.f32.gmra.mxu0 %v7188
  %v7409 = vpop.f32.mrf.mxu0
  %v7410 = vadd.f32 0.0, %v7409
  %v7411 = vpop.f32.mrf.mxu0
  %7412 = vmatprep.mubr.f32.mxu0 0.0
  %7413 = vmatmul.mubr.f32.gmra.mxu0 %v7191
  %v7414 = vpop.f32.mrf.mxu0
  %v7415 = vadd.f32 0.0, %v7414
  %v7416 = vpop.f32.mrf.mxu0
  %7417 = vdwg.mxu0
  %v7418 = vadd.f32 %v7025, %v7260
  %v7419 = vadd.f32 %v7026, %v7265
  %v7420 = vadd.f32 %v7027, %v7270
  %v7421 = vadd.f32 %v7028, %v7275
  %v7422 = vadd.f32 %v7029, %v7280
  %v7423 = vadd.f32 %v7030, %v7285
  %v7424 = vadd.f32 %v7031, %v7290
  %v7425 = vadd.f32 %v7032, %v7295
  %v7426 = vadd.f32 %v7033, %v7300
  %v7427 = vadd.f32 %v7034, %v7305
  %v7428 = vadd.f32 %v7035, %v7310
  %v7429 = vadd.f32 %v7036, %v7315
  %v7430 = vadd.f32 %v7037, %v7320
  %v7431 = vadd.f32 %v7038, %v7325
  %v7432 = vadd.f32 %v7039, %v7330
  %v7433 = vadd.f32 %v7040, %v7335
  %v7434 = vadd.f32 %v7041, %v7340
  %v7435 = vadd.f32 %v7042, %v7345
  %v7436 = vadd.f32 %v7043, %v7350
  %v7437 = vadd.f32 %v7044, %v7355
  %v7438 = vadd.f32 %v7045, %v7360
  %v7439 = vadd.f32 %v7046, %v7365
  %v7440 = vadd.f32 %v7047, %v7370
  %v7441 = vadd.f32 %v7048, %v7375
  %v7442 = vadd.f32 %v7049, %v7380
  %v7443 = vadd.f32 %v7050, %v7385
  %v7444 = vadd.f32 %v7051, %v7390
  %v7445 = vadd.f32 %v7052, %v7395
  %v7446 = vadd.f32 %v7053, %v7400
  %v7447 = vadd.f32 %v7054, %v7405
  %v7448 = vadd.f32 %v7055, %v7410
  %v7449 = vadd.f32 %v7056, %v7415
  %v7450 = vld [vmem:[#allocation3 + $0x13f] sm:$0xff]
  %v7451 = vld [vmem:[#allocation3 + $0x147] sm:$0xff]
  %v7452 = vld [vmem:[#allocation3 + $0x14f] sm:$0xff]
  %v7453 = vld [vmem:[#allocation3 + $0x157] sm:$0xff]
  %v7454 = vld [vmem:[#allocation3 + $0x15f] sm:$0xff]
  %v7455 = vld [vmem:[#allocation3 + $0x167] sm:$0xff]
  %v7456 = vld [vmem:[#allocation3 + $0x16f] sm:$0xff]
  %v7457 = vld [vmem:[#allocation3 + $0x177] sm:$0xff]
  %v7458 = vld [vmem:[#allocation3 + $0x17f] sm:$0xff]
  %v7459 = vld [vmem:[#allocation3 + $0x187] sm:$0xff]
  %v7460 = vld [vmem:[#allocation3 + $0x18f] sm:$0xff]
  %v7461 = vld [vmem:[#allocation3 + $0x197] sm:$0xff]
  %v7462 = vld [vmem:[#allocation3 + $0x19f] sm:$0xff]
  %v7463 = vld [vmem:[#allocation3 + $0x1a7] sm:$0xff]
  %v7464 = vld [vmem:[#allocation3 + $0x1af] sm:$0xff]
  %v7465 = vld [vmem:[#allocation3 + $0x1b7] sm:$0xff]
  %v7466 = vld [vmem:[#allocation3 + $0x1bf] sm:$0xff]
  %v7467 = vld [vmem:[#allocation3 + $0x1c7] sm:$0xff]
  %v7468 = vld [vmem:[#allocation3 + $0x1cf] sm:$0xff]
  %v7469 = vld [vmem:[#allocation3 + $0x1d7] sm:$0xff]
  %v7470 = vld [vmem:[#allocation3 + $0x1df] sm:$0xff]
  %v7471 = vld [vmem:[#allocation3 + $0x1e7] sm:$0xff]
  %v7472 = vld [vmem:[#allocation3 + $0x1ef] sm:$0xff]
  %v7473 = vld [vmem:[#allocation3 + $0x1f7] sm:$0xff]
  %v7474 = vld [vmem:[#allocation3 + $0x1ff] sm:$0xff]
  %v7475 = vld [vmem:[#allocation3 + $0x207] sm:$0xff]
  %v7476 = vld [vmem:[#allocation3 + $0x20f] sm:$0xff]
  %v7477 = vld [vmem:[#allocation3 + $0x217] sm:$0xff]
  %v7478 = vld [vmem:[#allocation3 + $0x21f] sm:$0xff]
  %v7479 = vld [vmem:[#allocation3 + $0x227] sm:$0xff]
  %v7480 = vld [vmem:[#allocation3 + $0x22f] sm:$0xff]
  %v7481 = vld [vmem:[#allocation3 + $0x237] sm:$0xff]
  %v7482 = vld [vmem:[%s2 + $0x180] sm:$0xff]
  %v7483 = vld [vmem:[%s2 + $0x188] sm:$0xff]
  %v7484 = vld [vmem:[%s2 + $0x190] sm:$0xff]
  %v7485 = vld [vmem:[%s2 + $0x198] sm:$0xff]
  %v7486 = vld [vmem:[%s2 + $0x1a0] sm:$0xff]
  %v7487 = vld [vmem:[%s2 + $0x1a8] sm:$0xff]
  %v7488 = vld [vmem:[%s2 + $0x1b0] sm:$0xff]
  %v7489 = vld [vmem:[%s2 + $0x1b8] sm:$0xff]
  %v7491 = vsel %vm1015, %v7450, 0
  %v7494 = vsel %vm1015, %v7451, 0
  %v7497 = vsel %vm1015, %v7452, 0
  %v7500 = vsel %vm1015, %v7453, 0
  %v7503 = vsel %vm1015, %v7454, 0
  %v7506 = vsel %vm1015, %v7455, 0
  %v7509 = vsel %vm1015, %v7456, 0
  %v7512 = vsel %vm1015, %v7457, 0
  %v7515 = vsel %vm1015, %v7458, 0
  %v7518 = vsel %vm1015, %v7459, 0
  %v7521 = vsel %vm1015, %v7460, 0
  %v7524 = vsel %vm1015, %v7461, 0
  %v7527 = vsel %vm1015, %v7462, 0
  %v7530 = vsel %vm1015, %v7463, 0
  %v7533 = vsel %vm1015, %v7464, 0
  %v7536 = vsel %vm1015, %v7465, 0
  %v7539 = vsel %vm1015, %v7466, 0
  %v7542 = vsel %vm1015, %v7467, 0
  %v7545 = vsel %vm1015, %v7468, 0
  %v7548 = vsel %vm1015, %v7469, 0
  %v7551 = vsel %vm1015, %v7470, 0
  %v7554 = vsel %vm1015, %v7471, 0
  %v7557 = vsel %vm1015, %v7472, 0
  %v7560 = vsel %vm1015, %v7473, 0
  %v7563 = vsel %vm1015, %v7474, 0
  %v7566 = vsel %vm1015, %v7475, 0
  %v7569 = vsel %vm1015, %v7476, 0
  %v7572 = vsel %vm1015, %v7477, 0
  %v7575 = vsel %vm1015, %v7478, 0
  %v7578 = vsel %vm1015, %v7479, 0
  %v7581 = vsel %vm1015, %v7480, 0
  %v7584 = vsel %vm1015, %v7481, 0
  %7586 = vmatprep.subr.mxu0 0.0
  %7587 = vmatpush1.msra.mxu0 0.0
  %7588 = vmatprep.subr.mxu0 0.0
  %7589 = vmatpush1.msra.mxu0 0.0
  %7590 = vmatprep.subr.mxu0 0.0
  %7591 = vmatpush1.msra.mxu0 0.0
  %7592 = vmatprep.subr.mxu0 0.0
  %7593 = vmatpush1.msra.mxu0 0.0
  %7594 = vmatprep.subr.mxu0 0.0
  %7595 = vmatpush1.msra.mxu0 0.0
  %7596 = vmatprep.subr.mxu0 0.0
  %7597 = vmatpush1.msra.mxu0 0.0
  %7598 = vmatprep.subr.mxu0 0.0
  %7599 = vmatpush1.msra.mxu0 0.0
  %7600 = vmatprep.subr.mxu0 0.0
  %7601 = vmatpush1.msra.mxu0 0.0
  %7602 = vmatprep.subr.mxu0 0.0
  %7603 = vmatpush1.msra.mxu0 %v7489
  %7604 = vmatprep.subr.mxu0 0.0
  %7605 = vmatpush1.msra.mxu0 %v7488
  %7606 = vmatprep.subr.mxu0 0.0
  %7607 = vmatpush1.msra.mxu0 %v7487
  %7608 = vmatprep.subr.mxu0 0.0
  %7609 = vmatpush1.msra.mxu0 %v7486
  %7610 = vmatprep.subr.mxu0 0.0
  %7611 = vmatpush1.msra.mxu0 %v7485
  %7612 = vmatprep.subr.mxu0 0.0
  %7613 = vmatpush1.msra.mxu0 %v7484
  %7614 = vmatprep.subr.mxu0 0.0
  %7615 = vmatpush1.msra.mxu0 %v7483
  %7616 = vmatprep.subr.mxu0 0.0
  %7617 = vmatpush1.msra.mxu0 %v7482
  %7618 = vmatprep.subr.mxu0 0.0
  %7619 = vmatpush2.msra.mxu0 0.0
  %7620 = vmatprep.subr.mxu0 0.0
  %7621 = vmatpush2.msra.mxu0 0.0
  %7622 = vmatprep.subr.mxu0 0.0
  %7623 = vmatpush2.msra.mxu0 0.0
  %7624 = vmatprep.subr.mxu0 0.0
  %7625 = vmatpush2.msra.mxu0 0.0
  %7626 = vmatprep.subr.mxu0 0.0
  %7627 = vmatpush2.msra.mxu0 0.0
  %7628 = vmatprep.subr.mxu0 0.0
  %7629 = vmatpush2.msra.mxu0 0.0
  %7630 = vmatprep.subr.mxu0 0.0
  %7631 = vmatpush2.msra.mxu0 0.0
  %7632 = vmatprep.subr.mxu0 0.0
  %7633 = vmatpush2.msra.mxu0 0.0
  %7634 = vmatprep.subr.mxu0 0.0
  %7635 = vmatpush2.msra.mxu0 0.0
  %7636 = vmatprep.subr.mxu0 0.0
  %7637 = vmatpush2.msra.mxu0 0.0
  %7638 = vmatprep.subr.mxu0 0.0
  %7639 = vmatpush2.msra.mxu0 0.0
  %7640 = vmatprep.subr.mxu0 0.0
  %7641 = vmatpush2.msra.mxu0 0.0
  %7642 = vmatprep.subr.mxu0 0.0
  %7643 = vmatpush2.msra.mxu0 0.0
  %7644 = vmatprep.subr.mxu0 0.0
  %7645 = vmatpush2.msra.mxu0 0.0
  %7646 = vmatprep.subr.mxu0 0.0
  %7647 = vmatpush2.msra.mxu0 0.0
  %7648 = vmatprep.subr.mxu0 0.0
  %7649 = vmatpush2.msra.mxu0 0.0
  %7650 = vmatprep.mubr.f32.mxu0 0.0
  %7651 = vmatmul.mubr.f32.gmra.mxu0 %v7491
  %v7652 = vpop.f32.mrf.mxu0
  %v7653 = vadd.f32 0.0, %v7652
  %v7654 = vpop.f32.mrf.mxu0
  %7655 = vmatprep.mubr.f32.mxu0 0.0
  %7656 = vmatmul.mubr.f32.gmra.mxu0 %v7494
  %v7657 = vpop.f32.mrf.mxu0
  %v7658 = vadd.f32 0.0, %v7657
  %v7659 = vpop.f32.mrf.mxu0
  %7660 = vmatprep.mubr.f32.mxu0 0.0
  %7661 = vmatmul.mubr.f32.gmra.mxu0 %v7497
  %v7662 = vpop.f32.mrf.mxu0
  %v7663 = vadd.f32 0.0, %v7662
  %v7664 = vpop.f32.mrf.mxu0
  %7665 = vmatprep.mubr.f32.mxu0 0.0
  %7666 = vmatmul.mubr.f32.gmra.mxu0 %v7500
  %v7667 = vpop.f32.mrf.mxu0
  %v7668 = vadd.f32 0.0, %v7667
  %v7669 = vpop.f32.mrf.mxu0
  %7670 = vmatprep.mubr.f32.mxu0 0.0
  %7671 = vmatmul.mubr.f32.gmra.mxu0 %v7503
  %v7672 = vpop.f32.mrf.mxu0
  %v7673 = vadd.f32 0.0, %v7672
  %v7674 = vpop.f32.mrf.mxu0
  %7675 = vmatprep.mubr.f32.mxu0 0.0
  %7676 = vmatmul.mubr.f32.gmra.mxu0 %v7506
  %v7677 = vpop.f32.mrf.mxu0
  %v7678 = vadd.f32 0.0, %v7677
  %v7679 = vpop.f32.mrf.mxu0
  %7680 = vmatprep.mubr.f32.mxu0 0.0
  %7681 = vmatmul.mubr.f32.gmra.mxu0 %v7509
  %v7682 = vpop.f32.mrf.mxu0
  %v7683 = vadd.f32 0.0, %v7682
  %v7684 = vpop.f32.mrf.mxu0
  %7685 = vmatprep.mubr.f32.mxu0 0.0
  %7686 = vmatmul.mubr.f32.gmra.mxu0 %v7512
  %v7687 = vpop.f32.mrf.mxu0
  %v7688 = vadd.f32 0.0, %v7687
  %v7689 = vpop.f32.mrf.mxu0
  %7690 = vmatprep.mubr.f32.mxu0 0.0
  %7691 = vmatmul.mubr.f32.gmra.mxu0 %v7515
  %v7692 = vpop.f32.mrf.mxu0
  %v7693 = vadd.f32 0.0, %v7692
  %v7694 = vpop.f32.mrf.mxu0
  %7695 = vmatprep.mubr.f32.mxu0 0.0
  %7696 = vmatmul.mubr.f32.gmra.mxu0 %v7518
  %v7697 = vpop.f32.mrf.mxu0
  %v7698 = vadd.f32 0.0, %v7697
  %v7699 = vpop.f32.mrf.mxu0
  %7700 = vmatprep.mubr.f32.mxu0 0.0
  %7701 = vmatmul.mubr.f32.gmra.mxu0 %v7521
  %v7702 = vpop.f32.mrf.mxu0
  %v7703 = vadd.f32 0.0, %v7702
  %v7704 = vpop.f32.mrf.mxu0
  %7705 = vmatprep.mubr.f32.mxu0 0.0
  %7706 = vmatmul.mubr.f32.gmra.mxu0 %v7524
  %v7707 = vpop.f32.mrf.mxu0
  %v7708 = vadd.f32 0.0, %v7707
  %v7709 = vpop.f32.mrf.mxu0
  %7710 = vmatprep.mubr.f32.mxu0 0.0
  %7711 = vmatmul.mubr.f32.gmra.mxu0 %v7527
  %v7712 = vpop.f32.mrf.mxu0
  %v7713 = vadd.f32 0.0, %v7712
  %v7714 = vpop.f32.mrf.mxu0
  %7715 = vmatprep.mubr.f32.mxu0 0.0
  %7716 = vmatmul.mubr.f32.gmra.mxu0 %v7530
  %v7717 = vpop.f32.mrf.mxu0
  %v7718 = vadd.f32 0.0, %v7717
  %v7719 = vpop.f32.mrf.mxu0
  %7720 = vmatprep.mubr.f32.mxu0 0.0
  %7721 = vmatmul.mubr.f32.gmra.mxu0 %v7533
  %v7722 = vpop.f32.mrf.mxu0
  %v7723 = vadd.f32 0.0, %v7722
  %v7724 = vpop.f32.mrf.mxu0
  %7725 = vmatprep.mubr.f32.mxu0 0.0
  %7726 = vmatmul.mubr.f32.gmra.mxu0 %v7536
  %v7727 = vpop.f32.mrf.mxu0
  %v7728 = vadd.f32 0.0, %v7727
  %v7729 = vpop.f32.mrf.mxu0
  %7730 = vmatprep.mubr.f32.mxu0 0.0
  %7731 = vmatmul.mubr.f32.gmra.mxu0 %v7539
  %v7732 = vpop.f32.mrf.mxu0
  %v7733 = vadd.f32 0.0, %v7732
  %v7734 = vpop.f32.mrf.mxu0
  %7735 = vmatprep.mubr.f32.mxu0 0.0
  %7736 = vmatmul.mubr.f32.gmra.mxu0 %v7542
  %v7737 = vpop.f32.mrf.mxu0
  %v7738 = vadd.f32 0.0, %v7737
  %v7739 = vpop.f32.mrf.mxu0
  %7740 = vmatprep.mubr.f32.mxu0 0.0
  %7741 = vmatmul.mubr.f32.gmra.mxu0 %v7545
  %v7742 = vpop.f32.mrf.mxu0
  %v7743 = vadd.f32 0.0, %v7742
  %v7744 = vpop.f32.mrf.mxu0
  %7745 = vmatprep.mubr.f32.mxu0 0.0
  %7746 = vmatmul.mubr.f32.gmra.mxu0 %v7548
  %v7747 = vpop.f32.mrf.mxu0
  %v7748 = vadd.f32 0.0, %v7747
  %v7749 = vpop.f32.mrf.mxu0
  %7750 = vmatprep.mubr.f32.mxu0 0.0
  %7751 = vmatmul.mubr.f32.gmra.mxu0 %v7551
  %v7752 = vpop.f32.mrf.mxu0
  %v7753 = vadd.f32 0.0, %v7752
  %v7754 = vpop.f32.mrf.mxu0
  %7755 = vmatprep.mubr.f32.mxu0 0.0
  %7756 = vmatmul.mubr.f32.gmra.mxu0 %v7554
  %v7757 = vpop.f32.mrf.mxu0
  %v7758 = vadd.f32 0.0, %v7757
  %v7759 = vpop.f32.mrf.mxu0
  %7760 = vmatprep.mubr.f32.mxu0 0.0
  %7761 = vmatmul.mubr.f32.gmra.mxu0 %v7557
  %v7762 = vpop.f32.mrf.mxu0
  %v7763 = vadd.f32 0.0, %v7762
  %v7764 = vpop.f32.mrf.mxu0
  %7765 = vmatprep.mubr.f32.mxu0 0.0
  %7766 = vmatmul.mubr.f32.gmra.mxu0 %v7560
  %v7767 = vpop.f32.mrf.mxu0
  %v7768 = vadd.f32 0.0, %v7767
  %v7769 = vpop.f32.mrf.mxu0
  %7770 = vmatprep.mubr.f32.mxu0 0.0
  %7771 = vmatmul.mubr.f32.gmra.mxu0 %v7563
  %v7772 = vpop.f32.mrf.mxu0
  %v7773 = vadd.f32 0.0, %v7772
  %v7774 = vpop.f32.mrf.mxu0
  %7775 = vmatprep.mubr.f32.mxu0 0.0
  %7776 = vmatmul.mubr.f32.gmra.mxu0 %v7566
  %v7777 = vpop.f32.mrf.mxu0
  %v7778 = vadd.f32 0.0, %v7777
  %v7779 = vpop.f32.mrf.mxu0
  %7780 = vmatprep.mubr.f32.mxu0 0.0
  %7781 = vmatmul.mubr.f32.gmra.mxu0 %v7569
  %v7782 = vpop.f32.mrf.mxu0
  %v7783 = vadd.f32 0.0, %v7782
  %v7784 = vpop.f32.mrf.mxu0
  %7785 = vmatprep.mubr.f32.mxu0 0.0
  %7786 = vmatmul.mubr.f32.gmra.mxu0 %v7572
  %v7787 = vpop.f32.mrf.mxu0
  %v7788 = vadd.f32 0.0, %v7787
  %v7789 = vpop.f32.mrf.mxu0
  %7790 = vmatprep.mubr.f32.mxu0 0.0
  %7791 = vmatmul.mubr.f32.gmra.mxu0 %v7575
  %v7792 = vpop.f32.mrf.mxu0
  %v7793 = vadd.f32 0.0, %v7792
  %v7794 = vpop.f32.mrf.mxu0
  %7795 = vmatprep.mubr.f32.mxu0 0.0
  %7796 = vmatmul.mubr.f32.gmra.mxu0 %v7578
  %v7797 = vpop.f32.mrf.mxu0
  %v7798 = vadd.f32 0.0, %v7797
  %v7799 = vpop.f32.mrf.mxu0
  %7800 = vmatprep.mubr.f32.mxu0 0.0
  %7801 = vmatmul.mubr.f32.gmra.mxu0 %v7581
  %v7802 = vpop.f32.mrf.mxu0
  %v7803 = vadd.f32 0.0, %v7802
  %v7804 = vpop.f32.mrf.mxu0
  %7805 = vmatprep.mubr.f32.mxu0 0.0
  %7806 = vmatmul.mubr.f32.gmra.mxu0 %v7584
  %v7807 = vpop.f32.mrf.mxu0
  %v7808 = vadd.f32 0.0, %v7807
  %v7809 = vpop.f32.mrf.mxu0
  %7810 = vdwg.mxu0
  %v7811 = vadd.f32 %v7418, %v7653
  %v7812 = vadd.f32 %v7419, %v7658
  %v7813 = vadd.f32 %v7420, %v7663
  %v7814 = vadd.f32 %v7421, %v7668
  %v7815 = vadd.f32 %v7422, %v7673
  %v7816 = vadd.f32 %v7423, %v7678
  %v7817 = vadd.f32 %v7424, %v7683
  %v7818 = vadd.f32 %v7425, %v7688
  %v7819 = vadd.f32 %v7426, %v7693
  %v7820 = vadd.f32 %v7427, %v7698
  %v7821 = vadd.f32 %v7428, %v7703
  %v7822 = vadd.f32 %v7429, %v7708
  %v7823 = vadd.f32 %v7430, %v7713
  %v7824 = vadd.f32 %v7431, %v7718
  %v7825 = vadd.f32 %v7432, %v7723
  %v7826 = vadd.f32 %v7433, %v7728
  %v7827 = vadd.f32 %v7434, %v7733
  %v7828 = vadd.f32 %v7435, %v7738
  %v7829 = vadd.f32 %v7436, %v7743
  %v7830 = vadd.f32 %v7437, %v7748
  %v7831 = vadd.f32 %v7438, %v7753
  %v7832 = vadd.f32 %v7439, %v7758
  %v7833 = vadd.f32 %v7440, %v7763
  %v7834 = vadd.f32 %v7441, %v7768
  %v7835 = vadd.f32 %v7442, %v7773
  %v7836 = vadd.f32 %v7443, %v7778
  %v7837 = vadd.f32 %v7444, %v7783
  %v7838 = vadd.f32 %v7445, %v7788
  %v7839 = vadd.f32 %v7446, %v7793
  %v7840 = vadd.f32 %v7447, %v7798
  %v7841 = vadd.f32 %v7448, %v7803
  %v7842 = vadd.f32 %v7449, %v7808
  %v7843 = vld [vmem:[#allocation2 + $0x140] sm:$0xff]
  %v7844 = vld [vmem:[#allocation2 + $0x148] sm:$0xff]
  %v7845 = vld [vmem:[#allocation2 + $0x150] sm:$0xff]
  %v7846 = vld [vmem:[#allocation2 + $0x158] sm:$0xff]
  %v7847 = vld [vmem:[#allocation2 + $0x160] sm:$0xff]
  %v7848 = vld [vmem:[#allocation2 + $0x168] sm:$0xff]
  %v7849 = vld [vmem:[#allocation2 + $0x170] sm:$0xff]
  %v7850 = vld [vmem:[#allocation2 + $0x178] sm:$0xff]
  %v7851 = vld [vmem:[#allocation2 + $0x180] sm:$0xff]
  %v7852 = vld [vmem:[#allocation2 + $0x188] sm:$0xff]
  %v7853 = vld [vmem:[#allocation2 + $0x190] sm:$0xff]
  %v7854 = vld [vmem:[#allocation2 + $0x198] sm:$0xff]
  %v7855 = vld [vmem:[#allocation2 + $0x1a0] sm:$0xff]
  %v7856 = vld [vmem:[#allocation2 + $0x1a8] sm:$0xff]
  %v7857 = vld [vmem:[#allocation2 + $0x1b0] sm:$0xff]
  %v7858 = vld [vmem:[#allocation2 + $0x1b8] sm:$0xff]
  %v7859 = vld [vmem:[#allocation2 + $0x1c0] sm:$0xff]
  %v7860 = vld [vmem:[#allocation2 + $0x1c8] sm:$0xff]
  %v7861 = vld [vmem:[#allocation2 + $0x1d0] sm:$0xff]
  %v7862 = vld [vmem:[#allocation2 + $0x1d8] sm:$0xff]
  %v7863 = vld [vmem:[#allocation2 + $0x1e0] sm:$0xff]
  %v7864 = vld [vmem:[#allocation2 + $0x1e8] sm:$0xff]
  %v7865 = vld [vmem:[#allocation2 + $0x1f0] sm:$0xff]
  %v7866 = vld [vmem:[#allocation2 + $0x1f8] sm:$0xff]
  %v7867 = vld [vmem:[#allocation2 + $0x200] sm:$0xff]
  %v7868 = vld [vmem:[#allocation2 + $0x208] sm:$0xff]
  %v7869 = vld [vmem:[#allocation2 + $0x210] sm:$0xff]
  %v7870 = vld [vmem:[#allocation2 + $0x218] sm:$0xff]
  %v7871 = vld [vmem:[#allocation2 + $0x220] sm:$0xff]
  %v7872 = vld [vmem:[#allocation2 + $0x228] sm:$0xff]
  %v7873 = vld [vmem:[#allocation2 + $0x230] sm:$0xff]
  %v7874 = vld [vmem:[#allocation2 + $0x238] sm:$0xff]
  %v7875 = vld [vmem:[%s2 + $0x1c0] sm:$0xff]
  %v7876 = vld [vmem:[%s2 + $0x1c8] sm:$0xff]
  %v7877 = vld [vmem:[%s2 + $0x1d0] sm:$0xff]
  %v7878 = vld [vmem:[%s2 + $0x1d8] sm:$0xff]
  %v7879 = vld [vmem:[%s2 + $0x1e0] sm:$0xff]
  %v7880 = vld [vmem:[%s2 + $0x1e8] sm:$0xff]
  %v7881 = vld [vmem:[%s2 + $0x1f0] sm:$0xff]
  %v7882 = vld [vmem:[%s2 + $0x1f8] sm:$0xff]
  %v7884 = vsel %vm1015, %v7843, 0
  %v7887 = vsel %vm1015, %v7844, 0
  %v7890 = vsel %vm1015, %v7845, 0
  %v7893 = vsel %vm1015, %v7846, 0
  %v7896 = vsel %vm1015, %v7847, 0
  %v7899 = vsel %vm1015, %v7848, 0
  %v7902 = vsel %vm1015, %v7849, 0
  %v7905 = vsel %vm1015, %v7850, 0
  %v7908 = vsel %vm1015, %v7851, 0
  %v7911 = vsel %vm1015, %v7852, 0
  %v7914 = vsel %vm1015, %v7853, 0
  %v7917 = vsel %vm1015, %v7854, 0
  %v7920 = vsel %vm1015, %v7855, 0
  %v7923 = vsel %vm1015, %v7856, 0
  %v7926 = vsel %vm1015, %v7857, 0
  %v7929 = vsel %vm1015, %v7858, 0
  %v7932 = vsel %vm1015, %v7859, 0
  %v7935 = vsel %vm1015, %v7860, 0
  %v7938 = vsel %vm1015, %v7861, 0
  %v7941 = vsel %vm1015, %v7862, 0
  %v7944 = vsel %vm1015, %v7863, 0
  %v7947 = vsel %vm1015, %v7864, 0
  %v7950 = vsel %vm1015, %v7865, 0
  %v7953 = vsel %vm1015, %v7866, 0
  %v7956 = vsel %vm1015, %v7867, 0
  %v7959 = vsel %vm1015, %v7868, 0
  %v7962 = vsel %vm1015, %v7869, 0
  %v7965 = vsel %vm1015, %v7870, 0
  %v7968 = vsel %vm1015, %v7871, 0
  %v7971 = vsel %vm1015, %v7872, 0
  %v7974 = vsel %vm1015, %v7873, 0
  %v7977 = vsel %vm1015, %v7874, 0
  %7979 = vmatprep.subr.mxu0 0.0
  %7980 = vmatpush1.msra.mxu0 0.0
  %7981 = vmatprep.subr.mxu0 0.0
  %7982 = vmatpush1.msra.mxu0 0.0
  %7983 = vmatprep.subr.mxu0 0.0
  %7984 = vmatpush1.msra.mxu0 0.0
  %7985 = vmatprep.subr.mxu0 0.0
  %7986 = vmatpush1.msra.mxu0 0.0
  %7987 = vmatprep.subr.mxu0 0.0
  %7988 = vmatpush1.msra.mxu0 0.0
  %7989 = vmatprep.subr.mxu0 0.0
  %7990 = vmatpush1.msra.mxu0 0.0
  %7991 = vmatprep.subr.mxu0 0.0
  %7992 = vmatpush1.msra.mxu0 0.0
  %7993 = vmatprep.subr.mxu0 0.0
  %7994 = vmatpush1.msra.mxu0 0.0
  %7995 = vmatprep.subr.mxu0 0.0
  %7996 = vmatpush1.msra.mxu0 %v7882
  %7997 = vmatprep.subr.mxu0 0.0
  %7998 = vmatpush1.msra.mxu0 %v7881
  %7999 = vmatprep.subr.mxu0 0.0
  %8000 = vmatpush1.msra.mxu0 %v7880
  %8001 = vmatprep.subr.mxu0 0.0
  %8002 = vmatpush1.msra.mxu0 %v7879
  %8003 = vmatprep.subr.mxu0 0.0
  %8004 = vmatpush1.msra.mxu0 %v7878
  %8005 = vmatprep.subr.mxu0 0.0
  %8006 = vmatpush1.msra.mxu0 %v7877
  %8007 = vmatprep.subr.mxu0 0.0
  %8008 = vmatpush1.msra.mxu0 %v7876
  %8009 = vmatprep.subr.mxu0 0.0
  %8010 = vmatpush1.msra.mxu0 %v7875
  %8011 = vmatprep.subr.mxu0 0.0
  %8012 = vmatpush2.msra.mxu0 0.0
  %8013 = vmatprep.subr.mxu0 0.0
  %8014 = vmatpush2.msra.mxu0 0.0
  %8015 = vmatprep.subr.mxu0 0.0
  %8016 = vmatpush2.msra.mxu0 0.0
  %8017 = vmatprep.subr.mxu0 0.0
  %8018 = vmatpush2.msra.mxu0 0.0
  %8019 = vmatprep.subr.mxu0 0.0
  %8020 = vmatpush2.msra.mxu0 0.0
  %8021 = vmatprep.subr.mxu0 0.0
  %8022 = vmatpush2.msra.mxu0 0.0
  %8023 = vmatprep.subr.mxu0 0.0
  %8024 = vmatpush2.msra.mxu0 0.0
  %8025 = vmatprep.subr.mxu0 0.0
  %8026 = vmatpush2.msra.mxu0 0.0
  %8027 = vmatprep.subr.mxu0 0.0
  %8028 = vmatpush2.msra.mxu0 0.0
  %8029 = vmatprep.subr.mxu0 0.0
  %8030 = vmatpush2.msra.mxu0 0.0
  %8031 = vmatprep.subr.mxu0 0.0
  %8032 = vmatpush2.msra.mxu0 0.0
  %8033 = vmatprep.subr.mxu0 0.0
  %8034 = vmatpush2.msra.mxu0 0.0
  %8035 = vmatprep.subr.mxu0 0.0
  %8036 = vmatpush2.msra.mxu0 0.0
  %8037 = vmatprep.subr.mxu0 0.0
  %8038 = vmatpush2.msra.mxu0 0.0
  %8039 = vmatprep.subr.mxu0 0.0
  %8040 = vmatpush2.msra.mxu0 0.0
  %8041 = vmatprep.subr.mxu0 0.0
  %8042 = vmatpush2.msra.mxu0 0.0
  %8043 = vmatprep.mubr.f32.mxu0 0.0
  %8044 = vmatmul.mubr.f32.gmra.mxu0 %v7884
  %v8045 = vpop.f32.mrf.mxu0
  %v8046 = vadd.f32 0.0, %v8045
  %v8047 = vpop.f32.mrf.mxu0
  %8048 = vmatprep.mubr.f32.mxu0 0.0
  %8049 = vmatmul.mubr.f32.gmra.mxu0 %v7887
  %v8050 = vpop.f32.mrf.mxu0
  %v8051 = vadd.f32 0.0, %v8050
  %v8052 = vpop.f32.mrf.mxu0
  %8053 = vmatprep.mubr.f32.mxu0 0.0
  %8054 = vmatmul.mubr.f32.gmra.mxu0 %v7890
  %v8055 = vpop.f32.mrf.mxu0
  %v8056 = vadd.f32 0.0, %v8055
  %v8057 = vpop.f32.mrf.mxu0
  %8058 = vmatprep.mubr.f32.mxu0 0.0
  %8059 = vmatmul.mubr.f32.gmra.mxu0 %v7893
  %v8060 = vpop.f32.mrf.mxu0
  %v8061 = vadd.f32 0.0, %v8060
  %v8062 = vpop.f32.mrf.mxu0
  %8063 = vmatprep.mubr.f32.mxu0 0.0
  %8064 = vmatmul.mubr.f32.gmra.mxu0 %v7896
  %v8065 = vpop.f32.mrf.mxu0
  %v8066 = vadd.f32 0.0, %v8065
  %v8067 = vpop.f32.mrf.mxu0
  %8068 = vmatprep.mubr.f32.mxu0 0.0
  %8069 = vmatmul.mubr.f32.gmra.mxu0 %v7899
  %v8070 = vpop.f32.mrf.mxu0
  %v8071 = vadd.f32 0.0, %v8070
  %v8072 = vpop.f32.mrf.mxu0
  %8073 = vmatprep.mubr.f32.mxu0 0.0
  %8074 = vmatmul.mubr.f32.gmra.mxu0 %v7902
  %v8075 = vpop.f32.mrf.mxu0
  %v8076 = vadd.f32 0.0, %v8075
  %v8077 = vpop.f32.mrf.mxu0
  %8078 = vmatprep.mubr.f32.mxu0 0.0
  %8079 = vmatmul.mubr.f32.gmra.mxu0 %v7905
  %v8080 = vpop.f32.mrf.mxu0
  %v8081 = vadd.f32 0.0, %v8080
  %v8082 = vpop.f32.mrf.mxu0
  %8083 = vmatprep.mubr.f32.mxu0 0.0
  %8084 = vmatmul.mubr.f32.gmra.mxu0 %v7908
  %v8085 = vpop.f32.mrf.mxu0
  %v8086 = vadd.f32 0.0, %v8085
  %v8087 = vpop.f32.mrf.mxu0
  %8088 = vmatprep.mubr.f32.mxu0 0.0
  %8089 = vmatmul.mubr.f32.gmra.mxu0 %v7911
  %v8090 = vpop.f32.mrf.mxu0
  %v8091 = vadd.f32 0.0, %v8090
  %v8092 = vpop.f32.mrf.mxu0
  %8093 = vmatprep.mubr.f32.mxu0 0.0
  %8094 = vmatmul.mubr.f32.gmra.mxu0 %v7914
  %v8095 = vpop.f32.mrf.mxu0
  %v8096 = vadd.f32 0.0, %v8095
  %v8097 = vpop.f32.mrf.mxu0
  %8098 = vmatprep.mubr.f32.mxu0 0.0
  %8099 = vmatmul.mubr.f32.gmra.mxu0 %v7917
  %v8100 = vpop.f32.mrf.mxu0
  %v8101 = vadd.f32 0.0, %v8100
  %v8102 = vpop.f32.mrf.mxu0
  %8103 = vmatprep.mubr.f32.mxu0 0.0
  %8104 = vmatmul.mubr.f32.gmra.mxu0 %v7920
  %v8105 = vpop.f32.mrf.mxu0
  %v8106 = vadd.f32 0.0, %v8105
  %v8107 = vpop.f32.mrf.mxu0
  %8108 = vmatprep.mubr.f32.mxu0 0.0
  %8109 = vmatmul.mubr.f32.gmra.mxu0 %v7923
  %v8110 = vpop.f32.mrf.mxu0
  %v8111 = vadd.f32 0.0, %v8110
  %v8112 = vpop.f32.mrf.mxu0
  %8113 = vmatprep.mubr.f32.mxu0 0.0
  %8114 = vmatmul.mubr.f32.gmra.mxu0 %v7926
  %v8115 = vpop.f32.mrf.mxu0
  %v8116 = vadd.f32 0.0, %v8115
  %v8117 = vpop.f32.mrf.mxu0
  %8118 = vmatprep.mubr.f32.mxu0 0.0
  %8119 = vmatmul.mubr.f32.gmra.mxu0 %v7929
  %v8120 = vpop.f32.mrf.mxu0
  %v8121 = vadd.f32 0.0, %v8120
  %v8122 = vpop.f32.mrf.mxu0
  %8123 = vmatprep.mubr.f32.mxu0 0.0
  %8124 = vmatmul.mubr.f32.gmra.mxu0 %v7932
  %v8125 = vpop.f32.mrf.mxu0
  %v8126 = vadd.f32 0.0, %v8125
  %v8127 = vpop.f32.mrf.mxu0
  %8128 = vmatprep.mubr.f32.mxu0 0.0
  %8129 = vmatmul.mubr.f32.gmra.mxu0 %v7935
  %v8130 = vpop.f32.mrf.mxu0
  %v8131 = vadd.f32 0.0, %v8130
  %v8132 = vpop.f32.mrf.mxu0
  %8133 = vmatprep.mubr.f32.mxu0 0.0
  %8134 = vmatmul.mubr.f32.gmra.mxu0 %v7938
  %v8135 = vpop.f32.mrf.mxu0
  %v8136 = vadd.f32 0.0, %v8135
  %v8137 = vpop.f32.mrf.mxu0
  %8138 = vmatprep.mubr.f32.mxu0 0.0
  %8139 = vmatmul.mubr.f32.gmra.mxu0 %v7941
  %v8140 = vpop.f32.mrf.mxu0
  %v8141 = vadd.f32 0.0, %v8140
  %v8142 = vpop.f32.mrf.mxu0
  %8143 = vmatprep.mubr.f32.mxu0 0.0
  %8144 = vmatmul.mubr.f32.gmra.mxu0 %v7944
  %v8145 = vpop.f32.mrf.mxu0
  %v8146 = vadd.f32 0.0, %v8145
  %v8147 = vpop.f32.mrf.mxu0
  %8148 = vmatprep.mubr.f32.mxu0 0.0
  %8149 = vmatmul.mubr.f32.gmra.mxu0 %v7947
  %v8150 = vpop.f32.mrf.mxu0
  %v8151 = vadd.f32 0.0, %v8150
  %v8152 = vpop.f32.mrf.mxu0
  %8153 = vmatprep.mubr.f32.mxu0 0.0
  %8154 = vmatmul.mubr.f32.gmra.mxu0 %v7950
  %v8155 = vpop.f32.mrf.mxu0
  %v8156 = vadd.f32 0.0, %v8155
  %v8157 = vpop.f32.mrf.mxu0
  %8158 = vmatprep.mubr.f32.mxu0 0.0
  %8159 = vmatmul.mubr.f32.gmra.mxu0 %v7953
  %v8160 = vpop.f32.mrf.mxu0
  %v8161 = vadd.f32 0.0, %v8160
  %v8162 = vpop.f32.mrf.mxu0
  %8163 = vmatprep.mubr.f32.mxu0 0.0
  %8164 = vmatmul.mubr.f32.gmra.mxu0 %v7956
  %v8165 = vpop.f32.mrf.mxu0
  %v8166 = vadd.f32 0.0, %v8165
  %v8167 = vpop.f32.mrf.mxu0
  %8168 = vmatprep.mubr.f32.mxu0 0.0
  %8169 = vmatmul.mubr.f32.gmra.mxu0 %v7959
  %v8170 = vpop.f32.mrf.mxu0
  %v8171 = vadd.f32 0.0, %v8170
  %v8172 = vpop.f32.mrf.mxu0
  %8173 = vmatprep.mubr.f32.mxu0 0.0
  %8174 = vmatmul.mubr.f32.gmra.mxu0 %v7962
  %v8175 = vpop.f32.mrf.mxu0
  %v8176 = vadd.f32 0.0, %v8175
  %v8177 = vpop.f32.mrf.mxu0
  %8178 = vmatprep.mubr.f32.mxu0 0.0
  %8179 = vmatmul.mubr.f32.gmra.mxu0 %v7965
  %v8180 = vpop.f32.mrf.mxu0
  %v8181 = vadd.f32 0.0, %v8180
  %v8182 = vpop.f32.mrf.mxu0
  %8183 = vmatprep.mubr.f32.mxu0 0.0
  %8184 = vmatmul.mubr.f32.gmra.mxu0 %v7968
  %v8185 = vpop.f32.mrf.mxu0
  %v8186 = vadd.f32 0.0, %v8185
  %v8187 = vpop.f32.mrf.mxu0
  %8188 = vmatprep.mubr.f32.mxu0 0.0
  %8189 = vmatmul.mubr.f32.gmra.mxu0 %v7971
  %v8190 = vpop.f32.mrf.mxu0
  %v8191 = vadd.f32 0.0, %v8190
  %v8192 = vpop.f32.mrf.mxu0
  %8193 = vmatprep.mubr.f32.mxu0 0.0
  %8194 = vmatmul.mubr.f32.gmra.mxu0 %v7974
  %v8195 = vpop.f32.mrf.mxu0
  %v8196 = vadd.f32 0.0, %v8195
  %v8197 = vpop.f32.mrf.mxu0
  %8198 = vmatprep.mubr.f32.mxu0 0.0
  %8199 = vmatmul.mubr.f32.gmra.mxu0 %v7977
  %v8200 = vpop.f32.mrf.mxu0
  %v8201 = vadd.f32 0.0, %v8200
  %v8202 = vpop.f32.mrf.mxu0
  %8203 = vdwg.mxu0
  %v8204 = vadd.f32 %v7811, %v8046
  %v8205 = vadd.f32 %v7812, %v8051
  %v8206 = vadd.f32 %v7813, %v8056
  %v8207 = vadd.f32 %v7814, %v8061
  %v8208 = vadd.f32 %v7815, %v8066
  %v8209 = vadd.f32 %v7816, %v8071
  %v8210 = vadd.f32 %v7817, %v8076
  %v8211 = vadd.f32 %v7818, %v8081
  %v8212 = vadd.f32 %v7819, %v8086
  %v8213 = vadd.f32 %v7820, %v8091
  %v8214 = vadd.f32 %v7821, %v8096
  %v8215 = vadd.f32 %v7822, %v8101
  %v8216 = vadd.f32 %v7823, %v8106
  %v8217 = vadd.f32 %v7824, %v8111
  %v8218 = vadd.f32 %v7825, %v8116
  %v8219 = vadd.f32 %v7826, %v8121
  %v8220 = vadd.f32 %v7827, %v8126
  %v8221 = vadd.f32 %v7828, %v8131
  %v8222 = vadd.f32 %v7829, %v8136
  %v8223 = vadd.f32 %v7830, %v8141
  %v8224 = vadd.f32 %v7831, %v8146
  %v8225 = vadd.f32 %v7832, %v8151
  %v8226 = vadd.f32 %v7833, %v8156
  %v8227 = vadd.f32 %v7834, %v8161
  %v8228 = vadd.f32 %v7835, %v8166
  %v8229 = vadd.f32 %v7836, %v8171
  %v8230 = vadd.f32 %v7837, %v8176
  %v8231 = vadd.f32 %v7838, %v8181
  %v8232 = vadd.f32 %v7839, %v8186
  %v8233 = vadd.f32 %v7840, %v8191
  %v8234 = vadd.f32 %v7841, %v8196
  %v8235 = vadd.f32 %v7842, %v8201
  %v8236 = vld [vmem:[#allocation4 + $0x141] sm:$0xff]
  %v8237 = vld [vmem:[#allocation4 + $0x149] sm:$0xff]
  %v8238 = vld [vmem:[#allocation4 + $0x151] sm:$0xff]
  %v8239 = vld [vmem:[#allocation4 + $0x159] sm:$0xff]
  %v8240 = vld [vmem:[#allocation4 + $0x161] sm:$0xff]
  %v8241 = vld [vmem:[#allocation4 + $0x169] sm:$0xff]
  %v8242 = vld [vmem:[#allocation4 + $0x171] sm:$0xff]
  %v8243 = vld [vmem:[#allocation4 + $0x179] sm:$0xff]
  %v8244 = vld [vmem:[#allocation4 + $0x181] sm:$0xff]
  %v8245 = vld [vmem:[#allocation4 + $0x189] sm:$0xff]
  %v8246 = vld [vmem:[#allocation4 + $0x191] sm:$0xff]
  %v8247 = vld [vmem:[#allocation4 + $0x199] sm:$0xff]
  %v8248 = vld [vmem:[#allocation4 + $0x1a1] sm:$0xff]
  %v8249 = vld [vmem:[#allocation4 + $0x1a9] sm:$0xff]
  %v8250 = vld [vmem:[#allocation4 + $0x1b1] sm:$0xff]
  %v8251 = vld [vmem:[#allocation4 + $0x1b9] sm:$0xff]
  %v8252 = vld [vmem:[#allocation4 + $0x1c1] sm:$0xff]
  %v8253 = vld [vmem:[#allocation4 + $0x1c9] sm:$0xff]
  %v8254 = vld [vmem:[#allocation4 + $0x1d1] sm:$0xff]
  %v8255 = vld [vmem:[#allocation4 + $0x1d9] sm:$0xff]
  %v8256 = vld [vmem:[#allocation4 + $0x1e1] sm:$0xff]
  %v8257 = vld [vmem:[#allocation4 + $0x1e9] sm:$0xff]
  %v8258 = vld [vmem:[#allocation4 + $0x1f1] sm:$0xff]
  %v8259 = vld [vmem:[#allocation4 + $0x1f9] sm:$0xff]
  %v8260 = vld [vmem:[#allocation4 + $0x201] sm:$0xff]
  %v8261 = vld [vmem:[#allocation4 + $0x209] sm:$0xff]
  %v8262 = vld [vmem:[#allocation4 + $0x211] sm:$0xff]
  %v8263 = vld [vmem:[#allocation4 + $0x219] sm:$0xff]
  %v8264 = vld [vmem:[#allocation4 + $0x221] sm:$0xff]
  %v8265 = vld [vmem:[#allocation4 + $0x229] sm:$0xff]
  %v8266 = vld [vmem:[#allocation4 + $0x231] sm:$0xff]
  %v8267 = vld [vmem:[#allocation4 + $0x239] sm:$0xff]
  %v8268 = vld [vmem:[%s2 + $0x200] sm:$0xff]
  %v8269 = vld [vmem:[%s2 + $0x208] sm:$0xff]
  %v8270 = vld [vmem:[%s2 + $0x210] sm:$0xff]
  %v8271 = vld [vmem:[%s2 + $0x218] sm:$0xff]
  %v8272 = vld [vmem:[%s2 + $0x220] sm:$0xff]
  %v8273 = vld [vmem:[%s2 + $0x228] sm:$0xff]
  %v8274 = vld [vmem:[%s2 + $0x230] sm:$0xff]
  %v8275 = vld [vmem:[%s2 + $0x238] sm:$0xff]
  %v8277 = vsel %vm1015, %v8236, 0
  %v8280 = vsel %vm1015, %v8237, 0
  %v8283 = vsel %vm1015, %v8238, 0
  %v8286 = vsel %vm1015, %v8239, 0
  %v8289 = vsel %vm1015, %v8240, 0
  %v8292 = vsel %vm1015, %v8241, 0
  %v8295 = vsel %vm1015, %v8242, 0
  %v8298 = vsel %vm1015, %v8243, 0
  %v8301 = vsel %vm1015, %v8244, 0
  %v8304 = vsel %vm1015, %v8245, 0
  %v8307 = vsel %vm1015, %v8246, 0
  %v8310 = vsel %vm1015, %v8247, 0
  %v8313 = vsel %vm1015, %v8248, 0
  %v8316 = vsel %vm1015, %v8249, 0
  %v8319 = vsel %vm1015, %v8250, 0
  %v8322 = vsel %vm1015, %v8251, 0
  %v8325 = vsel %vm1015, %v8252, 0
  %v8328 = vsel %vm1015, %v8253, 0
  %v8331 = vsel %vm1015, %v8254, 0
  %v8334 = vsel %vm1015, %v8255, 0
  %v8337 = vsel %vm1015, %v8256, 0
  %v8340 = vsel %vm1015, %v8257, 0
  %v8343 = vsel %vm1015, %v8258, 0
  %v8346 = vsel %vm1015, %v8259, 0
  %v8349 = vsel %vm1015, %v8260, 0
  %v8352 = vsel %vm1015, %v8261, 0
  %v8355 = vsel %vm1015, %v8262, 0
  %v8358 = vsel %vm1015, %v8263, 0
  %v8361 = vsel %vm1015, %v8264, 0
  %v8364 = vsel %vm1015, %v8265, 0
  %v8367 = vsel %vm1015, %v8266, 0
  %v8370 = vsel %vm1015, %v8267, 0
  %8372 = vmatprep.subr.mxu0 0.0
  %8373 = vmatpush1.msra.mxu0 0.0
  %8374 = vmatprep.subr.mxu0 0.0
  %8375 = vmatpush1.msra.mxu0 0.0
  %8376 = vmatprep.subr.mxu0 0.0
  %8377 = vmatpush1.msra.mxu0 0.0
  %8378 = vmatprep.subr.mxu0 0.0
  %8379 = vmatpush1.msra.mxu0 0.0
  %8380 = vmatprep.subr.mxu0 0.0
  %8381 = vmatpush1.msra.mxu0 0.0
  %8382 = vmatprep.subr.mxu0 0.0
  %8383 = vmatpush1.msra.mxu0 0.0
  %8384 = vmatprep.subr.mxu0 0.0
  %8385 = vmatpush1.msra.mxu0 0.0
  %8386 = vmatprep.subr.mxu0 0.0
  %8387 = vmatpush1.msra.mxu0 0.0
  %8388 = vmatprep.subr.mxu0 0.0
  %8389 = vmatpush1.msra.mxu0 %v8275
  %8390 = vmatprep.subr.mxu0 0.0
  %8391 = vmatpush1.msra.mxu0 %v8274
  %8392 = vmatprep.subr.mxu0 0.0
  %8393 = vmatpush1.msra.mxu0 %v8273
  %8394 = vmatprep.subr.mxu0 0.0
  %8395 = vmatpush1.msra.mxu0 %v8272
  %8396 = vmatprep.subr.mxu0 0.0
  %8397 = vmatpush1.msra.mxu0 %v8271
  %8398 = vmatprep.subr.mxu0 0.0
  %8399 = vmatpush1.msra.mxu0 %v8270
  %8400 = vmatprep.subr.mxu0 0.0
  %8401 = vmatpush1.msra.mxu0 %v8269
  %8402 = vmatprep.subr.mxu0 0.0
  %8403 = vmatpush1.msra.mxu0 %v8268
  %8404 = vmatprep.subr.mxu0 0.0
  %8405 = vmatpush2.msra.mxu0 0.0
  %8406 = vmatprep.subr.mxu0 0.0
  %8407 = vmatpush2.msra.mxu0 0.0
  %8408 = vmatprep.subr.mxu0 0.0
  %8409 = vmatpush2.msra.mxu0 0.0
  %8410 = vmatprep.subr.mxu0 0.0
  %8411 = vmatpush2.msra.mxu0 0.0
  %8412 = vmatprep.subr.mxu0 0.0
  %8413 = vmatpush2.msra.mxu0 0.0
  %8414 = vmatprep.subr.mxu0 0.0
  %8415 = vmatpush2.msra.mxu0 0.0
  %8416 = vmatprep.subr.mxu0 0.0
  %8417 = vmatpush2.msra.mxu0 0.0
  %8418 = vmatprep.subr.mxu0 0.0
  %8419 = vmatpush2.msra.mxu0 0.0
  %8420 = vmatprep.subr.mxu0 0.0
  %8421 = vmatpush2.msra.mxu0 0.0
  %8422 = vmatprep.subr.mxu0 0.0
  %8423 = vmatpush2.msra.mxu0 0.0
  %8424 = vmatprep.subr.mxu0 0.0
  %8425 = vmatpush2.msra.mxu0 0.0
  %8426 = vmatprep.subr.mxu0 0.0
  %8427 = vmatpush2.msra.mxu0 0.0
  %8428 = vmatprep.subr.mxu0 0.0
  %8429 = vmatpush2.msra.mxu0 0.0
  %8430 = vmatprep.subr.mxu0 0.0
  %8431 = vmatpush2.msra.mxu0 0.0
  %8432 = vmatprep.subr.mxu0 0.0
  %8433 = vmatpush2.msra.mxu0 0.0
  %8434 = vmatprep.subr.mxu0 0.0
  %8435 = vmatpush2.msra.mxu0 0.0
  %8436 = vmatprep.mubr.f32.mxu0 0.0
  %8437 = vmatmul.mubr.f32.gmra.mxu0 %v8277
  %v8438 = vpop.f32.mrf.mxu0
  %v8439 = vadd.f32 0.0, %v8438
  %v8440 = vpop.f32.mrf.mxu0
  %8441 = vmatprep.mubr.f32.mxu0 0.0
  %8442 = vmatmul.mubr.f32.gmra.mxu0 %v8280
  %v8443 = vpop.f32.mrf.mxu0
  %v8444 = vadd.f32 0.0, %v8443
  %v8445 = vpop.f32.mrf.mxu0
  %8446 = vmatprep.mubr.f32.mxu0 0.0
  %8447 = vmatmul.mubr.f32.gmra.mxu0 %v8283
  %v8448 = vpop.f32.mrf.mxu0
  %v8449 = vadd.f32 0.0, %v8448
  %v8450 = vpop.f32.mrf.mxu0
  %8451 = vmatprep.mubr.f32.mxu0 0.0
  %8452 = vmatmul.mubr.f32.gmra.mxu0 %v8286
  %v8453 = vpop.f32.mrf.mxu0
  %v8454 = vadd.f32 0.0, %v8453
  %v8455 = vpop.f32.mrf.mxu0
  %8456 = vmatprep.mubr.f32.mxu0 0.0
  %8457 = vmatmul.mubr.f32.gmra.mxu0 %v8289
  %v8458 = vpop.f32.mrf.mxu0
  %v8459 = vadd.f32 0.0, %v8458
  %v8460 = vpop.f32.mrf.mxu0
  %8461 = vmatprep.mubr.f32.mxu0 0.0
  %8462 = vmatmul.mubr.f32.gmra.mxu0 %v8292
  %v8463 = vpop.f32.mrf.mxu0
  %v8464 = vadd.f32 0.0, %v8463
  %v8465 = vpop.f32.mrf.mxu0
  %8466 = vmatprep.mubr.f32.mxu0 0.0
  %8467 = vmatmul.mubr.f32.gmra.mxu0 %v8295
  %v8468 = vpop.f32.mrf.mxu0
  %v8469 = vadd.f32 0.0, %v8468
  %v8470 = vpop.f32.mrf.mxu0
  %8471 = vmatprep.mubr.f32.mxu0 0.0
  %8472 = vmatmul.mubr.f32.gmra.mxu0 %v8298
  %v8473 = vpop.f32.mrf.mxu0
  %v8474 = vadd.f32 0.0, %v8473
  %v8475 = vpop.f32.mrf.mxu0
  %8476 = vmatprep.mubr.f32.mxu0 0.0
  %8477 = vmatmul.mubr.f32.gmra.mxu0 %v8301
  %v8478 = vpop.f32.mrf.mxu0
  %v8479 = vadd.f32 0.0, %v8478
  %v8480 = vpop.f32.mrf.mxu0
  %8481 = vmatprep.mubr.f32.mxu0 0.0
  %8482 = vmatmul.mubr.f32.gmra.mxu0 %v8304
  %v8483 = vpop.f32.mrf.mxu0
  %v8484 = vadd.f32 0.0, %v8483
  %v8485 = vpop.f32.mrf.mxu0
  %8486 = vmatprep.mubr.f32.mxu0 0.0
  %8487 = vmatmul.mubr.f32.gmra.mxu0 %v8307
  %v8488 = vpop.f32.mrf.mxu0
  %v8489 = vadd.f32 0.0, %v8488
  %v8490 = vpop.f32.mrf.mxu0
  %8491 = vmatprep.mubr.f32.mxu0 0.0
  %8492 = vmatmul.mubr.f32.gmra.mxu0 %v8310
  %v8493 = vpop.f32.mrf.mxu0
  %v8494 = vadd.f32 0.0, %v8493
  %v8495 = vpop.f32.mrf.mxu0
  %8496 = vmatprep.mubr.f32.mxu0 0.0
  %8497 = vmatmul.mubr.f32.gmra.mxu0 %v8313
  %v8498 = vpop.f32.mrf.mxu0
  %v8499 = vadd.f32 0.0, %v8498
  %v8500 = vpop.f32.mrf.mxu0
  %8501 = vmatprep.mubr.f32.mxu0 0.0
  %8502 = vmatmul.mubr.f32.gmra.mxu0 %v8316
  %v8503 = vpop.f32.mrf.mxu0
  %v8504 = vadd.f32 0.0, %v8503
  %v8505 = vpop.f32.mrf.mxu0
  %8506 = vmatprep.mubr.f32.mxu0 0.0
  %8507 = vmatmul.mubr.f32.gmra.mxu0 %v8319
  %v8508 = vpop.f32.mrf.mxu0
  %v8509 = vadd.f32 0.0, %v8508
  %v8510 = vpop.f32.mrf.mxu0
  %8511 = vmatprep.mubr.f32.mxu0 0.0
  %8512 = vmatmul.mubr.f32.gmra.mxu0 %v8322
  %v8513 = vpop.f32.mrf.mxu0
  %v8514 = vadd.f32 0.0, %v8513
  %v8515 = vpop.f32.mrf.mxu0
  %8516 = vmatprep.mubr.f32.mxu0 0.0
  %8517 = vmatmul.mubr.f32.gmra.mxu0 %v8325
  %v8518 = vpop.f32.mrf.mxu0
  %v8519 = vadd.f32 0.0, %v8518
  %v8520 = vpop.f32.mrf.mxu0
  %8521 = vmatprep.mubr.f32.mxu0 0.0
  %8522 = vmatmul.mubr.f32.gmra.mxu0 %v8328
  %v8523 = vpop.f32.mrf.mxu0
  %v8524 = vadd.f32 0.0, %v8523
  %v8525 = vpop.f32.mrf.mxu0
  %8526 = vmatprep.mubr.f32.mxu0 0.0
  %8527 = vmatmul.mubr.f32.gmra.mxu0 %v8331
  %v8528 = vpop.f32.mrf.mxu0
  %v8529 = vadd.f32 0.0, %v8528
  %v8530 = vpop.f32.mrf.mxu0
  %8531 = vmatprep.mubr.f32.mxu0 0.0
  %8532 = vmatmul.mubr.f32.gmra.mxu0 %v8334
  %v8533 = vpop.f32.mrf.mxu0
  %v8534 = vadd.f32 0.0, %v8533
  %v8535 = vpop.f32.mrf.mxu0
  %8536 = vmatprep.mubr.f32.mxu0 0.0
  %8537 = vmatmul.mubr.f32.gmra.mxu0 %v8337
  %v8538 = vpop.f32.mrf.mxu0
  %v8539 = vadd.f32 0.0, %v8538
  %v8540 = vpop.f32.mrf.mxu0
  %8541 = vmatprep.mubr.f32.mxu0 0.0
  %8542 = vmatmul.mubr.f32.gmra.mxu0 %v8340
  %v8543 = vpop.f32.mrf.mxu0
  %v8544 = vadd.f32 0.0, %v8543
  %v8545 = vpop.f32.mrf.mxu0
  %8546 = vmatprep.mubr.f32.mxu0 0.0
  %8547 = vmatmul.mubr.f32.gmra.mxu0 %v8343
  %v8548 = vpop.f32.mrf.mxu0
  %v8549 = vadd.f32 0.0, %v8548
  %v8550 = vpop.f32.mrf.mxu0
  %8551 = vmatprep.mubr.f32.mxu0 0.0
  %8552 = vmatmul.mubr.f32.gmra.mxu0 %v8346
  %v8553 = vpop.f32.mrf.mxu0
  %v8554 = vadd.f32 0.0, %v8553
  %v8555 = vpop.f32.mrf.mxu0
  %8556 = vmatprep.mubr.f32.mxu0 0.0
  %8557 = vmatmul.mubr.f32.gmra.mxu0 %v8349
  %v8558 = vpop.f32.mrf.mxu0
  %v8559 = vadd.f32 0.0, %v8558
  %v8560 = vpop.f32.mrf.mxu0
  %8561 = vmatprep.mubr.f32.mxu0 0.0
  %8562 = vmatmul.mubr.f32.gmra.mxu0 %v8352
  %v8563 = vpop.f32.mrf.mxu0
  %v8564 = vadd.f32 0.0, %v8563
  %v8565 = vpop.f32.mrf.mxu0
  %8566 = vmatprep.mubr.f32.mxu0 0.0
  %8567 = vmatmul.mubr.f32.gmra.mxu0 %v8355
  %v8568 = vpop.f32.mrf.mxu0
  %v8569 = vadd.f32 0.0, %v8568
  %v8570 = vpop.f32.mrf.mxu0
  %8571 = vmatprep.mubr.f32.mxu0 0.0
  %8572 = vmatmul.mubr.f32.gmra.mxu0 %v8358
  %v8573 = vpop.f32.mrf.mxu0
  %v8574 = vadd.f32 0.0, %v8573
  %v8575 = vpop.f32.mrf.mxu0
  %8576 = vmatprep.mubr.f32.mxu0 0.0
  %8577 = vmatmul.mubr.f32.gmra.mxu0 %v8361
  %v8578 = vpop.f32.mrf.mxu0
  %v8579 = vadd.f32 0.0, %v8578
  %v8580 = vpop.f32.mrf.mxu0
  %8581 = vmatprep.mubr.f32.mxu0 0.0
  %8582 = vmatmul.mubr.f32.gmra.mxu0 %v8364
  %v8583 = vpop.f32.mrf.mxu0
  %v8584 = vadd.f32 0.0, %v8583
  %v8585 = vpop.f32.mrf.mxu0
  %8586 = vmatprep.mubr.f32.mxu0 0.0
  %8587 = vmatmul.mubr.f32.gmra.mxu0 %v8367
  %v8588 = vpop.f32.mrf.mxu0
  %v8589 = vadd.f32 0.0, %v8588
  %v8590 = vpop.f32.mrf.mxu0
  %8591 = vmatprep.mubr.f32.mxu0 0.0
  %8592 = vmatmul.mubr.f32.gmra.mxu0 %v8370
  %v8593 = vpop.f32.mrf.mxu0
  %v8594 = vadd.f32 0.0, %v8593
  %v8595 = vpop.f32.mrf.mxu0
  %8596 = vdwg.mxu0
  %v8597 = vadd.f32 %v8204, %v8439
  %v8598 = vadd.f32 %v8205, %v8444
  %v8599 = vadd.f32 %v8206, %v8449
  %v8600 = vadd.f32 %v8207, %v8454
  %v8601 = vadd.f32 %v8208, %v8459
  %v8602 = vadd.f32 %v8209, %v8464
  %v8603 = vadd.f32 %v8210, %v8469
  %v8604 = vadd.f32 %v8211, %v8474
  %v8605 = vadd.f32 %v8212, %v8479
  %v8606 = vadd.f32 %v8213, %v8484
  %v8607 = vadd.f32 %v8214, %v8489
  %v8608 = vadd.f32 %v8215, %v8494
  %v8609 = vadd.f32 %v8216, %v8499
  %v8610 = vadd.f32 %v8217, %v8504
  %v8611 = vadd.f32 %v8218, %v8509
  %v8612 = vadd.f32 %v8219, %v8514
  %v8613 = vadd.f32 %v8220, %v8519
  %v8614 = vadd.f32 %v8221, %v8524
  %v8615 = vadd.f32 %v8222, %v8529
  %v8616 = vadd.f32 %v8223, %v8534
  %v8617 = vadd.f32 %v8224, %v8539
  %v8618 = vadd.f32 %v8225, %v8544
  %v8619 = vadd.f32 %v8226, %v8549
  %v8620 = vadd.f32 %v8227, %v8554
  %v8621 = vadd.f32 %v8228, %v8559
  %v8622 = vadd.f32 %v8229, %v8564
  %v8623 = vadd.f32 %v8230, %v8569
  %v8624 = vadd.f32 %v8231, %v8574
  %v8625 = vadd.f32 %v8232, %v8579
  %v8626 = vadd.f32 %v8233, %v8584
  %v8627 = vadd.f32 %v8234, %v8589
  %v8628 = vadd.f32 %v8235, %v8594
  %8629 = vst.msk [vmem:[%s4 + $0x100] sm:$0xff] %vm85, %v8597
  %8630 = vst.msk [vmem:[%s4 + $0x108] sm:$0xff] %vm85, %v8598
  %8631 = vst.msk [vmem:[%s4 + $0x110] sm:$0xff] %vm85, %v8599
  %8632 = vst.msk [vmem:[%s4 + $0x118] sm:$0xff] %vm85, %v8600
  %8633 = vst.msk [vmem:[%s4 + $0x120] sm:$0xff] %vm85, %v8601
  %8634 = vst.msk [vmem:[%s4 + $0x128] sm:$0xff] %vm85, %v8602
  %8635 = vst.msk [vmem:[%s4 + $0x130] sm:$0xff] %vm85, %v8603
  %8636 = vst.msk [vmem:[%s4 + $0x138] sm:$0xff] %vm85, %v8604
  %8637 = vst.msk [vmem:[%s4 + $0x140] sm:$0xff] %vm85, %v8605
  %8638 = vst.msk [vmem:[%s4 + $0x148] sm:$0xff] %vm85, %v8606
  %8639 = vst.msk [vmem:[%s4 + $0x150] sm:$0xff] %vm85, %v8607
  %8640 = vst.msk [vmem:[%s4 + $0x158] sm:$0xff] %vm85, %v8608
  %8641 = vst.msk [vmem:[%s4 + $0x160] sm:$0xff] %vm85, %v8609
  %8642 = vst.msk [vmem:[%s4 + $0x168] sm:$0xff] %vm85, %v8610
  %8643 = vst.msk [vmem:[%s4 + $0x170] sm:$0xff] %vm85, %v8611
  %8644 = vst.msk [vmem:[%s4 + $0x178] sm:$0xff] %vm85, %v8612
  %8645 = vst.msk [vmem:[%s4 + $0x180] sm:$0xff] %vm85, %v8613
  %8646 = vst.msk [vmem:[%s4 + $0x188] sm:$0xff] %vm85, %v8614
  %8647 = vst.msk [vmem:[%s4 + $0x190] sm:$0xff] %vm85, %v8615
  %8648 = vst.msk [vmem:[%s4 + $0x198] sm:$0xff] %vm85, %v8616
  %8649 = vst.msk [vmem:[%s4 + $0x1a0] sm:$0xff] %vm85, %v8617
  %8650 = vst.msk [vmem:[%s4 + $0x1a8] sm:$0xff] %vm85, %v8618
  %8651 = vst.msk [vmem:[%s4 + $0x1b0] sm:$0xff] %vm85, %v8619
  %8652 = vst.msk [vmem:[%s4 + $0x1b8] sm:$0xff] %vm85, %v8620
  %8653 = vst.msk [vmem:[%s4 + $0x1c0] sm:$0xff] %vm85, %v8621
  %8654 = vst.msk [vmem:[%s4 + $0x1c8] sm:$0xff] %vm85, %v8622
  %8655 = vst.msk [vmem:[%s4 + $0x1d0] sm:$0xff] %vm85, %v8623
  %8656 = vst.msk [vmem:[%s4 + $0x1d8] sm:$0xff] %vm85, %v8624
  %8657 = vst.msk [vmem:[%s4 + $0x1e0] sm:$0xff] %vm85, %v8625
  %8658 = vst.msk [vmem:[%s4 + $0x1e8] sm:$0xff] %vm85, %v8626
  %8659 = vst.msk [vmem:[%s4 + $0x1f0] sm:$0xff] %vm85, %v8627
  %8660 = vst.msk [vmem:[%s4 + $0x1f8] sm:$0xff] %vm85, %v8628
  // Predicated region
  $region18: #{tpu_custom_call.1} parent=0 // pred_check
    _
  $region19: #{tpu_custom_call.1} parent=0 // pred_check_branch
    %8662 = sbr.rel (0) target = $region21
  $region20: #{tpu_custom_call.1} parent=0 // pred_region
    _
  $region21: #{tpu_custom_call.1} parent=0 // pred_fallthru
    _
  // Predicated region
  $region22: #{tpu_custom_call.1} parent=0 // pred_check
    _
  $region23: #{tpu_custom_call.1} parent=0 // pred_check_branch
    %8664 = sbr.rel (0) target = $region25
  $region24: #{tpu_custom_call.1} parent=0 // pred_region
    _
  $region25: #{tpu_custom_call.1} parent=0 // pred_fallthru
    _

</llo_original>
